<compile_context>
chip_gen: v7x
topology: tpu7x:2x2x1
jax: 0.10.0
libtpu: 0.0.40
codegen_flags: <defaults>
</compile_context>

<pallas_src>
import numpy as np
import jax
import jax.numpy as jnp
from jax import lax
from jax.experimental import pallas as pl
from jax.experimental.pallas import tpu as pltpu

EPS = 1e-5
F32 = jnp.float32


# ---------------------------------------------------------------------------
# In-kernel helpers (traced; operate on VMEM refs holding ONE image).
# All activation slabs are zero-padded: shape (H+2, W+2, C), data at
# [1:H+1, 1:W+1, :], halo rows/cols are zero.
# ---------------------------------------------------------------------------
def _zero_border_rows(dst_ref, hd, wd, c):
    """Zero the top / bottom halo rows of a padded (hd+2, wd+2, c) slab."""
    zrow = jnp.zeros((wd + 2, c), F32)
    dst_ref[0] = zrow
    dst_ref[hd + 1] = zrow


def _conv3x3(src_ref, w_ref, s_ref, b_ref, H, W, relu, store_row):
    """3x3 'same' conv over a zero-padded (H+2, W+2, Cin) VMEM slab.

    One im2col matmul per output row: patch (W, 9*Cin) @ weight (9*Cin, Cout).
    Folded-BN scale/bias (+ optional ReLU) is applied in f32, then the (W,
    Cout) row is handed to `store_row(h, y)`.
    """
    cout = w_ref.shape[1]
    # Hoisted out of the row loop (JAX does not CSE broadcast_in_dim).
    scale = jnp.broadcast_to(s_ref[...], (W, cout))
    bias = jnp.broadcast_to(b_ref[...], (W, cout))

    def row_body(h, carry):
        taps = [src_ref[h + dy, pl.ds(dx, W), :]        # (W, Cin) each
                for dy in range(3) for dx in range(3)]
        patch = jnp.concatenate(taps, axis=1)            # (W, 9*Cin)
        y = jnp.dot(patch, w_ref[...], preferred_element_type=F32)
        y = y * scale + bias
        if relu:
            y = jnp.maximum(y, 0.0)
        store_row(h, y)
        return carry

    lax.fori_loop(0, H, row_body, 0)


def _conv3x3_to_padded(src_ref, dst_ref, w_ref, s_ref, b_ref, H, W, relu):
    """Conv whose output fills the interior of the next padded VMEM slab."""
    cout = w_ref.shape[1]
    _zero_border_rows(dst_ref, H, W, cout)
    zcol = jnp.zeros((1, cout), F32)

    def store_row(h, y):
        # Build the full padded row (zero | data | zero) so the store is a
        # full-width, aligned row store.
        dst_ref[h + 1] = jnp.concatenate([zcol, y, zcol], axis=0)

    _conv3x3(src_ref, w_ref, s_ref, b_ref, H, W, relu, store_row)


def _maxpool2x2_to_padded(src_ref, dst_ref, H, W):
    """2x2 / stride-2 max pool, padded (H+2,W+2,C) -> padded (H/2+2,W/2+2,C).

    Column pairing uses two tiny 0/1 selection matmuls instead of strided
    slices (cheap on the MXU, guaranteed to lower).
    """
    C = src_ref.shape[2]
    H2, W2 = H // 2, W // 2
    r_idx = lax.broadcasted_iota(jnp.int32, (W2, W), 0)
    c_idx = lax.broadcasted_iota(jnp.int32, (W2, W), 1)
    sel_even = (c_idx == 2 * r_idx).astype(F32)          # picks cols 0,2,4,..
    sel_odd = (c_idx == 2 * r_idx + 1).astype(F32)       # picks cols 1,3,5,..

    _zero_border_rows(dst_ref, H2, W2, C)
    zcol = jnp.zeros((1, C), F32)

    def body(ho, carry):
        r0 = src_ref[1 + 2 * ho, pl.ds(1, W), :]          # (W, C)
        r1 = src_ref[2 + 2 * ho, pl.ds(1, W), :]
        rm = jnp.maximum(r0, r1)
        pooled = jnp.maximum(
            jnp.dot(sel_even, rm, preferred_element_type=F32),
            jnp.dot(sel_odd, rm, preferred_element_type=F32))  # (W2, C)
        dst_ref[1 + ho] = jnp.concatenate([zcol, pooled, zcol], axis=0)
        return carry

    lax.fori_loop(0, H2, body, 0)


def _upsample_to_padded(src_ref, dst_ref, m_ref, hs, ws, Ho, Wo):
    """Bilinear x8 upsample (align_corners=False) as one kron-matrix matmul.

    src_ref: padded (hs+2, ws+2, C); dst_ref: padded (Ho+2, Wo+2, C);
    m_ref: (Ho*Wo, hs*ws) interpolation matrix.
    """
    C = src_ref.shape[2]
    rows = [src_ref[1 + i, pl.ds(1, ws), :] for i in range(hs)]  # hs x (ws, C)
    xflat = jnp.concatenate(rows, axis=0)                        # (hs*ws, C)
    up = jnp.dot(m_ref[...], xflat, preferred_element_type=F32)  # (Ho*Wo, C)

    _zero_border_rows(dst_ref, Ho, Wo, C)
    zcol = jnp.zeros((1, C), F32)
    for r in range(Ho):                                          # static unroll
        dst_ref[1 + r] = jnp.concatenate(
            [zcol, up[r * Wo:(r + 1) * Wo, :], zcol], axis=0)


# ---------------------------------------------------------------------------
# The fused kernel: whole network for one image per grid step.
# ---------------------------------------------------------------------------
def _fused_kernel(*refs):
    x_ref = refs[0]                       # (1, H, W, 8)  channel-padded input
    wsb = refs[1:28]                      # 9 x (w_im2col, scale, bias)
    m_ref = refs[28]                      # (Ho*Wo, hs*ws) bilinear kron matrix
    out_ref = refs[29]                    # (1, H, W, 2)
    (p_in, p1a, p1b, p2i, p2a, p2b,
     p3i, p3a, p3b, p4i, p4a, p4b, p5i) = refs[30:]   # VMEM activation slabs

    def layer(i):
        return wsb[3 * i], wsb[3 * i + 1], wsb[3 * i + 2]

    H, W = x_ref.shape[1], x_ref.shape[2]

    # ---- stage 0: copy input into a zero-padded VMEM slab -------------------
    _zero_border_rows(p_in, H, W, 8)
    zc8 = jnp.zeros((1, 8), F32)

    def copy_row(h, carry):
        p_in[h + 1] = jnp.concatenate([zc8, x_ref[0, h, :, :], zc8], axis=0)
        return carry

    lax.fori_loop(0, H, copy_row, 0)

    # ---- block1 --------------------------------------------------------------
    _conv3x3_to_padded(p_in, p1a, *layer(0), H, W, relu=True)
    _conv3x3_to_padded(p1a, p1b, *layer(1), H, W, relu=True)
    _maxpool2x2_to_padded(p1b, p2i, H, W)
    H, W = H // 2, W // 2

    # ---- block2 --------------------------------------------------------------
    _conv3x3_to_padded(p2i, p2a, *layer(2), H, W, relu=True)
    _conv3x3_to_padded(p2a, p2b, *layer(3), H, W, relu=True)
    _maxpool2x2_to_padded(p2b, p3i, H, W)
    H, W = H // 2, W // 2

    # ---- block3 --------------------------------------------------------------
    _conv3x3_to_padded(p3i, p3a, *layer(4), H, W, relu=True)
    _conv3x3_to_padded(p3a, p3b, *layer(5), H, W, relu=True)
    _maxpool2x2_to_padded(p3b, p4i, H, W)
    H, W = H // 2, W // 2

    # ---- block4 (no pool) ----------------------------------------------------
    _conv3x3_to_padded(p4i, p4a, *layer(6), H, W, relu=True)
    _conv3x3_to_padded(p4a, p4b, *layer(7), H, W, relu=True)

    # ---- bilinear x8 upsample ------------------------------------------------
    Ho, Wo = 8 * H, 8 * W
    _upsample_to_padded(p4b, p5i, m_ref, H, W, Ho, Wo)

    # ---- final conv (128 -> 2), no BN / no ReLU ------------------------------
    wc, sc, bc = layer(8)

    def store_out(h, y):
        # Output is tiny (16x16x2); kept NHWC to avoid in-kernel transposes.
        out_ref[0, h] = y.astype(out_ref.dtype)

    _conv3x3(p5i, wc, sc, bc, Ho, Wo, relu=False, store_row=store_out)


# ---------------------------------------------------------------------------
# Host-side parameter prep / wrappers.
# ---------------------------------------------------------------------------
def bilinear_1d_matrix(in_size, out_size):
    """1-D interpolation matrix matching F.interpolate(align_corners=False)."""
    scale = in_size / out_size
    A = np.zeros((out_size, in_size), dtype=np.float32)
    for o in range(out_size):
        src = max((o + 0.5) * scale - 0.5, 0.0)
        i0 = min(int(np.floor(src)), in_size - 1)
        i1 = min(i0 + 1, in_size - 1)
        lam = src - i0
        A[o, i0] += 1.0 - lam
        A[o, i1] += lam
    return A


def init_params(seed=0):
    """Deterministic synthetic parameters mirroring DeeperArrowMultiNet."""
    key = jax.random.PRNGKey(seed)
    chans = [(1, 16), (16, 16), (16, 32), (32, 32), (32, 64), (64, 64),
             (64, 128), (128, 128), (128, 2)]
    has_bn = [True] * 8 + [False]
    params = []
    for i, (cin, cout) in enumerate(chans):
        key, kw, kb, kg, kbe, km, kv = jax.random.split(key, 7)
        std = (2.0 / (9 * cin)) ** 0.5
        w = jax.random.normal(kw, (3, 3, cin, cout), F32) * std   # HWIO
        b = 0.05 * jax.random.normal(kb, (cout,), F32)
        bn = None
        if has_bn[i]:
            bn = dict(
                gamma=1.0 + 0.1 * jax.random.normal(kg, (cout,), F32),
                beta=0.1 * jax.random.normal(kbe, (cout,), F32),
                mean=0.1 * jax.random.normal(km, (cout,), F32),
                var=1.0 + 0.2 * jnp.abs(jax.random.normal(kv, (cout,), F32)),
            )
        params.append(dict(w=w, b=b, bn=bn))
    return params


def pack_layer(layer):
    """Fold eval-mode BN (+ conv bias) and reshape the weight for im2col."""
    w = layer["w"]                                  # (3, 3, Cin, Cout) HWIO
    cin, cout = w.shape[2], w.shape[3]
    if cin == 1:                                    # conv1: pad Cin 1 -> 8
        w = jnp.pad(w, ((0, 0), (0, 0), (0, 7), (0, 0)))
        cin = 8
    w_mat = w.reshape(9 * cin, cout)                # k-major: (3*dy+dx)*Cin+ci
    b, bn = layer["b"], layer["bn"]
    if bn is None:
        scale, bias = jnp.ones_like(b), b
    else:
        scale = bn["gamma"] / jnp.sqrt(bn["var"] + EPS)
        bias = bn["beta"] + scale * (b - bn["mean"])
    return w_mat, scale.reshape(1, cout), bias.reshape(1, cout)


def _scratch_shapes(H, W):
    H2, W2, H4, W4, H8, W8 = H // 2, W // 2, H // 4, W // 4, H // 8, W // 8

    def pad(h, w, c):
        return pltpu.VMEM((h + 2, w + 2, c), F32)

    return [
        pad(H, W, 8),       # p_in
        pad(H, W, 16),      # p1a
        pad(H, W, 16),      # p1b
        pad(H2, W2, 16),    # p2i
        pad(H2, W2, 32),    # p2a
        pad(H2, W2, 32),    # p2b
        pad(H4, W4, 32),    # p3i
        pad(H4, W4, 64),    # p3a
        pad(H4, W4, 64),    # p3b
        pad(H8, W8, 64),    # p4i
        pad(H8, W8, 128),   # p4a
        pad(H8, W8, 128),   # p4b
        pad(H, W, 128),     # p5i (x8 upsample of H8 == H)
    ]


@jax.jit
def forward(x_nchw, params, m):
    N, C_in, H, W = x_nchw.shape
    assert C_in == 1 and H % 8 == 0 and W % 8 == 0
    x = jnp.transpose(x_nchw, (0, 2, 3, 1)).astype(F32)        # -> NHWC
    x = jnp.pad(x, ((0, 0), (0, 0), (0, 0), (0, 8 - C_in)))    # Cin 1 -> 8

    packed = []
    for layer in params:
        packed.extend(pack_layer(layer))                        # 27 arrays

    in_arrays = [x] + packed + [m]
    in_specs = [pl.BlockSpec((1, H, W, 8), lambda n: (n, 0, 0, 0))]
    for arr in packed + [m]:                                    # all 2-D
        in_specs.append(pl.BlockSpec(arr.shape, lambda n: (0, 0)))

    out = pl.pallas_call(
        _fused_kernel,
        out_shape=jax.ShapeDtypeStruct((N, H, W, 2), F32),
        grid=(N,),
        in_specs=in_specs,
        out_specs=pl.BlockSpec((1, H, W, 2), lambda n: (n, 0, 0, 0)),
        scratch_shapes=_scratch_shapes(H, W),
        compiler_params=pltpu.CompilerParams(
            dimension_semantics=("parallel",)),
    )(*in_arrays)
    return jnp.transpose(out, (0, 3, 1, 2))                     # -> NCHW


# Pure-JAX/XLA reference (same math) used as a correctness smoke test.
@jax.jit
def reference_forward(x_nchw, params, m):
    x = jnp.transpose(x_nchw, (0, 2, 3, 1)).astype(F32)

    def conv(x, layer):
        y = lax.conv_general_dilated(
            x, layer["w"], (1, 1), "SAME",
            dimension_numbers=("NHWC", "HWIO", "NHWC"))
        return y + layer["b"]

    def cbr(x, layer):
        bn = layer["bn"]
        y = conv(x, layer)
        y = bn["gamma"] * (y - bn["mean"]) / jnp.sqrt(bn["var"] + EPS) + bn["beta"]
        return jax.nn.relu(y)

    def pool(x):
        return lax.reduce_window(x, -jnp.inf, lax.max,
                                 (1, 2, 2, 1), (1, 2, 2, 1), "VALID")

    x = pool(cbr(cbr(x, params[0]), params[1]))
    x = pool(cbr(cbr(x, params[2]), params[3]))
    x = pool(cbr(cbr(x, params[4]), params[5]))
    x = cbr(cbr(x, params[6]), params[7])
    N, h, w, C = x.shape
    x = jnp.matmul(m, x.reshape(N, h * w, C)).reshape(N, 8 * h, 8 * w, C)
    x = conv(x, params[8])
    return jnp.transpose(x, (0, 3, 1, 2))


if __name__ == "__main__":
    params = init_params(seed=0)

    N, H, W = 2, 16, 16
    hs = H // 8                                     # spatial size before upsample
    A = bilinear_1d_matrix(hs, 8 * hs)              # (16, 2)
    m = jnp.asarray(np.kron(A, A))                  # (256, 4)

    x = jax.random.normal(jax.random.PRNGKey(0), (N, 1, H, W), F32)

    out = jax.block_until_ready(forward(x, params, m))
    assert out.shape == (N, 2, H, W), out.shape

    ref = jax.block_until_ready(reference_forward(x, params, m))
    out_np, ref_np = np.asarray(out), np.asarray(ref)
    if not np.allclose(out_np, ref_np, rtol=1e-2, atol=1e-2):
        raise AssertionError(
            "Pallas output mismatch, max abs err = "
            f"{float(np.max(np.abs(out_np - ref_np)))}")

    print("KERNEL_OK")
</pallas_src>

<mosaic_0001>
module attributes {stable_mosaic.version = 11 : i64} {
  func.func @_fused_kernel(%arg0: i32, %arg1: memref<1x16x16x8xf32, #tpu.memory_space<vmem>>, %arg2: memref<72x16xf32, #tpu.memory_space<vmem>>, %arg3: memref<1x16xf32, #tpu.memory_space<vmem>>, %arg4: memref<1x16xf32, #tpu.memory_space<vmem>>, %arg5: memref<144x16xf32, #tpu.memory_space<vmem>>, %arg6: memref<1x16xf32, #tpu.memory_space<vmem>>, %arg7: memref<1x16xf32, #tpu.memory_space<vmem>>, %arg8: memref<144x32xf32, #tpu.memory_space<vmem>>, %arg9: memref<1x32xf32, #tpu.memory_space<vmem>>, %arg10: memref<1x32xf32, #tpu.memory_space<vmem>>, %arg11: memref<288x32xf32, #tpu.memory_space<vmem>>, %arg12: memref<1x32xf32, #tpu.memory_space<vmem>>, %arg13: memref<1x32xf32, #tpu.memory_space<vmem>>, %arg14: memref<288x64xf32, #tpu.memory_space<vmem>>, %arg15: memref<1x64xf32, #tpu.memory_space<vmem>>, %arg16: memref<1x64xf32, #tpu.memory_space<vmem>>, %arg17: memref<576x64xf32, #tpu.memory_space<vmem>>, %arg18: memref<1x64xf32, #tpu.memory_space<vmem>>, %arg19: memref<1x64xf32, #tpu.memory_space<vmem>>, %arg20: memref<576x128xf32, #tpu.memory_space<vmem>>, %arg21: memref<1x128xf32, #tpu.memory_space<vmem>>, %arg22: memref<1x128xf32, #tpu.memory_space<vmem>>, %arg23: memref<1152x128xf32, #tpu.memory_space<vmem>>, %arg24: memref<1x128xf32, #tpu.memory_space<vmem>>, %arg25: memref<1x128xf32, #tpu.memory_space<vmem>>, %arg26: memref<1152x2xf32, #tpu.memory_space<vmem>>, %arg27: memref<1x2xf32, #tpu.memory_space<vmem>>, %arg28: memref<1x2xf32, #tpu.memory_space<vmem>>, %arg29: memref<256x4xf32, #tpu.memory_space<vmem>>, %arg30: memref<1x16x16x2xf32, #tpu.memory_space<vmem>>, %arg31: memref<18x18x8xf32, #tpu.memory_space<vmem>>, %arg32: memref<18x18x16xf32, #tpu.memory_space<vmem>>, %arg33: memref<18x18x16xf32, #tpu.memory_space<vmem>>, %arg34: memref<10x10x16xf32, #tpu.memory_space<vmem>>, %arg35: memref<10x10x32xf32, #tpu.memory_space<vmem>>, %arg36: memref<10x10x32xf32, #tpu.memory_space<vmem>>, %arg37: memref<6x6x32xf32, #tpu.memory_space<vmem>>, %arg38: memref<6x6x64xf32, #tpu.memory_space<vmem>>, %arg39: memref<6x6x64xf32, #tpu.memory_space<vmem>>, %arg40: memref<4x4x64xf32, #tpu.memory_space<vmem>>, %arg41: memref<4x4x128xf32, #tpu.memory_space<vmem>>, %arg42: memref<4x4x128xf32, #tpu.memory_space<vmem>>, %arg43: memref<18x18x128xf32, #tpu.memory_space<vmem>>) attributes {dimension_semantics = [#tpu.dimension_semantics<parallel>], iteration_bounds = array<i64: 2>, scalar_prefetch = 0 : i64, scratch_operands = 13 : i64, tpu.core_type = #tpu.core_type<tc>, window_params = [{transform_indices = @transform_0, window_bounds = array<i64: 1, 16, 16, 8>}, {pipeline_mode = #tpu.pipeline_mode<synchronous>, transform_indices = @transform_1, window_bounds = array<i64: 72, 16>}, {pipeline_mode = #tpu.pipeline_mode<synchronous>, transform_indices = @transform_2, window_bounds = array<i64: 1, 16>}, {pipeline_mode = #tpu.pipeline_mode<synchronous>, transform_indices = @transform_3, window_bounds = array<i64: 1, 16>}, {pipeline_mode = #tpu.pipeline_mode<synchronous>, transform_indices = @transform_4, window_bounds = array<i64: 144, 16>}, {pipeline_mode = #tpu.pipeline_mode<synchronous>, transform_indices = @transform_5, window_bounds = array<i64: 1, 16>}, {pipeline_mode = #tpu.pipeline_mode<synchronous>, transform_indices = @transform_6, window_bounds = array<i64: 1, 16>}, {pipeline_mode = #tpu.pipeline_mode<synchronous>, transform_indices = @transform_7, window_bounds = array<i64: 144, 32>}, {pipeline_mode = #tpu.pipeline_mode<synchronous>, transform_indices = @transform_8, window_bounds = array<i64: 1, 32>}, {pipeline_mode = #tpu.pipeline_mode<synchronous>, transform_indices = @transform_9, window_bounds = array<i64: 1, 32>}, {pipeline_mode = #tpu.pipeline_mode<synchronous>, transform_indices = @transform_10, window_bounds = array<i64: 288, 32>}, {pipeline_mode = #tpu.pipeline_mode<synchronous>, transform_indices = @transform_11, window_bounds = array<i64: 1, 32>}, {pipeline_mode = #tpu.pipeline_mode<synchronous>, transform_indices = @transform_12, window_bounds = array<i64: 1, 32>}, {pipeline_mode = #tpu.pipeline_mode<synchronous>, transform_indices = @transform_13, window_bounds = array<i64: 288, 64>}, {pipeline_mode = #tpu.pipeline_mode<synchronous>, transform_indices = @transform_14, window_bounds = array<i64: 1, 64>}, {pipeline_mode = #tpu.pipeline_mode<synchronous>, transform_indices = @transform_15, window_bounds = array<i64: 1, 64>}, {pipeline_mode = #tpu.pipeline_mode<synchronous>, transform_indices = @transform_16, window_bounds = array<i64: 576, 64>}, {pipeline_mode = #tpu.pipeline_mode<synchronous>, transform_indices = @transform_17, window_bounds = array<i64: 1, 64>}, {pipeline_mode = #tpu.pipeline_mode<synchronous>, transform_indices = @transform_18, window_bounds = array<i64: 1, 64>}, {pipeline_mode = #tpu.pipeline_mode<synchronous>, transform_indices = @transform_19, window_bounds = array<i64: 576, 128>}, {pipeline_mode = #tpu.pipeline_mode<synchronous>, transform_indices = @transform_20, window_bounds = array<i64: 1, 128>}, {pipeline_mode = #tpu.pipeline_mode<synchronous>, transform_indices = @transform_21, window_bounds = array<i64: 1, 128>}, {pipeline_mode = #tpu.pipeline_mode<synchronous>, transform_indices = @transform_22, window_bounds = array<i64: 1152, 128>}, {pipeline_mode = #tpu.pipeline_mode<synchronous>, transform_indices = @transform_23, window_bounds = array<i64: 1, 128>}, {pipeline_mode = #tpu.pipeline_mode<synchronous>, transform_indices = @transform_24, window_bounds = array<i64: 1, 128>}, {pipeline_mode = #tpu.pipeline_mode<synchronous>, transform_indices = @transform_25, window_bounds = array<i64: 1152, 2>}, {pipeline_mode = #tpu.pipeline_mode<synchronous>, transform_indices = @transform_26, window_bounds = array<i64: 1, 2>}, {pipeline_mode = #tpu.pipeline_mode<synchronous>, transform_indices = @transform_27, window_bounds = array<i64: 1, 2>}, {pipeline_mode = #tpu.pipeline_mode<synchronous>, transform_indices = @transform_28, window_bounds = array<i64: 256, 4>}, {transform_indices = @transform_29, window_bounds = array<i64: 1, 16, 16, 2>}]} {
    %cst = arith.constant 0.000000e+00 : f32
    %0 = vector.broadcast %cst : f32 to vector<18x8xf32>
    %c0 = arith.constant 0 : index
    %c0_0 = arith.constant 0 : index
    %c0_1 = arith.constant 0 : index
    %1 = vector.load %arg31[%c0, %c0_0, %c0_1] : memref<18x18x8xf32, #tpu.memory_space<vmem>>, vector<1x18x8xf32>
    %2 = vector.shape_cast %1 : vector<1x18x8xf32> to vector<18x8xf32>
    %3 = vector.shape_cast %0 : vector<18x8xf32> to vector<1x18x8xf32>
    tpu.vector_store %arg31[%c0, %c0_0, %c0_1], %3 {strides = array<i32>} : memref<18x18x8xf32, #tpu.memory_space<vmem>>, vector<1x18x8xf32>,
    %c17 = arith.constant 17 : index
    %c0_2 = arith.constant 0 : index
    %c0_3 = arith.constant 0 : index
    %4 = vector.load %arg31[%c17, %c0_2, %c0_3] : memref<18x18x8xf32, #tpu.memory_space<vmem>>, vector<1x18x8xf32>
    %5 = vector.shape_cast %4 : vector<1x18x8xf32> to vector<18x8xf32>
    %6 = vector.shape_cast %0 : vector<18x8xf32> to vector<1x18x8xf32>
    tpu.vector_store %arg31[%c17, %c0_2, %c0_3], %6 {strides = array<i32>} : memref<18x18x8xf32, #tpu.memory_space<vmem>>, vector<1x18x8xf32>,
    %cst_4 = arith.constant 0.000000e+00 : f32
    %7 = vector.broadcast %cst_4 : f32 to vector<1x8xf32>
    %c0_i32 = arith.constant 0 : i32
    %c16_i32 = arith.constant 16 : i32
    %8 = arith.addi %c0_i32, %c16_i32 : i32
    %c1_i32 = arith.constant 1 : i32
    scf.for %arg44 = %c0_i32 to %8 step %c1_i32  : i32 {
      %c0_233 = arith.constant 0 : index
      %300 = arith.index_cast %arg44 : i32 to index
      %c0_234 = arith.constant 0 : index
      %c0_235 = arith.constant 0 : index
      %301 = vector.load %arg1[%c0_233, %300, %c0_234, %c0_235] : memref<1x16x16x8xf32, #tpu.memory_space<vmem>>, vector<1x1x16x8xf32>
      %302 = vector.shape_cast %301 : vector<1x1x16x8xf32> to vector<16x8xf32>
      %303 = tpu.concatenate %7, %302, %7 in 0 : vector<1x8xf32>, vector<16x8xf32>, vector<1x8xf32> -> vector<18x8xf32>
      %c1_i32_236 = arith.constant 1 : i32
      %304 = arith.addi %arg44, %c1_i32_236 : i32
      %305 = arith.index_cast %304 : i32 to index
      %c0_237 = arith.constant 0 : index
      %c0_238 = arith.constant 0 : index
      %306 = vector.load %arg31[%305, %c0_237, %c0_238] : memref<18x18x8xf32, #tpu.memory_space<vmem>>, vector<1x18x8xf32>
      %307 = vector.shape_cast %306 : vector<1x18x8xf32> to vector<18x8xf32>
      %308 = vector.shape_cast %303 : vector<18x8xf32> to vector<1x18x8xf32>
      tpu.vector_store %arg31[%305, %c0_237, %c0_238], %308 {strides = array<i32>} : memref<18x18x8xf32, #tpu.memory_space<vmem>>, vector<1x18x8xf32>,
    }
    %c16_i32_5 = arith.constant 16 : i32
    %cst_6 = arith.constant 0.000000e+00 : f32
    %9 = vector.broadcast %cst_6 : f32 to vector<18x16xf32>
    %c0_7 = arith.constant 0 : index
    %c0_8 = arith.constant 0 : index
    %c0_9 = arith.constant 0 : index
    %10 = vector.load %arg32[%c0_7, %c0_8, %c0_9] : memref<18x18x16xf32, #tpu.memory_space<vmem>>, vector<1x18x16xf32>
    %11 = vector.shape_cast %10 : vector<1x18x16xf32> to vector<18x16xf32>
    %12 = vector.shape_cast %9 : vector<18x16xf32> to vector<1x18x16xf32>
    tpu.vector_store %arg32[%c0_7, %c0_8, %c0_9], %12 {strides = array<i32>} : memref<18x18x16xf32, #tpu.memory_space<vmem>>, vector<1x18x16xf32>,
    %c17_10 = arith.constant 17 : index
    %c0_11 = arith.constant 0 : index
    %c0_12 = arith.constant 0 : index
    %13 = vector.load %arg32[%c17_10, %c0_11, %c0_12] : memref<18x18x16xf32, #tpu.memory_space<vmem>>, vector<1x18x16xf32>
    %14 = vector.shape_cast %13 : vector<1x18x16xf32> to vector<18x16xf32>
    %15 = vector.shape_cast %9 : vector<18x16xf32> to vector<1x18x16xf32>
    tpu.vector_store %arg32[%c17_10, %c0_11, %c0_12], %15 {strides = array<i32>} : memref<18x18x16xf32, #tpu.memory_space<vmem>>, vector<1x18x16xf32>,
    %cst_13 = arith.constant 0.000000e+00 : f32
    %16 = vector.broadcast %cst_13 : f32 to vector<1x16xf32>
    %c0_14 = arith.constant 0 : index
    %c0_15 = arith.constant 0 : index
    %17 = vector.load %arg3[%c0_14, %c0_15] : memref<1x16xf32, #tpu.memory_space<vmem>>, vector<1x16xf32>
    %18 = vector.shape_cast %17 : vector<1x16xf32> to vector<1x16xf32>
    %19 = vector.broadcast %18 : vector<1x16xf32> to vector<16x16xf32>
    %c0_16 = arith.constant 0 : index
    %c0_17 = arith.constant 0 : index
    %20 = vector.load %arg4[%c0_16, %c0_17] : memref<1x16xf32, #tpu.memory_space<vmem>>, vector<1x16xf32>
    %21 = vector.shape_cast %20 : vector<1x16xf32> to vector<1x16xf32>
    %22 = vector.broadcast %21 : vector<1x16xf32> to vector<16x16xf32>
    %c0_i32_18 = arith.constant 0 : i32
    %c16_i32_19 = arith.constant 16 : i32
    %23 = arith.addi %c0_i32_18, %c16_i32_19 : i32
    %c1_i32_20 = arith.constant 1 : i32
    scf.for %arg44 = %c0_i32_18 to %23 step %c1_i32_20  : i32 {
      %c0_i32_233 = arith.constant 0 : i32
      %300 = arith.addi %arg44, %c0_i32_233 : i32
      %301 = arith.index_cast %300 : i32 to index
      %c0_234 = arith.constant 0 : index
      %c0_235 = arith.constant 0 : index
      %302 = vector.load %arg31[%301, %c0_234, %c0_235] : memref<18x18x8xf32, #tpu.memory_space<vmem>>, vector<1x16x8xf32>
      %303 = vector.shape_cast %302 : vector<1x16x8xf32> to vector<16x8xf32>
      %c0_i32_236 = arith.constant 0 : i32
      %304 = arith.addi %arg44, %c0_i32_236 : i32
      %305 = arith.index_cast %304 : i32 to index
      %c1_237 = arith.constant 1 : index
      %c0_238 = arith.constant 0 : index
      %306 = vector.load %arg31[%305, %c1_237, %c0_238] : memref<18x18x8xf32, #tpu.memory_space<vmem>>, vector<1x16x8xf32>
      %307 = vector.shape_cast %306 : vector<1x16x8xf32> to vector<16x8xf32>
      %c0_i32_239 = arith.constant 0 : i32
      %308 = arith.addi %arg44, %c0_i32_239 : i32
      %309 = arith.index_cast %308 : i32 to index
      %c2_240 = arith.constant 2 : index
      %c0_241 = arith.constant 0 : index
      %310 = vector.load %arg31[%309, %c2_240, %c0_241] : memref<18x18x8xf32, #tpu.memory_space<vmem>>, vector<1x16x8xf32>
      %311 = vector.shape_cast %310 : vector<1x16x8xf32> to vector<16x8xf32>
      %c1_i32_242 = arith.constant 1 : i32
      %312 = arith.addi %arg44, %c1_i32_242 : i32
      %313 = arith.index_cast %312 : i32 to index
      %c0_243 = arith.constant 0 : index
      %c0_244 = arith.constant 0 : index
      %314 = vector.load %arg31[%313, %c0_243, %c0_244] : memref<18x18x8xf32, #tpu.memory_space<vmem>>, vector<1x16x8xf32>
      %315 = vector.shape_cast %314 : vector<1x16x8xf32> to vector<16x8xf32>
      %c1_i32_245 = arith.constant 1 : i32
      %316 = arith.addi %arg44, %c1_i32_245 : i32
      %317 = arith.index_cast %316 : i32 to index
      %c1_246 = arith.constant 1 : index
      %c0_247 = arith.constant 0 : index
      %318 = vector.load %arg31[%317, %c1_246, %c0_247] : memref<18x18x8xf32, #tpu.memory_space<vmem>>, vector<1x16x8xf32>
      %319 = vector.shape_cast %318 : vector<1x16x8xf32> to vector<16x8xf32>
      %c1_i32_248 = arith.constant 1 : i32
      %320 = arith.addi %arg44, %c1_i32_248 : i32
      %321 = arith.index_cast %320 : i32 to index
      %c2_249 = arith.constant 2 : index
      %c0_250 = arith.constant 0 : index
      %322 = vector.load %arg31[%321, %c2_249, %c0_250] : memref<18x18x8xf32, #tpu.memory_space<vmem>>, vector<1x16x8xf32>
      %323 = vector.shape_cast %322 : vector<1x16x8xf32> to vector<16x8xf32>
      %c2_i32_251 = arith.constant 2 : i32
      %324 = arith.addi %arg44, %c2_i32_251 : i32
      %325 = arith.index_cast %324 : i32 to index
      %c0_252 = arith.constant 0 : index
      %c0_253 = arith.constant 0 : index
      %326 = vector.load %arg31[%325, %c0_252, %c0_253] : memref<18x18x8xf32, #tpu.memory_space<vmem>>, vector<1x16x8xf32>
      %327 = vector.shape_cast %326 : vector<1x16x8xf32> to vector<16x8xf32>
      %c2_i32_254 = arith.constant 2 : i32
      %328 = arith.addi %arg44, %c2_i32_254 : i32
      %329 = arith.index_cast %328 : i32 to index
      %c1_255 = arith.constant 1 : index
      %c0_256 = arith.constant 0 : index
      %330 = vector.load %arg31[%329, %c1_255, %c0_256] : memref<18x18x8xf32, #tpu.memory_space<vmem>>, vector<1x16x8xf32>
      %331 = vector.shape_cast %330 : vector<1x16x8xf32> to vector<16x8xf32>
      %c2_i32_257 = arith.constant 2 : i32
      %332 = arith.addi %arg44, %c2_i32_257 : i32
      %333 = arith.index_cast %332 : i32 to index
      %c2_258 = arith.constant 2 : index
      %c0_259 = arith.constant 0 : index
      %334 = vector.load %arg31[%333, %c2_258, %c0_259] : memref<18x18x8xf32, #tpu.memory_space<vmem>>, vector<1x16x8xf32>
      %335 = vector.shape_cast %334 : vector<1x16x8xf32> to vector<16x8xf32>
      %336 = tpu.concatenate %303, %307, %311, %315, %319, %323, %327, %331, %335 in 1 : vector<16x8xf32>, vector<16x8xf32>, vector<16x8xf32>, vector<16x8xf32>, vector<16x8xf32>, vector<16x8xf32>, vector<16x8xf32>, vector<16x8xf32>, vector<16x8xf32> -> vector<16x72xf32>
      %c0_260 = arith.constant 0 : index
      %c0_261 = arith.constant 0 : index
      %337 = vector.load %arg2[%c0_260, %c0_261] : memref<72x16xf32, #tpu.memory_space<vmem>>, vector<72x16xf32>
      %cst_262 = arith.constant dense<0.000000e+00> : vector<16x16xf32>
      %338 = tpu.matmul %336, %337, %cst_262 {dimension_numbers = #tpu.dot_dimension_numbers<[1], [0], [0], [1], [0, 0, 1, 1], [], []>} : vector<16x72xf32>, vector<72x16xf32>, vector<16x16xf32> -> vector<16x16xf32>
      %339 = arith.mulf %338, %19 : vector<16x16xf32>
      %340 = arith.addf %339, %22 : vector<16x16xf32>
      %cst_263 = arith.constant 0.000000e+00 : f32
      %341 = vector.broadcast %cst_263 : f32 to vector<16x16xf32>
      %342 = arith.maximumf %340, %341 : vector<16x16xf32>
      %343 = tpu.concatenate %16, %342, %16 in 0 : vector<1x16xf32>, vector<16x16xf32>, vector<1x16xf32> -> vector<18x16xf32>
      %c1_i32_264 = arith.constant 1 : i32
      %344 = arith.addi %arg44, %c1_i32_264 : i32
      %345 = arith.index_cast %344 : i32 to index
      %c0_265 = arith.constant 0 : index
      %c0_266 = arith.constant 0 : index
      %346 = vector.load %arg32[%345, %c0_265, %c0_266] : memref<18x18x16xf32, #tpu.memory_space<vmem>>, vector<1x18x16xf32>
      %347 = vector.shape_cast %346 : vector<1x18x16xf32> to vector<18x16xf32>
      %348 = vector.shape_cast %343 : vector<18x16xf32> to vector<1x18x16xf32>
      tpu.vector_store %arg32[%345, %c0_265, %c0_266], %348 {strides = array<i32>} : memref<18x18x16xf32, #tpu.memory_space<vmem>>, vector<1x18x16xf32>,
    }
    %c16_i32_21 = arith.constant 16 : i32
    %cst_22 = arith.constant 0.000000e+00 : f32
    %24 = vector.broadcast %cst_22 : f32 to vector<18x16xf32>
    %c0_23 = arith.constant 0 : index
    %c0_24 = arith.constant 0 : index
    %c0_25 = arith.constant 0 : index
    %25 = vector.load %arg33[%c0_23, %c0_24, %c0_25] : memref<18x18x16xf32, #tpu.memory_space<vmem>>, vector<1x18x16xf32>
    %26 = vector.shape_cast %25 : vector<1x18x16xf32> to vector<18x16xf32>
    %27 = vector.shape_cast %24 : vector<18x16xf32> to vector<1x18x16xf32>
    tpu.vector_store %arg33[%c0_23, %c0_24, %c0_25], %27 {strides = array<i32>} : memref<18x18x16xf32, #tpu.memory_space<vmem>>, vector<1x18x16xf32>,
    %c17_26 = arith.constant 17 : index
    %c0_27 = arith.constant 0 : index
    %c0_28 = arith.constant 0 : index
    %28 = vector.load %arg33[%c17_26, %c0_27, %c0_28] : memref<18x18x16xf32, #tpu.memory_space<vmem>>, vector<1x18x16xf32>
    %29 = vector.shape_cast %28 : vector<1x18x16xf32> to vector<18x16xf32>
    %30 = vector.shape_cast %24 : vector<18x16xf32> to vector<1x18x16xf32>
    tpu.vector_store %arg33[%c17_26, %c0_27, %c0_28], %30 {strides = array<i32>} : memref<18x18x16xf32, #tpu.memory_space<vmem>>, vector<1x18x16xf32>,
    %cst_29 = arith.constant 0.000000e+00 : f32
    %31 = vector.broadcast %cst_29 : f32 to vector<1x16xf32>
    %c0_30 = arith.constant 0 : index
    %c0_31 = arith.constant 0 : index
    %32 = vector.load %arg6[%c0_30, %c0_31] : memref<1x16xf32, #tpu.memory_space<vmem>>, vector<1x16xf32>
    %33 = vector.shape_cast %32 : vector<1x16xf32> to vector<1x16xf32>
    %34 = vector.broadcast %33 : vector<1x16xf32> to vector<16x16xf32>
    %c0_32 = arith.constant 0 : index
    %c0_33 = arith.constant 0 : index
    %35 = vector.load %arg7[%c0_32, %c0_33] : memref<1x16xf32, #tpu.memory_space<vmem>>, vector<1x16xf32>
    %36 = vector.shape_cast %35 : vector<1x16xf32> to vector<1x16xf32>
    %37 = vector.broadcast %36 : vector<1x16xf32> to vector<16x16xf32>
    %c0_i32_34 = arith.constant 0 : i32
    %c16_i32_35 = arith.constant 16 : i32
    %38 = arith.addi %c0_i32_34, %c16_i32_35 : i32
    %c1_i32_36 = arith.constant 1 : i32
    scf.for %arg44 = %c0_i32_34 to %38 step %c1_i32_36  : i32 {
      %c0_i32_233 = arith.constant 0 : i32
      %300 = arith.addi %arg44, %c0_i32_233 : i32
      %301 = arith.index_cast %300 : i32 to index
      %c0_234 = arith.constant 0 : index
      %c0_235 = arith.constant 0 : index
      %302 = vector.load %arg32[%301, %c0_234, %c0_235] : memref<18x18x16xf32, #tpu.memory_space<vmem>>, vector<1x16x16xf32>
      %303 = vector.shape_cast %302 : vector<1x16x16xf32> to vector<16x16xf32>
      %c0_i32_236 = arith.constant 0 : i32
      %304 = arith.addi %arg44, %c0_i32_236 : i32
      %305 = arith.index_cast %304 : i32 to index
      %c1_237 = arith.constant 1 : index
      %c0_238 = arith.constant 0 : index
      %306 = vector.load %arg32[%305, %c1_237, %c0_238] : memref<18x18x16xf32, #tpu.memory_space<vmem>>, vector<1x16x16xf32>
      %307 = vector.shape_cast %306 : vector<1x16x16xf32> to vector<16x16xf32>
      %c0_i32_239 = arith.constant 0 : i32
      %308 = arith.addi %arg44, %c0_i32_239 : i32
      %309 = arith.index_cast %308 : i32 to index
      %c2_240 = arith.constant 2 : index
      %c0_241 = arith.constant 0 : index
      %310 = vector.load %arg32[%309, %c2_240, %c0_241] : memref<18x18x16xf32, #tpu.memory_space<vmem>>, vector<1x16x16xf32>
      %311 = vector.shape_cast %310 : vector<1x16x16xf32> to vector<16x16xf32>
      %c1_i32_242 = arith.constant 1 : i32
      %312 = arith.addi %arg44, %c1_i32_242 : i32
      %313 = arith.index_cast %312 : i32 to index
      %c0_243 = arith.constant 0 : index
      %c0_244 = arith.constant 0 : index
      %314 = vector.load %arg32[%313, %c0_243, %c0_244] : memref<18x18x16xf32, #tpu.memory_space<vmem>>, vector<1x16x16xf32>
      %315 = vector.shape_cast %314 : vector<1x16x16xf32> to vector<16x16xf32>
      %c1_i32_245 = arith.constant 1 : i32
      %316 = arith.addi %arg44, %c1_i32_245 : i32
      %317 = arith.index_cast %316 : i32 to index
      %c1_246 = arith.constant 1 : index
      %c0_247 = arith.constant 0 : index
      %318 = vector.load %arg32[%317, %c1_246, %c0_247] : memref<18x18x16xf32, #tpu.memory_space<vmem>>, vector<1x16x16xf32>
      %319 = vector.shape_cast %318 : vector<1x16x16xf32> to vector<16x16xf32>
      %c1_i32_248 = arith.constant 1 : i32
      %320 = arith.addi %arg44, %c1_i32_248 : i32
      %321 = arith.index_cast %320 : i32 to index
      %c2_249 = arith.constant 2 : index
      %c0_250 = arith.constant 0 : index
      %322 = vector.load %arg32[%321, %c2_249, %c0_250] : memref<18x18x16xf32, #tpu.memory_space<vmem>>, vector<1x16x16xf32>
      %323 = vector.shape_cast %322 : vector<1x16x16xf32> to vector<16x16xf32>
      %c2_i32_251 = arith.constant 2 : i32
      %324 = arith.addi %arg44, %c2_i32_251 : i32
      %325 = arith.index_cast %324 : i32 to index
      %c0_252 = arith.constant 0 : index
      %c0_253 = arith.constant 0 : index
      %326 = vector.load %arg32[%325, %c0_252, %c0_253] : memref<18x18x16xf32, #tpu.memory_space<vmem>>, vector<1x16x16xf32>
      %327 = vector.shape_cast %326 : vector<1x16x16xf32> to vector<16x16xf32>
      %c2_i32_254 = arith.constant 2 : i32
      %328 = arith.addi %arg44, %c2_i32_254 : i32
      %329 = arith.index_cast %328 : i32 to index
      %c1_255 = arith.constant 1 : index
      %c0_256 = arith.constant 0 : index
      %330 = vector.load %arg32[%329, %c1_255, %c0_256] : memref<18x18x16xf32, #tpu.memory_space<vmem>>, vector<1x16x16xf32>
      %331 = vector.shape_cast %330 : vector<1x16x16xf32> to vector<16x16xf32>
      %c2_i32_257 = arith.constant 2 : i32
      %332 = arith.addi %arg44, %c2_i32_257 : i32
      %333 = arith.index_cast %332 : i32 to index
      %c2_258 = arith.constant 2 : index
      %c0_259 = arith.constant 0 : index
      %334 = vector.load %arg32[%333, %c2_258, %c0_259] : memref<18x18x16xf32, #tpu.memory_space<vmem>>, vector<1x16x16xf32>
      %335 = vector.shape_cast %334 : vector<1x16x16xf32> to vector<16x16xf32>
      %336 = tpu.concatenate %303, %307, %311, %315, %319, %323, %327, %331, %335 in 1 : vector<16x16xf32>, vector<16x16xf32>, vector<16x16xf32>, vector<16x16xf32>, vector<16x16xf32>, vector<16x16xf32>, vector<16x16xf32>, vector<16x16xf32>, vector<16x16xf32> -> vector<16x144xf32>
      %c0_260 = arith.constant 0 : index
      %c0_261 = arith.constant 0 : index
      %337 = vector.load %arg5[%c0_260, %c0_261] : memref<144x16xf32, #tpu.memory_space<vmem>>, vector<144x16xf32>
      %cst_262 = arith.constant dense<0.000000e+00> : vector<16x16xf32>
      %338 = tpu.matmul %336, %337, %cst_262 {dimension_numbers = #tpu.dot_dimension_numbers<[1], [0], [0], [1], [0, 0, 1, 1], [], []>} : vector<16x144xf32>, vector<144x16xf32>, vector<16x16xf32> -> vector<16x16xf32>
      %339 = arith.mulf %338, %34 : vector<16x16xf32>
      %340 = arith.addf %339, %37 : vector<16x16xf32>
      %cst_263 = arith.constant 0.000000e+00 : f32
      %341 = vector.broadcast %cst_263 : f32 to vector<16x16xf32>
      %342 = arith.maximumf %340, %341 : vector<16x16xf32>
      %343 = tpu.concatenate %31, %342, %31 in 0 : vector<1x16xf32>, vector<16x16xf32>, vector<1x16xf32> -> vector<18x16xf32>
      %c1_i32_264 = arith.constant 1 : i32
      %344 = arith.addi %arg44, %c1_i32_264 : i32
      %345 = arith.index_cast %344 : i32 to index
      %c0_265 = arith.constant 0 : index
      %c0_266 = arith.constant 0 : index
      %346 = vector.load %arg33[%345, %c0_265, %c0_266] : memref<18x18x16xf32, #tpu.memory_space<vmem>>, vector<1x18x16xf32>
      %347 = vector.shape_cast %346 : vector<1x18x16xf32> to vector<18x16xf32>
      %348 = vector.shape_cast %343 : vector<18x16xf32> to vector<1x18x16xf32>
      tpu.vector_store %arg33[%345, %c0_265, %c0_266], %348 {strides = array<i32>} : memref<18x18x16xf32, #tpu.memory_space<vmem>>, vector<1x18x16xf32>,
    }
    %c16_i32_37 = arith.constant 16 : i32
    %39 = tpu.iota {dimensions = array<i32: 0>} : vector<8x16xi32>
    %40 = tpu.iota {dimensions = array<i32: 1>} : vector<8x16xi32>
    %c2_i32 = arith.constant 2 : i32
    %41 = vector.broadcast %c2_i32 : i32 to vector<8x16xi32>
    %42 = arith.muli %41, %39 : vector<8x16xi32>
    %43 = arith.cmpi eq, %40, %42 : vector<8x16xi32>
    %44 = arith.extui %43 : vector<8x16xi1> to vector<8x16xi32>
    %45 = arith.sitofp %44 : vector<8x16xi32> to vector<8x16xf32>
    %c2_i32_38 = arith.constant 2 : i32
    %46 = vector.broadcast %c2_i32_38 : i32 to vector<8x16xi32>
    %47 = arith.muli %46, %39 : vector<8x16xi32>
    %c1_i32_39 = arith.constant 1 : i32
    %48 = vector.broadcast %c1_i32_39 : i32 to vector<8x16xi32>
    %49 = arith.addi %47, %48 : vector<8x16xi32>
    %50 = arith.cmpi eq, %40, %49 : vector<8x16xi32>
    %51 = arith.extui %50 : vector<8x16xi1> to vector<8x16xi32>
    %52 = arith.sitofp %51 : vector<8x16xi32> to vector<8x16xf32>
    %cst_40 = arith.constant 0.000000e+00 : f32
    %53 = vector.broadcast %cst_40 : f32 to vector<10x16xf32>
    %c0_41 = arith.constant 0 : index
    %c0_42 = arith.constant 0 : index
    %c0_43 = arith.constant 0 : index
    %54 = vector.load %arg34[%c0_41, %c0_42, %c0_43] : memref<10x10x16xf32, #tpu.memory_space<vmem>>, vector<1x10x16xf32>
    %55 = vector.shape_cast %54 : vector<1x10x16xf32> to vector<10x16xf32>
    %56 = vector.shape_cast %53 : vector<10x16xf32> to vector<1x10x16xf32>
    tpu.vector_store %arg34[%c0_41, %c0_42, %c0_43], %56 {strides = array<i32>} : memref<10x10x16xf32, #tpu.memory_space<vmem>>, vector<1x10x16xf32>,
    %c9 = arith.constant 9 : index
    %c0_44 = arith.constant 0 : index
    %c0_45 = arith.constant 0 : index
    %57 = vector.load %arg34[%c9, %c0_44, %c0_45] : memref<10x10x16xf32, #tpu.memory_space<vmem>>, vector<1x10x16xf32>
    %58 = vector.shape_cast %57 : vector<1x10x16xf32> to vector<10x16xf32>
    %59 = vector.shape_cast %53 : vector<10x16xf32> to vector<1x10x16xf32>
    tpu.vector_store %arg34[%c9, %c0_44, %c0_45], %59 {strides = array<i32>} : memref<10x10x16xf32, #tpu.memory_space<vmem>>, vector<1x10x16xf32>,
    %cst_46 = arith.constant 0.000000e+00 : f32
    %60 = vector.broadcast %cst_46 : f32 to vector<1x16xf32>
    %c0_i32_47 = arith.constant 0 : i32
    %c8_i32 = arith.constant 8 : i32
    %61 = arith.addi %c0_i32_47, %c8_i32 : i32
    %c1_i32_48 = arith.constant 1 : i32
    scf.for %arg44 = %c0_i32_47 to %61 step %c1_i32_48  : i32 {
      %c2_i32_233 = arith.constant 2 : i32
      %300 = arith.muli %c2_i32_233, %arg44 : i32
      %c1_i32_234 = arith.constant 1 : i32
      %301 = arith.addi %c1_i32_234, %300 : i32
      %302 = arith.index_cast %301 : i32 to index
      %c1_235 = arith.constant 1 : index
      %c0_236 = arith.constant 0 : index
      %303 = vector.load %arg33[%302, %c1_235, %c0_236] : memref<18x18x16xf32, #tpu.memory_space<vmem>>, vector<1x16x16xf32>
      %304 = vector.shape_cast %303 : vector<1x16x16xf32> to vector<16x16xf32>
      %c2_i32_237 = arith.constant 2 : i32
      %305 = arith.muli %c2_i32_237, %arg44 : i32
      %c2_i32_238 = arith.constant 2 : i32
      %306 = arith.addi %c2_i32_238, %305 : i32
      %307 = arith.index_cast %306 : i32 to index
      %c1_239 = arith.constant 1 : index
      %c0_240 = arith.constant 0 : index
      %308 = vector.load %arg33[%307, %c1_239, %c0_240] : memref<18x18x16xf32, #tpu.memory_space<vmem>>, vector<1x16x16xf32>
      %309 = vector.shape_cast %308 : vector<1x16x16xf32> to vector<16x16xf32>
      %310 = arith.maximumf %304, %309 : vector<16x16xf32>
      %cst_241 = arith.constant dense<0.000000e+00> : vector<8x16xf32>
      %311 = tpu.matmul %45, %310, %cst_241 {dimension_numbers = #tpu.dot_dimension_numbers<[1], [0], [0], [1], [0, 0, 1, 1], [], []>} : vector<8x16xf32>, vector<16x16xf32>, vector<8x16xf32> -> vector<8x16xf32>
      %cst_242 = arith.constant dense<0.000000e+00> : vector<8x16xf32>
      %312 = tpu.matmul %52, %310, %cst_242 {dimension_numbers = #tpu.dot_dimension_numbers<[1], [0], [0], [1], [0, 0, 1, 1], [], []>} : vector<8x16xf32>, vector<16x16xf32>, vector<8x16xf32> -> vector<8x16xf32>
      %313 = arith.maximumf %311, %312 : vector<8x16xf32>
      %314 = tpu.concatenate %60, %313, %60 in 0 : vector<1x16xf32>, vector<8x16xf32>, vector<1x16xf32> -> vector<10x16xf32>
      %c1_i32_243 = arith.constant 1 : i32
      %315 = arith.addi %c1_i32_243, %arg44 : i32
      %316 = arith.index_cast %315 : i32 to index
      %c0_244 = arith.constant 0 : index
      %c0_245 = arith.constant 0 : index
      %317 = vector.load %arg34[%316, %c0_244, %c0_245] : memref<10x10x16xf32, #tpu.memory_space<vmem>>, vector<1x10x16xf32>
      %318 = vector.shape_cast %317 : vector<1x10x16xf32> to vector<10x16xf32>
      %319 = vector.shape_cast %314 : vector<10x16xf32> to vector<1x10x16xf32>
      tpu.vector_store %arg34[%316, %c0_244, %c0_245], %319 {strides = array<i32>} : memref<10x10x16xf32, #tpu.memory_space<vmem>>, vector<1x10x16xf32>,
    }
    %c8_i32_49 = arith.constant 8 : i32
    %cst_50 = arith.constant 0.000000e+00 : f32
    %62 = vector.broadcast %cst_50 : f32 to vector<10x32xf32>
    %c0_51 = arith.constant 0 : index
    %c0_52 = arith.constant 0 : index
    %c0_53 = arith.constant 0 : index
    %63 = vector.load %arg35[%c0_51, %c0_52, %c0_53] : memref<10x10x32xf32, #tpu.memory_space<vmem>>, vector<1x10x32xf32>
    %64 = vector.shape_cast %63 : vector<1x10x32xf32> to vector<10x32xf32>
    %65 = vector.shape_cast %62 : vector<10x32xf32> to vector<1x10x32xf32>
    tpu.vector_store %arg35[%c0_51, %c0_52, %c0_53], %65 {strides = array<i32>} : memref<10x10x32xf32, #tpu.memory_space<vmem>>, vector<1x10x32xf32>,
    %c9_54 = arith.constant 9 : index
    %c0_55 = arith.constant 0 : index
    %c0_56 = arith.constant 0 : index
    %66 = vector.load %arg35[%c9_54, %c0_55, %c0_56] : memref<10x10x32xf32, #tpu.memory_space<vmem>>, vector<1x10x32xf32>
    %67 = vector.shape_cast %66 : vector<1x10x32xf32> to vector<10x32xf32>
    %68 = vector.shape_cast %62 : vector<10x32xf32> to vector<1x10x32xf32>
    tpu.vector_store %arg35[%c9_54, %c0_55, %c0_56], %68 {strides = array<i32>} : memref<10x10x32xf32, #tpu.memory_space<vmem>>, vector<1x10x32xf32>,
    %cst_57 = arith.constant 0.000000e+00 : f32
    %69 = vector.broadcast %cst_57 : f32 to vector<1x32xf32>
    %c0_58 = arith.constant 0 : index
    %c0_59 = arith.constant 0 : index
    %70 = vector.load %arg9[%c0_58, %c0_59] : memref<1x32xf32, #tpu.memory_space<vmem>>, vector<1x32xf32>
    %71 = vector.shape_cast %70 : vector<1x32xf32> to vector<1x32xf32>
    %72 = vector.broadcast %71 : vector<1x32xf32> to vector<8x32xf32>
    %c0_60 = arith.constant 0 : index
    %c0_61 = arith.constant 0 : index
    %73 = vector.load %arg10[%c0_60, %c0_61] : memref<1x32xf32, #tpu.memory_space<vmem>>, vector<1x32xf32>
    %74 = vector.shape_cast %73 : vector<1x32xf32> to vector<1x32xf32>
    %75 = vector.broadcast %74 : vector<1x32xf32> to vector<8x32xf32>
    %c0_i32_62 = arith.constant 0 : i32
    %c8_i32_63 = arith.constant 8 : i32
    %76 = arith.addi %c0_i32_62, %c8_i32_63 : i32
    %c1_i32_64 = arith.constant 1 : i32
    scf.for %arg44 = %c0_i32_62 to %76 step %c1_i32_64  : i32 {
      %c0_i32_233 = arith.constant 0 : i32
      %300 = arith.addi %arg44, %c0_i32_233 : i32
      %301 = arith.index_cast %300 : i32 to index
      %c0_234 = arith.constant 0 : index
      %c0_235 = arith.constant 0 : index
      %302 = vector.load %arg34[%301, %c0_234, %c0_235] : memref<10x10x16xf32, #tpu.memory_space<vmem>>, vector<1x8x16xf32>
      %303 = vector.shape_cast %302 : vector<1x8x16xf32> to vector<8x16xf32>
      %c0_i32_236 = arith.constant 0 : i32
      %304 = arith.addi %arg44, %c0_i32_236 : i32
      %305 = arith.index_cast %304 : i32 to index
      %c1_237 = arith.constant 1 : index
      %c0_238 = arith.constant 0 : index
      %306 = vector.load %arg34[%305, %c1_237, %c0_238] : memref<10x10x16xf32, #tpu.memory_space<vmem>>, vector<1x8x16xf32>
      %307 = vector.shape_cast %306 : vector<1x8x16xf32> to vector<8x16xf32>
      %c0_i32_239 = arith.constant 0 : i32
      %308 = arith.addi %arg44, %c0_i32_239 : i32
      %309 = arith.index_cast %308 : i32 to index
      %c2_240 = arith.constant 2 : index
      %c0_241 = arith.constant 0 : index
      %310 = vector.load %arg34[%309, %c2_240, %c0_241] : memref<10x10x16xf32, #tpu.memory_space<vmem>>, vector<1x8x16xf32>
      %311 = vector.shape_cast %310 : vector<1x8x16xf32> to vector<8x16xf32>
      %c1_i32_242 = arith.constant 1 : i32
      %312 = arith.addi %arg44, %c1_i32_242 : i32
      %313 = arith.index_cast %312 : i32 to index
      %c0_243 = arith.constant 0 : index
      %c0_244 = arith.constant 0 : index
      %314 = vector.load %arg34[%313, %c0_243, %c0_244] : memref<10x10x16xf32, #tpu.memory_space<vmem>>, vector<1x8x16xf32>
      %315 = vector.shape_cast %314 : vector<1x8x16xf32> to vector<8x16xf32>
      %c1_i32_245 = arith.constant 1 : i32
      %316 = arith.addi %arg44, %c1_i32_245 : i32
      %317 = arith.index_cast %316 : i32 to index
      %c1_246 = arith.constant 1 : index
      %c0_247 = arith.constant 0 : index
      %318 = vector.load %arg34[%317, %c1_246, %c0_247] : memref<10x10x16xf32, #tpu.memory_space<vmem>>, vector<1x8x16xf32>
      %319 = vector.shape_cast %318 : vector<1x8x16xf32> to vector<8x16xf32>
      %c1_i32_248 = arith.constant 1 : i32
      %320 = arith.addi %arg44, %c1_i32_248 : i32
      %321 = arith.index_cast %320 : i32 to index
      %c2_249 = arith.constant 2 : index
      %c0_250 = arith.constant 0 : index
      %322 = vector.load %arg34[%321, %c2_249, %c0_250] : memref<10x10x16xf32, #tpu.memory_space<vmem>>, vector<1x8x16xf32>
      %323 = vector.shape_cast %322 : vector<1x8x16xf32> to vector<8x16xf32>
      %c2_i32_251 = arith.constant 2 : i32
      %324 = arith.addi %arg44, %c2_i32_251 : i32
      %325 = arith.index_cast %324 : i32 to index
      %c0_252 = arith.constant 0 : index
      %c0_253 = arith.constant 0 : index
      %326 = vector.load %arg34[%325, %c0_252, %c0_253] : memref<10x10x16xf32, #tpu.memory_space<vmem>>, vector<1x8x16xf32>
      %327 = vector.shape_cast %326 : vector<1x8x16xf32> to vector<8x16xf32>
      %c2_i32_254 = arith.constant 2 : i32
      %328 = arith.addi %arg44, %c2_i32_254 : i32
      %329 = arith.index_cast %328 : i32 to index
      %c1_255 = arith.constant 1 : index
      %c0_256 = arith.constant 0 : index
      %330 = vector.load %arg34[%329, %c1_255, %c0_256] : memref<10x10x16xf32, #tpu.memory_space<vmem>>, vector<1x8x16xf32>
      %331 = vector.shape_cast %330 : vector<1x8x16xf32> to vector<8x16xf32>
      %c2_i32_257 = arith.constant 2 : i32
      %332 = arith.addi %arg44, %c2_i32_257 : i32
      %333 = arith.index_cast %332 : i32 to index
      %c2_258 = arith.constant 2 : index
      %c0_259 = arith.constant 0 : index
      %334 = vector.load %arg34[%333, %c2_258, %c0_259] : memref<10x10x16xf32, #tpu.memory_space<vmem>>, vector<1x8x16xf32>
      %335 = vector.shape_cast %334 : vector<1x8x16xf32> to vector<8x16xf32>
      %336 = tpu.concatenate %303, %307, %311, %315, %319, %323, %327, %331, %335 in 1 : vector<8x16xf32>, vector<8x16xf32>, vector<8x16xf32>, vector<8x16xf32>, vector<8x16xf32>, vector<8x16xf32>, vector<8x16xf32>, vector<8x16xf32>, vector<8x16xf32> -> vector<8x144xf32>
      %c0_260 = arith.constant 0 : index
      %c0_261 = arith.constant 0 : index
      %337 = vector.load %arg8[%c0_260, %c0_261] : memref<144x32xf32, #tpu.memory_space<vmem>>, vector<144x32xf32>
      %cst_262 = arith.constant dense<0.000000e+00> : vector<8x32xf32>
      %338 = tpu.matmul %336, %337, %cst_262 {dimension_numbers = #tpu.dot_dimension_numbers<[1], [0], [0], [1], [0, 0, 1, 1], [], []>} : vector<8x144xf32>, vector<144x32xf32>, vector<8x32xf32> -> vector<8x32xf32>
      %339 = arith.mulf %338, %72 : vector<8x32xf32>
      %340 = arith.addf %339, %75 : vector<8x32xf32>
      %cst_263 = arith.constant 0.000000e+00 : f32
      %341 = vector.broadcast %cst_263 : f32 to vector<8x32xf32>
      %342 = arith.maximumf %340, %341 : vector<8x32xf32>
      %343 = tpu.concatenate %69, %342, %69 in 0 : vector<1x32xf32>, vector<8x32xf32>, vector<1x32xf32> -> vector<10x32xf32>
      %c1_i32_264 = arith.constant 1 : i32
      %344 = arith.addi %arg44, %c1_i32_264 : i32
      %345 = arith.index_cast %344 : i32 to index
      %c0_265 = arith.constant 0 : index
      %c0_266 = arith.constant 0 : index
      %346 = vector.load %arg35[%345, %c0_265, %c0_266] : memref<10x10x32xf32, #tpu.memory_space<vmem>>, vector<1x10x32xf32>
      %347 = vector.shape_cast %346 : vector<1x10x32xf32> to vector<10x32xf32>
      %348 = vector.shape_cast %343 : vector<10x32xf32> to vector<1x10x32xf32>
      tpu.vector_store %arg35[%345, %c0_265, %c0_266], %348 {strides = array<i32>} : memref<10x10x32xf32, #tpu.memory_space<vmem>>, vector<1x10x32xf32>,
    }
    %c8_i32_65 = arith.constant 8 : i32
    %cst_66 = arith.constant 0.000000e+00 : f32
    %77 = vector.broadcast %cst_66 : f32 to vector<10x32xf32>
    %c0_67 = arith.constant 0 : index
    %c0_68 = arith.constant 0 : index
    %c0_69 = arith.constant 0 : index
    %78 = vector.load %arg36[%c0_67, %c0_68, %c0_69] : memref<10x10x32xf32, #tpu.memory_space<vmem>>, vector<1x10x32xf32>
    %79 = vector.shape_cast %78 : vector<1x10x32xf32> to vector<10x32xf32>
    %80 = vector.shape_cast %77 : vector<10x32xf32> to vector<1x10x32xf32>
    tpu.vector_store %arg36[%c0_67, %c0_68, %c0_69], %80 {strides = array<i32>} : memref<10x10x32xf32, #tpu.memory_space<vmem>>, vector<1x10x32xf32>,
    %c9_70 = arith.constant 9 : index
    %c0_71 = arith.constant 0 : index
    %c0_72 = arith.constant 0 : index
    %81 = vector.load %arg36[%c9_70, %c0_71, %c0_72] : memref<10x10x32xf32, #tpu.memory_space<vmem>>, vector<1x10x32xf32>
    %82 = vector.shape_cast %81 : vector<1x10x32xf32> to vector<10x32xf32>
    %83 = vector.shape_cast %77 : vector<10x32xf32> to vector<1x10x32xf32>
    tpu.vector_store %arg36[%c9_70, %c0_71, %c0_72], %83 {strides = array<i32>} : memref<10x10x32xf32, #tpu.memory_space<vmem>>, vector<1x10x32xf32>,
    %cst_73 = arith.constant 0.000000e+00 : f32
    %84 = vector.broadcast %cst_73 : f32 to vector<1x32xf32>
    %c0_74 = arith.constant 0 : index
    %c0_75 = arith.constant 0 : index
    %85 = vector.load %arg12[%c0_74, %c0_75] : memref<1x32xf32, #tpu.memory_space<vmem>>, vector<1x32xf32>
    %86 = vector.shape_cast %85 : vector<1x32xf32> to vector<1x32xf32>
    %87 = vector.broadcast %86 : vector<1x32xf32> to vector<8x32xf32>
    %c0_76 = arith.constant 0 : index
    %c0_77 = arith.constant 0 : index
    %88 = vector.load %arg13[%c0_76, %c0_77] : memref<1x32xf32, #tpu.memory_space<vmem>>, vector<1x32xf32>
    %89 = vector.shape_cast %88 : vector<1x32xf32> to vector<1x32xf32>
    %90 = vector.broadcast %89 : vector<1x32xf32> to vector<8x32xf32>
    %c0_i32_78 = arith.constant 0 : i32
    %c8_i32_79 = arith.constant 8 : i32
    %91 = arith.addi %c0_i32_78, %c8_i32_79 : i32
    %c1_i32_80 = arith.constant 1 : i32
    scf.for %arg44 = %c0_i32_78 to %91 step %c1_i32_80  : i32 {
      %c0_i32_233 = arith.constant 0 : i32
      %300 = arith.addi %arg44, %c0_i32_233 : i32
      %301 = arith.index_cast %300 : i32 to index
      %c0_234 = arith.constant 0 : index
      %c0_235 = arith.constant 0 : index
      %302 = vector.load %arg35[%301, %c0_234, %c0_235] : memref<10x10x32xf32, #tpu.memory_space<vmem>>, vector<1x8x32xf32>
      %303 = vector.shape_cast %302 : vector<1x8x32xf32> to vector<8x32xf32>
      %c0_i32_236 = arith.constant 0 : i32
      %304 = arith.addi %arg44, %c0_i32_236 : i32
      %305 = arith.index_cast %304 : i32 to index
      %c1_237 = arith.constant 1 : index
      %c0_238 = arith.constant 0 : index
      %306 = vector.load %arg35[%305, %c1_237, %c0_238] : memref<10x10x32xf32, #tpu.memory_space<vmem>>, vector<1x8x32xf32>
      %307 = vector.shape_cast %306 : vector<1x8x32xf32> to vector<8x32xf32>
      %c0_i32_239 = arith.constant 0 : i32
      %308 = arith.addi %arg44, %c0_i32_239 : i32
      %309 = arith.index_cast %308 : i32 to index
      %c2_240 = arith.constant 2 : index
      %c0_241 = arith.constant 0 : index
      %310 = vector.load %arg35[%309, %c2_240, %c0_241] : memref<10x10x32xf32, #tpu.memory_space<vmem>>, vector<1x8x32xf32>
      %311 = vector.shape_cast %310 : vector<1x8x32xf32> to vector<8x32xf32>
      %c1_i32_242 = arith.constant 1 : i32
      %312 = arith.addi %arg44, %c1_i32_242 : i32
      %313 = arith.index_cast %312 : i32 to index
      %c0_243 = arith.constant 0 : index
      %c0_244 = arith.constant 0 : index
      %314 = vector.load %arg35[%313, %c0_243, %c0_244] : memref<10x10x32xf32, #tpu.memory_space<vmem>>, vector<1x8x32xf32>
      %315 = vector.shape_cast %314 : vector<1x8x32xf32> to vector<8x32xf32>
      %c1_i32_245 = arith.constant 1 : i32
      %316 = arith.addi %arg44, %c1_i32_245 : i32
      %317 = arith.index_cast %316 : i32 to index
      %c1_246 = arith.constant 1 : index
      %c0_247 = arith.constant 0 : index
      %318 = vector.load %arg35[%317, %c1_246, %c0_247] : memref<10x10x32xf32, #tpu.memory_space<vmem>>, vector<1x8x32xf32>
      %319 = vector.shape_cast %318 : vector<1x8x32xf32> to vector<8x32xf32>
      %c1_i32_248 = arith.constant 1 : i32
      %320 = arith.addi %arg44, %c1_i32_248 : i32
      %321 = arith.index_cast %320 : i32 to index
      %c2_249 = arith.constant 2 : index
      %c0_250 = arith.constant 0 : index
      %322 = vector.load %arg35[%321, %c2_249, %c0_250] : memref<10x10x32xf32, #tpu.memory_space<vmem>>, vector<1x8x32xf32>
      %323 = vector.shape_cast %322 : vector<1x8x32xf32> to vector<8x32xf32>
      %c2_i32_251 = arith.constant 2 : i32
      %324 = arith.addi %arg44, %c2_i32_251 : i32
      %325 = arith.index_cast %324 : i32 to index
      %c0_252 = arith.constant 0 : index
      %c0_253 = arith.constant 0 : index
      %326 = vector.load %arg35[%325, %c0_252, %c0_253] : memref<10x10x32xf32, #tpu.memory_space<vmem>>, vector<1x8x32xf32>
      %327 = vector.shape_cast %326 : vector<1x8x32xf32> to vector<8x32xf32>
      %c2_i32_254 = arith.constant 2 : i32
      %328 = arith.addi %arg44, %c2_i32_254 : i32
      %329 = arith.index_cast %328 : i32 to index
      %c1_255 = arith.constant 1 : index
      %c0_256 = arith.constant 0 : index
      %330 = vector.load %arg35[%329, %c1_255, %c0_256] : memref<10x10x32xf32, #tpu.memory_space<vmem>>, vector<1x8x32xf32>
      %331 = vector.shape_cast %330 : vector<1x8x32xf32> to vector<8x32xf32>
      %c2_i32_257 = arith.constant 2 : i32
      %332 = arith.addi %arg44, %c2_i32_257 : i32
      %333 = arith.index_cast %332 : i32 to index
      %c2_258 = arith.constant 2 : index
      %c0_259 = arith.constant 0 : index
      %334 = vector.load %arg35[%333, %c2_258, %c0_259] : memref<10x10x32xf32, #tpu.memory_space<vmem>>, vector<1x8x32xf32>
      %335 = vector.shape_cast %334 : vector<1x8x32xf32> to vector<8x32xf32>
      %336 = tpu.concatenate %303, %307, %311, %315, %319, %323, %327, %331, %335 in 1 : vector<8x32xf32>, vector<8x32xf32>, vector<8x32xf32>, vector<8x32xf32>, vector<8x32xf32>, vector<8x32xf32>, vector<8x32xf32>, vector<8x32xf32>, vector<8x32xf32> -> vector<8x288xf32>
      %c0_260 = arith.constant 0 : index
      %c0_261 = arith.constant 0 : index
      %337 = vector.load %arg11[%c0_260, %c0_261] : memref<288x32xf32, #tpu.memory_space<vmem>>, vector<288x32xf32>
      %cst_262 = arith.constant dense<0.000000e+00> : vector<8x32xf32>
      %338 = tpu.matmul %336, %337, %cst_262 {dimension_numbers = #tpu.dot_dimension_numbers<[1], [0], [0], [1], [0, 0, 1, 1], [], []>} : vector<8x288xf32>, vector<288x32xf32>, vector<8x32xf32> -> vector<8x32xf32>
      %339 = arith.mulf %338, %87 : vector<8x32xf32>
      %340 = arith.addf %339, %90 : vector<8x32xf32>
      %cst_263 = arith.constant 0.000000e+00 : f32
      %341 = vector.broadcast %cst_263 : f32 to vector<8x32xf32>
      %342 = arith.maximumf %340, %341 : vector<8x32xf32>
      %343 = tpu.concatenate %84, %342, %84 in 0 : vector<1x32xf32>, vector<8x32xf32>, vector<1x32xf32> -> vector<10x32xf32>
      %c1_i32_264 = arith.constant 1 : i32
      %344 = arith.addi %arg44, %c1_i32_264 : i32
      %345 = arith.index_cast %344 : i32 to index
      %c0_265 = arith.constant 0 : index
      %c0_266 = arith.constant 0 : index
      %346 = vector.load %arg36[%345, %c0_265, %c0_266] : memref<10x10x32xf32, #tpu.memory_space<vmem>>, vector<1x10x32xf32>
      %347 = vector.shape_cast %346 : vector<1x10x32xf32> to vector<10x32xf32>
      %348 = vector.shape_cast %343 : vector<10x32xf32> to vector<1x10x32xf32>
      tpu.vector_store %arg36[%345, %c0_265, %c0_266], %348 {strides = array<i32>} : memref<10x10x32xf32, #tpu.memory_space<vmem>>, vector<1x10x32xf32>,
    }
    %c8_i32_81 = arith.constant 8 : i32
    %92 = tpu.iota {dimensions = array<i32: 0>} : vector<4x8xi32>
    %93 = tpu.iota {dimensions = array<i32: 1>} : vector<4x8xi32>
    %c2_i32_82 = arith.constant 2 : i32
    %94 = vector.broadcast %c2_i32_82 : i32 to vector<4x8xi32>
    %95 = arith.muli %94, %92 : vector<4x8xi32>
    %96 = arith.cmpi eq, %93, %95 : vector<4x8xi32>
    %97 = arith.extui %96 : vector<4x8xi1> to vector<4x8xi32>
    %98 = arith.sitofp %97 : vector<4x8xi32> to vector<4x8xf32>
    %c2_i32_83 = arith.constant 2 : i32
    %99 = vector.broadcast %c2_i32_83 : i32 to vector<4x8xi32>
    %100 = arith.muli %99, %92 : vector<4x8xi32>
    %c1_i32_84 = arith.constant 1 : i32
    %101 = vector.broadcast %c1_i32_84 : i32 to vector<4x8xi32>
    %102 = arith.addi %100, %101 : vector<4x8xi32>
    %103 = arith.cmpi eq, %93, %102 : vector<4x8xi32>
    %104 = arith.extui %103 : vector<4x8xi1> to vector<4x8xi32>
    %105 = arith.sitofp %104 : vector<4x8xi32> to vector<4x8xf32>
    %cst_85 = arith.constant 0.000000e+00 : f32
    %106 = vector.broadcast %cst_85 : f32 to vector<6x32xf32>
    %c0_86 = arith.constant 0 : index
    %c0_87 = arith.constant 0 : index
    %c0_88 = arith.constant 0 : index
    %107 = vector.load %arg37[%c0_86, %c0_87, %c0_88] : memref<6x6x32xf32, #tpu.memory_space<vmem>>, vector<1x6x32xf32>
    %108 = vector.shape_cast %107 : vector<1x6x32xf32> to vector<6x32xf32>
    %109 = vector.shape_cast %106 : vector<6x32xf32> to vector<1x6x32xf32>
    tpu.vector_store %arg37[%c0_86, %c0_87, %c0_88], %109 {strides = array<i32>} : memref<6x6x32xf32, #tpu.memory_space<vmem>>, vector<1x6x32xf32>,
    %c5 = arith.constant 5 : index
    %c0_89 = arith.constant 0 : index
    %c0_90 = arith.constant 0 : index
    %110 = vector.load %arg37[%c5, %c0_89, %c0_90] : memref<6x6x32xf32, #tpu.memory_space<vmem>>, vector<1x6x32xf32>
    %111 = vector.shape_cast %110 : vector<1x6x32xf32> to vector<6x32xf32>
    %112 = vector.shape_cast %106 : vector<6x32xf32> to vector<1x6x32xf32>
    tpu.vector_store %arg37[%c5, %c0_89, %c0_90], %112 {strides = array<i32>} : memref<6x6x32xf32, #tpu.memory_space<vmem>>, vector<1x6x32xf32>,
    %cst_91 = arith.constant 0.000000e+00 : f32
    %113 = vector.broadcast %cst_91 : f32 to vector<1x32xf32>
    %c0_i32_92 = arith.constant 0 : i32
    %c4_i32 = arith.constant 4 : i32
    %114 = arith.addi %c0_i32_92, %c4_i32 : i32
    %c1_i32_93 = arith.constant 1 : i32
    scf.for %arg44 = %c0_i32_92 to %114 step %c1_i32_93  : i32 {
      %c2_i32_233 = arith.constant 2 : i32
      %300 = arith.muli %c2_i32_233, %arg44 : i32
      %c1_i32_234 = arith.constant 1 : i32
      %301 = arith.addi %c1_i32_234, %300 : i32
      %302 = arith.index_cast %301 : i32 to index
      %c1_235 = arith.constant 1 : index
      %c0_236 = arith.constant 0 : index
      %303 = vector.load %arg36[%302, %c1_235, %c0_236] : memref<10x10x32xf32, #tpu.memory_space<vmem>>, vector<1x8x32xf32>
      %304 = vector.shape_cast %303 : vector<1x8x32xf32> to vector<8x32xf32>
      %c2_i32_237 = arith.constant 2 : i32
      %305 = arith.muli %c2_i32_237, %arg44 : i32
      %c2_i32_238 = arith.constant 2 : i32
      %306 = arith.addi %c2_i32_238, %305 : i32
      %307 = arith.index_cast %306 : i32 to index
      %c1_239 = arith.constant 1 : index
      %c0_240 = arith.constant 0 : index
      %308 = vector.load %arg36[%307, %c1_239, %c0_240] : memref<10x10x32xf32, #tpu.memory_space<vmem>>, vector<1x8x32xf32>
      %309 = vector.shape_cast %308 : vector<1x8x32xf32> to vector<8x32xf32>
      %310 = arith.maximumf %304, %309 : vector<8x32xf32>
      %cst_241 = arith.constant dense<0.000000e+00> : vector<4x32xf32>
      %311 = tpu.matmul %98, %310, %cst_241 {dimension_numbers = #tpu.dot_dimension_numbers<[1], [0], [0], [1], [0, 0, 1, 1], [], []>} : vector<4x8xf32>, vector<8x32xf32>, vector<4x32xf32> -> vector<4x32xf32>
      %cst_242 = arith.constant dense<0.000000e+00> : vector<4x32xf32>
      %312 = tpu.matmul %105, %310, %cst_242 {dimension_numbers = #tpu.dot_dimension_numbers<[1], [0], [0], [1], [0, 0, 1, 1], [], []>} : vector<4x8xf32>, vector<8x32xf32>, vector<4x32xf32> -> vector<4x32xf32>
      %313 = arith.maximumf %311, %312 : vector<4x32xf32>
      %314 = tpu.concatenate %113, %313, %113 in 0 : vector<1x32xf32>, vector<4x32xf32>, vector<1x32xf32> -> vector<6x32xf32>
      %c1_i32_243 = arith.constant 1 : i32
      %315 = arith.addi %c1_i32_243, %arg44 : i32
      %316 = arith.index_cast %315 : i32 to index
      %c0_244 = arith.constant 0 : index
      %c0_245 = arith.constant 0 : index
      %317 = vector.load %arg37[%316, %c0_244, %c0_245] : memref<6x6x32xf32, #tpu.memory_space<vmem>>, vector<1x6x32xf32>
      %318 = vector.shape_cast %317 : vector<1x6x32xf32> to vector<6x32xf32>
      %319 = vector.shape_cast %314 : vector<6x32xf32> to vector<1x6x32xf32>
      tpu.vector_store %arg37[%316, %c0_244, %c0_245], %319 {strides = array<i32>} : memref<6x6x32xf32, #tpu.memory_space<vmem>>, vector<1x6x32xf32>,
    }
    %c4_i32_94 = arith.constant 4 : i32
    %cst_95 = arith.constant 0.000000e+00 : f32
    %115 = vector.broadcast %cst_95 : f32 to vector<6x64xf32>
    %c0_96 = arith.constant 0 : index
    %c0_97 = arith.constant 0 : index
    %c0_98 = arith.constant 0 : index
    %116 = vector.load %arg38[%c0_96, %c0_97, %c0_98] : memref<6x6x64xf32, #tpu.memory_space<vmem>>, vector<1x6x64xf32>
    %117 = vector.shape_cast %116 : vector<1x6x64xf32> to vector<6x64xf32>
    %118 = vector.shape_cast %115 : vector<6x64xf32> to vector<1x6x64xf32>
    tpu.vector_store %arg38[%c0_96, %c0_97, %c0_98], %118 {strides = array<i32>} : memref<6x6x64xf32, #tpu.memory_space<vmem>>, vector<1x6x64xf32>,
    %c5_99 = arith.constant 5 : index
    %c0_100 = arith.constant 0 : index
    %c0_101 = arith.constant 0 : index
    %119 = vector.load %arg38[%c5_99, %c0_100, %c0_101] : memref<6x6x64xf32, #tpu.memory_space<vmem>>, vector<1x6x64xf32>
    %120 = vector.shape_cast %119 : vector<1x6x64xf32> to vector<6x64xf32>
    %121 = vector.shape_cast %115 : vector<6x64xf32> to vector<1x6x64xf32>
    tpu.vector_store %arg38[%c5_99, %c0_100, %c0_101], %121 {strides = array<i32>} : memref<6x6x64xf32, #tpu.memory_space<vmem>>, vector<1x6x64xf32>,
    %cst_102 = arith.constant 0.000000e+00 : f32
    %122 = vector.broadcast %cst_102 : f32 to vector<1x64xf32>
    %c0_103 = arith.constant 0 : index
    %c0_104 = arith.constant 0 : index
    %123 = vector.load %arg15[%c0_103, %c0_104] : memref<1x64xf32, #tpu.memory_space<vmem>>, vector<1x64xf32>
    %124 = vector.shape_cast %123 : vector<1x64xf32> to vector<1x64xf32>
    %125 = vector.broadcast %124 : vector<1x64xf32> to vector<4x64xf32>
    %c0_105 = arith.constant 0 : index
    %c0_106 = arith.constant 0 : index
    %126 = vector.load %arg16[%c0_105, %c0_106] : memref<1x64xf32, #tpu.memory_space<vmem>>, vector<1x64xf32>
    %127 = vector.shape_cast %126 : vector<1x64xf32> to vector<1x64xf32>
    %128 = vector.broadcast %127 : vector<1x64xf32> to vector<4x64xf32>
    %c0_i32_107 = arith.constant 0 : i32
    %c4_i32_108 = arith.constant 4 : i32
    %129 = arith.addi %c0_i32_107, %c4_i32_108 : i32
    %c1_i32_109 = arith.constant 1 : i32
    scf.for %arg44 = %c0_i32_107 to %129 step %c1_i32_109  : i32 {
      %c0_i32_233 = arith.constant 0 : i32
      %300 = arith.addi %arg44, %c0_i32_233 : i32
      %301 = arith.index_cast %300 : i32 to index
      %c0_234 = arith.constant 0 : index
      %c0_235 = arith.constant 0 : index
      %302 = vector.load %arg37[%301, %c0_234, %c0_235] : memref<6x6x32xf32, #tpu.memory_space<vmem>>, vector<1x4x32xf32>
      %303 = vector.shape_cast %302 : vector<1x4x32xf32> to vector<4x32xf32>
      %c0_i32_236 = arith.constant 0 : i32
      %304 = arith.addi %arg44, %c0_i32_236 : i32
      %305 = arith.index_cast %304 : i32 to index
      %c1_237 = arith.constant 1 : index
      %c0_238 = arith.constant 0 : index
      %306 = vector.load %arg37[%305, %c1_237, %c0_238] : memref<6x6x32xf32, #tpu.memory_space<vmem>>, vector<1x4x32xf32>
      %307 = vector.shape_cast %306 : vector<1x4x32xf32> to vector<4x32xf32>
      %c0_i32_239 = arith.constant 0 : i32
      %308 = arith.addi %arg44, %c0_i32_239 : i32
      %309 = arith.index_cast %308 : i32 to index
      %c2_240 = arith.constant 2 : index
      %c0_241 = arith.constant 0 : index
      %310 = vector.load %arg37[%309, %c2_240, %c0_241] : memref<6x6x32xf32, #tpu.memory_space<vmem>>, vector<1x4x32xf32>
      %311 = vector.shape_cast %310 : vector<1x4x32xf32> to vector<4x32xf32>
      %c1_i32_242 = arith.constant 1 : i32
      %312 = arith.addi %arg44, %c1_i32_242 : i32
      %313 = arith.index_cast %312 : i32 to index
      %c0_243 = arith.constant 0 : index
      %c0_244 = arith.constant 0 : index
      %314 = vector.load %arg37[%313, %c0_243, %c0_244] : memref<6x6x32xf32, #tpu.memory_space<vmem>>, vector<1x4x32xf32>
      %315 = vector.shape_cast %314 : vector<1x4x32xf32> to vector<4x32xf32>
      %c1_i32_245 = arith.constant 1 : i32
      %316 = arith.addi %arg44, %c1_i32_245 : i32
      %317 = arith.index_cast %316 : i32 to index
      %c1_246 = arith.constant 1 : index
      %c0_247 = arith.constant 0 : index
      %318 = vector.load %arg37[%317, %c1_246, %c0_247] : memref<6x6x32xf32, #tpu.memory_space<vmem>>, vector<1x4x32xf32>
      %319 = vector.shape_cast %318 : vector<1x4x32xf32> to vector<4x32xf32>
      %c1_i32_248 = arith.constant 1 : i32
      %320 = arith.addi %arg44, %c1_i32_248 : i32
      %321 = arith.index_cast %320 : i32 to index
      %c2_249 = arith.constant 2 : index
      %c0_250 = arith.constant 0 : index
      %322 = vector.load %arg37[%321, %c2_249, %c0_250] : memref<6x6x32xf32, #tpu.memory_space<vmem>>, vector<1x4x32xf32>
      %323 = vector.shape_cast %322 : vector<1x4x32xf32> to vector<4x32xf32>
      %c2_i32_251 = arith.constant 2 : i32
      %324 = arith.addi %arg44, %c2_i32_251 : i32
      %325 = arith.index_cast %324 : i32 to index
      %c0_252 = arith.constant 0 : index
      %c0_253 = arith.constant 0 : index
      %326 = vector.load %arg37[%325, %c0_252, %c0_253] : memref<6x6x32xf32, #tpu.memory_space<vmem>>, vector<1x4x32xf32>
      %327 = vector.shape_cast %326 : vector<1x4x32xf32> to vector<4x32xf32>
      %c2_i32_254 = arith.constant 2 : i32
      %328 = arith.addi %arg44, %c2_i32_254 : i32
      %329 = arith.index_cast %328 : i32 to index
      %c1_255 = arith.constant 1 : index
      %c0_256 = arith.constant 0 : index
      %330 = vector.load %arg37[%329, %c1_255, %c0_256] : memref<6x6x32xf32, #tpu.memory_space<vmem>>, vector<1x4x32xf32>
      %331 = vector.shape_cast %330 : vector<1x4x32xf32> to vector<4x32xf32>
      %c2_i32_257 = arith.constant 2 : i32
      %332 = arith.addi %arg44, %c2_i32_257 : i32
      %333 = arith.index_cast %332 : i32 to index
      %c2_258 = arith.constant 2 : index
      %c0_259 = arith.constant 0 : index
      %334 = vector.load %arg37[%333, %c2_258, %c0_259] : memref<6x6x32xf32, #tpu.memory_space<vmem>>, vector<1x4x32xf32>
      %335 = vector.shape_cast %334 : vector<1x4x32xf32> to vector<4x32xf32>
      %336 = tpu.concatenate %303, %307, %311, %315, %319, %323, %327, %331, %335 in 1 : vector<4x32xf32>, vector<4x32xf32>, vector<4x32xf32>, vector<4x32xf32>, vector<4x32xf32>, vector<4x32xf32>, vector<4x32xf32>, vector<4x32xf32>, vector<4x32xf32> -> vector<4x288xf32>
      %c0_260 = arith.constant 0 : index
      %c0_261 = arith.constant 0 : index
      %337 = vector.load %arg14[%c0_260, %c0_261] : memref<288x64xf32, #tpu.memory_space<vmem>>, vector<288x64xf32>
      %cst_262 = arith.constant dense<0.000000e+00> : vector<4x64xf32>
      %338 = tpu.matmul %336, %337, %cst_262 {dimension_numbers = #tpu.dot_dimension_numbers<[1], [0], [0], [1], [0, 0, 1, 1], [], []>} : vector<4x288xf32>, vector<288x64xf32>, vector<4x64xf32> -> vector<4x64xf32>
      %339 = arith.mulf %338, %125 : vector<4x64xf32>
      %340 = arith.addf %339, %128 : vector<4x64xf32>
      %cst_263 = arith.constant 0.000000e+00 : f32
      %341 = vector.broadcast %cst_263 : f32 to vector<4x64xf32>
      %342 = arith.maximumf %340, %341 : vector<4x64xf32>
      %343 = tpu.concatenate %122, %342, %122 in 0 : vector<1x64xf32>, vector<4x64xf32>, vector<1x64xf32> -> vector<6x64xf32>
      %c1_i32_264 = arith.constant 1 : i32
      %344 = arith.addi %arg44, %c1_i32_264 : i32
      %345 = arith.index_cast %344 : i32 to index
      %c0_265 = arith.constant 0 : index
      %c0_266 = arith.constant 0 : index
      %346 = vector.load %arg38[%345, %c0_265, %c0_266] : memref<6x6x64xf32, #tpu.memory_space<vmem>>, vector<1x6x64xf32>
      %347 = vector.shape_cast %346 : vector<1x6x64xf32> to vector<6x64xf32>
      %348 = vector.shape_cast %343 : vector<6x64xf32> to vector<1x6x64xf32>
      tpu.vector_store %arg38[%345, %c0_265, %c0_266], %348 {strides = array<i32>} : memref<6x6x64xf32, #tpu.memory_space<vmem>>, vector<1x6x64xf32>,
    }
    %c4_i32_110 = arith.constant 4 : i32
    %cst_111 = arith.constant 0.000000e+00 : f32
    %130 = vector.broadcast %cst_111 : f32 to vector<6x64xf32>
    %c0_112 = arith.constant 0 : index
    %c0_113 = arith.constant 0 : index
    %c0_114 = arith.constant 0 : index
    %131 = vector.load %arg39[%c0_112, %c0_113, %c0_114] : memref<6x6x64xf32, #tpu.memory_space<vmem>>, vector<1x6x64xf32>
    %132 = vector.shape_cast %131 : vector<1x6x64xf32> to vector<6x64xf32>
    %133 = vector.shape_cast %130 : vector<6x64xf32> to vector<1x6x64xf32>
    tpu.vector_store %arg39[%c0_112, %c0_113, %c0_114], %133 {strides = array<i32>} : memref<6x6x64xf32, #tpu.memory_space<vmem>>, vector<1x6x64xf32>,
    %c5_115 = arith.constant 5 : index
    %c0_116 = arith.constant 0 : index
    %c0_117 = arith.constant 0 : index
    %134 = vector.load %arg39[%c5_115, %c0_116, %c0_117] : memref<6x6x64xf32, #tpu.memory_space<vmem>>, vector<1x6x64xf32>
    %135 = vector.shape_cast %134 : vector<1x6x64xf32> to vector<6x64xf32>
    %136 = vector.shape_cast %130 : vector<6x64xf32> to vector<1x6x64xf32>
    tpu.vector_store %arg39[%c5_115, %c0_116, %c0_117], %136 {strides = array<i32>} : memref<6x6x64xf32, #tpu.memory_space<vmem>>, vector<1x6x64xf32>,
    %cst_118 = arith.constant 0.000000e+00 : f32
    %137 = vector.broadcast %cst_118 : f32 to vector<1x64xf32>
    %c0_119 = arith.constant 0 : index
    %c0_120 = arith.constant 0 : index
    %138 = vector.load %arg18[%c0_119, %c0_120] : memref<1x64xf32, #tpu.memory_space<vmem>>, vector<1x64xf32>
    %139 = vector.shape_cast %138 : vector<1x64xf32> to vector<1x64xf32>
    %140 = vector.broadcast %139 : vector<1x64xf32> to vector<4x64xf32>
    %c0_121 = arith.constant 0 : index
    %c0_122 = arith.constant 0 : index
    %141 = vector.load %arg19[%c0_121, %c0_122] : memref<1x64xf32, #tpu.memory_space<vmem>>, vector<1x64xf32>
    %142 = vector.shape_cast %141 : vector<1x64xf32> to vector<1x64xf32>
    %143 = vector.broadcast %142 : vector<1x64xf32> to vector<4x64xf32>
    %c0_i32_123 = arith.constant 0 : i32
    %c4_i32_124 = arith.constant 4 : i32
    %144 = arith.addi %c0_i32_123, %c4_i32_124 : i32
    %c1_i32_125 = arith.constant 1 : i32
    scf.for %arg44 = %c0_i32_123 to %144 step %c1_i32_125  : i32 {
      %c0_i32_233 = arith.constant 0 : i32
      %300 = arith.addi %arg44, %c0_i32_233 : i32
      %301 = arith.index_cast %300 : i32 to index
      %c0_234 = arith.constant 0 : index
      %c0_235 = arith.constant 0 : index
      %302 = vector.load %arg38[%301, %c0_234, %c0_235] : memref<6x6x64xf32, #tpu.memory_space<vmem>>, vector<1x4x64xf32>
      %303 = vector.shape_cast %302 : vector<1x4x64xf32> to vector<4x64xf32>
      %c0_i32_236 = arith.constant 0 : i32
      %304 = arith.addi %arg44, %c0_i32_236 : i32
      %305 = arith.index_cast %304 : i32 to index
      %c1_237 = arith.constant 1 : index
      %c0_238 = arith.constant 0 : index
      %306 = vector.load %arg38[%305, %c1_237, %c0_238] : memref<6x6x64xf32, #tpu.memory_space<vmem>>, vector<1x4x64xf32>
      %307 = vector.shape_cast %306 : vector<1x4x64xf32> to vector<4x64xf32>
      %c0_i32_239 = arith.constant 0 : i32
      %308 = arith.addi %arg44, %c0_i32_239 : i32
      %309 = arith.index_cast %308 : i32 to index
      %c2_240 = arith.constant 2 : index
      %c0_241 = arith.constant 0 : index
      %310 = vector.load %arg38[%309, %c2_240, %c0_241] : memref<6x6x64xf32, #tpu.memory_space<vmem>>, vector<1x4x64xf32>
      %311 = vector.shape_cast %310 : vector<1x4x64xf32> to vector<4x64xf32>
      %c1_i32_242 = arith.constant 1 : i32
      %312 = arith.addi %arg44, %c1_i32_242 : i32
      %313 = arith.index_cast %312 : i32 to index
      %c0_243 = arith.constant 0 : index
      %c0_244 = arith.constant 0 : index
      %314 = vector.load %arg38[%313, %c0_243, %c0_244] : memref<6x6x64xf32, #tpu.memory_space<vmem>>, vector<1x4x64xf32>
      %315 = vector.shape_cast %314 : vector<1x4x64xf32> to vector<4x64xf32>
      %c1_i32_245 = arith.constant 1 : i32
      %316 = arith.addi %arg44, %c1_i32_245 : i32
      %317 = arith.index_cast %316 : i32 to index
      %c1_246 = arith.constant 1 : index
      %c0_247 = arith.constant 0 : index
      %318 = vector.load %arg38[%317, %c1_246, %c0_247] : memref<6x6x64xf32, #tpu.memory_space<vmem>>, vector<1x4x64xf32>
      %319 = vector.shape_cast %318 : vector<1x4x64xf32> to vector<4x64xf32>
      %c1_i32_248 = arith.constant 1 : i32
      %320 = arith.addi %arg44, %c1_i32_248 : i32
      %321 = arith.index_cast %320 : i32 to index
      %c2_249 = arith.constant 2 : index
      %c0_250 = arith.constant 0 : index
      %322 = vector.load %arg38[%321, %c2_249, %c0_250] : memref<6x6x64xf32, #tpu.memory_space<vmem>>, vector<1x4x64xf32>
      %323 = vector.shape_cast %322 : vector<1x4x64xf32> to vector<4x64xf32>
      %c2_i32_251 = arith.constant 2 : i32
      %324 = arith.addi %arg44, %c2_i32_251 : i32
      %325 = arith.index_cast %324 : i32 to index
      %c0_252 = arith.constant 0 : index
      %c0_253 = arith.constant 0 : index
      %326 = vector.load %arg38[%325, %c0_252, %c0_253] : memref<6x6x64xf32, #tpu.memory_space<vmem>>, vector<1x4x64xf32>
      %327 = vector.shape_cast %326 : vector<1x4x64xf32> to vector<4x64xf32>
      %c2_i32_254 = arith.constant 2 : i32
      %328 = arith.addi %arg44, %c2_i32_254 : i32
      %329 = arith.index_cast %328 : i32 to index
      %c1_255 = arith.constant 1 : index
      %c0_256 = arith.constant 0 : index
      %330 = vector.load %arg38[%329, %c1_255, %c0_256] : memref<6x6x64xf32, #tpu.memory_space<vmem>>, vector<1x4x64xf32>
      %331 = vector.shape_cast %330 : vector<1x4x64xf32> to vector<4x64xf32>
      %c2_i32_257 = arith.constant 2 : i32
      %332 = arith.addi %arg44, %c2_i32_257 : i32
      %333 = arith.index_cast %332 : i32 to index
      %c2_258 = arith.constant 2 : index
      %c0_259 = arith.constant 0 : index
      %334 = vector.load %arg38[%333, %c2_258, %c0_259] : memref<6x6x64xf32, #tpu.memory_space<vmem>>, vector<1x4x64xf32>
      %335 = vector.shape_cast %334 : vector<1x4x64xf32> to vector<4x64xf32>
      %336 = tpu.concatenate %303, %307, %311, %315, %319, %323, %327, %331, %335 in 1 : vector<4x64xf32>, vector<4x64xf32>, vector<4x64xf32>, vector<4x64xf32>, vector<4x64xf32>, vector<4x64xf32>, vector<4x64xf32>, vector<4x64xf32>, vector<4x64xf32> -> vector<4x576xf32>
      %c0_260 = arith.constant 0 : index
      %c0_261 = arith.constant 0 : index
      %337 = vector.load %arg17[%c0_260, %c0_261] : memref<576x64xf32, #tpu.memory_space<vmem>>, vector<576x64xf32>
      %cst_262 = arith.constant dense<0.000000e+00> : vector<4x64xf32>
      %338 = tpu.matmul %336, %337, %cst_262 {dimension_numbers = #tpu.dot_dimension_numbers<[1], [0], [0], [1], [0, 0, 1, 1], [], []>} : vector<4x576xf32>, vector<576x64xf32>, vector<4x64xf32> -> vector<4x64xf32>
      %339 = arith.mulf %338, %140 : vector<4x64xf32>
      %340 = arith.addf %339, %143 : vector<4x64xf32>
      %cst_263 = arith.constant 0.000000e+00 : f32
      %341 = vector.broadcast %cst_263 : f32 to vector<4x64xf32>
      %342 = arith.maximumf %340, %341 : vector<4x64xf32>
      %343 = tpu.concatenate %137, %342, %137 in 0 : vector<1x64xf32>, vector<4x64xf32>, vector<1x64xf32> -> vector<6x64xf32>
      %c1_i32_264 = arith.constant 1 : i32
      %344 = arith.addi %arg44, %c1_i32_264 : i32
      %345 = arith.index_cast %344 : i32 to index
      %c0_265 = arith.constant 0 : index
      %c0_266 = arith.constant 0 : index
      %346 = vector.load %arg39[%345, %c0_265, %c0_266] : memref<6x6x64xf32, #tpu.memory_space<vmem>>, vector<1x6x64xf32>
      %347 = vector.shape_cast %346 : vector<1x6x64xf32> to vector<6x64xf32>
      %348 = vector.shape_cast %343 : vector<6x64xf32> to vector<1x6x64xf32>
      tpu.vector_store %arg39[%345, %c0_265, %c0_266], %348 {strides = array<i32>} : memref<6x6x64xf32, #tpu.memory_space<vmem>>, vector<1x6x64xf32>,
    }
    %c4_i32_126 = arith.constant 4 : i32
    %145 = tpu.iota {dimensions = array<i32: 0>} : vector<2x4xi32>
    %146 = tpu.iota {dimensions = array<i32: 1>} : vector<2x4xi32>
    %c2_i32_127 = arith.constant 2 : i32
    %147 = vector.broadcast %c2_i32_127 : i32 to vector<2x4xi32>
    %148 = arith.muli %147, %145 : vector<2x4xi32>
    %149 = arith.cmpi eq, %146, %148 : vector<2x4xi32>
    %150 = arith.extui %149 : vector<2x4xi1> to vector<2x4xi32>
    %151 = arith.sitofp %150 : vector<2x4xi32> to vector<2x4xf32>
    %c2_i32_128 = arith.constant 2 : i32
    %152 = vector.broadcast %c2_i32_128 : i32 to vector<2x4xi32>
    %153 = arith.muli %152, %145 : vector<2x4xi32>
    %c1_i32_129 = arith.constant 1 : i32
    %154 = vector.broadcast %c1_i32_129 : i32 to vector<2x4xi32>
    %155 = arith.addi %153, %154 : vector<2x4xi32>
    %156 = arith.cmpi eq, %146, %155 : vector<2x4xi32>
    %157 = arith.extui %156 : vector<2x4xi1> to vector<2x4xi32>
    %158 = arith.sitofp %157 : vector<2x4xi32> to vector<2x4xf32>
    %cst_130 = arith.constant 0.000000e+00 : f32
    %159 = vector.broadcast %cst_130 : f32 to vector<4x64xf32>
    %c0_131 = arith.constant 0 : index
    %c0_132 = arith.constant 0 : index
    %c0_133 = arith.constant 0 : index
    %160 = vector.load %arg40[%c0_131, %c0_132, %c0_133] : memref<4x4x64xf32, #tpu.memory_space<vmem>>, vector<1x4x64xf32>
    %161 = vector.shape_cast %160 : vector<1x4x64xf32> to vector<4x64xf32>
    %162 = vector.shape_cast %159 : vector<4x64xf32> to vector<1x4x64xf32>
    tpu.vector_store %arg40[%c0_131, %c0_132, %c0_133], %162 {strides = array<i32>} : memref<4x4x64xf32, #tpu.memory_space<vmem>>, vector<1x4x64xf32>,
    %c3 = arith.constant 3 : index
    %c0_134 = arith.constant 0 : index
    %c0_135 = arith.constant 0 : index
    %163 = vector.load %arg40[%c3, %c0_134, %c0_135] : memref<4x4x64xf32, #tpu.memory_space<vmem>>, vector<1x4x64xf32>
    %164 = vector.shape_cast %163 : vector<1x4x64xf32> to vector<4x64xf32>
    %165 = vector.shape_cast %159 : vector<4x64xf32> to vector<1x4x64xf32>
    tpu.vector_store %arg40[%c3, %c0_134, %c0_135], %165 {strides = array<i32>} : memref<4x4x64xf32, #tpu.memory_space<vmem>>, vector<1x4x64xf32>,
    %cst_136 = arith.constant 0.000000e+00 : f32
    %166 = vector.broadcast %cst_136 : f32 to vector<1x64xf32>
    %c0_i32_137 = arith.constant 0 : i32
    %c2_i32_138 = arith.constant 2 : i32
    %167 = arith.addi %c0_i32_137, %c2_i32_138 : i32
    %c1_i32_139 = arith.constant 1 : i32
    scf.for %arg44 = %c0_i32_137 to %167 step %c1_i32_139  : i32 {
      %c2_i32_233 = arith.constant 2 : i32
      %300 = arith.muli %c2_i32_233, %arg44 : i32
      %c1_i32_234 = arith.constant 1 : i32
      %301 = arith.addi %c1_i32_234, %300 : i32
      %302 = arith.index_cast %301 : i32 to index
      %c1_235 = arith.constant 1 : index
      %c0_236 = arith.constant 0 : index
      %303 = vector.load %arg39[%302, %c1_235, %c0_236] : memref<6x6x64xf32, #tpu.memory_space<vmem>>, vector<1x4x64xf32>
      %304 = vector.shape_cast %303 : vector<1x4x64xf32> to vector<4x64xf32>
      %c2_i32_237 = arith.constant 2 : i32
      %305 = arith.muli %c2_i32_237, %arg44 : i32
      %c2_i32_238 = arith.constant 2 : i32
      %306 = arith.addi %c2_i32_238, %305 : i32
      %307 = arith.index_cast %306 : i32 to index
      %c1_239 = arith.constant 1 : index
      %c0_240 = arith.constant 0 : index
      %308 = vector.load %arg39[%307, %c1_239, %c0_240] : memref<6x6x64xf32, #tpu.memory_space<vmem>>, vector<1x4x64xf32>
      %309 = vector.shape_cast %308 : vector<1x4x64xf32> to vector<4x64xf32>
      %310 = arith.maximumf %304, %309 : vector<4x64xf32>
      %cst_241 = arith.constant dense<0.000000e+00> : vector<2x64xf32>
      %311 = tpu.matmul %151, %310, %cst_241 {dimension_numbers = #tpu.dot_dimension_numbers<[1], [0], [0], [1], [0, 0, 1, 1], [], []>} : vector<2x4xf32>, vector<4x64xf32>, vector<2x64xf32> -> vector<2x64xf32>
      %cst_242 = arith.constant dense<0.000000e+00> : vector<2x64xf32>
      %312 = tpu.matmul %158, %310, %cst_242 {dimension_numbers = #tpu.dot_dimension_numbers<[1], [0], [0], [1], [0, 0, 1, 1], [], []>} : vector<2x4xf32>, vector<4x64xf32>, vector<2x64xf32> -> vector<2x64xf32>
      %313 = arith.maximumf %311, %312 : vector<2x64xf32>
      %314 = tpu.concatenate %166, %313, %166 in 0 : vector<1x64xf32>, vector<2x64xf32>, vector<1x64xf32> -> vector<4x64xf32>
      %c1_i32_243 = arith.constant 1 : i32
      %315 = arith.addi %c1_i32_243, %arg44 : i32
      %316 = arith.index_cast %315 : i32 to index
      %c0_244 = arith.constant 0 : index
      %c0_245 = arith.constant 0 : index
      %317 = vector.load %arg40[%316, %c0_244, %c0_245] : memref<4x4x64xf32, #tpu.memory_space<vmem>>, vector<1x4x64xf32>
      %318 = vector.shape_cast %317 : vector<1x4x64xf32> to vector<4x64xf32>
      %319 = vector.shape_cast %314 : vector<4x64xf32> to vector<1x4x64xf32>
      tpu.vector_store %arg40[%316, %c0_244, %c0_245], %319 {strides = array<i32>} : memref<4x4x64xf32, #tpu.memory_space<vmem>>, vector<1x4x64xf32>,
    }
    %c2_i32_140 = arith.constant 2 : i32
    %cst_141 = arith.constant 0.000000e+00 : f32
    %168 = vector.broadcast %cst_141 : f32 to vector<4x128xf32>
    %c0_142 = arith.constant 0 : index
    %c0_143 = arith.constant 0 : index
    %c0_144 = arith.constant 0 : index
    %169 = vector.load %arg41[%c0_142, %c0_143, %c0_144] : memref<4x4x128xf32, #tpu.memory_space<vmem>>, vector<1x4x128xf32>
    %170 = vector.shape_cast %169 : vector<1x4x128xf32> to vector<4x128xf32>
    %171 = vector.shape_cast %168 : vector<4x128xf32> to vector<1x4x128xf32>
    tpu.vector_store %arg41[%c0_142, %c0_143, %c0_144], %171 {strides = array<i32>} : memref<4x4x128xf32, #tpu.memory_space<vmem>>, vector<1x4x128xf32>,
    %c3_145 = arith.constant 3 : index
    %c0_146 = arith.constant 0 : index
    %c0_147 = arith.constant 0 : index
    %172 = vector.load %arg41[%c3_145, %c0_146, %c0_147] : memref<4x4x128xf32, #tpu.memory_space<vmem>>, vector<1x4x128xf32>
    %173 = vector.shape_cast %172 : vector<1x4x128xf32> to vector<4x128xf32>
    %174 = vector.shape_cast %168 : vector<4x128xf32> to vector<1x4x128xf32>
    tpu.vector_store %arg41[%c3_145, %c0_146, %c0_147], %174 {strides = array<i32>} : memref<4x4x128xf32, #tpu.memory_space<vmem>>, vector<1x4x128xf32>,
    %cst_148 = arith.constant 0.000000e+00 : f32
    %175 = vector.broadcast %cst_148 : f32 to vector<1x128xf32>
    %c0_149 = arith.constant 0 : index
    %c0_150 = arith.constant 0 : index
    %176 = vector.load %arg21[%c0_149, %c0_150] : memref<1x128xf32, #tpu.memory_space<vmem>>, vector<1x128xf32>
    %177 = vector.shape_cast %176 : vector<1x128xf32> to vector<1x128xf32>
    %178 = vector.broadcast %177 : vector<1x128xf32> to vector<2x128xf32>
    %c0_151 = arith.constant 0 : index
    %c0_152 = arith.constant 0 : index
    %179 = vector.load %arg22[%c0_151, %c0_152] : memref<1x128xf32, #tpu.memory_space<vmem>>, vector<1x128xf32>
    %180 = vector.shape_cast %179 : vector<1x128xf32> to vector<1x128xf32>
    %181 = vector.broadcast %180 : vector<1x128xf32> to vector<2x128xf32>
    %c0_i32_153 = arith.constant 0 : i32
    %c2_i32_154 = arith.constant 2 : i32
    %182 = arith.addi %c0_i32_153, %c2_i32_154 : i32
    %c1_i32_155 = arith.constant 1 : i32
    scf.for %arg44 = %c0_i32_153 to %182 step %c1_i32_155  : i32 {
      %c0_i32_233 = arith.constant 0 : i32
      %300 = arith.addi %arg44, %c0_i32_233 : i32
      %301 = arith.index_cast %300 : i32 to index
      %c0_234 = arith.constant 0 : index
      %c0_235 = arith.constant 0 : index
      %302 = vector.load %arg40[%301, %c0_234, %c0_235] : memref<4x4x64xf32, #tpu.memory_space<vmem>>, vector<1x2x64xf32>
      %303 = vector.shape_cast %302 : vector<1x2x64xf32> to vector<2x64xf32>
      %c0_i32_236 = arith.constant 0 : i32
      %304 = arith.addi %arg44, %c0_i32_236 : i32
      %305 = arith.index_cast %304 : i32 to index
      %c1_237 = arith.constant 1 : index
      %c0_238 = arith.constant 0 : index
      %306 = vector.load %arg40[%305, %c1_237, %c0_238] : memref<4x4x64xf32, #tpu.memory_space<vmem>>, vector<1x2x64xf32>
      %307 = vector.shape_cast %306 : vector<1x2x64xf32> to vector<2x64xf32>
      %c0_i32_239 = arith.constant 0 : i32
      %308 = arith.addi %arg44, %c0_i32_239 : i32
      %309 = arith.index_cast %308 : i32 to index
      %c2_240 = arith.constant 2 : index
      %c0_241 = arith.constant 0 : index
      %310 = vector.load %arg40[%309, %c2_240, %c0_241] : memref<4x4x64xf32, #tpu.memory_space<vmem>>, vector<1x2x64xf32>
      %311 = vector.shape_cast %310 : vector<1x2x64xf32> to vector<2x64xf32>
      %c1_i32_242 = arith.constant 1 : i32
      %312 = arith.addi %arg44, %c1_i32_242 : i32
      %313 = arith.index_cast %312 : i32 to index
      %c0_243 = arith.constant 0 : index
      %c0_244 = arith.constant 0 : index
      %314 = vector.load %arg40[%313, %c0_243, %c0_244] : memref<4x4x64xf32, #tpu.memory_space<vmem>>, vector<1x2x64xf32>
      %315 = vector.shape_cast %314 : vector<1x2x64xf32> to vector<2x64xf32>
      %c1_i32_245 = arith.constant 1 : i32
      %316 = arith.addi %arg44, %c1_i32_245 : i32
      %317 = arith.index_cast %316 : i32 to index
      %c1_246 = arith.constant 1 : index
      %c0_247 = arith.constant 0 : index
      %318 = vector.load %arg40[%317, %c1_246, %c0_247] : memref<4x4x64xf32, #tpu.memory_space<vmem>>, vector<1x2x64xf32>
      %319 = vector.shape_cast %318 : vector<1x2x64xf32> to vector<2x64xf32>
      %c1_i32_248 = arith.constant 1 : i32
      %320 = arith.addi %arg44, %c1_i32_248 : i32
      %321 = arith.index_cast %320 : i32 to index
      %c2_249 = arith.constant 2 : index
      %c0_250 = arith.constant 0 : index
      %322 = vector.load %arg40[%321, %c2_249, %c0_250] : memref<4x4x64xf32, #tpu.memory_space<vmem>>, vector<1x2x64xf32>
      %323 = vector.shape_cast %322 : vector<1x2x64xf32> to vector<2x64xf32>
      %c2_i32_251 = arith.constant 2 : i32
      %324 = arith.addi %arg44, %c2_i32_251 : i32
      %325 = arith.index_cast %324 : i32 to index
      %c0_252 = arith.constant 0 : index
      %c0_253 = arith.constant 0 : index
      %326 = vector.load %arg40[%325, %c0_252, %c0_253] : memref<4x4x64xf32, #tpu.memory_space<vmem>>, vector<1x2x64xf32>
      %327 = vector.shape_cast %326 : vector<1x2x64xf32> to vector<2x64xf32>
      %c2_i32_254 = arith.constant 2 : i32
      %328 = arith.addi %arg44, %c2_i32_254 : i32
      %329 = arith.index_cast %328 : i32 to index
      %c1_255 = arith.constant 1 : index
      %c0_256 = arith.constant 0 : index
      %330 = vector.load %arg40[%329, %c1_255, %c0_256] : memref<4x4x64xf32, #tpu.memory_space<vmem>>, vector<1x2x64xf32>
      %331 = vector.shape_cast %330 : vector<1x2x64xf32> to vector<2x64xf32>
      %c2_i32_257 = arith.constant 2 : i32
      %332 = arith.addi %arg44, %c2_i32_257 : i32
      %333 = arith.index_cast %332 : i32 to index
      %c2_258 = arith.constant 2 : index
      %c0_259 = arith.constant 0 : index
      %334 = vector.load %arg40[%333, %c2_258, %c0_259] : memref<4x4x64xf32, #tpu.memory_space<vmem>>, vector<1x2x64xf32>
      %335 = vector.shape_cast %334 : vector<1x2x64xf32> to vector<2x64xf32>
      %336 = tpu.concatenate %303, %307, %311, %315, %319, %323, %327, %331, %335 in 1 : vector<2x64xf32>, vector<2x64xf32>, vector<2x64xf32>, vector<2x64xf32>, vector<2x64xf32>, vector<2x64xf32>, vector<2x64xf32>, vector<2x64xf32>, vector<2x64xf32> -> vector<2x576xf32>
      %c0_260 = arith.constant 0 : index
      %c0_261 = arith.constant 0 : index
      %337 = vector.load %arg20[%c0_260, %c0_261] : memref<576x128xf32, #tpu.memory_space<vmem>>, vector<576x128xf32>
      %cst_262 = arith.constant dense<0.000000e+00> : vector<2x128xf32>
      %338 = tpu.matmul %336, %337, %cst_262 {dimension_numbers = #tpu.dot_dimension_numbers<[1], [0], [0], [1], [0, 0, 1, 1], [], []>} : vector<2x576xf32>, vector<576x128xf32>, vector<2x128xf32> -> vector<2x128xf32>
      %339 = arith.mulf %338, %178 : vector<2x128xf32>
      %340 = arith.addf %339, %181 : vector<2x128xf32>
      %cst_263 = arith.constant 0.000000e+00 : f32
      %341 = vector.broadcast %cst_263 : f32 to vector<2x128xf32>
      %342 = arith.maximumf %340, %341 : vector<2x128xf32>
      %343 = tpu.concatenate %175, %342, %175 in 0 : vector<1x128xf32>, vector<2x128xf32>, vector<1x128xf32> -> vector<4x128xf32>
      %c1_i32_264 = arith.constant 1 : i32
      %344 = arith.addi %arg44, %c1_i32_264 : i32
      %345 = arith.index_cast %344 : i32 to index
      %c0_265 = arith.constant 0 : index
      %c0_266 = arith.constant 0 : index
      %346 = vector.load %arg41[%345, %c0_265, %c0_266] : memref<4x4x128xf32, #tpu.memory_space<vmem>>, vector<1x4x128xf32>
      %347 = vector.shape_cast %346 : vector<1x4x128xf32> to vector<4x128xf32>
      %348 = vector.shape_cast %343 : vector<4x128xf32> to vector<1x4x128xf32>
      tpu.vector_store %arg41[%345, %c0_265, %c0_266], %348 {strides = array<i32>} : memref<4x4x128xf32, #tpu.memory_space<vmem>>, vector<1x4x128xf32>,
    }
    %c2_i32_156 = arith.constant 2 : i32
    %cst_157 = arith.constant 0.000000e+00 : f32
    %183 = vector.broadcast %cst_157 : f32 to vector<4x128xf32>
    %c0_158 = arith.constant 0 : index
    %c0_159 = arith.constant 0 : index
    %c0_160 = arith.constant 0 : index
    %184 = vector.load %arg42[%c0_158, %c0_159, %c0_160] : memref<4x4x128xf32, #tpu.memory_space<vmem>>, vector<1x4x128xf32>
    %185 = vector.shape_cast %184 : vector<1x4x128xf32> to vector<4x128xf32>
    %186 = vector.shape_cast %183 : vector<4x128xf32> to vector<1x4x128xf32>
    tpu.vector_store %arg42[%c0_158, %c0_159, %c0_160], %186 {strides = array<i32>} : memref<4x4x128xf32, #tpu.memory_space<vmem>>, vector<1x4x128xf32>,
    %c3_161 = arith.constant 3 : index
    %c0_162 = arith.constant 0 : index
    %c0_163 = arith.constant 0 : index
    %187 = vector.load %arg42[%c3_161, %c0_162, %c0_163] : memref<4x4x128xf32, #tpu.memory_space<vmem>>, vector<1x4x128xf32>
    %188 = vector.shape_cast %187 : vector<1x4x128xf32> to vector<4x128xf32>
    %189 = vector.shape_cast %183 : vector<4x128xf32> to vector<1x4x128xf32>
    tpu.vector_store %arg42[%c3_161, %c0_162, %c0_163], %189 {strides = array<i32>} : memref<4x4x128xf32, #tpu.memory_space<vmem>>, vector<1x4x128xf32>,
    %cst_164 = arith.constant 0.000000e+00 : f32
    %190 = vector.broadcast %cst_164 : f32 to vector<1x128xf32>
    %c0_165 = arith.constant 0 : index
    %c0_166 = arith.constant 0 : index
    %191 = vector.load %arg24[%c0_165, %c0_166] : memref<1x128xf32, #tpu.memory_space<vmem>>, vector<1x128xf32>
    %192 = vector.shape_cast %191 : vector<1x128xf32> to vector<1x128xf32>
    %193 = vector.broadcast %192 : vector<1x128xf32> to vector<2x128xf32>
    %c0_167 = arith.constant 0 : index
    %c0_168 = arith.constant 0 : index
    %194 = vector.load %arg25[%c0_167, %c0_168] : memref<1x128xf32, #tpu.memory_space<vmem>>, vector<1x128xf32>
    %195 = vector.shape_cast %194 : vector<1x128xf32> to vector<1x128xf32>
    %196 = vector.broadcast %195 : vector<1x128xf32> to vector<2x128xf32>
    %c0_i32_169 = arith.constant 0 : i32
    %c2_i32_170 = arith.constant 2 : i32
    %197 = arith.addi %c0_i32_169, %c2_i32_170 : i32
    %c1_i32_171 = arith.constant 1 : i32
    scf.for %arg44 = %c0_i32_169 to %197 step %c1_i32_171  : i32 {
      %c0_i32_233 = arith.constant 0 : i32
      %300 = arith.addi %arg44, %c0_i32_233 : i32
      %301 = arith.index_cast %300 : i32 to index
      %c0_234 = arith.constant 0 : index
      %c0_235 = arith.constant 0 : index
      %302 = vector.load %arg41[%301, %c0_234, %c0_235] : memref<4x4x128xf32, #tpu.memory_space<vmem>>, vector<1x2x128xf32>
      %303 = vector.shape_cast %302 : vector<1x2x128xf32> to vector<2x128xf32>
      %c0_i32_236 = arith.constant 0 : i32
      %304 = arith.addi %arg44, %c0_i32_236 : i32
      %305 = arith.index_cast %304 : i32 to index
      %c1_237 = arith.constant 1 : index
      %c0_238 = arith.constant 0 : index
      %306 = vector.load %arg41[%305, %c1_237, %c0_238] : memref<4x4x128xf32, #tpu.memory_space<vmem>>, vector<1x2x128xf32>
      %307 = vector.shape_cast %306 : vector<1x2x128xf32> to vector<2x128xf32>
      %c0_i32_239 = arith.constant 0 : i32
      %308 = arith.addi %arg44, %c0_i32_239 : i32
      %309 = arith.index_cast %308 : i32 to index
      %c2_240 = arith.constant 2 : index
      %c0_241 = arith.constant 0 : index
      %310 = vector.load %arg41[%309, %c2_240, %c0_241] : memref<4x4x128xf32, #tpu.memory_space<vmem>>, vector<1x2x128xf32>
      %311 = vector.shape_cast %310 : vector<1x2x128xf32> to vector<2x128xf32>
      %c1_i32_242 = arith.constant 1 : i32
      %312 = arith.addi %arg44, %c1_i32_242 : i32
      %313 = arith.index_cast %312 : i32 to index
      %c0_243 = arith.constant 0 : index
      %c0_244 = arith.constant 0 : index
      %314 = vector.load %arg41[%313, %c0_243, %c0_244] : memref<4x4x128xf32, #tpu.memory_space<vmem>>, vector<1x2x128xf32>
      %315 = vector.shape_cast %314 : vector<1x2x128xf32> to vector<2x128xf32>
      %c1_i32_245 = arith.constant 1 : i32
      %316 = arith.addi %arg44, %c1_i32_245 : i32
      %317 = arith.index_cast %316 : i32 to index
      %c1_246 = arith.constant 1 : index
      %c0_247 = arith.constant 0 : index
      %318 = vector.load %arg41[%317, %c1_246, %c0_247] : memref<4x4x128xf32, #tpu.memory_space<vmem>>, vector<1x2x128xf32>
      %319 = vector.shape_cast %318 : vector<1x2x128xf32> to vector<2x128xf32>
      %c1_i32_248 = arith.constant 1 : i32
      %320 = arith.addi %arg44, %c1_i32_248 : i32
      %321 = arith.index_cast %320 : i32 to index
      %c2_249 = arith.constant 2 : index
      %c0_250 = arith.constant 0 : index
      %322 = vector.load %arg41[%321, %c2_249, %c0_250] : memref<4x4x128xf32, #tpu.memory_space<vmem>>, vector<1x2x128xf32>
      %323 = vector.shape_cast %322 : vector<1x2x128xf32> to vector<2x128xf32>
      %c2_i32_251 = arith.constant 2 : i32
      %324 = arith.addi %arg44, %c2_i32_251 : i32
      %325 = arith.index_cast %324 : i32 to index
      %c0_252 = arith.constant 0 : index
      %c0_253 = arith.constant 0 : index
      %326 = vector.load %arg41[%325, %c0_252, %c0_253] : memref<4x4x128xf32, #tpu.memory_space<vmem>>, vector<1x2x128xf32>
      %327 = vector.shape_cast %326 : vector<1x2x128xf32> to vector<2x128xf32>
      %c2_i32_254 = arith.constant 2 : i32
      %328 = arith.addi %arg44, %c2_i32_254 : i32
      %329 = arith.index_cast %328 : i32 to index
      %c1_255 = arith.constant 1 : index
      %c0_256 = arith.constant 0 : index
      %330 = vector.load %arg41[%329, %c1_255, %c0_256] : memref<4x4x128xf32, #tpu.memory_space<vmem>>, vector<1x2x128xf32>
      %331 = vector.shape_cast %330 : vector<1x2x128xf32> to vector<2x128xf32>
      %c2_i32_257 = arith.constant 2 : i32
      %332 = arith.addi %arg44, %c2_i32_257 : i32
      %333 = arith.index_cast %332 : i32 to index
      %c2_258 = arith.constant 2 : index
      %c0_259 = arith.constant 0 : index
      %334 = vector.load %arg41[%333, %c2_258, %c0_259] : memref<4x4x128xf32, #tpu.memory_space<vmem>>, vector<1x2x128xf32>
      %335 = vector.shape_cast %334 : vector<1x2x128xf32> to vector<2x128xf32>
      %336 = tpu.concatenate %303, %307, %311, %315, %319, %323, %327, %331, %335 in 1 : vector<2x128xf32>, vector<2x128xf32>, vector<2x128xf32>, vector<2x128xf32>, vector<2x128xf32>, vector<2x128xf32>, vector<2x128xf32>, vector<2x128xf32>, vector<2x128xf32> -> vector<2x1152xf32>
      %c0_260 = arith.constant 0 : index
      %c0_261 = arith.constant 0 : index
      %337 = vector.load %arg23[%c0_260, %c0_261] : memref<1152x128xf32, #tpu.memory_space<vmem>>, vector<1152x128xf32>
      %cst_262 = arith.constant dense<0.000000e+00> : vector<2x128xf32>
      %338 = tpu.matmul %336, %337, %cst_262 {dimension_numbers = #tpu.dot_dimension_numbers<[1], [0], [0], [1], [0, 0, 1, 1], [], []>} : vector<2x1152xf32>, vector<1152x128xf32>, vector<2x128xf32> -> vector<2x128xf32>
      %339 = arith.mulf %338, %193 : vector<2x128xf32>
      %340 = arith.addf %339, %196 : vector<2x128xf32>
      %cst_263 = arith.constant 0.000000e+00 : f32
      %341 = vector.broadcast %cst_263 : f32 to vector<2x128xf32>
      %342 = arith.maximumf %340, %341 : vector<2x128xf32>
      %343 = tpu.concatenate %190, %342, %190 in 0 : vector<1x128xf32>, vector<2x128xf32>, vector<1x128xf32> -> vector<4x128xf32>
      %c1_i32_264 = arith.constant 1 : i32
      %344 = arith.addi %arg44, %c1_i32_264 : i32
      %345 = arith.index_cast %344 : i32 to index
      %c0_265 = arith.constant 0 : index
      %c0_266 = arith.constant 0 : index
      %346 = vector.load %arg42[%345, %c0_265, %c0_266] : memref<4x4x128xf32, #tpu.memory_space<vmem>>, vector<1x4x128xf32>
      %347 = vector.shape_cast %346 : vector<1x4x128xf32> to vector<4x128xf32>
      %348 = vector.shape_cast %343 : vector<4x128xf32> to vector<1x4x128xf32>
      tpu.vector_store %arg42[%345, %c0_265, %c0_266], %348 {strides = array<i32>} : memref<4x4x128xf32, #tpu.memory_space<vmem>>, vector<1x4x128xf32>,
    }
    %c2_i32_172 = arith.constant 2 : i32
    %c1 = arith.constant 1 : index
    %c1_173 = arith.constant 1 : index
    %c0_174 = arith.constant 0 : index
    %198 = vector.load %arg42[%c1, %c1_173, %c0_174] : memref<4x4x128xf32, #tpu.memory_space<vmem>>, vector<1x2x128xf32>
    %199 = vector.shape_cast %198 : vector<1x2x128xf32> to vector<2x128xf32>
    %c2 = arith.constant 2 : index
    %c1_175 = arith.constant 1 : index
    %c0_176 = arith.constant 0 : index
    %200 = vector.load %arg42[%c2, %c1_175, %c0_176] : memref<4x4x128xf32, #tpu.memory_space<vmem>>, vector<1x2x128xf32>
    %201 = vector.shape_cast %200 : vector<1x2x128xf32> to vector<2x128xf32>
    %202 = tpu.concatenate %199, %201 in 0 : vector<2x128xf32>, vector<2x128xf32> -> vector<4x128xf32>
    %c0_177 = arith.constant 0 : index
    %c0_178 = arith.constant 0 : index
    %203 = vector.load %arg29[%c0_177, %c0_178] : memref<256x4xf32, #tpu.memory_space<vmem>>, vector<256x4xf32>
    %cst_179 = arith.constant dense<0.000000e+00> : vector<256x128xf32>
    %204 = tpu.matmul %203, %202, %cst_179 {dimension_numbers = #tpu.dot_dimension_numbers<[1], [0], [0], [1], [0, 0, 1, 1], [], []>} : vector<256x4xf32>, vector<4x128xf32>, vector<256x128xf32> -> vector<256x128xf32>
    %cst_180 = arith.constant 0.000000e+00 : f32
    %205 = vector.broadcast %cst_180 : f32 to vector<18x128xf32>
    %c0_181 = arith.constant 0 : index
    %c0_182 = arith.constant 0 : index
    %c0_183 = arith.constant 0 : index
    %206 = vector.load %arg43[%c0_181, %c0_182, %c0_183] : memref<18x18x128xf32, #tpu.memory_space<vmem>>, vector<1x18x128xf32>
    %207 = vector.shape_cast %206 : vector<1x18x128xf32> to vector<18x128xf32>
    %208 = vector.shape_cast %205 : vector<18x128xf32> to vector<1x18x128xf32>
    tpu.vector_store %arg43[%c0_181, %c0_182, %c0_183], %208 {strides = array<i32>} : memref<18x18x128xf32, #tpu.memory_space<vmem>>, vector<1x18x128xf32>,
    %c17_184 = arith.constant 17 : index
    %c0_185 = arith.constant 0 : index
    %c0_186 = arith.constant 0 : index
    %209 = vector.load %arg43[%c17_184, %c0_185, %c0_186] : memref<18x18x128xf32, #tpu.memory_space<vmem>>, vector<1x18x128xf32>
    %210 = vector.shape_cast %209 : vector<1x18x128xf32> to vector<18x128xf32>
    %211 = vector.shape_cast %205 : vector<18x128xf32> to vector<1x18x128xf32>
    tpu.vector_store %arg43[%c17_184, %c0_185, %c0_186], %211 {strides = array<i32>} : memref<18x18x128xf32, #tpu.memory_space<vmem>>, vector<1x18x128xf32>,
    %cst_187 = arith.constant 0.000000e+00 : f32
    %212 = vector.broadcast %cst_187 : f32 to vector<1x128xf32>
    %213 = vector.extract_strided_slice %204 {offsets = [0, 0], sizes = [16, 128], strides = [1, 1]} : vector<256x128xf32> to vector<16x128xf32>
    %214 = tpu.concatenate %212, %213, %212 in 0 : vector<1x128xf32>, vector<16x128xf32>, vector<1x128xf32> -> vector<18x128xf32>
    %c1_188 = arith.constant 1 : index
    %c0_189 = arith.constant 0 : index
    %c0_190 = arith.constant 0 : index
    %215 = vector.load %arg43[%c1_188, %c0_189, %c0_190] : memref<18x18x128xf32, #tpu.memory_space<vmem>>, vector<1x18x128xf32>
    %216 = vector.shape_cast %215 : vector<1x18x128xf32> to vector<18x128xf32>
    %217 = vector.shape_cast %214 : vector<18x128xf32> to vector<1x18x128xf32>
    tpu.vector_store %arg43[%c1_188, %c0_189, %c0_190], %217 {strides = array<i32>} : memref<18x18x128xf32, #tpu.memory_space<vmem>>, vector<1x18x128xf32>,
    %218 = vector.extract_strided_slice %204 {offsets = [16, 0], sizes = [16, 128], strides = [1, 1]} : vector<256x128xf32> to vector<16x128xf32>
    %219 = tpu.concatenate %212, %218, %212 in 0 : vector<1x128xf32>, vector<16x128xf32>, vector<1x128xf32> -> vector<18x128xf32>
    %c2_191 = arith.constant 2 : index
    %c0_192 = arith.constant 0 : index
    %c0_193 = arith.constant 0 : index
    %220 = vector.load %arg43[%c2_191, %c0_192, %c0_193] : memref<18x18x128xf32, #tpu.memory_space<vmem>>, vector<1x18x128xf32>
    %221 = vector.shape_cast %220 : vector<1x18x128xf32> to vector<18x128xf32>
    %222 = vector.shape_cast %219 : vector<18x128xf32> to vector<1x18x128xf32>
    tpu.vector_store %arg43[%c2_191, %c0_192, %c0_193], %222 {strides = array<i32>} : memref<18x18x128xf32, #tpu.memory_space<vmem>>, vector<1x18x128xf32>,
    %223 = vector.extract_strided_slice %204 {offsets = [32, 0], sizes = [16, 128], strides = [1, 1]} : vector<256x128xf32> to vector<16x128xf32>
    %224 = tpu.concatenate %212, %223, %212 in 0 : vector<1x128xf32>, vector<16x128xf32>, vector<1x128xf32> -> vector<18x128xf32>
    %c3_194 = arith.constant 3 : index
    %c0_195 = arith.constant 0 : index
    %c0_196 = arith.constant 0 : index
    %225 = vector.load %arg43[%c3_194, %c0_195, %c0_196] : memref<18x18x128xf32, #tpu.memory_space<vmem>>, vector<1x18x128xf32>
    %226 = vector.shape_cast %225 : vector<1x18x128xf32> to vector<18x128xf32>
    %227 = vector.shape_cast %224 : vector<18x128xf32> to vector<1x18x128xf32>
    tpu.vector_store %arg43[%c3_194, %c0_195, %c0_196], %227 {strides = array<i32>} : memref<18x18x128xf32, #tpu.memory_space<vmem>>, vector<1x18x128xf32>,
    %228 = vector.extract_strided_slice %204 {offsets = [48, 0], sizes = [16, 128], strides = [1, 1]} : vector<256x128xf32> to vector<16x128xf32>
    %229 = tpu.concatenate %212, %228, %212 in 0 : vector<1x128xf32>, vector<16x128xf32>, vector<1x128xf32> -> vector<18x128xf32>
    %c4 = arith.constant 4 : index
    %c0_197 = arith.constant 0 : index
    %c0_198 = arith.constant 0 : index
    %230 = vector.load %arg43[%c4, %c0_197, %c0_198] : memref<18x18x128xf32, #tpu.memory_space<vmem>>, vector<1x18x128xf32>
    %231 = vector.shape_cast %230 : vector<1x18x128xf32> to vector<18x128xf32>
    %232 = vector.shape_cast %229 : vector<18x128xf32> to vector<1x18x128xf32>
    tpu.vector_store %arg43[%c4, %c0_197, %c0_198], %232 {strides = array<i32>} : memref<18x18x128xf32, #tpu.memory_space<vmem>>, vector<1x18x128xf32>,
    %233 = vector.extract_strided_slice %204 {offsets = [64, 0], sizes = [16, 128], strides = [1, 1]} : vector<256x128xf32> to vector<16x128xf32>
    %234 = tpu.concatenate %212, %233, %212 in 0 : vector<1x128xf32>, vector<16x128xf32>, vector<1x128xf32> -> vector<18x128xf32>
    %c5_199 = arith.constant 5 : index
    %c0_200 = arith.constant 0 : index
    %c0_201 = arith.constant 0 : index
    %235 = vector.load %arg43[%c5_199, %c0_200, %c0_201] : memref<18x18x128xf32, #tpu.memory_space<vmem>>, vector<1x18x128xf32>
    %236 = vector.shape_cast %235 : vector<1x18x128xf32> to vector<18x128xf32>
    %237 = vector.shape_cast %234 : vector<18x128xf32> to vector<1x18x128xf32>
    tpu.vector_store %arg43[%c5_199, %c0_200, %c0_201], %237 {strides = array<i32>} : memref<18x18x128xf32, #tpu.memory_space<vmem>>, vector<1x18x128xf32>,
    %238 = vector.extract_strided_slice %204 {offsets = [80, 0], sizes = [16, 128], strides = [1, 1]} : vector<256x128xf32> to vector<16x128xf32>
    %239 = tpu.concatenate %212, %238, %212 in 0 : vector<1x128xf32>, vector<16x128xf32>, vector<1x128xf32> -> vector<18x128xf32>
    %c6 = arith.constant 6 : index
    %c0_202 = arith.constant 0 : index
    %c0_203 = arith.constant 0 : index
    %240 = vector.load %arg43[%c6, %c0_202, %c0_203] : memref<18x18x128xf32, #tpu.memory_space<vmem>>, vector<1x18x128xf32>
    %241 = vector.shape_cast %240 : vector<1x18x128xf32> to vector<18x128xf32>
    %242 = vector.shape_cast %239 : vector<18x128xf32> to vector<1x18x128xf32>
    tpu.vector_store %arg43[%c6, %c0_202, %c0_203], %242 {strides = array<i32>} : memref<18x18x128xf32, #tpu.memory_space<vmem>>, vector<1x18x128xf32>,
    %243 = vector.extract_strided_slice %204 {offsets = [96, 0], sizes = [16, 128], strides = [1, 1]} : vector<256x128xf32> to vector<16x128xf32>
    %244 = tpu.concatenate %212, %243, %212 in 0 : vector<1x128xf32>, vector<16x128xf32>, vector<1x128xf32> -> vector<18x128xf32>
    %c7 = arith.constant 7 : index
    %c0_204 = arith.constant 0 : index
    %c0_205 = arith.constant 0 : index
    %245 = vector.load %arg43[%c7, %c0_204, %c0_205] : memref<18x18x128xf32, #tpu.memory_space<vmem>>, vector<1x18x128xf32>
    %246 = vector.shape_cast %245 : vector<1x18x128xf32> to vector<18x128xf32>
    %247 = vector.shape_cast %244 : vector<18x128xf32> to vector<1x18x128xf32>
    tpu.vector_store %arg43[%c7, %c0_204, %c0_205], %247 {strides = array<i32>} : memref<18x18x128xf32, #tpu.memory_space<vmem>>, vector<1x18x128xf32>,
    %248 = vector.extract_strided_slice %204 {offsets = [112, 0], sizes = [16, 128], strides = [1, 1]} : vector<256x128xf32> to vector<16x128xf32>
    %249 = tpu.concatenate %212, %248, %212 in 0 : vector<1x128xf32>, vector<16x128xf32>, vector<1x128xf32> -> vector<18x128xf32>
    %c8 = arith.constant 8 : index
    %c0_206 = arith.constant 0 : index
    %c0_207 = arith.constant 0 : index
    %250 = vector.load %arg43[%c8, %c0_206, %c0_207] : memref<18x18x128xf32, #tpu.memory_space<vmem>>, vector<1x18x128xf32>
    %251 = vector.shape_cast %250 : vector<1x18x128xf32> to vector<18x128xf32>
    %252 = vector.shape_cast %249 : vector<18x128xf32> to vector<1x18x128xf32>
    tpu.vector_store %arg43[%c8, %c0_206, %c0_207], %252 {strides = array<i32>} : memref<18x18x128xf32, #tpu.memory_space<vmem>>, vector<1x18x128xf32>,
    %253 = vector.extract_strided_slice %204 {offsets = [128, 0], sizes = [16, 128], strides = [1, 1]} : vector<256x128xf32> to vector<16x128xf32>
    %254 = tpu.concatenate %212, %253, %212 in 0 : vector<1x128xf32>, vector<16x128xf32>, vector<1x128xf32> -> vector<18x128xf32>
    %c9_208 = arith.constant 9 : index
    %c0_209 = arith.constant 0 : index
    %c0_210 = arith.constant 0 : index
    %255 = vector.load %arg43[%c9_208, %c0_209, %c0_210] : memref<18x18x128xf32, #tpu.memory_space<vmem>>, vector<1x18x128xf32>
    %256 = vector.shape_cast %255 : vector<1x18x128xf32> to vector<18x128xf32>
    %257 = vector.shape_cast %254 : vector<18x128xf32> to vector<1x18x128xf32>
    tpu.vector_store %arg43[%c9_208, %c0_209, %c0_210], %257 {strides = array<i32>} : memref<18x18x128xf32, #tpu.memory_space<vmem>>, vector<1x18x128xf32>,
    %258 = vector.extract_strided_slice %204 {offsets = [144, 0], sizes = [16, 128], strides = [1, 1]} : vector<256x128xf32> to vector<16x128xf32>
    %259 = tpu.concatenate %212, %258, %212 in 0 : vector<1x128xf32>, vector<16x128xf32>, vector<1x128xf32> -> vector<18x128xf32>
    %c10 = arith.constant 10 : index
    %c0_211 = arith.constant 0 : index
    %c0_212 = arith.constant 0 : index
    %260 = vector.load %arg43[%c10, %c0_211, %c0_212] : memref<18x18x128xf32, #tpu.memory_space<vmem>>, vector<1x18x128xf32>
    %261 = vector.shape_cast %260 : vector<1x18x128xf32> to vector<18x128xf32>
    %262 = vector.shape_cast %259 : vector<18x128xf32> to vector<1x18x128xf32>
    tpu.vector_store %arg43[%c10, %c0_211, %c0_212], %262 {strides = array<i32>} : memref<18x18x128xf32, #tpu.memory_space<vmem>>, vector<1x18x128xf32>,
    %263 = vector.extract_strided_slice %204 {offsets = [160, 0], sizes = [16, 128], strides = [1, 1]} : vector<256x128xf32> to vector<16x128xf32>
    %264 = tpu.concatenate %212, %263, %212 in 0 : vector<1x128xf32>, vector<16x128xf32>, vector<1x128xf32> -> vector<18x128xf32>
    %c11 = arith.constant 11 : index
    %c0_213 = arith.constant 0 : index
    %c0_214 = arith.constant 0 : index
    %265 = vector.load %arg43[%c11, %c0_213, %c0_214] : memref<18x18x128xf32, #tpu.memory_space<vmem>>, vector<1x18x128xf32>
    %266 = vector.shape_cast %265 : vector<1x18x128xf32> to vector<18x128xf32>
    %267 = vector.shape_cast %264 : vector<18x128xf32> to vector<1x18x128xf32>
    tpu.vector_store %arg43[%c11, %c0_213, %c0_214], %267 {strides = array<i32>} : memref<18x18x128xf32, #tpu.memory_space<vmem>>, vector<1x18x128xf32>,
    %268 = vector.extract_strided_slice %204 {offsets = [176, 0], sizes = [16, 128], strides = [1, 1]} : vector<256x128xf32> to vector<16x128xf32>
    %269 = tpu.concatenate %212, %268, %212 in 0 : vector<1x128xf32>, vector<16x128xf32>, vector<1x128xf32> -> vector<18x128xf32>
    %c12 = arith.constant 12 : index
    %c0_215 = arith.constant 0 : index
    %c0_216 = arith.constant 0 : index
    %270 = vector.load %arg43[%c12, %c0_215, %c0_216] : memref<18x18x128xf32, #tpu.memory_space<vmem>>, vector<1x18x128xf32>
    %271 = vector.shape_cast %270 : vector<1x18x128xf32> to vector<18x128xf32>
    %272 = vector.shape_cast %269 : vector<18x128xf32> to vector<1x18x128xf32>
    tpu.vector_store %arg43[%c12, %c0_215, %c0_216], %272 {strides = array<i32>} : memref<18x18x128xf32, #tpu.memory_space<vmem>>, vector<1x18x128xf32>,
    %273 = vector.extract_strided_slice %204 {offsets = [192, 0], sizes = [16, 128], strides = [1, 1]} : vector<256x128xf32> to vector<16x128xf32>
    %274 = tpu.concatenate %212, %273, %212 in 0 : vector<1x128xf32>, vector<16x128xf32>, vector<1x128xf32> -> vector<18x128xf32>
    %c13 = arith.constant 13 : index
    %c0_217 = arith.constant 0 : index
    %c0_218 = arith.constant 0 : index
    %275 = vector.load %arg43[%c13, %c0_217, %c0_218] : memref<18x18x128xf32, #tpu.memory_space<vmem>>, vector<1x18x128xf32>
    %276 = vector.shape_cast %275 : vector<1x18x128xf32> to vector<18x128xf32>
    %277 = vector.shape_cast %274 : vector<18x128xf32> to vector<1x18x128xf32>
    tpu.vector_store %arg43[%c13, %c0_217, %c0_218], %277 {strides = array<i32>} : memref<18x18x128xf32, #tpu.memory_space<vmem>>, vector<1x18x128xf32>,
    %278 = vector.extract_strided_slice %204 {offsets = [208, 0], sizes = [16, 128], strides = [1, 1]} : vector<256x128xf32> to vector<16x128xf32>
    %279 = tpu.concatenate %212, %278, %212 in 0 : vector<1x128xf32>, vector<16x128xf32>, vector<1x128xf32> -> vector<18x128xf32>
    %c14 = arith.constant 14 : index
    %c0_219 = arith.constant 0 : index
    %c0_220 = arith.constant 0 : index
    %280 = vector.load %arg43[%c14, %c0_219, %c0_220] : memref<18x18x128xf32, #tpu.memory_space<vmem>>, vector<1x18x128xf32>
    %281 = vector.shape_cast %280 : vector<1x18x128xf32> to vector<18x128xf32>
    %282 = vector.shape_cast %279 : vector<18x128xf32> to vector<1x18x128xf32>
    tpu.vector_store %arg43[%c14, %c0_219, %c0_220], %282 {strides = array<i32>} : memref<18x18x128xf32, #tpu.memory_space<vmem>>, vector<1x18x128xf32>,
    %283 = vector.extract_strided_slice %204 {offsets = [224, 0], sizes = [16, 128], strides = [1, 1]} : vector<256x128xf32> to vector<16x128xf32>
    %284 = tpu.concatenate %212, %283, %212 in 0 : vector<1x128xf32>, vector<16x128xf32>, vector<1x128xf32> -> vector<18x128xf32>
    %c15 = arith.constant 15 : index
    %c0_221 = arith.constant 0 : index
    %c0_222 = arith.constant 0 : index
    %285 = vector.load %arg43[%c15, %c0_221, %c0_222] : memref<18x18x128xf32, #tpu.memory_space<vmem>>, vector<1x18x128xf32>
    %286 = vector.shape_cast %285 : vector<1x18x128xf32> to vector<18x128xf32>
    %287 = vector.shape_cast %284 : vector<18x128xf32> to vector<1x18x128xf32>
    tpu.vector_store %arg43[%c15, %c0_221, %c0_222], %287 {strides = array<i32>} : memref<18x18x128xf32, #tpu.memory_space<vmem>>, vector<1x18x128xf32>,
    %288 = vector.extract_strided_slice %204 {offsets = [240, 0], sizes = [16, 128], strides = [1, 1]} : vector<256x128xf32> to vector<16x128xf32>
    %289 = tpu.concatenate %212, %288, %212 in 0 : vector<1x128xf32>, vector<16x128xf32>, vector<1x128xf32> -> vector<18x128xf32>
    %c16 = arith.constant 16 : index
    %c0_223 = arith.constant 0 : index
    %c0_224 = arith.constant 0 : index
    %290 = vector.load %arg43[%c16, %c0_223, %c0_224] : memref<18x18x128xf32, #tpu.memory_space<vmem>>, vector<1x18x128xf32>
    %291 = vector.shape_cast %290 : vector<1x18x128xf32> to vector<18x128xf32>
    %292 = vector.shape_cast %289 : vector<18x128xf32> to vector<1x18x128xf32>
    tpu.vector_store %arg43[%c16, %c0_223, %c0_224], %292 {strides = array<i32>} : memref<18x18x128xf32, #tpu.memory_space<vmem>>, vector<1x18x128xf32>,
    %c0_225 = arith.constant 0 : index
    %c0_226 = arith.constant 0 : index
    %293 = vector.load %arg27[%c0_225, %c0_226] : memref<1x2xf32, #tpu.memory_space<vmem>>, vector<1x2xf32>
    %294 = vector.shape_cast %293 : vector<1x2xf32> to vector<1x2xf32>
    %295 = vector.broadcast %294 : vector<1x2xf32> to vector<16x2xf32>
    %c0_227 = arith.constant 0 : index
    %c0_228 = arith.constant 0 : index
    %296 = vector.load %arg28[%c0_227, %c0_228] : memref<1x2xf32, #tpu.memory_space<vmem>>, vector<1x2xf32>
    %297 = vector.shape_cast %296 : vector<1x2xf32> to vector<1x2xf32>
    %298 = vector.broadcast %297 : vector<1x2xf32> to vector<16x2xf32>
    %c0_i32_229 = arith.constant 0 : i32
    %c16_i32_230 = arith.constant 16 : i32
    %299 = arith.addi %c0_i32_229, %c16_i32_230 : i32
    %c1_i32_231 = arith.constant 1 : i32
    scf.for %arg44 = %c0_i32_229 to %299 step %c1_i32_231  : i32 {
      %c0_i32_233 = arith.constant 0 : i32
      %300 = arith.addi %arg44, %c0_i32_233 : i32
      %301 = arith.index_cast %300 : i32 to index
      %c0_234 = arith.constant 0 : index
      %c0_235 = arith.constant 0 : index
      %302 = vector.load %arg43[%301, %c0_234, %c0_235] : memref<18x18x128xf32, #tpu.memory_space<vmem>>, vector<1x16x128xf32>
      %303 = vector.shape_cast %302 : vector<1x16x128xf32> to vector<16x128xf32>
      %c0_i32_236 = arith.constant 0 : i32
      %304 = arith.addi %arg44, %c0_i32_236 : i32
      %305 = arith.index_cast %304 : i32 to index
      %c1_237 = arith.constant 1 : index
      %c0_238 = arith.constant 0 : index
      %306 = vector.load %arg43[%305, %c1_237, %c0_238] : memref<18x18x128xf32, #tpu.memory_space<vmem>>, vector<1x16x128xf32>
      %307 = vector.shape_cast %306 : vector<1x16x128xf32> to vector<16x128xf32>
      %c0_i32_239 = arith.constant 0 : i32
      %308 = arith.addi %arg44, %c0_i32_239 : i32
      %309 = arith.index_cast %308 : i32 to index
      %c2_240 = arith.constant 2 : index
      %c0_241 = arith.constant 0 : index
      %310 = vector.load %arg43[%309, %c2_240, %c0_241] : memref<18x18x128xf32, #tpu.memory_space<vmem>>, vector<1x16x128xf32>
      %311 = vector.shape_cast %310 : vector<1x16x128xf32> to vector<16x128xf32>
      %c1_i32_242 = arith.constant 1 : i32
      %312 = arith.addi %arg44, %c1_i32_242 : i32
      %313 = arith.index_cast %312 : i32 to index
      %c0_243 = arith.constant 0 : index
      %c0_244 = arith.constant 0 : index
      %314 = vector.load %arg43[%313, %c0_243, %c0_244] : memref<18x18x128xf32, #tpu.memory_space<vmem>>, vector<1x16x128xf32>
      %315 = vector.shape_cast %314 : vector<1x16x128xf32> to vector<16x128xf32>
      %c1_i32_245 = arith.constant 1 : i32
      %316 = arith.addi %arg44, %c1_i32_245 : i32
      %317 = arith.index_cast %316 : i32 to index
      %c1_246 = arith.constant 1 : index
      %c0_247 = arith.constant 0 : index
      %318 = vector.load %arg43[%317, %c1_246, %c0_247] : memref<18x18x128xf32, #tpu.memory_space<vmem>>, vector<1x16x128xf32>
      %319 = vector.shape_cast %318 : vector<1x16x128xf32> to vector<16x128xf32>
      %c1_i32_248 = arith.constant 1 : i32
      %320 = arith.addi %arg44, %c1_i32_248 : i32
      %321 = arith.index_cast %320 : i32 to index
      %c2_249 = arith.constant 2 : index
      %c0_250 = arith.constant 0 : index
      %322 = vector.load %arg43[%321, %c2_249, %c0_250] : memref<18x18x128xf32, #tpu.memory_space<vmem>>, vector<1x16x128xf32>
      %323 = vector.shape_cast %322 : vector<1x16x128xf32> to vector<16x128xf32>
      %c2_i32_251 = arith.constant 2 : i32
      %324 = arith.addi %arg44, %c2_i32_251 : i32
      %325 = arith.index_cast %324 : i32 to index
      %c0_252 = arith.constant 0 : index
      %c0_253 = arith.constant 0 : index
      %326 = vector.load %arg43[%325, %c0_252, %c0_253] : memref<18x18x128xf32, #tpu.memory_space<vmem>>, vector<1x16x128xf32>
      %327 = vector.shape_cast %326 : vector<1x16x128xf32> to vector<16x128xf32>
      %c2_i32_254 = arith.constant 2 : i32
      %328 = arith.addi %arg44, %c2_i32_254 : i32
      %329 = arith.index_cast %328 : i32 to index
      %c1_255 = arith.constant 1 : index
      %c0_256 = arith.constant 0 : index
      %330 = vector.load %arg43[%329, %c1_255, %c0_256] : memref<18x18x128xf32, #tpu.memory_space<vmem>>, vector<1x16x128xf32>
      %331 = vector.shape_cast %330 : vector<1x16x128xf32> to vector<16x128xf32>
      %c2_i32_257 = arith.constant 2 : i32
      %332 = arith.addi %arg44, %c2_i32_257 : i32
      %333 = arith.index_cast %332 : i32 to index
      %c2_258 = arith.constant 2 : index
      %c0_259 = arith.constant 0 : index
      %334 = vector.load %arg43[%333, %c2_258, %c0_259] : memref<18x18x128xf32, #tpu.memory_space<vmem>>, vector<1x16x128xf32>
      %335 = vector.shape_cast %334 : vector<1x16x128xf32> to vector<16x128xf32>
      %336 = tpu.concatenate %303, %307, %311, %315, %319, %323, %327, %331, %335 in 1 : vector<16x128xf32>, vector<16x128xf32>, vector<16x128xf32>, vector<16x128xf32>, vector<16x128xf32>, vector<16x128xf32>, vector<16x128xf32>, vector<16x128xf32>, vector<16x128xf32> -> vector<16x1152xf32>
      %c0_260 = arith.constant 0 : index
      %c0_261 = arith.constant 0 : index
      %337 = vector.load %arg26[%c0_260, %c0_261] : memref<1152x2xf32, #tpu.memory_space<vmem>>, vector<1152x2xf32>
      %cst_262 = arith.constant dense<0.000000e+00> : vector<16x2xf32>
      %338 = tpu.matmul %336, %337, %cst_262 {dimension_numbers = #tpu.dot_dimension_numbers<[1], [0], [0], [1], [0, 0, 1, 1], [], []>} : vector<16x1152xf32>, vector<1152x2xf32>, vector<16x2xf32> -> vector<16x2xf32>
      %339 = arith.mulf %338, %295 : vector<16x2xf32>
      %340 = arith.addf %339, %298 : vector<16x2xf32>
      %c0_263 = arith.constant 0 : index
      %341 = arith.index_cast %arg44 : i32 to index
      %c0_264 = arith.constant 0 : index
      %c0_265 = arith.constant 0 : index
      %342 = vector.load %arg30[%c0_263, %341, %c0_264, %c0_265] : memref<1x16x16x2xf32, #tpu.memory_space<vmem>>, vector<1x1x16x2xf32>
      %343 = vector.shape_cast %342 : vector<1x1x16x2xf32> to vector<16x2xf32>
      %344 = vector.shape_cast %340 : vector<16x2xf32> to vector<1x1x16x2xf32>
      tpu.vector_store %arg30[%c0_263, %341, %c0_264, %c0_265], %344 {strides = array<i32>} : memref<1x16x16x2xf32, #tpu.memory_space<vmem>>, vector<1x1x16x2xf32>,
    }
    %c16_i32_232 = arith.constant 16 : i32
    return
  }
  func.func @transform_0(%arg0: i32) -> (i32, i32, i32, i32) {
    %c0_i32 = arith.constant 0 : i32
    %c0_i32_0 = arith.constant 0 : i32
    %c0_i32_1 = arith.constant 0 : i32
    %c0_i32_2 = arith.constant 0 : i32
    return %arg0, %c0_i32, %c0_i32_0, %c0_i32_1 : i32, i32, i32, i32
  }
  func.func @transform_1(%arg0: i32) -> (i32, i32) {
    %c0_i32 = arith.constant 0 : i32
    %c0_i32_0 = arith.constant 0 : i32
    %c0_i32_1 = arith.constant 0 : i32
    return %c0_i32, %c0_i32_0 : i32, i32
  }
  func.func @transform_2(%arg0: i32) -> (i32, i32) {
    %c0_i32 = arith.constant 0 : i32
    %c0_i32_0 = arith.constant 0 : i32
    %c0_i32_1 = arith.constant 0 : i32
    return %c0_i32, %c0_i32_0 : i32, i32
  }
  func.func @transform_3(%arg0: i32) -> (i32, i32) {
    %c0_i32 = arith.constant 0 : i32
    %c0_i32_0 = arith.constant 0 : i32
    %c0_i32_1 = arith.constant 0 : i32
    return %c0_i32, %c0_i32_0 : i32, i32
  }
  func.func @transform_4(%arg0: i32) -> (i32, i32) {
    %c0_i32 = arith.constant 0 : i32
    %c0_i32_0 = arith.constant 0 : i32
    %c0_i32_1 = arith.constant 0 : i32
    return %c0_i32, %c0_i32_0 : i32, i32
  }
  func.func @transform_5(%arg0: i32) -> (i32, i32) {
    %c0_i32 = arith.constant 0 : i32
    %c0_i32_0 = arith.constant 0 : i32
    %c0_i32_1 = arith.constant 0 : i32
    return %c0_i32, %c0_i32_0 : i32, i32
  }
  func.func @transform_6(%arg0: i32) -> (i32, i32) {
    %c0_i32 = arith.constant 0 : i32
    %c0_i32_0 = arith.constant 0 : i32
    %c0_i32_1 = arith.constant 0 : i32
    return %c0_i32, %c0_i32_0 : i32, i32
  }
  func.func @transform_7(%arg0: i32) -> (i32, i32) {
    %c0_i32 = arith.constant 0 : i32
    %c0_i32_0 = arith.constant 0 : i32
    %c0_i32_1 = arith.constant 0 : i32
    return %c0_i32, %c0_i32_0 : i32, i32
  }
  func.func @transform_8(%arg0: i32) -> (i32, i32) {
    %c0_i32 = arith.constant 0 : i32
    %c0_i32_0 = arith.constant 0 : i32
    %c0_i32_1 = arith.constant 0 : i32
    return %c0_i32, %c0_i32_0 : i32, i32
  }
  func.func @transform_9(%arg0: i32) -> (i32, i32) {
    %c0_i32 = arith.constant 0 : i32
    %c0_i32_0 = arith.constant 0 : i32
    %c0_i32_1 = arith.constant 0 : i32
    return %c0_i32, %c0_i32_0 : i32, i32
  }
  func.func @transform_10(%arg0: i32) -> (i32, i32) {
    %c0_i32 = arith.constant 0 : i32
    %c0_i32_0 = arith.constant 0 : i32
    %c0_i32_1 = arith.constant 0 : i32
    return %c0_i32, %c0_i32_0 : i32, i32
  }
  func.func @transform_11(%arg0: i32) -> (i32, i32) {
    %c0_i32 = arith.constant 0 : i32
    %c0_i32_0 = arith.constant 0 : i32
    %c0_i32_1 = arith.constant 0 : i32
    return %c0_i32, %c0_i32_0 : i32, i32
  }
  func.func @transform_12(%arg0: i32) -> (i32, i32) {
    %c0_i32 = arith.constant 0 : i32
    %c0_i32_0 = arith.constant 0 : i32
    %c0_i32_1 = arith.constant 0 : i32
    return %c0_i32, %c0_i32_0 : i32, i32
  }
  func.func @transform_13(%arg0: i32) -> (i32, i32) {
    %c0_i32 = arith.constant 0 : i32
    %c0_i32_0 = arith.constant 0 : i32
    %c0_i32_1 = arith.constant 0 : i32
    return %c0_i32, %c0_i32_0 : i32, i32
  }
  func.func @transform_14(%arg0: i32) -> (i32, i32) {
    %c0_i32 = arith.constant 0 : i32
    %c0_i32_0 = arith.constant 0 : i32
    %c0_i32_1 = arith.constant 0 : i32
    return %c0_i32, %c0_i32_0 : i32, i32
  }
  func.func @transform_15(%arg0: i32) -> (i32, i32) {
    %c0_i32 = arith.constant 0 : i32
    %c0_i32_0 = arith.constant 0 : i32
    %c0_i32_1 = arith.constant 0 : i32
    return %c0_i32, %c0_i32_0 : i32, i32
  }
  func.func @transform_16(%arg0: i32) -> (i32, i32) {
    %c0_i32 = arith.constant 0 : i32
    %c0_i32_0 = arith.constant 0 : i32
    %c0_i32_1 = arith.constant 0 : i32
    return %c0_i32, %c0_i32_0 : i32, i32
  }
  func.func @transform_17(%arg0: i32) -> (i32, i32) {
    %c0_i32 = arith.constant 0 : i32
    %c0_i32_0 = arith.constant 0 : i32
    %c0_i32_1 = arith.constant 0 : i32
    return %c0_i32, %c0_i32_0 : i32, i32
  }
  func.func @transform_18(%arg0: i32) -> (i32, i32) {
    %c0_i32 = arith.constant 0 : i32
    %c0_i32_0 = arith.constant 0 : i32
    %c0_i32_1 = arith.constant 0 : i32
    return %c0_i32, %c0_i32_0 : i32, i32
  }
  func.func @transform_19(%arg0: i32) -> (i32, i32) {
    %c0_i32 = arith.constant 0 : i32
    %c0_i32_0 = arith.constant 0 : i32
    %c0_i32_1 = arith.constant 0 : i32
    return %c0_i32, %c0_i32_0 : i32, i32
  }
  func.func @transform_20(%arg0: i32) -> (i32, i32) {
    %c0_i32 = arith.constant 0 : i32
    %c0_i32_0 = arith.constant 0 : i32
    %c0_i32_1 = arith.constant 0 : i32
    return %c0_i32, %c0_i32_0 : i32, i32
  }
  func.func @transform_21(%arg0: i32) -> (i32, i32) {
    %c0_i32 = arith.constant 0 : i32
    %c0_i32_0 = arith.constant 0 : i32
    %c0_i32_1 = arith.constant 0 : i32
    return %c0_i32, %c0_i32_0 : i32, i32
  }
  func.func @transform_22(%arg0: i32) -> (i32, i32) {
    %c0_i32 = arith.constant 0 : i32
    %c0_i32_0 = arith.constant 0 : i32
    %c0_i32_1 = arith.constant 0 : i32
    return %c0_i32, %c0_i32_0 : i32, i32
  }
  func.func @transform_23(%arg0: i32) -> (i32, i32) {
    %c0_i32 = arith.constant 0 : i32
    %c0_i32_0 = arith.constant 0 : i32
    %c0_i32_1 = arith.constant 0 : i32
    return %c0_i32, %c0_i32_0 : i32, i32
  }
  func.func @transform_24(%arg0: i32) -> (i32, i32) {
    %c0_i32 = arith.constant 0 : i32
    %c0_i32_0 = arith.constant 0 : i32
    %c0_i32_1 = arith.constant 0 : i32
    return %c0_i32, %c0_i32_0 : i32, i32
  }
  func.func @transform_25(%arg0: i32) -> (i32, i32) {
    %c0_i32 = arith.constant 0 : i32
    %c0_i32_0 = arith.constant 0 : i32
    %c0_i32_1 = arith.constant 0 : i32
    return %c0_i32, %c0_i32_0 : i32, i32
  }
  func.func @transform_26(%arg0: i32) -> (i32, i32) {
    %c0_i32 = arith.constant 0 : i32
    %c0_i32_0 = arith.constant 0 : i32
    %c0_i32_1 = arith.constant 0 : i32
    return %c0_i32, %c0_i32_0 : i32, i32
  }
  func.func @transform_27(%arg0: i32) -> (i32, i32) {
    %c0_i32 = arith.constant 0 : i32
    %c0_i32_0 = arith.constant 0 : i32
    %c0_i32_1 = arith.constant 0 : i32
    return %c0_i32, %c0_i32_0 : i32, i32
  }
  func.func @transform_28(%arg0: i32) -> (i32, i32) {
    %c0_i32 = arith.constant 0 : i32
    %c0_i32_0 = arith.constant 0 : i32
    %c0_i32_1 = arith.constant 0 : i32
    return %c0_i32, %c0_i32_0 : i32, i32
  }
  func.func @transform_29(%arg0: i32) -> (i32, i32, i32, i32) {
    %c0_i32 = arith.constant 0 : i32
    %c0_i32_0 = arith.constant 0 : i32
    %c0_i32_1 = arith.constant 0 : i32
    %c0_i32_2 = arith.constant 0 : i32
    return %arg0, %c0_i32, %c0_i32_0, %c0_i32_1 : i32, i32, i32, i32
  }
}

</mosaic_0001>

<llo_original>
// kernel: forward.1
$region0: #{forward.1}
  #allocation0 [shape = 'u32[]', space=smem, size = 0x4, offset = 0x4, fixed_abs, tag = 'smem constant byte address 0x4 - core index']
  #allocation1 [shape = 'u32[144,128]{1,0:T(1,128)}', space=vmem, size = 0x12000, scoped, tag = 'internal scratch']
  #allocation2 [shape = 'f32[18,18,8]{2,1,0:T(8,128)}', space=vmem, size = 0x36000, scoped, tag = 'scratch operand']
  #allocation3 [shape = 'f32[18,18,16]{2,1,0:T(8,128)}', space=vmem, size = 0x36000, scoped, tag = 'scratch operand']
  #allocation4 [shape = 'f32[18,18,16]{2,1,0:T(8,128)}', space=vmem, size = 0x36000, scoped, tag = 'scratch operand']
  #allocation5 [shape = 'f32[10,10,16]{2,1,0:T(8,128)}', space=vmem, size = 0x14000, scoped, tag = 'scratch operand']
  #allocation6 [shape = 'f32[10,10,32]{2,1,0:T(8,128)}', space=vmem, size = 0x14000, scoped, tag = 'scratch operand']
  #allocation7 [shape = 'f32[10,10,32]{2,1,0:T(8,128)}', space=vmem, size = 0x14000, scoped, tag = 'scratch operand']
  #allocation8 [shape = 'f32[6,6,32]{2,1,0:T(8,128)}', space=vmem, size = 0x6000, scoped, tag = 'scratch operand']
  #allocation9 [shape = 'f32[6,6,64]{2,1,0:T(8,128)}', space=vmem, size = 0x6000, scoped, tag = 'scratch operand']
  #allocation10 [shape = 'f32[6,6,64]{2,1,0:T(8,128)}', space=vmem, size = 0x6000, scoped, tag = 'scratch operand']
  #allocation11 [shape = 'f32[4,4,64]{2,1,0:T(4,128)}', space=vmem, size = 0x2000, scoped, tag = 'scratch operand']
  #allocation12 [shape = 'f32[4,4,128]{2,1,0:T(4,128)}', space=vmem, size = 0x2000, scoped, tag = 'scratch operand']
  #allocation13 [shape = 'f32[4,4,128]{2,1,0:T(4,128)}', space=vmem, size = 0x2000, scoped, tag = 'scratch operand']
  #allocation14 [shape = 'f32[18,18,128]{2,1,0:T(8,128)}', space=vmem, size = 0x36000, scoped, tag = 'scratch operand']
  %s0 = inlined_call_operand.smem [shape: u32[30], index: -1, kind: input, shape index: {}]
  %s1 = sld [smem:[%s0]]
  %s2 = scalar_lea.smem %s0, 1
  %s3 = sld [smem:[%s2]]
  %s4 = scalar_lea.smem %s0, 2
  %s5 = sld [smem:[%s4]]
  %s6 = scalar_lea.smem %s0, 3
  %s7 = sld [smem:[%s6]]
  %s8 = scalar_lea.smem %s0, 4
  %s9 = sld [smem:[%s8]]
  %s10 = scalar_lea.smem %s0, 5
  %s11 = sld [smem:[%s10]]
  %s12 = scalar_lea.smem %s0, 6
  %s13 = sld [smem:[%s12]]
  %s14 = scalar_lea.smem %s0, 7
  %s15 = sld [smem:[%s14]]
  %s16 = scalar_lea.smem %s0, 8
  %s17 = sld [smem:[%s16]]
  %s18 = scalar_lea.smem %s0, 9
  %s19 = sld [smem:[%s18]]
  %s20 = scalar_lea.smem %s0, 10
  %s21 = sld [smem:[%s20]]
  %s22 = scalar_lea.smem %s0, 11
  %s23 = sld [smem:[%s22]]
  %s24 = scalar_lea.smem %s0, 12
  %s25 = sld [smem:[%s24]]
  %s26 = scalar_lea.smem %s0, 13
  %s27 = sld [smem:[%s26]]
  %s28 = scalar_lea.smem %s0, 14
  %s29 = sld [smem:[%s28]]
  %s30 = scalar_lea.smem %s0, 15
  %s31 = sld [smem:[%s30]]
  %s32 = scalar_lea.smem %s0, 16
  %s33 = sld [smem:[%s32]]
  %s34 = scalar_lea.smem %s0, 17
  %s35 = sld [smem:[%s34]]
  %s36 = scalar_lea.smem %s0, 18
  %s37 = sld [smem:[%s36]]
  %s38 = scalar_lea.smem %s0, 19
  %s39 = sld [smem:[%s38]]
  %s40 = scalar_lea.smem %s0, 20
  %s41 = sld [smem:[%s40]]
  %s42 = scalar_lea.smem %s0, 21
  %s43 = sld [smem:[%s42]]
  %s44 = scalar_lea.smem %s0, 22
  %s45 = sld [smem:[%s44]]
  %s46 = scalar_lea.smem %s0, 23
  %s47 = sld [smem:[%s46]]
  %s48 = scalar_lea.smem %s0, 24
  %s49 = sld [smem:[%s48]]
  %s50 = scalar_lea.smem %s0, 25
  %s51 = sld [smem:[%s50]]
  %s52 = scalar_lea.smem %s0, 26
  %s53 = sld [smem:[%s52]]
  %s54 = scalar_lea.smem %s0, 27
  %s55 = sld [smem:[%s54]]
  %s56 = scalar_lea.smem %s0, 28
  %s57 = sld [smem:[%s56]]
  %s58 = scalar_lea.smem %s0, 29
  %s59 = sld [smem:[%s58]]
  %s60 = sld [smem:[#allocation0]]
  $region244: #{forward.1} parent=0
    _
  %s62 = ssub.s32 1, %s60
  %s63 = scalar_select 0, %s62, %s60
  $region1: #{forward.1} parent=0
    #allocation15 [shape = 'u8[512]{0}', space=vmem, size = 0x400, scoped, tag = 'input window, operand 27, single buffered']
    #allocation16 [shape = 's32[2]{0}', space=sflag, size = 0x8, scoped, tag = 'scoped memory for forward.1']
    %64 = vsyncpa [#allocation16], 0
    loop: start=0, step=1, limit=4
    $region2: #{forward.1} parent=1 // loop_pre_header
      _
    $region3: #{forward.1} parent=1 // loop_header
      %s66 = sphi 0, %s70
      %p67 = scmp.ge.s32.totalorder %s66, 4
      %s76 = sphi 0, %s78
      %s79 = sphi 0, %s76
      %s80 = sphi 0, %s79
      %s96 = sphi 0, %s80
      %s100 = sphi 0, %s100
      %s102 = sphi 0, %s100
      %s103 = sphi 0, %s102
      %s117 = sphi 0, %s103
      %s121 = sphi 0, %s121
      %s123 = sphi 0, %s121
      %s124 = sphi 0, %s123
      %s138 = sphi 0, %s124
      %s142 = sphi 0, %s142
      %s144 = sphi 0, %s142
      %s145 = sphi 0, %s144
      %s159 = sphi 0, %s145
      %s163 = sphi 0, %s163
      %s165 = sphi 0, %s163
      %s166 = sphi 0, %s165
      %s180 = sphi 0, %s166
      %s184 = sphi 0, %s184
      %s186 = sphi 0, %s184
      %s187 = sphi 0, %s186
      %s201 = sphi 0, %s187
      %s205 = sphi 0, %s205
      %s207 = sphi 0, %s205
      %s208 = sphi 0, %s207
      %s222 = sphi 0, %s208
      %s226 = sphi 0, %s226
      %s228 = sphi 0, %s226
      %s229 = sphi 0, %s228
      %s243 = sphi 0, %s229
      %s247 = sphi 0, %s247
      %s249 = sphi 0, %s247
      %s250 = sphi 0, %s249
      %s264 = sphi 0, %s250
      %s268 = sphi 0, %s268
      %s270 = sphi 0, %s268
      %s271 = sphi 0, %s270
      %s285 = sphi 0, %s271
      %s289 = sphi 0, %s289
      %s291 = sphi 0, %s289
      %s292 = sphi 0, %s291
      %s306 = sphi 0, %s292
      %s310 = sphi 0, %s310
      %s312 = sphi 0, %s310
      %s313 = sphi 0, %s312
      %s327 = sphi 0, %s313
      %s331 = sphi 0, %s331
      %s333 = sphi 0, %s331
      %s334 = sphi 0, %s333
      %s348 = sphi 0, %s334
      %s352 = sphi 0, %s352
      %s354 = sphi 0, %s352
      %s355 = sphi 0, %s354
      %s369 = sphi 0, %s355
      %s373 = sphi 0, %s373
      %s375 = sphi 0, %s373
      %s376 = sphi 0, %s375
      %s390 = sphi 0, %s376
      %s394 = sphi 0, %s394
      %s396 = sphi 0, %s394
      %s397 = sphi 0, %s396
      %s411 = sphi 0, %s397
      %s415 = sphi 0, %s415
      %s417 = sphi 0, %s415
      %s418 = sphi 0, %s417
      %s432 = sphi 0, %s418
      %s436 = sphi 0, %s436
      %s438 = sphi 0, %s436
      %s439 = sphi 0, %s438
      %s453 = sphi 0, %s439
      %s457 = sphi 0, %s457
      %s459 = sphi 0, %s457
      %s460 = sphi 0, %s459
      %s474 = sphi 0, %s460
      %s478 = sphi 0, %s478
      %s480 = sphi 0, %s478
      %s481 = sphi 0, %s480
      %s495 = sphi 0, %s481
      %s499 = sphi 0, %s499
      %s501 = sphi 0, %s499
      %s502 = sphi 0, %s501
      %s516 = sphi 0, %s502
      %s520 = sphi 0, %s520
      %s522 = sphi 0, %s520
      %s523 = sphi 0, %s522
      %s537 = sphi 0, %s523
      %s541 = sphi 0, %s541
      %s543 = sphi 0, %s541
      %s544 = sphi 0, %s543
      %s558 = sphi 0, %s544
      %s562 = sphi 0, %s562
      %s564 = sphi 0, %s562
      %s565 = sphi 0, %s564
      %s579 = sphi 0, %s565
      %s583 = sphi 0, %s583
      %s585 = sphi 0, %s583
      %s586 = sphi 0, %s585
      %s600 = sphi 0, %s586
      %s604 = sphi 0, %s604
      %s606 = sphi 0, %s604
      %s607 = sphi 0, %s606
      %s621 = sphi 0, %s607
      %s625 = sphi 0, %s625
      %s627 = sphi 0, %s625
      %s628 = sphi 0, %s627
      %s642 = sphi 0, %s628
      %s646 = sphi 0, %s646
      %s648 = sphi 0, %s646
      %s649 = sphi 0, %s648
      %s663 = sphi 0, %s649
      %s667 = sphi 0, %s667
      %s669 = sphi 0, %s667
      %s670 = sphi 0, %s669
      %s684 = sphi 0, %s670
      %s690 = sphi 0, %s692
      %s693 = sphi 0, %s690
      %s694 = sphi 0, %s693
      %s710 = sphi 0, %s694
    $region4: #{forward.1} parent=1 // loop_header_branch
      %69 = sbr.rel (%p67) target = $region8
    $region5: #{forward.1} parent=1 // loop_body
      %s71 = ssub.s32 %s66, 1
      %s72 = ssub.s32 %s66, 2
      %s73 = sadd.s32 %s66, 1
      %s74 = ssub.s32 %s66, %s73
      %p75 = scmp.eq.s32.totalorder %s74, 0
      %s77 = sadd.s32 %s76, 1
      %s78 = scalar_select %p75, %s76, %s77
      %p81 = pneg %p75
      %p82 = scmp.eq.s32.totalorder %s66, 1
      %p83 = por %p81, %p82
      %p84 = scmp.ne.s32.totalorder %s76, %s79
      %p85 = scmp.eq.s32.totalorder %s66, 0
      %p86 = por %p84, %p85
      %p87 = scmp.ne.s32.totalorder %s76, %s79
      %p88 = scmp.eq.s32.totalorder %s71, 1
      %p89 = por %p87, %p88
      %p90 = scmp.ne.s32.totalorder %s79, %s80
      %p91 = scmp.eq.s32.totalorder %s71, 0
      %p92 = por %p90, %p91
      %p93 = scmp.ne.s32.totalorder %s79, %s80
      %p94 = scmp.eq.s32.totalorder %s72, 1
      %p95 = por %p93, %p94
      %p97 = scmp.ne.s32.totalorder %s80, %s96
      %p98 = scmp.eq.s32.totalorder %s72, 0
      %p99 = por %p97, %p98
      %s101 = sadd.s32 %s100, 1
      %p104 = scmp.eq.s32.totalorder %s66, 1
      %p105 = scmp.ne.s32.totalorder %s100, %s102
      %p106 = scmp.eq.s32.totalorder %s66, 0
      %p107 = por %p105, %p106
      %p108 = scmp.ne.s32.totalorder %s100, %s102
      %p109 = scmp.eq.s32.totalorder %s71, 1
      %p110 = por %p108, %p109
      %p111 = scmp.ne.s32.totalorder %s102, %s103
      %p112 = scmp.eq.s32.totalorder %s71, 0
      %p113 = por %p111, %p112
      %p114 = scmp.ne.s32.totalorder %s102, %s103
      %p115 = scmp.eq.s32.totalorder %s72, 1
      %p116 = por %p114, %p115
      %p118 = scmp.ne.s32.totalorder %s103, %s117
      %p119 = scmp.eq.s32.totalorder %s72, 0
      %p120 = por %p118, %p119
      %s122 = sadd.s32 %s121, 1
      %p125 = scmp.eq.s32.totalorder %s66, 1
      %p126 = scmp.ne.s32.totalorder %s121, %s123
      %p127 = scmp.eq.s32.totalorder %s66, 0
      %p128 = por %p126, %p127
      %p129 = scmp.ne.s32.totalorder %s121, %s123
      %p130 = scmp.eq.s32.totalorder %s71, 1
      %p131 = por %p129, %p130
      %p132 = scmp.ne.s32.totalorder %s123, %s124
      %p133 = scmp.eq.s32.totalorder %s71, 0
      %p134 = por %p132, %p133
      %p135 = scmp.ne.s32.totalorder %s123, %s124
      %p136 = scmp.eq.s32.totalorder %s72, 1
      %p137 = por %p135, %p136
      %p139 = scmp.ne.s32.totalorder %s124, %s138
      %p140 = scmp.eq.s32.totalorder %s72, 0
      %p141 = por %p139, %p140
      %s143 = sadd.s32 %s142, 1
      %p146 = scmp.eq.s32.totalorder %s66, 1
      %p147 = scmp.ne.s32.totalorder %s142, %s144
      %p148 = scmp.eq.s32.totalorder %s66, 0
      %p149 = por %p147, %p148
      %p150 = scmp.ne.s32.totalorder %s142, %s144
      %p151 = scmp.eq.s32.totalorder %s71, 1
      %p152 = por %p150, %p151
      %p153 = scmp.ne.s32.totalorder %s144, %s145
      %p154 = scmp.eq.s32.totalorder %s71, 0
      %p155 = por %p153, %p154
      %p156 = scmp.ne.s32.totalorder %s144, %s145
      %p157 = scmp.eq.s32.totalorder %s72, 1
      %p158 = por %p156, %p157
      %p160 = scmp.ne.s32.totalorder %s145, %s159
      %p161 = scmp.eq.s32.totalorder %s72, 0
      %p162 = por %p160, %p161
      %s164 = sadd.s32 %s163, 1
      %p167 = scmp.eq.s32.totalorder %s66, 1
      %p168 = scmp.ne.s32.totalorder %s163, %s165
      %p169 = scmp.eq.s32.totalorder %s66, 0
      %p170 = por %p168, %p169
      %p171 = scmp.ne.s32.totalorder %s163, %s165
      %p172 = scmp.eq.s32.totalorder %s71, 1
      %p173 = por %p171, %p172
      %p174 = scmp.ne.s32.totalorder %s165, %s166
      %p175 = scmp.eq.s32.totalorder %s71, 0
      %p176 = por %p174, %p175
      %p177 = scmp.ne.s32.totalorder %s165, %s166
      %p178 = scmp.eq.s32.totalorder %s72, 1
      %p179 = por %p177, %p178
      %p181 = scmp.ne.s32.totalorder %s166, %s180
      %p182 = scmp.eq.s32.totalorder %s72, 0
      %p183 = por %p181, %p182
      %s185 = sadd.s32 %s184, 1
      %p188 = scmp.eq.s32.totalorder %s66, 1
      %p189 = scmp.ne.s32.totalorder %s184, %s186
      %p190 = scmp.eq.s32.totalorder %s66, 0
      %p191 = por %p189, %p190
      %p192 = scmp.ne.s32.totalorder %s184, %s186
      %p193 = scmp.eq.s32.totalorder %s71, 1
      %p194 = por %p192, %p193
      %p195 = scmp.ne.s32.totalorder %s186, %s187
      %p196 = scmp.eq.s32.totalorder %s71, 0
      %p197 = por %p195, %p196
      %p198 = scmp.ne.s32.totalorder %s186, %s187
      %p199 = scmp.eq.s32.totalorder %s72, 1
      %p200 = por %p198, %p199
      %p202 = scmp.ne.s32.totalorder %s187, %s201
      %p203 = scmp.eq.s32.totalorder %s72, 0
      %p204 = por %p202, %p203
      %s206 = sadd.s32 %s205, 1
      %p209 = scmp.eq.s32.totalorder %s66, 1
      %p210 = scmp.ne.s32.totalorder %s205, %s207
      %p211 = scmp.eq.s32.totalorder %s66, 0
      %p212 = por %p210, %p211
      %p213 = scmp.ne.s32.totalorder %s205, %s207
      %p214 = scmp.eq.s32.totalorder %s71, 1
      %p215 = por %p213, %p214
      %p216 = scmp.ne.s32.totalorder %s207, %s208
      %p217 = scmp.eq.s32.totalorder %s71, 0
      %p218 = por %p216, %p217
      %p219 = scmp.ne.s32.totalorder %s207, %s208
      %p220 = scmp.eq.s32.totalorder %s72, 1
      %p221 = por %p219, %p220
      %p223 = scmp.ne.s32.totalorder %s208, %s222
      %p224 = scmp.eq.s32.totalorder %s72, 0
      %p225 = por %p223, %p224
      %s227 = sadd.s32 %s226, 1
      %p230 = scmp.eq.s32.totalorder %s66, 1
      %p231 = scmp.ne.s32.totalorder %s226, %s228
      %p232 = scmp.eq.s32.totalorder %s66, 0
      %p233 = por %p231, %p232
      %p234 = scmp.ne.s32.totalorder %s226, %s228
      %p235 = scmp.eq.s32.totalorder %s71, 1
      %p236 = por %p234, %p235
      %p237 = scmp.ne.s32.totalorder %s228, %s229
      %p238 = scmp.eq.s32.totalorder %s71, 0
      %p239 = por %p237, %p238
      %p240 = scmp.ne.s32.totalorder %s228, %s229
      %p241 = scmp.eq.s32.totalorder %s72, 1
      %p242 = por %p240, %p241
      %p244 = scmp.ne.s32.totalorder %s229, %s243
      %p245 = scmp.eq.s32.totalorder %s72, 0
      %p246 = por %p244, %p245
      %s248 = sadd.s32 %s247, 1
      %p251 = scmp.eq.s32.totalorder %s66, 1
      %p252 = scmp.ne.s32.totalorder %s247, %s249
      %p253 = scmp.eq.s32.totalorder %s66, 0
      %p254 = por %p252, %p253
      %p255 = scmp.ne.s32.totalorder %s247, %s249
      %p256 = scmp.eq.s32.totalorder %s71, 1
      %p257 = por %p255, %p256
      %p258 = scmp.ne.s32.totalorder %s249, %s250
      %p259 = scmp.eq.s32.totalorder %s71, 0
      %p260 = por %p258, %p259
      %p261 = scmp.ne.s32.totalorder %s249, %s250
      %p262 = scmp.eq.s32.totalorder %s72, 1
      %p263 = por %p261, %p262
      %p265 = scmp.ne.s32.totalorder %s250, %s264
      %p266 = scmp.eq.s32.totalorder %s72, 0
      %p267 = por %p265, %p266
      %s269 = sadd.s32 %s268, 1
      %p272 = scmp.eq.s32.totalorder %s66, 1
      %p273 = scmp.ne.s32.totalorder %s268, %s270
      %p274 = scmp.eq.s32.totalorder %s66, 0
      %p275 = por %p273, %p274
      %p276 = scmp.ne.s32.totalorder %s268, %s270
      %p277 = scmp.eq.s32.totalorder %s71, 1
      %p278 = por %p276, %p277
      %p279 = scmp.ne.s32.totalorder %s270, %s271
      %p280 = scmp.eq.s32.totalorder %s71, 0
      %p281 = por %p279, %p280
      %p282 = scmp.ne.s32.totalorder %s270, %s271
      %p283 = scmp.eq.s32.totalorder %s72, 1
      %p284 = por %p282, %p283
      %p286 = scmp.ne.s32.totalorder %s271, %s285
      %p287 = scmp.eq.s32.totalorder %s72, 0
      %p288 = por %p286, %p287
      %s290 = sadd.s32 %s289, 1
      %p293 = scmp.eq.s32.totalorder %s66, 1
      %p294 = scmp.ne.s32.totalorder %s289, %s291
      %p295 = scmp.eq.s32.totalorder %s66, 0
      %p296 = por %p294, %p295
      %p297 = scmp.ne.s32.totalorder %s289, %s291
      %p298 = scmp.eq.s32.totalorder %s71, 1
      %p299 = por %p297, %p298
      %p300 = scmp.ne.s32.totalorder %s291, %s292
      %p301 = scmp.eq.s32.totalorder %s71, 0
      %p302 = por %p300, %p301
      %p303 = scmp.ne.s32.totalorder %s291, %s292
      %p304 = scmp.eq.s32.totalorder %s72, 1
      %p305 = por %p303, %p304
      %p307 = scmp.ne.s32.totalorder %s292, %s306
      %p308 = scmp.eq.s32.totalorder %s72, 0
      %p309 = por %p307, %p308
      %s311 = sadd.s32 %s310, 1
      %p314 = scmp.eq.s32.totalorder %s66, 1
      %p315 = scmp.ne.s32.totalorder %s310, %s312
      %p316 = scmp.eq.s32.totalorder %s66, 0
      %p317 = por %p315, %p316
      %p318 = scmp.ne.s32.totalorder %s310, %s312
      %p319 = scmp.eq.s32.totalorder %s71, 1
      %p320 = por %p318, %p319
      %p321 = scmp.ne.s32.totalorder %s312, %s313
      %p322 = scmp.eq.s32.totalorder %s71, 0
      %p323 = por %p321, %p322
      %p324 = scmp.ne.s32.totalorder %s312, %s313
      %p325 = scmp.eq.s32.totalorder %s72, 1
      %p326 = por %p324, %p325
      %p328 = scmp.ne.s32.totalorder %s313, %s327
      %p329 = scmp.eq.s32.totalorder %s72, 0
      %p330 = por %p328, %p329
      %s332 = sadd.s32 %s331, 1
      %p335 = scmp.eq.s32.totalorder %s66, 1
      %p336 = scmp.ne.s32.totalorder %s331, %s333
      %p337 = scmp.eq.s32.totalorder %s66, 0
      %p338 = por %p336, %p337
      %p339 = scmp.ne.s32.totalorder %s331, %s333
      %p340 = scmp.eq.s32.totalorder %s71, 1
      %p341 = por %p339, %p340
      %p342 = scmp.ne.s32.totalorder %s333, %s334
      %p343 = scmp.eq.s32.totalorder %s71, 0
      %p344 = por %p342, %p343
      %p345 = scmp.ne.s32.totalorder %s333, %s334
      %p346 = scmp.eq.s32.totalorder %s72, 1
      %p347 = por %p345, %p346
      %p349 = scmp.ne.s32.totalorder %s334, %s348
      %p350 = scmp.eq.s32.totalorder %s72, 0
      %p351 = por %p349, %p350
      %s353 = sadd.s32 %s352, 1
      %p356 = scmp.eq.s32.totalorder %s66, 1
      %p357 = scmp.ne.s32.totalorder %s352, %s354
      %p358 = scmp.eq.s32.totalorder %s66, 0
      %p359 = por %p357, %p358
      %p360 = scmp.ne.s32.totalorder %s352, %s354
      %p361 = scmp.eq.s32.totalorder %s71, 1
      %p362 = por %p360, %p361
      %p363 = scmp.ne.s32.totalorder %s354, %s355
      %p364 = scmp.eq.s32.totalorder %s71, 0
      %p365 = por %p363, %p364
      %p366 = scmp.ne.s32.totalorder %s354, %s355
      %p367 = scmp.eq.s32.totalorder %s72, 1
      %p368 = por %p366, %p367
      %p370 = scmp.ne.s32.totalorder %s355, %s369
      %p371 = scmp.eq.s32.totalorder %s72, 0
      %p372 = por %p370, %p371
      %s374 = sadd.s32 %s373, 1
      %p377 = scmp.eq.s32.totalorder %s66, 1
      %p378 = scmp.ne.s32.totalorder %s373, %s375
      %p379 = scmp.eq.s32.totalorder %s66, 0
      %p380 = por %p378, %p379
      %p381 = scmp.ne.s32.totalorder %s373, %s375
      %p382 = scmp.eq.s32.totalorder %s71, 1
      %p383 = por %p381, %p382
      %p384 = scmp.ne.s32.totalorder %s375, %s376
      %p385 = scmp.eq.s32.totalorder %s71, 0
      %p386 = por %p384, %p385
      %p387 = scmp.ne.s32.totalorder %s375, %s376
      %p388 = scmp.eq.s32.totalorder %s72, 1
      %p389 = por %p387, %p388
      %p391 = scmp.ne.s32.totalorder %s376, %s390
      %p392 = scmp.eq.s32.totalorder %s72, 0
      %p393 = por %p391, %p392
      %s395 = sadd.s32 %s394, 1
      %p398 = scmp.eq.s32.totalorder %s66, 1
      %p399 = scmp.ne.s32.totalorder %s394, %s396
      %p400 = scmp.eq.s32.totalorder %s66, 0
      %p401 = por %p399, %p400
      %p402 = scmp.ne.s32.totalorder %s394, %s396
      %p403 = scmp.eq.s32.totalorder %s71, 1
      %p404 = por %p402, %p403
      %p405 = scmp.ne.s32.totalorder %s396, %s397
      %p406 = scmp.eq.s32.totalorder %s71, 0
      %p407 = por %p405, %p406
      %p408 = scmp.ne.s32.totalorder %s396, %s397
      %p409 = scmp.eq.s32.totalorder %s72, 1
      %p410 = por %p408, %p409
      %p412 = scmp.ne.s32.totalorder %s397, %s411
      %p413 = scmp.eq.s32.totalorder %s72, 0
      %p414 = por %p412, %p413
      %s416 = sadd.s32 %s415, 1
      %p419 = scmp.eq.s32.totalorder %s66, 1
      %p420 = scmp.ne.s32.totalorder %s415, %s417
      %p421 = scmp.eq.s32.totalorder %s66, 0
      %p422 = por %p420, %p421
      %p423 = scmp.ne.s32.totalorder %s415, %s417
      %p424 = scmp.eq.s32.totalorder %s71, 1
      %p425 = por %p423, %p424
      %p426 = scmp.ne.s32.totalorder %s417, %s418
      %p427 = scmp.eq.s32.totalorder %s71, 0
      %p428 = por %p426, %p427
      %p429 = scmp.ne.s32.totalorder %s417, %s418
      %p430 = scmp.eq.s32.totalorder %s72, 1
      %p431 = por %p429, %p430
      %p433 = scmp.ne.s32.totalorder %s418, %s432
      %p434 = scmp.eq.s32.totalorder %s72, 0
      %p435 = por %p433, %p434
      %s437 = sadd.s32 %s436, 1
      %p440 = scmp.eq.s32.totalorder %s66, 1
      %p441 = scmp.ne.s32.totalorder %s436, %s438
      %p442 = scmp.eq.s32.totalorder %s66, 0
      %p443 = por %p441, %p442
      %p444 = scmp.ne.s32.totalorder %s436, %s438
      %p445 = scmp.eq.s32.totalorder %s71, 1
      %p446 = por %p444, %p445
      %p447 = scmp.ne.s32.totalorder %s438, %s439
      %p448 = scmp.eq.s32.totalorder %s71, 0
      %p449 = por %p447, %p448
      %p450 = scmp.ne.s32.totalorder %s438, %s439
      %p451 = scmp.eq.s32.totalorder %s72, 1
      %p452 = por %p450, %p451
      %p454 = scmp.ne.s32.totalorder %s439, %s453
      %p455 = scmp.eq.s32.totalorder %s72, 0
      %p456 = por %p454, %p455
      %s458 = sadd.s32 %s457, 1
      %p461 = scmp.eq.s32.totalorder %s66, 1
      %p462 = scmp.ne.s32.totalorder %s457, %s459
      %p463 = scmp.eq.s32.totalorder %s66, 0
      %p464 = por %p462, %p463
      %p465 = scmp.ne.s32.totalorder %s457, %s459
      %p466 = scmp.eq.s32.totalorder %s71, 1
      %p467 = por %p465, %p466
      %p468 = scmp.ne.s32.totalorder %s459, %s460
      %p469 = scmp.eq.s32.totalorder %s71, 0
      %p470 = por %p468, %p469
      %p471 = scmp.ne.s32.totalorder %s459, %s460
      %p472 = scmp.eq.s32.totalorder %s72, 1
      %p473 = por %p471, %p472
      %p475 = scmp.ne.s32.totalorder %s460, %s474
      %p476 = scmp.eq.s32.totalorder %s72, 0
      %p477 = por %p475, %p476
      %s479 = sadd.s32 %s478, 1
      %p482 = scmp.eq.s32.totalorder %s66, 1
      %p483 = scmp.ne.s32.totalorder %s478, %s480
      %p484 = scmp.eq.s32.totalorder %s66, 0
      %p485 = por %p483, %p484
      %p486 = scmp.ne.s32.totalorder %s478, %s480
      %p487 = scmp.eq.s32.totalorder %s71, 1
      %p488 = por %p486, %p487
      %p489 = scmp.ne.s32.totalorder %s480, %s481
      %p490 = scmp.eq.s32.totalorder %s71, 0
      %p491 = por %p489, %p490
      %p492 = scmp.ne.s32.totalorder %s480, %s481
      %p493 = scmp.eq.s32.totalorder %s72, 1
      %p494 = por %p492, %p493
      %p496 = scmp.ne.s32.totalorder %s481, %s495
      %p497 = scmp.eq.s32.totalorder %s72, 0
      %p498 = por %p496, %p497
      %s500 = sadd.s32 %s499, 1
      %p503 = scmp.eq.s32.totalorder %s66, 1
      %p504 = scmp.ne.s32.totalorder %s499, %s501
      %p505 = scmp.eq.s32.totalorder %s66, 0
      %p506 = por %p504, %p505
      %p507 = scmp.ne.s32.totalorder %s499, %s501
      %p508 = scmp.eq.s32.totalorder %s71, 1
      %p509 = por %p507, %p508
      %p510 = scmp.ne.s32.totalorder %s501, %s502
      %p511 = scmp.eq.s32.totalorder %s71, 0
      %p512 = por %p510, %p511
      %p513 = scmp.ne.s32.totalorder %s501, %s502
      %p514 = scmp.eq.s32.totalorder %s72, 1
      %p515 = por %p513, %p514
      %p517 = scmp.ne.s32.totalorder %s502, %s516
      %p518 = scmp.eq.s32.totalorder %s72, 0
      %p519 = por %p517, %p518
      %s521 = sadd.s32 %s520, 1
      %p524 = scmp.eq.s32.totalorder %s66, 1
      %p525 = scmp.ne.s32.totalorder %s520, %s522
      %p526 = scmp.eq.s32.totalorder %s66, 0
      %p527 = por %p525, %p526
      %p528 = scmp.ne.s32.totalorder %s520, %s522
      %p529 = scmp.eq.s32.totalorder %s71, 1
      %p530 = por %p528, %p529
      %p531 = scmp.ne.s32.totalorder %s522, %s523
      %p532 = scmp.eq.s32.totalorder %s71, 0
      %p533 = por %p531, %p532
      %p534 = scmp.ne.s32.totalorder %s522, %s523
      %p535 = scmp.eq.s32.totalorder %s72, 1
      %p536 = por %p534, %p535
      %p538 = scmp.ne.s32.totalorder %s523, %s537
      %p539 = scmp.eq.s32.totalorder %s72, 0
      %p540 = por %p538, %p539
      %s542 = sadd.s32 %s541, 1
      %p545 = scmp.eq.s32.totalorder %s66, 1
      %p546 = scmp.ne.s32.totalorder %s541, %s543
      %p547 = scmp.eq.s32.totalorder %s66, 0
      %p548 = por %p546, %p547
      %p549 = scmp.ne.s32.totalorder %s541, %s543
      %p550 = scmp.eq.s32.totalorder %s71, 1
      %p551 = por %p549, %p550
      %p552 = scmp.ne.s32.totalorder %s543, %s544
      %p553 = scmp.eq.s32.totalorder %s71, 0
      %p554 = por %p552, %p553
      %p555 = scmp.ne.s32.totalorder %s543, %s544
      %p556 = scmp.eq.s32.totalorder %s72, 1
      %p557 = por %p555, %p556
      %p559 = scmp.ne.s32.totalorder %s544, %s558
      %p560 = scmp.eq.s32.totalorder %s72, 0
      %p561 = por %p559, %p560
      %s563 = sadd.s32 %s562, 1
      %p566 = scmp.eq.s32.totalorder %s66, 1
      %p567 = scmp.ne.s32.totalorder %s562, %s564
      %p568 = scmp.eq.s32.totalorder %s66, 0
      %p569 = por %p567, %p568
      %p570 = scmp.ne.s32.totalorder %s562, %s564
      %p571 = scmp.eq.s32.totalorder %s71, 1
      %p572 = por %p570, %p571
      %p573 = scmp.ne.s32.totalorder %s564, %s565
      %p574 = scmp.eq.s32.totalorder %s71, 0
      %p575 = por %p573, %p574
      %p576 = scmp.ne.s32.totalorder %s564, %s565
      %p577 = scmp.eq.s32.totalorder %s72, 1
      %p578 = por %p576, %p577
      %p580 = scmp.ne.s32.totalorder %s565, %s579
      %p581 = scmp.eq.s32.totalorder %s72, 0
      %p582 = por %p580, %p581
      %s584 = sadd.s32 %s583, 1
      %p587 = scmp.eq.s32.totalorder %s66, 1
      %p588 = scmp.ne.s32.totalorder %s583, %s585
      %p589 = scmp.eq.s32.totalorder %s66, 0
      %p590 = por %p588, %p589
      %p591 = scmp.ne.s32.totalorder %s583, %s585
      %p592 = scmp.eq.s32.totalorder %s71, 1
      %p593 = por %p591, %p592
      %p594 = scmp.ne.s32.totalorder %s585, %s586
      %p595 = scmp.eq.s32.totalorder %s71, 0
      %p596 = por %p594, %p595
      %p597 = scmp.ne.s32.totalorder %s585, %s586
      %p598 = scmp.eq.s32.totalorder %s72, 1
      %p599 = por %p597, %p598
      %p601 = scmp.ne.s32.totalorder %s586, %s600
      %p602 = scmp.eq.s32.totalorder %s72, 0
      %p603 = por %p601, %p602
      %s605 = sadd.s32 %s604, 1
      %p608 = scmp.eq.s32.totalorder %s66, 1
      %p609 = scmp.ne.s32.totalorder %s604, %s606
      %p610 = scmp.eq.s32.totalorder %s66, 0
      %p611 = por %p609, %p610
      %p612 = scmp.ne.s32.totalorder %s604, %s606
      %p613 = scmp.eq.s32.totalorder %s71, 1
      %p614 = por %p612, %p613
      %p615 = scmp.ne.s32.totalorder %s606, %s607
      %p616 = scmp.eq.s32.totalorder %s71, 0
      %p617 = por %p615, %p616
      %p618 = scmp.ne.s32.totalorder %s606, %s607
      %p619 = scmp.eq.s32.totalorder %s72, 1
      %p620 = por %p618, %p619
      %p622 = scmp.ne.s32.totalorder %s607, %s621
      %p623 = scmp.eq.s32.totalorder %s72, 0
      %p624 = por %p622, %p623
      %s626 = sadd.s32 %s625, 1
      %p629 = scmp.eq.s32.totalorder %s66, 1
      %p630 = scmp.ne.s32.totalorder %s625, %s627
      %p631 = scmp.eq.s32.totalorder %s66, 0
      %p632 = por %p630, %p631
      %p633 = scmp.ne.s32.totalorder %s625, %s627
      %p634 = scmp.eq.s32.totalorder %s71, 1
      %p635 = por %p633, %p634
      %p636 = scmp.ne.s32.totalorder %s627, %s628
      %p637 = scmp.eq.s32.totalorder %s71, 0
      %p638 = por %p636, %p637
      %p639 = scmp.ne.s32.totalorder %s627, %s628
      %p640 = scmp.eq.s32.totalorder %s72, 1
      %p641 = por %p639, %p640
      %p643 = scmp.ne.s32.totalorder %s628, %s642
      %p644 = scmp.eq.s32.totalorder %s72, 0
      %p645 = por %p643, %p644
      %s647 = sadd.s32 %s646, 1
      %p650 = scmp.eq.s32.totalorder %s66, 1
      %p651 = scmp.ne.s32.totalorder %s646, %s648
      %p652 = scmp.eq.s32.totalorder %s66, 0
      %p653 = por %p651, %p652
      %p654 = scmp.ne.s32.totalorder %s646, %s648
      %p655 = scmp.eq.s32.totalorder %s71, 1
      %p656 = por %p654, %p655
      %p657 = scmp.ne.s32.totalorder %s648, %s649
      %p658 = scmp.eq.s32.totalorder %s71, 0
      %p659 = por %p657, %p658
      %p660 = scmp.ne.s32.totalorder %s648, %s649
      %p661 = scmp.eq.s32.totalorder %s72, 1
      %p662 = por %p660, %p661
      %p664 = scmp.ne.s32.totalorder %s649, %s663
      %p665 = scmp.eq.s32.totalorder %s72, 0
      %p666 = por %p664, %p665
      %s668 = sadd.s32 %s667, 1
      %p671 = scmp.eq.s32.totalorder %s66, 1
      %p672 = scmp.ne.s32.totalorder %s667, %s669
      %p673 = scmp.eq.s32.totalorder %s66, 0
      %p674 = por %p672, %p673
      %p675 = scmp.ne.s32.totalorder %s667, %s669
      %p676 = scmp.eq.s32.totalorder %s71, 1
      %p677 = por %p675, %p676
      %p678 = scmp.ne.s32.totalorder %s669, %s670
      %p679 = scmp.eq.s32.totalorder %s71, 0
      %p680 = por %p678, %p679
      %p681 = scmp.ne.s32.totalorder %s669, %s670
      %p682 = scmp.eq.s32.totalorder %s72, 1
      %p683 = por %p681, %p682
      %p685 = scmp.ne.s32.totalorder %s670, %s684
      %p686 = scmp.eq.s32.totalorder %s72, 0
      %p687 = por %p685, %p686
      %s688 = ssub.s32 %s66, %s73
      %p689 = scmp.eq.s32.totalorder %s688, 0
      %s691 = sadd.s32 %s690, 1
      %s692 = scalar_select %p689, %s690, %s691
      %p695 = pneg %p689
      %p696 = scmp.eq.s32.totalorder %s66, 1
      %p697 = por %p695, %p696
      %p698 = scmp.ne.s32.totalorder %s690, %s693
      %p699 = scmp.eq.s32.totalorder %s66, 0
      %p700 = por %p698, %p699
      %p701 = scmp.ne.s32.totalorder %s690, %s693
      %p702 = scmp.eq.s32.totalorder %s71, 1
      %p703 = por %p701, %p702
      %p704 = scmp.ne.s32.totalorder %s693, %s694
      %p705 = scmp.eq.s32.totalorder %s71, 0
      %p706 = por %p704, %p705
      %p707 = scmp.ne.s32.totalorder %s693, %s694
      %p708 = scmp.eq.s32.totalorder %s72, 1
      %p709 = por %p707, %p708
      %p711 = scmp.ne.s32.totalorder %s694, %s710
      %p712 = scmp.eq.s32.totalorder %s72, 0
      %p713 = por %p711, %p712
      %p714 = scmp.le.s32.totalorder 1, %s66
      %p715 = scmp.lt.s32.totalorder %s66, 3
      %p716 = pnand %p714, %p715
      %p717 = pneg %p716
      // Predicated region
      $region9: #{forward.1} parent=5 // pred_check
        _
      $region10: #{forward.1} parent=5 // pred_check_branch
        %719 = sbr.rel (%p716) target = $region12
      $region11: #{forward.1} parent=5 // pred_region
        %s720 = ssub.s32 %s66, 1
        // Predicated region
        $region13: #{forward.1} parent=11 // pred_check
          %p721 = pneg %p113
        $region14: #{forward.1} parent=11 // pred_check_branch
          %723 = sbr.rel (%p721) target = $region16
        $region15: #{forward.1} parent=11 // pred_region
          _
        $region16: #{forward.1} parent=11 // pred_fallthru
          _
        // Predicated region
        $region17: #{forward.1} parent=11 // pred_check
          %p724 = pneg %p134
        $region18: #{forward.1} parent=11 // pred_check_branch
          %726 = sbr.rel (%p724) target = $region20
        $region19: #{forward.1} parent=11 // pred_region
          _
        $region20: #{forward.1} parent=11 // pred_fallthru
          _
        // Predicated region
        $region21: #{forward.1} parent=11 // pred_check
          %p727 = pneg %p155
        $region22: #{forward.1} parent=11 // pred_check_branch
          %729 = sbr.rel (%p727) target = $region24
        $region23: #{forward.1} parent=11 // pred_region
          _
        $region24: #{forward.1} parent=11 // pred_fallthru
          _
        // Predicated region
        $region25: #{forward.1} parent=11 // pred_check
          %p730 = pneg %p176
        $region26: #{forward.1} parent=11 // pred_check_branch
          %732 = sbr.rel (%p730) target = $region28
        $region27: #{forward.1} parent=11 // pred_region
          _
        $region28: #{forward.1} parent=11 // pred_fallthru
          _
        // Predicated region
        $region29: #{forward.1} parent=11 // pred_check
          %p733 = pneg %p197
        $region30: #{forward.1} parent=11 // pred_check_branch
          %735 = sbr.rel (%p733) target = $region32
        $region31: #{forward.1} parent=11 // pred_region
          _
        $region32: #{forward.1} parent=11 // pred_fallthru
          _
        // Predicated region
        $region33: #{forward.1} parent=11 // pred_check
          %p736 = pneg %p218
        $region34: #{forward.1} parent=11 // pred_check_branch
          %738 = sbr.rel (%p736) target = $region36
        $region35: #{forward.1} parent=11 // pred_region
          _
        $region36: #{forward.1} parent=11 // pred_fallthru
          _
        // Predicated region
        $region37: #{forward.1} parent=11 // pred_check
          %p739 = pneg %p239
        $region38: #{forward.1} parent=11 // pred_check_branch
          %741 = sbr.rel (%p739) target = $region40
        $region39: #{forward.1} parent=11 // pred_region
          _
        $region40: #{forward.1} parent=11 // pred_fallthru
          _
        // Predicated region
        $region41: #{forward.1} parent=11 // pred_check
          %p742 = pneg %p260
        $region42: #{forward.1} parent=11 // pred_check_branch
          %744 = sbr.rel (%p742) target = $region44
        $region43: #{forward.1} parent=11 // pred_region
          _
        $region44: #{forward.1} parent=11 // pred_fallthru
          _
        // Predicated region
        $region45: #{forward.1} parent=11 // pred_check
          %p745 = pneg %p281
        $region46: #{forward.1} parent=11 // pred_check_branch
          %747 = sbr.rel (%p745) target = $region48
        $region47: #{forward.1} parent=11 // pred_region
          _
        $region48: #{forward.1} parent=11 // pred_fallthru
          _
        // Predicated region
        $region49: #{forward.1} parent=11 // pred_check
          %p748 = pneg %p302
        $region50: #{forward.1} parent=11 // pred_check_branch
          %750 = sbr.rel (%p748) target = $region52
        $region51: #{forward.1} parent=11 // pred_region
          _
        $region52: #{forward.1} parent=11 // pred_fallthru
          _
        // Predicated region
        $region53: #{forward.1} parent=11 // pred_check
          %p751 = pneg %p323
        $region54: #{forward.1} parent=11 // pred_check_branch
          %753 = sbr.rel (%p751) target = $region56
        $region55: #{forward.1} parent=11 // pred_region
          _
        $region56: #{forward.1} parent=11 // pred_fallthru
          _
        // Predicated region
        $region57: #{forward.1} parent=11 // pred_check
          %p754 = pneg %p344
        $region58: #{forward.1} parent=11 // pred_check_branch
          %756 = sbr.rel (%p754) target = $region60
        $region59: #{forward.1} parent=11 // pred_region
          _
        $region60: #{forward.1} parent=11 // pred_fallthru
          _
        // Predicated region
        $region61: #{forward.1} parent=11 // pred_check
          %p757 = pneg %p365
        $region62: #{forward.1} parent=11 // pred_check_branch
          %759 = sbr.rel (%p757) target = $region64
        $region63: #{forward.1} parent=11 // pred_region
          _
        $region64: #{forward.1} parent=11 // pred_fallthru
          _
        // Predicated region
        $region65: #{forward.1} parent=11 // pred_check
          %p760 = pneg %p386
        $region66: #{forward.1} parent=11 // pred_check_branch
          %762 = sbr.rel (%p760) target = $region68
        $region67: #{forward.1} parent=11 // pred_region
          _
        $region68: #{forward.1} parent=11 // pred_fallthru
          _
        // Predicated region
        $region69: #{forward.1} parent=11 // pred_check
          %p763 = pneg %p407
        $region70: #{forward.1} parent=11 // pred_check_branch
          %765 = sbr.rel (%p763) target = $region72
        $region71: #{forward.1} parent=11 // pred_region
          _
        $region72: #{forward.1} parent=11 // pred_fallthru
          _
        // Predicated region
        $region73: #{forward.1} parent=11 // pred_check
          %p766 = pneg %p428
        $region74: #{forward.1} parent=11 // pred_check_branch
          %768 = sbr.rel (%p766) target = $region76
        $region75: #{forward.1} parent=11 // pred_region
          _
        $region76: #{forward.1} parent=11 // pred_fallthru
          _
        // Predicated region
        $region77: #{forward.1} parent=11 // pred_check
          %p769 = pneg %p449
        $region78: #{forward.1} parent=11 // pred_check_branch
          %771 = sbr.rel (%p769) target = $region80
        $region79: #{forward.1} parent=11 // pred_region
          _
        $region80: #{forward.1} parent=11 // pred_fallthru
          _
        // Predicated region
        $region81: #{forward.1} parent=11 // pred_check
          %p772 = pneg %p470
        $region82: #{forward.1} parent=11 // pred_check_branch
          %774 = sbr.rel (%p772) target = $region84
        $region83: #{forward.1} parent=11 // pred_region
          _
        $region84: #{forward.1} parent=11 // pred_fallthru
          _
        // Predicated region
        $region85: #{forward.1} parent=11 // pred_check
          %p775 = pneg %p491
        $region86: #{forward.1} parent=11 // pred_check_branch
          %777 = sbr.rel (%p775) target = $region88
        $region87: #{forward.1} parent=11 // pred_region
          _
        $region88: #{forward.1} parent=11 // pred_fallthru
          _
        // Predicated region
        $region89: #{forward.1} parent=11 // pred_check
          %p778 = pneg %p512
        $region90: #{forward.1} parent=11 // pred_check_branch
          %780 = sbr.rel (%p778) target = $region92
        $region91: #{forward.1} parent=11 // pred_region
          _
        $region92: #{forward.1} parent=11 // pred_fallthru
          _
        // Predicated region
        $region93: #{forward.1} parent=11 // pred_check
          %p781 = pneg %p533
        $region94: #{forward.1} parent=11 // pred_check_branch
          %783 = sbr.rel (%p781) target = $region96
        $region95: #{forward.1} parent=11 // pred_region
          _
        $region96: #{forward.1} parent=11 // pred_fallthru
          _
        // Predicated region
        $region97: #{forward.1} parent=11 // pred_check
          %p784 = pneg %p554
        $region98: #{forward.1} parent=11 // pred_check_branch
          %786 = sbr.rel (%p784) target = $region100
        $region99: #{forward.1} parent=11 // pred_region
          _
        $region100: #{forward.1} parent=11 // pred_fallthru
          _
        // Predicated region
        $region101: #{forward.1} parent=11 // pred_check
          %p787 = pneg %p575
        $region102: #{forward.1} parent=11 // pred_check_branch
          %789 = sbr.rel (%p787) target = $region104
        $region103: #{forward.1} parent=11 // pred_region
          _
        $region104: #{forward.1} parent=11 // pred_fallthru
          _
        // Predicated region
        $region105: #{forward.1} parent=11 // pred_check
          %p790 = pneg %p596
        $region106: #{forward.1} parent=11 // pred_check_branch
          %792 = sbr.rel (%p790) target = $region108
        $region107: #{forward.1} parent=11 // pred_region
          _
        $region108: #{forward.1} parent=11 // pred_fallthru
          _
        // Predicated region
        $region109: #{forward.1} parent=11 // pred_check
          %p793 = pneg %p617
        $region110: #{forward.1} parent=11 // pred_check_branch
          %795 = sbr.rel (%p793) target = $region112
        $region111: #{forward.1} parent=11 // pred_region
          _
        $region112: #{forward.1} parent=11 // pred_fallthru
          _
        // Predicated region
        $region113: #{forward.1} parent=11 // pred_check
          %p796 = pneg %p638
        $region114: #{forward.1} parent=11 // pred_check_branch
          %798 = sbr.rel (%p796) target = $region116
        $region115: #{forward.1} parent=11 // pred_region
          _
        $region116: #{forward.1} parent=11 // pred_fallthru
          _
        // Predicated region
        $region117: #{forward.1} parent=11 // pred_check
          %p799 = pneg %p659
        $region118: #{forward.1} parent=11 // pred_check_branch
          %801 = sbr.rel (%p799) target = $region120
        $region119: #{forward.1} parent=11 // pred_region
          %s803 = ssub.s32 16, 16
          %804 = vsyncadd [#allocation16], %s803
          %s806 = sshll.u32 [#allocation15], 4
          %s807 = int_to_ptr.vmem [resolvable:$true] %s806
          %809 = dma.hbm_to_vmem [thread:$0]  %s55, 16, %s807, [#allocation16]
        $region120: #{forward.1} parent=11 // pred_fallthru
          _
        // Predicated region
        $region121: #{forward.1} parent=11 // pred_check
          %p810 = pneg %p680
        $region122: #{forward.1} parent=11 // pred_check_branch
          %812 = sbr.rel (%p810) target = $region124
        $region123: #{forward.1} parent=11 // pred_region
          _
        $region124: #{forward.1} parent=11 // pred_fallthru
          _
      $region12: #{forward.1} parent=5 // pred_fallthru
        _
      %p813 = scmp.lt.s32.totalorder %s66, 2
      // Predicated region
      $region125: #{forward.1} parent=5 // pred_check
        %p814 = pneg %p813
      $region126: #{forward.1} parent=5 // pred_check_branch
        %816 = sbr.rel (%p814) target = $region128
      $region127: #{forward.1} parent=5 // pred_region
        // Predicated region
        $region129: #{forward.1} parent=127 // pred_check
          %p817 = pneg %p86
        $region130: #{forward.1} parent=127 // pred_check_branch
          %819 = sbr.rel (%p817) target = $region132
        $region131: #{forward.1} parent=127 // pred_region
          %p820 = scmp.lt.s32.totalorder %s66, 1
          %s821 = scalar_select %p820, %s66, 1
          %s822 = smul.addr %s821, 32
          %s823 = smul.addr %s822, 8
          %s824 = scalar_lea.vmem %s1, %s823
        $region132: #{forward.1} parent=127 // pred_fallthru
          _
      $region128: #{forward.1} parent=5 // pred_fallthru
        _
      %p825 = scmp.le.s32.totalorder 1, %s66
      %p826 = scmp.lt.s32.totalorder %s66, 3
      %p827 = pnand %p825, %p826
      %p828 = pneg %p827
      // Predicated region
      $region133: #{forward.1} parent=5 // pred_check
        _
      $region134: #{forward.1} parent=5 // pred_check_branch
        %830 = sbr.rel (%p827) target = $region136
      $region135: #{forward.1} parent=5 // pred_region
        %s831 = ssub.s32 %s66, 1
        // Predicated region
        $region137: #{forward.1} parent=135 // pred_check
          %p832 = pneg %p659
        $region138: #{forward.1} parent=135 // pred_check_branch
          %834 = sbr.rel (%p832) target = $region140
        $region139: #{forward.1} parent=135 // pred_region
          %835 = dma.done [#allocation16], 16
        $region140: #{forward.1} parent=135 // pred_fallthru
          _
        %p836 = scmp.lt.s32.totalorder %s71, 1
        %s837 = scalar_select %p836, %s71, 1
        %s838 = smul.addr %s837, 32
        %s839 = smul.addr %s838, 8
        %s840 = scalar_lea.vmem %s1, %s839
        %p841 = pneg %p92
        %p842 = pneg %p89
        %p843 = pneg %p113
        %p844 = pneg %p110
        %p845 = pneg %p134
        %p846 = pneg %p131
        %p847 = pneg %p155
        %p848 = pneg %p152
        %p849 = pneg %p176
        %p850 = pneg %p173
        %p851 = pneg %p197
        %p852 = pneg %p194
        %p853 = pneg %p218
        %p854 = pneg %p215
        %p855 = pneg %p239
        %p856 = pneg %p236
        %p857 = pneg %p260
        %p858 = pneg %p257
        %p859 = pneg %p281
        %p860 = pneg %p278
        %p861 = pneg %p302
        %p862 = pneg %p299
        %p863 = pneg %p323
        %p864 = pneg %p320
        %p865 = pneg %p344
        %p866 = pneg %p341
        %p867 = pneg %p365
        %p868 = pneg %p362
        %p869 = pneg %p386
        %p870 = pneg %p383
        %p871 = pneg %p407
        %p872 = pneg %p404
        %p873 = pneg %p428
        %p874 = pneg %p425
        %p875 = pneg %p449
        %p876 = pneg %p446
        %p877 = pneg %p470
        %p878 = pneg %p467
        %p879 = pneg %p491
        %p880 = pneg %p488
        %p881 = pneg %p512
        %p882 = pneg %p509
        %p883 = pneg %p533
        %p884 = pneg %p530
        %p885 = pneg %p554
        %p886 = pneg %p551
        %p887 = pneg %p575
        %p888 = pneg %p572
        %p889 = pneg %p596
        %p890 = pneg %p593
        %p891 = pneg %p617
        %p892 = pneg %p614
        %p893 = pneg %p638
        %p894 = pneg %p635
        %p895 = pneg %p659
        %p896 = pneg %p656
        %p897 = pneg %p680
        %p898 = pneg %p677
        %p899 = pneg %p706
        %p900 = pneg %p703
        %p901 = scmp.lt.s32.totalorder %s71, 1
        %s902 = scalar_select %p901, %s71, 1
        %s903 = smul.addr %s902, 32
        %s904 = smul.addr %s903, 8
        %s905 = scalar_lea.vmem %s59, %s904
        %p906 = scmp.lt.s32.totalorder %s71, 1
        %s907 = scalar_select %p906, %s71, 1
        %s908 = smul.addr %s907, 32
        %s909 = smul.addr %s908, 8
        %s910 = scalar_lea.vmem %s1, %s909
        %p911 = scmp.lt.s32.totalorder %s71, 1
        %s912 = scalar_select %p911, %s71, 1
        %s913 = smul.addr %s912, 32
        %s914 = smul.addr %s913, 8
        %s915 = scalar_lea.vmem %s59, %s914
        %vm916 = vcmask 64512
        %917 = vst.msk [vmem:[#allocation2] sm:$0xff] %vm916, 0.0
        %918 = vst.msk [vmem:[#allocation2 + $0x8] sm:$0xff] %vm916, 0.0
        %vm919 = vcmask 58368
        %920 = vst.msk [vmem:[#allocation2 + $0x10] sm:$0x3] %vm919, 0.0
        %s921 = scalar_lea.vmem [#allocation2], 408
        %922 = vst.msk [vmem:[%s921] sm:$0xff] %vm916, 0.0
        %923 = vst.msk [vmem:[%s921 + $0x8] sm:$0xff] %vm916, 0.0
        %924 = vst.msk [vmem:[%s921 + $0x10] sm:$0x3] %vm919, 0.0
        loop: start=0, step=1, limit=16
        $region141: #{forward.1} parent=135 // loop_pre_header
          _
        $region142: #{forward.1} parent=135 // loop_header
          %s926 = sphi 0, %s930
          %p927 = scmp.ge.s32.totalorder %s926, 16
        $region143: #{forward.1} parent=135 // loop_header_branch
          %929 = sbr.rel (%p927) target = $region147
        $region144: #{forward.1} parent=135 // loop_body
          %s931 = smul.u32 %s926, 16
          %s932 = scalar_lea.vmem %s910, %s931
          %v933 = vld [vmem:[%s932] sm:$0xff]
          %v934 = vld [vmem:[%s932 + $0x8] sm:$0xff]
          %vm937 = vcmask 1040384
          %v938 = vrot.slane %v933, 7
          %v939 = vrot.slane %v934, 7
          %v940 = vsel %vm937, %v938, %v939
          %v944 = vsel %vm937, 0.0, %v938
          %v945 = vsel %vm937, %v939, 0.0
          %s946 = sadd.s32 %s926, 1
          %s947 = smul.u32 %s946, 24
          %s948 = scalar_lea.vmem [#allocation2], %s947
          %949 = vst.msk [vmem:[%s948] sm:$0xff] %vm916, %v944
          %950 = vst.msk [vmem:[%s948 + $0x8] sm:$0xff] %vm916, %v940
          %951 = vst.msk [vmem:[%s948 + $0x10] sm:$0x3] %vm919, %v945
        $region145: #{forward.1} parent=135 // loop_footer
          %s930 = sadd.s32 1, %s926
        $region146: #{forward.1} parent=135 // loop_footer_branch
          %925 = sbr.rel target = $region142
        $region147: #{forward.1} parent=135 // loop_exit
          _
        %vm952 = vcmask 130048
        %953 = vst.msk [vmem:[#allocation3] sm:$0xff] %vm952, 0.0
        %954 = vst.msk [vmem:[#allocation3 + $0x8] sm:$0xff] %vm952, 0.0
        %vm955 = vcmask 123904
        %956 = vst.msk [vmem:[#allocation3 + $0x10] sm:$0x3] %vm955, 0.0
        %s957 = scalar_lea.vmem [#allocation3], 408
        %958 = vst.msk [vmem:[%s957] sm:$0xff] %vm952, 0.0
        %959 = vst.msk [vmem:[%s957 + $0x8] sm:$0xff] %vm952, 0.0
        %960 = vst.msk [vmem:[%s957 + $0x10] sm:$0x3] %vm955, 0.0
        %v961 = vld [vmem:[%s5] sm:$0x1]
        %v963 = vlaneseq
        %v964 = vshrl.u32 %v963, 7
        %v965 = vsub.s32 0, %v964
        %v966 = vrot.slane %v961, %v965
        %v968 = vld [vmem:[%s7] sm:$0x1]
        %v970 = vlaneseq
        %v971 = vshrl.u32 %v970, 7
        %v972 = vsub.s32 0, %v971
        %v973 = vrot.slane %v968, %v972
        loop: start=0, step=1, limit=16
        $region148: #{forward.1} parent=135 // loop_pre_header
          _
        $region149: #{forward.1} parent=135 // loop_header
          %s976 = sphi 0, %s980
          %p977 = scmp.ge.s32.totalorder %s976, 16
        $region150: #{forward.1} parent=135 // loop_header_branch
          %979 = sbr.rel (%p977) target = $region154
        $region151: #{forward.1} parent=135 // loop_body
          %s981 = smul.u32 %s976, 24
          %s982 = scalar_lea.vmem [#allocation2], %s981
          %v983 = vld [vmem:[%s982] sm:$0xff]
          %v984 = vld [vmem:[%s982 + $0x8] sm:$0xff]
          %v985 = vld [vmem:[%s982 + $0x1] sm:$0xff]
          %v986 = vld [vmem:[%s982 + $0x9] sm:$0xff]
          %v987 = vld [vmem:[%s982 + $0x2] sm:$0xff]
          %v988 = vld [vmem:[%s982 + $0xa] sm:$0xff]
          %s989 = sadd.s32 %s976, 1
          %s990 = smul.u32 %s989, 24
          %s991 = scalar_lea.vmem [#allocation2], %s990
          %v992 = vld [vmem:[%s991] sm:$0xff]
          %v993 = vld [vmem:[%s991 + $0x8] sm:$0xff]
          %v994 = vld [vmem:[%s991 + $0x1] sm:$0xff]
          %v995 = vld [vmem:[%s991 + $0x9] sm:$0xff]
          %v996 = vld [vmem:[%s991 + $0x2] sm:$0xff]
          %v997 = vld [vmem:[%s991 + $0xa] sm:$0xff]
          %s998 = sadd.s32 %s976, 2
          %s999 = smul.u32 %s998, 24
          %s1000 = scalar_lea.vmem [#allocation2], %s999
          %v1001 = vld [vmem:[%s1000] sm:$0xff]
          %v1002 = vld [vmem:[%s1000 + $0x8] sm:$0xff]
          %v1003 = vld [vmem:[%s1000 + $0x1] sm:$0xff]
          %v1004 = vld [vmem:[%s1000 + $0x9] sm:$0xff]
          %v1005 = vld [vmem:[%s1000 + $0x2] sm:$0xff]
          %v1006 = vld [vmem:[%s1000 + $0xa] sm:$0xff]
          %1009 = vrot.lane.b32.xlu0 %v985, 8
          %v1010 = vpop.permute.xlu0 %1009
          %1011 = vrot.lane.b32.xlu0 %v986, 8
          %v1012 = vpop.permute.xlu0 %1011
          %1017 = vrot.lane.b32.xlu0 %v987, 16
          %v1018 = vpop.permute.xlu0 %1017
          %1019 = vrot.lane.b32.xlu0 %v988, 16
          %v1020 = vpop.permute.xlu0 %1019
          %1025 = vrot.lane.b32.xlu0 %v992, 24
          %v1026 = vpop.permute.xlu0 %1025
          %1027 = vrot.lane.b32.xlu0 %v993, 24
          %v1028 = vpop.permute.xlu0 %1027
          %1033 = vrot.lane.b32.xlu0 %v994, 32
          %v1034 = vpop.permute.xlu0 %1033
          %1035 = vrot.lane.b32.xlu0 %v995, 32
          %v1036 = vpop.permute.xlu0 %1035
          %1041 = vrot.lane.b32.xlu0 %v996, 40
          %v1042 = vpop.permute.xlu0 %1041
          %1043 = vrot.lane.b32.xlu0 %v997, 40
          %v1044 = vpop.permute.xlu0 %1043
          %1049 = vrot.lane.b32.xlu0 %v1001, 48
          %v1050 = vpop.permute.xlu0 %1049
          %1051 = vrot.lane.b32.xlu0 %v1002, 48
          %v1052 = vpop.permute.xlu0 %1051
          %1057 = vrot.lane.b32.xlu0 %v1003, 56
          %v1058 = vpop.permute.xlu0 %1057
          %1059 = vrot.lane.b32.xlu0 %v1004, 56
          %v1060 = vpop.permute.xlu0 %1059
          %1065 = vrot.lane.b32.xlu0 %v1005, 64
          %v1066 = vpop.permute.xlu0 %1065
          %1067 = vrot.lane.b32.xlu0 %v1006, 64
          %v1068 = vpop.permute.xlu0 %1067
          %v1071 = vsel %vm916, %v983, %v1010
          %v1072 = vsel %vm916, %v984, %v1012
          %v1073 = vsel %vm952, %v1071, %v1018
          %v1074 = vsel %vm952, %v1072, %v1020
          %vm1075 = vcmask 195584
          %v1076 = vsel %vm1075, %v1073, %v1026
          %v1077 = vsel %vm1075, %v1074, %v1028
          %vm1078 = vcmask 261120
          %v1079 = vsel %vm1078, %v1076, %v1034
          %v1080 = vsel %vm1078, %v1077, %v1036
          %vm1081 = vcmask 326656
          %v1082 = vsel %vm1081, %v1079, %v1042
          %v1083 = vsel %vm1081, %v1080, %v1044
          %vm1084 = vcmask 392192
          %v1085 = vsel %vm1084, %v1082, %v1050
          %v1086 = vsel %vm1084, %v1083, %v1052
          %vm1087 = vcmask 457728
          %v1088 = vsel %vm1087, %v1085, %v1058
          %v1089 = vsel %vm1087, %v1086, %v1060
          %vm1090 = vcmask 523264
          %v1091 = vsel %vm1090, %v1088, %v1066
          %v1092 = vsel %vm1090, %v1089, %v1068
          %v1093 = vld [vmem:[%s3] sm:$0xff]
          %v1094 = vld [vmem:[%s3 + $0x8] sm:$0xff]
          %v1095 = vld [vmem:[%s3 + $0x10] sm:$0xff]
          %v1096 = vld [vmem:[%s3 + $0x18] sm:$0xff]
          %v1097 = vld [vmem:[%s3 + $0x20] sm:$0xff]
          %v1098 = vld [vmem:[%s3 + $0x28] sm:$0xff]
          %v1099 = vld [vmem:[%s3 + $0x30] sm:$0xff]
          %v1100 = vld [vmem:[%s3 + $0x38] sm:$0xff]
          %v1101 = vld [vmem:[%s3 + $0x40] sm:$0xff]
          %vm1102 = vcmask 588800
          %v1104 = vsel %vm1102, %v1091, 0
          %v1107 = vsel %vm1102, %v1092, 0
          %1109 = vmatprep.subr.mxu0 0.0
          %1110 = vmatpush1.msra.mxu0 %v1093
          %1111 = vmatprep.subr.mxu0 0.0
          %1112 = vmatpush1.msra.mxu0 %v1094
          %1113 = vmatprep.subr.mxu0 0.0
          %1114 = vmatpush1.msra.mxu0 %v1095
          %1115 = vmatprep.subr.mxu0 0.0
          %1116 = vmatpush1.msra.mxu0 %v1096
          %1117 = vmatprep.subr.mxu0 0.0
          %1118 = vmatpush1.msra.mxu0 %v1097
          %1119 = vmatprep.subr.mxu0 0.0
          %1120 = vmatpush1.msra.mxu0 %v1098
          %1121 = vmatprep.subr.mxu0 0.0
          %1122 = vmatpush1.msra.mxu0 %v1099
          %1123 = vmatprep.subr.mxu0 0.0
          %1124 = vmatpush1.msra.mxu0 %v1100
          %1125 = vmatprep.subr.mxu0 0.0
          %1126 = vmatpush1.msra.mxu0 %v1101
          %1127 = vmatprep.subr.mxu0 0.0
          %1128 = vmatpush1.msra.mxu0 0.0
          %1129 = vmatprep.subr.mxu0 0.0
          %1130 = vmatpush1.msra.mxu0 0.0
          %1131 = vmatprep.subr.mxu0 0.0
          %1132 = vmatpush1.msra.mxu0 0.0
          %1133 = vmatprep.subr.mxu0 0.0
          %1134 = vmatpush1.msra.mxu0 0.0
          %1135 = vmatprep.subr.mxu0 0.0
          %1136 = vmatpush1.msra.mxu0 0.0
          %1137 = vmatprep.subr.mxu0 0.0
          %1138 = vmatpush1.msra.mxu0 0.0
          %1139 = vmatprep.subr.mxu0 0.0
          %1140 = vmatpush1.msra.mxu0 0.0
          %1141 = vmatprep.subr.mxu0 0.0
          %1142 = vmatpush1.msra.mxu0 0.0
          %1143 = vmatprep.subr.mxu0 0.0
          %1144 = vmatpush1.msra.mxu0 0.0
          %1145 = vmatprep.subr.mxu0 0.0
          %1146 = vmatpush1.msra.mxu0 0.0
          %1147 = vmatprep.subr.mxu0 0.0
          %1148 = vmatpush1.msra.mxu0 0.0
          %1149 = vmatprep.subr.mxu0 0.0
          %1150 = vmatpush1.msra.mxu0 0.0
          %1151 = vmatprep.subr.mxu0 0.0
          %1152 = vmatpush1.msra.mxu0 0.0
          %1153 = vmatprep.subr.mxu0 0.0
          %1154 = vmatpush1.msra.mxu0 0.0
          %1155 = vmatprep.subr.mxu0 0.0
          %1156 = vmatpush1.msra.mxu0 0.0
          %1157 = vmatprep.subr.mxu0 0.0
          %1158 = vmatpush1.msra.mxu0 0.0
          %1159 = vmatprep.subr.mxu0 0.0
          %1160 = vmatpush1.msra.mxu0 0.0
          %1161 = vmatprep.subr.mxu0 0.0
          %1162 = vmatpush1.msra.mxu0 0.0
          %1163 = vmatprep.subr.mxu0 0.0
          %1164 = vmatpush1.msra.mxu0 0.0
          %1165 = vmatprep.subr.mxu0 0.0
          %1166 = vmatpush1.msra.mxu0 0.0
          %1167 = vmatprep.subr.mxu0 0.0
          %1168 = vmatpush1.msra.mxu0 0.0
          %1169 = vmatprep.subr.mxu0 0.0
          %1170 = vmatpush1.msra.mxu0 0.0
          %1171 = vmatprep.subr.mxu0 0.0
          %1172 = vmatpush1.msra.mxu0 0.0
          %1173 = vmatprep.mubr.f32.mxu0 0.0
          %1174 = vmatmul.mubr.f32.gmra.mrb[0].mxu0 %v1104
          %v1175 = vpop.f32.mrb[0].mxu0
          %v1176 = vadd.f32 0.0, %v1175
          %v1177 = vpop.f32.mrb[0].mxu0
          %1178 = vmatprep.mubr.f32.mxu0 0.0
          %1179 = vmatmul.mubr.f32.gmra.mrb[0].mxu0 %v1107
          %v1180 = vpop.f32.mrb[0].mxu0
          %v1181 = vadd.f32 0.0, %v1180
          %v1182 = vpop.f32.mrb[0].mxu0
          %1183 = vdwg.mxu0
          %v1184 = vmul.f32 %v1176, %v966
          %v1185 = vmul.f32 %v1181, %v966
          %v1186 = vadd.f32 %v1184, %v973
          %v1187 = vadd.f32 %v1185, %v973
          %v1188 = vmax.f32 %v1186, 0.0
          %v1189 = vmax.f32 %v1187, 0.0
          %vm1192 = vcmask 1040384
          %v1193 = vrot.slane %v1188, 7
          %v1194 = vrot.slane %v1189, 7
          %v1195 = vsel %vm1192, %v1193, %v1194
          %v1199 = vsel %vm1192, 0.0, %v1193
          %v1200 = vsel %vm1192, %v1194, 0.0
          %s1201 = scalar_lea.vmem [#allocation3], %s990
          %1202 = vst.msk [vmem:[%s1201] sm:$0xff] %vm952, %v1199
          %1203 = vst.msk [vmem:[%s1201 + $0x8] sm:$0xff] %vm952, %v1195
          %1204 = vst.msk [vmem:[%s1201 + $0x10] sm:$0x3] %vm955, %v1200
        $region152: #{forward.1} parent=135 // loop_footer
          %s980 = sadd.s32 1, %s976
        $region153: #{forward.1} parent=135 // loop_footer_branch
          %975 = sbr.rel target = $region149
        $region154: #{forward.1} parent=135 // loop_exit
          _
        %1205 = vst.msk [vmem:[#allocation4] sm:$0xff] %vm952, 0.0
        %1206 = vst.msk [vmem:[#allocation4 + $0x8] sm:$0xff] %vm952, 0.0
        %1207 = vst.msk [vmem:[#allocation4 + $0x10] sm:$0x3] %vm955, 0.0
        %s1208 = scalar_lea.vmem [#allocation4], 408
        %1209 = vst.msk [vmem:[%s1208] sm:$0xff] %vm952, 0.0
        %1210 = vst.msk [vmem:[%s1208 + $0x8] sm:$0xff] %vm952, 0.0
        %1211 = vst.msk [vmem:[%s1208 + $0x10] sm:$0x3] %vm955, 0.0
        %v1212 = vld [vmem:[%s11] sm:$0x1]
        %v1214 = vlaneseq
        %v1215 = vshrl.u32 %v1214, 7
        %v1216 = vsub.s32 0, %v1215
        %v1217 = vrot.slane %v1212, %v1216
        %v1219 = vld [vmem:[%s13] sm:$0x1]
        %v1221 = vlaneseq
        %v1222 = vshrl.u32 %v1221, 7
        %v1223 = vsub.s32 0, %v1222
        %v1224 = vrot.slane %v1219, %v1223
        loop: start=0, step=1, limit=16
        $region155: #{forward.1} parent=135 // loop_pre_header
          _
        $region156: #{forward.1} parent=135 // loop_header
          %s1227 = sphi 0, %s1231
          %p1228 = scmp.ge.s32.totalorder %s1227, 16
        $region157: #{forward.1} parent=135 // loop_header_branch
          %1230 = sbr.rel (%p1228) target = $region161
        $region158: #{forward.1} parent=135 // loop_body
          %s1232 = smul.u32 %s1227, 24
          %s1233 = scalar_lea.vmem [#allocation3], %s1232
          %v1234 = vld [vmem:[%s1233] sm:$0xff]
          %v1235 = vld [vmem:[%s1233 + $0x8] sm:$0xff]
          %v1236 = vld [vmem:[%s1233 + $0x1] sm:$0xff]
          %v1237 = vld [vmem:[%s1233 + $0x9] sm:$0xff]
          %v1238 = vld [vmem:[%s1233 + $0x2] sm:$0xff]
          %v1239 = vld [vmem:[%s1233 + $0xa] sm:$0xff]
          %s1240 = sadd.s32 %s1227, 1
          %s1241 = smul.u32 %s1240, 24
          %s1242 = scalar_lea.vmem [#allocation3], %s1241
          %v1243 = vld [vmem:[%s1242] sm:$0xff]
          %v1244 = vld [vmem:[%s1242 + $0x8] sm:$0xff]
          %v1245 = vld [vmem:[%s1242 + $0x1] sm:$0xff]
          %v1246 = vld [vmem:[%s1242 + $0x9] sm:$0xff]
          %v1247 = vld [vmem:[%s1242 + $0x2] sm:$0xff]
          %v1248 = vld [vmem:[%s1242 + $0xa] sm:$0xff]
          %s1249 = sadd.s32 %s1227, 2
          %s1250 = smul.u32 %s1249, 24
          %s1251 = scalar_lea.vmem [#allocation3], %s1250
          %v1252 = vld [vmem:[%s1251] sm:$0xff]
          %v1253 = vld [vmem:[%s1251 + $0x8] sm:$0xff]
          %v1254 = vld [vmem:[%s1251 + $0x1] sm:$0xff]
          %v1255 = vld [vmem:[%s1251 + $0x9] sm:$0xff]
          %v1256 = vld [vmem:[%s1251 + $0x2] sm:$0xff]
          %v1257 = vld [vmem:[%s1251 + $0xa] sm:$0xff]
          %1260 = vrot.lane.b32.xlu0 %v1236, 16
          %v1261 = vpop.permute.xlu0 %1260
          %1262 = vrot.lane.b32.xlu0 %v1237, 16
          %v1263 = vpop.permute.xlu0 %1262
          %1268 = vrot.lane.b32.xlu0 %v1238, 32
          %v1269 = vpop.permute.xlu0 %1268
          %1270 = vrot.lane.b32.xlu0 %v1239, 32
          %v1271 = vpop.permute.xlu0 %1270
          %1276 = vrot.lane.b32.xlu0 %v1243, 48
          %v1277 = vpop.permute.xlu0 %1276
          %1278 = vrot.lane.b32.xlu0 %v1244, 48
          %v1279 = vpop.permute.xlu0 %1278
          %1284 = vrot.lane.b32.xlu0 %v1245, 64
          %v1285 = vpop.permute.xlu0 %1284
          %1286 = vrot.lane.b32.xlu0 %v1246, 64
          %v1287 = vpop.permute.xlu0 %1286
          %1292 = vrot.lane.b32.xlu0 %v1247, 80
          %v1293 = vpop.permute.xlu0 %1292
          %1294 = vrot.lane.b32.xlu0 %v1248, 80
          %v1295 = vpop.permute.xlu0 %1294
          %1300 = vrot.lane.b32.xlu0 %v1252, 96
          %v1301 = vpop.permute.xlu0 %1300
          %1302 = vrot.lane.b32.xlu0 %v1253, 96
          %v1303 = vpop.permute.xlu0 %1302
          %1308 = vrot.lane.b32.xlu0 %v1254, 112
          %v1309 = vpop.permute.xlu0 %1308
          %1310 = vrot.lane.b32.xlu0 %v1255, 112
          %v1311 = vpop.permute.xlu0 %1310
          %v1314 = vsel %vm952, %v1234, %v1261
          %v1315 = vsel %vm952, %v1235, %v1263
          %vm1316 = vcmask 261120
          %v1317 = vsel %vm1316, %v1314, %v1269
          %v1318 = vsel %vm1316, %v1315, %v1271
          %vm1319 = vcmask 392192
          %v1320 = vsel %vm1319, %v1317, %v1277
          %v1321 = vsel %vm1319, %v1318, %v1279
          %vm1322 = vcmask 523264
          %v1323 = vsel %vm1322, %v1320, %v1285
          %v1324 = vsel %vm1322, %v1321, %v1287
          %vm1325 = vcmask 654336
          %v1326 = vsel %vm1325, %v1323, %v1293
          %v1327 = vsel %vm1325, %v1324, %v1295
          %vm1328 = vcmask 785408
          %v1329 = vsel %vm1328, %v1326, %v1301
          %v1330 = vsel %vm1328, %v1327, %v1303
          %vm1331 = vcmask 916480
          %v1332 = vsel %vm1331, %v1329, %v1309
          %v1333 = vsel %vm1331, %v1330, %v1311
          %v1334 = vld [vmem:[%s9] sm:$0xff]
          %v1335 = vld [vmem:[%s9 + $0x8] sm:$0xff]
          %v1336 = vld [vmem:[%s9 + $0x10] sm:$0xff]
          %v1337 = vld [vmem:[%s9 + $0x18] sm:$0xff]
          %v1338 = vld [vmem:[%s9 + $0x20] sm:$0xff]
          %v1339 = vld [vmem:[%s9 + $0x28] sm:$0xff]
          %v1340 = vld [vmem:[%s9 + $0x30] sm:$0xff]
          %v1341 = vld [vmem:[%s9 + $0x38] sm:$0xff]
          %v1342 = vld [vmem:[%s9 + $0x40] sm:$0xff]
          %v1343 = vld [vmem:[%s9 + $0x48] sm:$0xff]
          %v1344 = vld [vmem:[%s9 + $0x50] sm:$0xff]
          %v1345 = vld [vmem:[%s9 + $0x58] sm:$0xff]
          %v1346 = vld [vmem:[%s9 + $0x60] sm:$0xff]
          %v1347 = vld [vmem:[%s9 + $0x68] sm:$0xff]
          %v1348 = vld [vmem:[%s9 + $0x70] sm:$0xff]
          %v1349 = vld [vmem:[%s9 + $0x78] sm:$0xff]
          %v1350 = vld [vmem:[%s9 + $0x80] sm:$0xff]
          %v1351 = vld [vmem:[%s9 + $0x88] sm:$0xff]
          %v1353 = vsel %vm952, %v1256, 0
          %v1356 = vsel %vm952, %v1257, 0
          %1358 = vmatprep.subr.mxu0 0.0
          %1359 = vmatpush1.msra.mxu0 %v1334
          %1360 = vmatprep.subr.mxu0 0.0
          %1361 = vmatpush1.msra.mxu0 %v1335
          %1362 = vmatprep.subr.mxu0 0.0
          %1363 = vmatpush1.msra.mxu0 %v1336
          %1364 = vmatprep.subr.mxu0 0.0
          %1365 = vmatpush1.msra.mxu0 %v1337
          %1366 = vmatprep.subr.mxu0 0.0
          %1367 = vmatpush1.msra.mxu0 %v1338
          %1368 = vmatprep.subr.mxu0 0.0
          %1369 = vmatpush1.msra.mxu0 %v1339
          %1370 = vmatprep.subr.mxu0 0.0
          %1371 = vmatpush1.msra.mxu0 %v1340
          %1372 = vmatprep.subr.mxu0 0.0
          %1373 = vmatpush1.msra.mxu0 %v1341
          %1374 = vmatprep.subr.mxu0 0.0
          %1375 = vmatpush1.msra.mxu0 %v1342
          %1376 = vmatprep.subr.mxu0 0.0
          %1377 = vmatpush1.msra.mxu0 %v1343
          %1378 = vmatprep.subr.mxu0 0.0
          %1379 = vmatpush1.msra.mxu0 %v1344
          %1380 = vmatprep.subr.mxu0 0.0
          %1381 = vmatpush1.msra.mxu0 %v1345
          %1382 = vmatprep.subr.mxu0 0.0
          %1383 = vmatpush1.msra.mxu0 %v1346
          %1384 = vmatprep.subr.mxu0 0.0
          %1385 = vmatpush1.msra.mxu0 %v1347
          %1386 = vmatprep.subr.mxu0 0.0
          %1387 = vmatpush1.msra.mxu0 %v1348
          %1388 = vmatprep.subr.mxu0 0.0
          %1389 = vmatpush1.msra.mxu0 %v1349
          %1390 = vmatprep.subr.mxu0 0.0
          %1391 = vmatpush1.msra.mxu0 %v1350
          %1392 = vmatprep.subr.mxu0 0.0
          %1393 = vmatpush1.msra.mxu0 %v1351
          %1394 = vmatprep.subr.mxu0 0.0
          %1395 = vmatpush1.msra.mxu0 0.0
          %1396 = vmatprep.subr.mxu0 0.0
          %1397 = vmatpush1.msra.mxu0 0.0
          %1398 = vmatprep.subr.mxu0 0.0
          %1399 = vmatpush1.msra.mxu0 0.0
          %1400 = vmatprep.subr.mxu0 0.0
          %1401 = vmatpush1.msra.mxu0 0.0
          %1402 = vmatprep.subr.mxu0 0.0
          %1403 = vmatpush1.msra.mxu0 0.0
          %1404 = vmatprep.subr.mxu0 0.0
          %1405 = vmatpush1.msra.mxu0 0.0
          %1406 = vmatprep.subr.mxu0 0.0
          %1407 = vmatpush1.msra.mxu0 0.0
          %1408 = vmatprep.subr.mxu0 0.0
          %1409 = vmatpush1.msra.mxu0 0.0
          %1410 = vmatprep.subr.mxu0 0.0
          %1411 = vmatpush1.msra.mxu0 0.0
          %1412 = vmatprep.subr.mxu0 0.0
          %1413 = vmatpush1.msra.mxu0 0.0
          %1414 = vmatprep.subr.mxu0 0.0
          %1415 = vmatpush1.msra.mxu0 0.0
          %1416 = vmatprep.subr.mxu0 0.0
          %1417 = vmatpush1.msra.mxu0 0.0
          %1418 = vmatprep.subr.mxu0 0.0
          %1419 = vmatpush1.msra.mxu0 0.0
          %1420 = vmatprep.subr.mxu0 0.0
          %1421 = vmatpush1.msra.mxu0 0.0
          %1422 = vmatprep.mubr.f32.mxu0 %v1353
          %1423 = vmatmul.mubr.f32.gmra.mrb[0].mxu0 %v1332
          %v1424 = vpop.f32.mrb[0].mxu0
          %v1425 = vadd.f32 0.0, %v1424
          %v1426 = vpop.f32.mrb[0].mxu0
          %1427 = vmatprep.mubr.f32.mxu0 %v1356
          %1428 = vmatmul.mubr.f32.gmra.mrb[0].mxu0 %v1333
          %v1429 = vpop.f32.mrb[0].mxu0
          %v1430 = vadd.f32 0.0, %v1429
          %v1431 = vpop.f32.mrb[0].mxu0
          %1432 = vdwg.mxu0
          %v1433 = vmul.f32 %v1425, %v1217
          %v1434 = vmul.f32 %v1430, %v1217
          %v1435 = vadd.f32 %v1433, %v1224
          %v1436 = vadd.f32 %v1434, %v1224
          %v1437 = vmax.f32 %v1435, 0.0
          %v1438 = vmax.f32 %v1436, 0.0
          %vm1441 = vcmask 1040384
          %v1442 = vrot.slane %v1437, 7
          %v1443 = vrot.slane %v1438, 7
          %v1444 = vsel %vm1441, %v1442, %v1443
          %v1448 = vsel %vm1441, 0.0, %v1442
          %v1449 = vsel %vm1441, %v1443, 0.0
          %s1450 = scalar_lea.vmem [#allocation4], %s1241
          %1451 = vst.msk [vmem:[%s1450] sm:$0xff] %vm952, %v1448
          %1452 = vst.msk [vmem:[%s1450 + $0x8] sm:$0xff] %vm952, %v1444
          %1453 = vst.msk [vmem:[%s1450 + $0x10] sm:$0x3] %vm955, %v1449
        $region159: #{forward.1} parent=135 // loop_footer
          %s1231 = sadd.s32 1, %s1227
        $region160: #{forward.1} parent=135 // loop_footer_branch
          %1226 = sbr.rel target = $region156
        $region161: #{forward.1} parent=135 // loop_exit
          _
        %v1454 = vlaneseq
        %v1455 = vshrl.u32 %v1454, 7
        %v1456 = vlaneseq
        %v1457 = vand.u32 %v1456, 127
        %v1458 = vmul.u32 %v1455, 2
        %vm1459 = vcmp.eq.s32.totalorder %v1457, %v1458
        %v1460 = vsel %vm1459, 1, 0
        %v1461 = vcvt.s32.f32 %v1460
        %v1462 = vadd.s32 %v1458, 1
        %vm1463 = vcmp.eq.s32.totalorder %v1457, %v1462
        %v1464 = vsel %vm1463, 1, 0
        %v1465 = vcvt.s32.f32 %v1464
        %1466 = vst.msk [vmem:[#allocation5] sm:$0xff] %vm952, 0.0
        %1467 = vst.msk [vmem:[#allocation5 + $0x8] sm:$0x3] %vm955, 0.0
        %s1468 = scalar_lea.vmem [#allocation5], 144
        %1469 = vst.msk [vmem:[%s1468] sm:$0xff] %vm952, 0.0
        %1470 = vst.msk [vmem:[%s1468 + $0x8] sm:$0x3] %vm955, 0.0
        loop: start=0, step=1, limit=8
        $region162: #{forward.1} parent=135 // loop_pre_header
          _
        $region163: #{forward.1} parent=135 // loop_header
          %s1472 = sphi 0, %s1476
          %p1473 = scmp.ge.s32.totalorder %s1472, 8
        $region164: #{forward.1} parent=135 // loop_header_branch
          %1475 = sbr.rel (%p1473) target = $region168
        $region165: #{forward.1} parent=135 // loop_body
          %s1477 = smul.u32 %s1472, 2
          %s1478 = sadd.s32 %s1477, 1
          %s1479 = smul.u32 %s1478, 24
          %s1480 = scalar_lea.vmem [#allocation4], %s1479
          %v1481 = vld [vmem:[%s1480 + $0x1] sm:$0xff]
          %v1482 = vld [vmem:[%s1480 + $0x9] sm:$0xff]
          %s1483 = sadd.s32 %s1477, 2
          %s1484 = smul.u32 %s1483, 24
          %s1485 = scalar_lea.vmem [#allocation4], %s1484
          %v1486 = vld [vmem:[%s1485 + $0x1] sm:$0xff]
          %v1487 = vld [vmem:[%s1485 + $0x9] sm:$0xff]
          %v1488 = vmax.f32 %v1481, %v1486
          %v1489 = vmax.f32 %v1482, %v1487
          %v1491 = vsel %vm952, %v1461, 0
          %1493 = vmatprep.subr.mxu0 0.0
          %1494 = vmatpush1.msra.mxu0 %v1488
          %1495 = vmatprep.subr.mxu0 0.0
          %1496 = vmatpush1.msra.mxu0 %v1489
          %1497 = vmatprep.subr.mxu0 0.0
          %1498 = vmatpush1.msra.mxu0 0.0
          %1499 = vmatprep.subr.mxu0 0.0
          %1500 = vmatpush1.msra.mxu0 0.0
          %1501 = vmatprep.subr.mxu0 0.0
          %1502 = vmatpush1.msra.mxu0 0.0
          %1503 = vmatprep.subr.mxu0 0.0
          %1504 = vmatpush1.msra.mxu0 0.0
          %1505 = vmatprep.subr.mxu0 0.0
          %1506 = vmatpush1.msra.mxu0 0.0
          %1507 = vmatprep.subr.mxu0 0.0
          %1508 = vmatpush1.msra.mxu0 0.0
          %1509 = vmatprep.subr.mxu0 0.0
          %1510 = vmatpush1.msra.mxu0 0.0
          %1511 = vmatprep.subr.mxu0 0.0
          %1512 = vmatpush1.msra.mxu0 0.0
          %1513 = vmatprep.subr.mxu0 0.0
          %1514 = vmatpush1.msra.mxu0 0.0
          %1515 = vmatprep.subr.mxu0 0.0
          %1516 = vmatpush1.msra.mxu0 0.0
          %1517 = vmatprep.subr.mxu0 0.0
          %1518 = vmatpush1.msra.mxu0 0.0
          %1519 = vmatprep.subr.mxu0 0.0
          %1520 = vmatpush1.msra.mxu0 0.0
          %1521 = vmatprep.subr.mxu0 0.0
          %1522 = vmatpush1.msra.mxu0 0.0
          %1523 = vmatprep.subr.mxu0 0.0
          %1524 = vmatpush1.msra.mxu0 0.0
          %1525 = vmatprep.subr.mxu0 0.0
          %1526 = vmatpush1.msra.mxu0 0.0
          %1527 = vmatprep.subr.mxu0 0.0
          %1528 = vmatpush1.msra.mxu0 0.0
          %1529 = vmatprep.subr.mxu0 0.0
          %1530 = vmatpush1.msra.mxu0 0.0
          %1531 = vmatprep.subr.mxu0 0.0
          %1532 = vmatpush1.msra.mxu0 0.0
          %1533 = vmatprep.subr.mxu0 0.0
          %1534 = vmatpush1.msra.mxu0 0.0
          %1535 = vmatprep.subr.mxu0 0.0
          %1536 = vmatpush1.msra.mxu0 0.0
          %1537 = vmatprep.subr.mxu0 0.0
          %1538 = vmatpush1.msra.mxu0 0.0
          %1539 = vmatprep.subr.mxu0 0.0
          %1540 = vmatpush1.msra.mxu0 0.0
          %1541 = vmatprep.subr.mxu0 0.0
          %1542 = vmatpush1.msra.mxu0 0.0
          %1543 = vmatprep.subr.mxu0 0.0
          %1544 = vmatpush1.msra.mxu0 0.0
          %1545 = vmatprep.subr.mxu0 0.0
          %1546 = vmatpush1.msra.mxu0 0.0
          %1547 = vmatprep.subr.mxu0 0.0
          %1548 = vmatpush1.msra.mxu0 0.0
          %1549 = vmatprep.subr.mxu0 0.0
          %1550 = vmatpush1.msra.mxu0 0.0
          %1551 = vmatprep.subr.mxu0 0.0
          %1552 = vmatpush1.msra.mxu0 0.0
          %1553 = vmatprep.subr.mxu0 0.0
          %1554 = vmatpush1.msra.mxu0 0.0
          %1555 = vmatprep.subr.mxu0 0.0
          %1556 = vmatpush1.msra.mxu0 0.0
          %1557 = vmatprep.mubr.f32.mxu0 0.0
          %1558 = vmatmul.mubr.f32.gmra.mrb[0].mxu0 %v1491
          %v1559 = vpop.f32.mrb[0].mxu0
          %v1560 = vadd.f32 0.0, %v1559
          %v1561 = vpop.f32.mrb[0].mxu0
          %1562 = vdwg.mxu0
          %v1564 = vsel %vm952, %v1465, 0
          %1566 = vmatprep.subr.mxu0 0.0
          %1567 = vmatpush1.msra.mxu0 %v1488
          %1568 = vmatprep.subr.mxu0 0.0
          %1569 = vmatpush1.msra.mxu0 %v1489
          %1570 = vmatprep.subr.mxu0 0.0
          %1571 = vmatpush1.msra.mxu0 0.0
          %1572 = vmatprep.subr.mxu0 0.0
          %1573 = vmatpush1.msra.mxu0 0.0
          %1574 = vmatprep.subr.mxu0 0.0
          %1575 = vmatpush1.msra.mxu0 0.0
          %1576 = vmatprep.subr.mxu0 0.0
          %1577 = vmatpush1.msra.mxu0 0.0
          %1578 = vmatprep.subr.mxu0 0.0
          %1579 = vmatpush1.msra.mxu0 0.0
          %1580 = vmatprep.subr.mxu0 0.0
          %1581 = vmatpush1.msra.mxu0 0.0
          %1582 = vmatprep.subr.mxu0 0.0
          %1583 = vmatpush1.msra.mxu0 0.0
          %1584 = vmatprep.subr.mxu0 0.0
          %1585 = vmatpush1.msra.mxu0 0.0
          %1586 = vmatprep.subr.mxu0 0.0
          %1587 = vmatpush1.msra.mxu0 0.0
          %1588 = vmatprep.subr.mxu0 0.0
          %1589 = vmatpush1.msra.mxu0 0.0
          %1590 = vmatprep.subr.mxu0 0.0
          %1591 = vmatpush1.msra.mxu0 0.0
          %1592 = vmatprep.subr.mxu0 0.0
          %1593 = vmatpush1.msra.mxu0 0.0
          %1594 = vmatprep.subr.mxu0 0.0
          %1595 = vmatpush1.msra.mxu0 0.0
          %1596 = vmatprep.subr.mxu0 0.0
          %1597 = vmatpush1.msra.mxu0 0.0
          %1598 = vmatprep.subr.mxu0 0.0
          %1599 = vmatpush1.msra.mxu0 0.0
          %1600 = vmatprep.subr.mxu0 0.0
          %1601 = vmatpush1.msra.mxu0 0.0
          %1602 = vmatprep.subr.mxu0 0.0
          %1603 = vmatpush1.msra.mxu0 0.0
          %1604 = vmatprep.subr.mxu0 0.0
          %1605 = vmatpush1.msra.mxu0 0.0
          %1606 = vmatprep.subr.mxu0 0.0
          %1607 = vmatpush1.msra.mxu0 0.0
          %1608 = vmatprep.subr.mxu0 0.0
          %1609 = vmatpush1.msra.mxu0 0.0
          %1610 = vmatprep.subr.mxu0 0.0
          %1611 = vmatpush1.msra.mxu0 0.0
          %1612 = vmatprep.subr.mxu0 0.0
          %1613 = vmatpush1.msra.mxu0 0.0
          %1614 = vmatprep.subr.mxu0 0.0
          %1615 = vmatpush1.msra.mxu0 0.0
          %1616 = vmatprep.subr.mxu0 0.0
          %1617 = vmatpush1.msra.mxu0 0.0
          %1618 = vmatprep.subr.mxu0 0.0
          %1619 = vmatpush1.msra.mxu0 0.0
          %1620 = vmatprep.subr.mxu0 0.0
          %1621 = vmatpush1.msra.mxu0 0.0
          %1622 = vmatprep.subr.mxu0 0.0
          %1623 = vmatpush1.msra.mxu0 0.0
          %1624 = vmatprep.subr.mxu0 0.0
          %1625 = vmatpush1.msra.mxu0 0.0
          %1626 = vmatprep.subr.mxu0 0.0
          %1627 = vmatpush1.msra.mxu0 0.0
          %1628 = vmatprep.subr.mxu0 0.0
          %1629 = vmatpush1.msra.mxu0 0.0
          %1630 = vmatprep.mubr.f32.mxu0 0.0
          %1631 = vmatmul.mubr.f32.gmra.mrb[0].mxu0 %v1564
          %v1632 = vpop.f32.mrb[0].mxu0
          %v1633 = vadd.f32 0.0, %v1632
          %v1634 = vpop.f32.mrb[0].mxu0
          %1635 = vdwg.mxu0
          %v1636 = vmax.f32 %v1560, %v1633
          %v1638 = vrot.slane %v1636, 7
          %vm1640 = vcmask 1040384
          %v1641 = vsel %vm1640, 0.0, %v1638
          %v1642 = vsel %vm1640, %v1638, 0.0
          %s1643 = sadd.s32 %s1472, 1
          %s1644 = smul.u32 %s1643, 16
          %s1645 = scalar_lea.vmem [#allocation5], %s1644
          %1646 = vst.msk [vmem:[%s1645] sm:$0xff] %vm952, %v1641
          %1647 = vst.msk [vmem:[%s1645 + $0x8] sm:$0x3] %vm955, %v1642
        $region166: #{forward.1} parent=135 // loop_footer
          %s1476 = sadd.s32 1, %s1472
        $region167: #{forward.1} parent=135 // loop_footer_branch
          %1471 = sbr.rel target = $region163
        $region168: #{forward.1} parent=135 // loop_exit
          _
        %vm1648 = vcmask 261120
        %1649 = vst.msk [vmem:[#allocation6] sm:$0xff] %vm1648, 0.0
        %vm1650 = vcmask 254976
        %1651 = vst.msk [vmem:[#allocation6 + $0x8] sm:$0x3] %vm1650, 0.0
        %s1652 = scalar_lea.vmem [#allocation6], 144
        %1653 = vst.msk [vmem:[%s1652] sm:$0xff] %vm1648, 0.0
        %1654 = vst.msk [vmem:[%s1652 + $0x8] sm:$0x3] %vm1650, 0.0
        %v1655 = vld [vmem:[%s17] sm:$0x1]
        %v1657 = vlaneseq
        %v1658 = vshrl.u32 %v1657, 7
        %v1659 = vsub.s32 0, %v1658
        %v1660 = vrot.slane %v1655, %v1659
        %v1662 = vld [vmem:[%s19] sm:$0x1]
        %v1664 = vlaneseq
        %v1665 = vshrl.u32 %v1664, 7
        %v1666 = vsub.s32 0, %v1665
        %v1667 = vrot.slane %v1662, %v1666
        loop: start=0, step=1, limit=8
        $region169: #{forward.1} parent=135 // loop_pre_header
          _
        $region170: #{forward.1} parent=135 // loop_header
          %s1670 = sphi 0, %s1674
          %p1671 = scmp.ge.s32.totalorder %s1670, 8
        $region171: #{forward.1} parent=135 // loop_header_branch
          %1673 = sbr.rel (%p1671) target = $region175
        $region172: #{forward.1} parent=135 // loop_body
          %s1675 = smul.u32 %s1670, 16
          %s1676 = scalar_lea.vmem [#allocation5], %s1675
          %v1677 = vld [vmem:[%s1676] sm:$0xff]
          %v1678 = vld [vmem:[%s1676 + $0x1] sm:$0xff]
          %v1679 = vld [vmem:[%s1676 + $0x2] sm:$0xff]
          %s1680 = sadd.s32 %s1670, 1
          %s1681 = smul.u32 %s1680, 16
          %s1682 = scalar_lea.vmem [#allocation5], %s1681
          %v1683 = vld [vmem:[%s1682] sm:$0xff]
          %v1684 = vld [vmem:[%s1682 + $0x1] sm:$0xff]
          %v1685 = vld [vmem:[%s1682 + $0x2] sm:$0xff]
          %s1686 = sadd.s32 %s1670, 2
          %s1687 = smul.u32 %s1686, 16
          %s1688 = scalar_lea.vmem [#allocation5], %s1687
          %v1689 = vld [vmem:[%s1688] sm:$0xff]
          %v1690 = vld [vmem:[%s1688 + $0x1] sm:$0xff]
          %v1691 = vld [vmem:[%s1688 + $0x2] sm:$0xff]
          %1693 = vrot.lane.b32.xlu0 %v1678, 16
          %v1694 = vpop.permute.xlu0 %1693
          %1697 = vrot.lane.b32.xlu0 %v1679, 32
          %v1698 = vpop.permute.xlu0 %1697
          %1701 = vrot.lane.b32.xlu0 %v1683, 48
          %v1702 = vpop.permute.xlu0 %1701
          %1705 = vrot.lane.b32.xlu0 %v1684, 64
          %v1706 = vpop.permute.xlu0 %1705
          %1709 = vrot.lane.b32.xlu0 %v1685, 80
          %v1710 = vpop.permute.xlu0 %1709
          %1713 = vrot.lane.b32.xlu0 %v1689, 96
          %v1714 = vpop.permute.xlu0 %1713
          %1717 = vrot.lane.b32.xlu0 %v1690, 112
          %v1718 = vpop.permute.xlu0 %1717
          %v1720 = vsel %vm952, %v1677, %v1694
          %v1721 = vsel %vm1648, %v1720, %v1698
          %vm1722 = vcmask 392192
          %v1723 = vsel %vm1722, %v1721, %v1702
          %vm1724 = vcmask 523264
          %v1725 = vsel %vm1724, %v1723, %v1706
          %vm1726 = vcmask 654336
          %v1727 = vsel %vm1726, %v1725, %v1710
          %vm1728 = vcmask 785408
          %v1729 = vsel %vm1728, %v1727, %v1714
          %vm1730 = vcmask 916480
          %v1731 = vsel %vm1730, %v1729, %v1718
          %v1732 = vld [vmem:[%s15] sm:$0xff]
          %v1733 = vld [vmem:[%s15 + $0x8] sm:$0xff]
          %v1734 = vld [vmem:[%s15 + $0x10] sm:$0xff]
          %v1735 = vld [vmem:[%s15 + $0x18] sm:$0xff]
          %v1736 = vld [vmem:[%s15 + $0x20] sm:$0xff]
          %v1737 = vld [vmem:[%s15 + $0x28] sm:$0xff]
          %v1738 = vld [vmem:[%s15 + $0x30] sm:$0xff]
          %v1739 = vld [vmem:[%s15 + $0x38] sm:$0xff]
          %v1740 = vld [vmem:[%s15 + $0x40] sm:$0xff]
          %v1741 = vld [vmem:[%s15 + $0x48] sm:$0xff]
          %v1742 = vld [vmem:[%s15 + $0x50] sm:$0xff]
          %v1743 = vld [vmem:[%s15 + $0x58] sm:$0xff]
          %v1744 = vld [vmem:[%s15 + $0x60] sm:$0xff]
          %v1745 = vld [vmem:[%s15 + $0x68] sm:$0xff]
          %v1746 = vld [vmem:[%s15 + $0x70] sm:$0xff]
          %v1747 = vld [vmem:[%s15 + $0x78] sm:$0xff]
          %v1748 = vld [vmem:[%s15 + $0x80] sm:$0xff]
          %v1749 = vld [vmem:[%s15 + $0x88] sm:$0xff]
          %v1751 = vsel %vm952, %v1691, 0
          %1753 = vmatprep.subr.mxu0 0.0
          %1754 = vmatpush1.msra.mxu0 %v1732
          %1755 = vmatprep.subr.mxu0 0.0
          %1756 = vmatpush1.msra.mxu0 %v1733
          %1757 = vmatprep.subr.mxu0 0.0
          %1758 = vmatpush1.msra.mxu0 %v1734
          %1759 = vmatprep.subr.mxu0 0.0
          %1760 = vmatpush1.msra.mxu0 %v1735
          %1761 = vmatprep.subr.mxu0 0.0
          %1762 = vmatpush1.msra.mxu0 %v1736
          %1763 = vmatprep.subr.mxu0 0.0
          %1764 = vmatpush1.msra.mxu0 %v1737
          %1765 = vmatprep.subr.mxu0 0.0
          %1766 = vmatpush1.msra.mxu0 %v1738
          %1767 = vmatprep.subr.mxu0 0.0
          %1768 = vmatpush1.msra.mxu0 %v1739
          %1769 = vmatprep.subr.mxu0 0.0
          %1770 = vmatpush1.msra.mxu0 %v1740
          %1771 = vmatprep.subr.mxu0 0.0
          %1772 = vmatpush1.msra.mxu0 %v1741
          %1773 = vmatprep.subr.mxu0 0.0
          %1774 = vmatpush1.msra.mxu0 %v1742
          %1775 = vmatprep.subr.mxu0 0.0
          %1776 = vmatpush1.msra.mxu0 %v1743
          %1777 = vmatprep.subr.mxu0 0.0
          %1778 = vmatpush1.msra.mxu0 %v1744
          %1779 = vmatprep.subr.mxu0 0.0
          %1780 = vmatpush1.msra.mxu0 %v1745
          %1781 = vmatprep.subr.mxu0 0.0
          %1782 = vmatpush1.msra.mxu0 %v1746
          %1783 = vmatprep.subr.mxu0 0.0
          %1784 = vmatpush1.msra.mxu0 %v1747
          %1785 = vmatprep.subr.mxu0 0.0
          %1786 = vmatpush1.msra.mxu0 %v1748
          %1787 = vmatprep.subr.mxu0 0.0
          %1788 = vmatpush1.msra.mxu0 %v1749
          %1789 = vmatprep.subr.mxu0 0.0
          %1790 = vmatpush1.msra.mxu0 0.0
          %1791 = vmatprep.subr.mxu0 0.0
          %1792 = vmatpush1.msra.mxu0 0.0
          %1793 = vmatprep.subr.mxu0 0.0
          %1794 = vmatpush1.msra.mxu0 0.0
          %1795 = vmatprep.subr.mxu0 0.0
          %1796 = vmatpush1.msra.mxu0 0.0
          %1797 = vmatprep.subr.mxu0 0.0
          %1798 = vmatpush1.msra.mxu0 0.0
          %1799 = vmatprep.subr.mxu0 0.0
          %1800 = vmatpush1.msra.mxu0 0.0
          %1801 = vmatprep.subr.mxu0 0.0
          %1802 = vmatpush1.msra.mxu0 0.0
          %1803 = vmatprep.subr.mxu0 0.0
          %1804 = vmatpush1.msra.mxu0 0.0
          %1805 = vmatprep.subr.mxu0 0.0
          %1806 = vmatpush1.msra.mxu0 0.0
          %1807 = vmatprep.subr.mxu0 0.0
          %1808 = vmatpush1.msra.mxu0 0.0
          %1809 = vmatprep.subr.mxu0 0.0
          %1810 = vmatpush1.msra.mxu0 0.0
          %1811 = vmatprep.subr.mxu0 0.0
          %1812 = vmatpush1.msra.mxu0 0.0
          %1813 = vmatprep.subr.mxu0 0.0
          %1814 = vmatpush1.msra.mxu0 0.0
          %1815 = vmatprep.subr.mxu0 0.0
          %1816 = vmatpush1.msra.mxu0 0.0
          %1817 = vmatprep.mubr.f32.mxu0 %v1751
          %1818 = vmatmul.mubr.f32.gmra.mrb[0].mxu0 %v1731
          %v1819 = vpop.f32.mrb[0].mxu0
          %v1820 = vadd.f32 0.0, %v1819
          %v1821 = vpop.f32.mrb[0].mxu0
          %1822 = vdwg.mxu0
          %v1823 = vmul.f32 %v1820, %v1660
          %v1824 = vadd.f32 %v1823, %v1667
          %v1825 = vmax.f32 %v1824, 0.0
          %v1827 = vrot.slane %v1825, 7
          %vm1829 = vcmask 1040384
          %v1830 = vsel %vm1829, 0.0, %v1827
          %v1831 = vsel %vm1829, %v1827, 0.0
          %s1832 = scalar_lea.vmem [#allocation6], %s1681
          %1833 = vst.msk [vmem:[%s1832] sm:$0xff] %vm1648, %v1830
          %1834 = vst.msk [vmem:[%s1832 + $0x8] sm:$0x3] %vm1650, %v1831
        $region173: #{forward.1} parent=135 // loop_footer
          %s1674 = sadd.s32 1, %s1670
        $region174: #{forward.1} parent=135 // loop_footer_branch
          %1669 = sbr.rel target = $region170
        $region175: #{forward.1} parent=135 // loop_exit
          _
        %1835 = vst.msk [vmem:[#allocation7] sm:$0xff] %vm1648, 0.0
        %1836 = vst.msk [vmem:[#allocation7 + $0x8] sm:$0x3] %vm1650, 0.0
        %s1837 = scalar_lea.vmem [#allocation7], 144
        %1838 = vst.msk [vmem:[%s1837] sm:$0xff] %vm1648, 0.0
        %1839 = vst.msk [vmem:[%s1837 + $0x8] sm:$0x3] %vm1650, 0.0
        %v1840 = vld [vmem:[%s23] sm:$0x1]
        %v1842 = vlaneseq
        %v1843 = vshrl.u32 %v1842, 7
        %v1844 = vsub.s32 0, %v1843
        %v1845 = vrot.slane %v1840, %v1844
        %v1847 = vld [vmem:[%s25] sm:$0x1]
        %v1849 = vlaneseq
        %v1850 = vshrl.u32 %v1849, 7
        %v1851 = vsub.s32 0, %v1850
        %v1852 = vrot.slane %v1847, %v1851
        loop: start=0, step=1, limit=8
        $region176: #{forward.1} parent=135 // loop_pre_header
          _
        $region177: #{forward.1} parent=135 // loop_header
          %s1855 = sphi 0, %s1859
          %p1856 = scmp.ge.s32.totalorder %s1855, 8
        $region178: #{forward.1} parent=135 // loop_header_branch
          %1858 = sbr.rel (%p1856) target = $region182
        $region179: #{forward.1} parent=135 // loop_body
          %s1860 = smul.u32 %s1855, 16
          %s1861 = scalar_lea.vmem [#allocation6], %s1860
          %v1862 = vld [vmem:[%s1861] sm:$0xff]
          %v1863 = vld [vmem:[%s1861 + $0x1] sm:$0xff]
          %v1864 = vld [vmem:[%s1861 + $0x2] sm:$0xff]
          %s1865 = sadd.s32 %s1855, 1
          %s1866 = smul.u32 %s1865, 16
          %s1867 = scalar_lea.vmem [#allocation6], %s1866
          %v1868 = vld [vmem:[%s1867] sm:$0xff]
          %v1869 = vld [vmem:[%s1867 + $0x1] sm:$0xff]
          %v1870 = vld [vmem:[%s1867 + $0x2] sm:$0xff]
          %s1871 = sadd.s32 %s1855, 2
          %s1872 = smul.u32 %s1871, 16
          %s1873 = scalar_lea.vmem [#allocation6], %s1872
          %v1874 = vld [vmem:[%s1873] sm:$0xff]
          %v1875 = vld [vmem:[%s1873 + $0x1] sm:$0xff]
          %v1876 = vld [vmem:[%s1873 + $0x2] sm:$0xff]
          %1878 = vrot.lane.b32.xlu0 %v1863, 32
          %v1879 = vpop.permute.xlu0 %1878
          %1882 = vrot.lane.b32.xlu0 %v1864, 64
          %v1883 = vpop.permute.xlu0 %1882
          %1886 = vrot.lane.b32.xlu0 %v1868, 96
          %v1887 = vpop.permute.xlu0 %1886
          %1890 = vrot.lane.b32.xlu0 %v1870, 32
          %v1891 = vpop.permute.xlu0 %1890
          %1894 = vrot.lane.b32.xlu0 %v1874, 64
          %v1895 = vpop.permute.xlu0 %1894
          %1898 = vrot.lane.b32.xlu0 %v1875, 96
          %v1899 = vpop.permute.xlu0 %1898
          %v1901 = vsel %vm1648, %v1862, %v1879
          %vm1902 = vcmask 523264
          %v1903 = vsel %vm1902, %v1901, %v1883
          %vm1904 = vcmask 785408
          %v1905 = vsel %vm1904, %v1903, %v1887
          %v1906 = vsel %vm1648, %v1869, %v1891
          %v1907 = vsel %vm1902, %v1906, %v1895
          %v1908 = vsel %vm1904, %v1907, %v1899
          %v1909 = vld [vmem:[%s21] sm:$0xff]
          %v1910 = vld [vmem:[%s21 + $0x8] sm:$0xff]
          %v1911 = vld [vmem:[%s21 + $0x10] sm:$0xff]
          %v1912 = vld [vmem:[%s21 + $0x18] sm:$0xff]
          %v1913 = vld [vmem:[%s21 + $0x20] sm:$0xff]
          %v1914 = vld [vmem:[%s21 + $0x28] sm:$0xff]
          %v1915 = vld [vmem:[%s21 + $0x30] sm:$0xff]
          %v1916 = vld [vmem:[%s21 + $0x38] sm:$0xff]
          %v1917 = vld [vmem:[%s21 + $0x40] sm:$0xff]
          %v1918 = vld [vmem:[%s21 + $0x48] sm:$0xff]
          %v1919 = vld [vmem:[%s21 + $0x50] sm:$0xff]
          %v1920 = vld [vmem:[%s21 + $0x58] sm:$0xff]
          %v1921 = vld [vmem:[%s21 + $0x60] sm:$0xff]
          %v1922 = vld [vmem:[%s21 + $0x68] sm:$0xff]
          %v1923 = vld [vmem:[%s21 + $0x70] sm:$0xff]
          %v1924 = vld [vmem:[%s21 + $0x78] sm:$0xff]
          %v1925 = vld [vmem:[%s21 + $0x80] sm:$0xff]
          %v1926 = vld [vmem:[%s21 + $0x88] sm:$0xff]
          %v1927 = vld [vmem:[%s21 + $0x90] sm:$0xff]
          %v1928 = vld [vmem:[%s21 + $0x98] sm:$0xff]
          %v1929 = vld [vmem:[%s21 + $0xa0] sm:$0xff]
          %v1930 = vld [vmem:[%s21 + $0xa8] sm:$0xff]
          %v1931 = vld [vmem:[%s21 + $0xb0] sm:$0xff]
          %v1932 = vld [vmem:[%s21 + $0xb8] sm:$0xff]
          %v1933 = vld [vmem:[%s21 + $0xc0] sm:$0xff]
          %v1934 = vld [vmem:[%s21 + $0xc8] sm:$0xff]
          %v1935 = vld [vmem:[%s21 + $0xd0] sm:$0xff]
          %v1936 = vld [vmem:[%s21 + $0xd8] sm:$0xff]
          %v1937 = vld [vmem:[%s21 + $0xe0] sm:$0xff]
          %v1938 = vld [vmem:[%s21 + $0xe8] sm:$0xff]
          %v1939 = vld [vmem:[%s21 + $0xf0] sm:$0xff]
          %v1940 = vld [vmem:[%s21 + $0xf8] sm:$0xff]
          %v1941 = vld [vmem:[%s21 + $0x100] sm:$0xff]
          %v1942 = vld [vmem:[%s21 + $0x108] sm:$0xff]
          %v1943 = vld [vmem:[%s21 + $0x110] sm:$0xff]
          %v1944 = vld [vmem:[%s21 + $0x118] sm:$0xff]
          %v1946 = vsel %vm1648, %v1876, 0
          %1948 = vmatprep.subr.mxu0 0.0
          %1949 = vmatpush1.msra.mxu0 %v1909
          %1950 = vmatprep.subr.mxu0 0.0
          %1951 = vmatpush1.msra.mxu0 %v1910
          %1952 = vmatprep.subr.mxu0 0.0
          %1953 = vmatpush1.msra.mxu0 %v1911
          %1954 = vmatprep.subr.mxu0 0.0
          %1955 = vmatpush1.msra.mxu0 %v1912
          %1956 = vmatprep.subr.mxu0 0.0
          %1957 = vmatpush1.msra.mxu0 %v1913
          %1958 = vmatprep.subr.mxu0 0.0
          %1959 = vmatpush1.msra.mxu0 %v1914
          %1960 = vmatprep.subr.mxu0 0.0
          %1961 = vmatpush1.msra.mxu0 %v1915
          %1962 = vmatprep.subr.mxu0 0.0
          %1963 = vmatpush1.msra.mxu0 %v1916
          %1964 = vmatprep.subr.mxu0 0.0
          %1965 = vmatpush1.msra.mxu0 %v1917
          %1966 = vmatprep.subr.mxu0 0.0
          %1967 = vmatpush1.msra.mxu0 %v1918
          %1968 = vmatprep.subr.mxu0 0.0
          %1969 = vmatpush1.msra.mxu0 %v1919
          %1970 = vmatprep.subr.mxu0 0.0
          %1971 = vmatpush1.msra.mxu0 %v1920
          %1972 = vmatprep.subr.mxu0 0.0
          %1973 = vmatpush1.msra.mxu0 %v1921
          %1974 = vmatprep.subr.mxu0 0.0
          %1975 = vmatpush1.msra.mxu0 %v1922
          %1976 = vmatprep.subr.mxu0 0.0
          %1977 = vmatpush1.msra.mxu0 %v1923
          %1978 = vmatprep.subr.mxu0 0.0
          %1979 = vmatpush1.msra.mxu0 %v1924
          %1980 = vmatprep.subr.mxu0 0.0
          %1981 = vmatpush1.msra.mxu0 %v1925
          %1982 = vmatprep.subr.mxu0 0.0
          %1983 = vmatpush1.msra.mxu0 %v1926
          %1984 = vmatprep.subr.mxu0 0.0
          %1985 = vmatpush1.msra.mxu0 %v1927
          %1986 = vmatprep.subr.mxu0 0.0
          %1987 = vmatpush1.msra.mxu0 %v1928
          %1988 = vmatprep.subr.mxu0 0.0
          %1989 = vmatpush1.msra.mxu0 %v1929
          %1990 = vmatprep.subr.mxu0 0.0
          %1991 = vmatpush1.msra.mxu0 %v1930
          %1992 = vmatprep.subr.mxu0 0.0
          %1993 = vmatpush1.msra.mxu0 %v1931
          %1994 = vmatprep.subr.mxu0 0.0
          %1995 = vmatpush1.msra.mxu0 %v1932
          %1996 = vmatprep.subr.mxu0 0.0
          %1997 = vmatpush1.msra.mxu0 %v1933
          %1998 = vmatprep.subr.mxu0 0.0
          %1999 = vmatpush1.msra.mxu0 %v1934
          %2000 = vmatprep.subr.mxu0 0.0
          %2001 = vmatpush1.msra.mxu0 %v1935
          %2002 = vmatprep.subr.mxu0 0.0
          %2003 = vmatpush1.msra.mxu0 %v1936
          %2004 = vmatprep.subr.mxu0 0.0
          %2005 = vmatpush1.msra.mxu0 %v1937
          %2006 = vmatprep.subr.mxu0 0.0
          %2007 = vmatpush1.msra.mxu0 %v1938
          %2008 = vmatprep.subr.mxu0 0.0
          %2009 = vmatpush1.msra.mxu0 %v1939
          %2010 = vmatprep.subr.mxu0 0.0
          %2011 = vmatpush1.msra.mxu0 %v1940
          %2012 = vmatprep.mubr.f32.mxu0 %v1908
          %2013 = vmatmul.mubr.f32.gmra.mrb[0].mxu0 %v1905
          %v2014 = vpop.f32.mrb[0].mxu0
          %v2015 = vadd.f32 0.0, %v2014
          %v2016 = vpop.f32.mrb[0].mxu0
          %2017 = vdwg.mxu0
          %2018 = vmatprep.subr.mxu0 0.0
          %2019 = vmatpush1.msra.mxu0 %v1941
          %2020 = vmatprep.subr.mxu0 0.0
          %2021 = vmatpush1.msra.mxu0 %v1942
          %2022 = vmatprep.subr.mxu0 0.0
          %2023 = vmatpush1.msra.mxu0 %v1943
          %2024 = vmatprep.subr.mxu0 0.0
          %2025 = vmatpush1.msra.mxu0 %v1944
          %2026 = vmatprep.subr.mxu0 0.0
          %2027 = vmatpush1.msra.mxu0 0.0
          %2028 = vmatprep.subr.mxu0 0.0
          %2029 = vmatpush1.msra.mxu0 0.0
          %2030 = vmatprep.subr.mxu0 0.0
          %2031 = vmatpush1.msra.mxu0 0.0
          %2032 = vmatprep.subr.mxu0 0.0
          %2033 = vmatpush1.msra.mxu0 0.0
          %2034 = vmatprep.subr.mxu0 0.0
          %2035 = vmatpush1.msra.mxu0 0.0
          %2036 = vmatprep.subr.mxu0 0.0
          %2037 = vmatpush1.msra.mxu0 0.0
          %2038 = vmatprep.subr.mxu0 0.0
          %2039 = vmatpush1.msra.mxu0 0.0
          %2040 = vmatprep.subr.mxu0 0.0
          %2041 = vmatpush1.msra.mxu0 0.0
          %2042 = vmatprep.subr.mxu0 0.0
          %2043 = vmatpush1.msra.mxu0 0.0
          %2044 = vmatprep.subr.mxu0 0.0
          %2045 = vmatpush1.msra.mxu0 0.0
          %2046 = vmatprep.subr.mxu0 0.0
          %2047 = vmatpush1.msra.mxu0 0.0
          %2048 = vmatprep.subr.mxu0 0.0
          %2049 = vmatpush1.msra.mxu0 0.0
          %2050 = vmatprep.subr.mxu0 0.0
          %2051 = vmatpush1.msra.mxu0 0.0
          %2052 = vmatprep.subr.mxu0 0.0
          %2053 = vmatpush1.msra.mxu0 0.0
          %2054 = vmatprep.subr.mxu0 0.0
          %2055 = vmatpush1.msra.mxu0 0.0
          %2056 = vmatprep.subr.mxu0 0.0
          %2057 = vmatpush1.msra.mxu0 0.0
          %2058 = vmatprep.subr.mxu0 0.0
          %2059 = vmatpush1.msra.mxu0 0.0
          %2060 = vmatprep.subr.mxu0 0.0
          %2061 = vmatpush1.msra.mxu0 0.0
          %2062 = vmatprep.subr.mxu0 0.0
          %2063 = vmatpush1.msra.mxu0 0.0
          %2064 = vmatprep.subr.mxu0 0.0
          %2065 = vmatpush1.msra.mxu0 0.0
          %2066 = vmatprep.subr.mxu0 0.0
          %2067 = vmatpush1.msra.mxu0 0.0
          %2068 = vmatprep.subr.mxu0 0.0
          %2069 = vmatpush1.msra.mxu0 0.0
          %2070 = vmatprep.subr.mxu0 0.0
          %2071 = vmatpush1.msra.mxu0 0.0
          %2072 = vmatprep.subr.mxu0 0.0
          %2073 = vmatpush1.msra.mxu0 0.0
          %2074 = vmatprep.subr.mxu0 0.0
          %2075 = vmatpush1.msra.mxu0 0.0
          %2076 = vmatprep.subr.mxu0 0.0
          %2077 = vmatpush1.msra.mxu0 0.0
          %2078 = vmatprep.subr.mxu0 0.0
          %2079 = vmatpush1.msra.mxu0 0.0
          %2080 = vmatprep.subr.mxu0 0.0
          %2081 = vmatpush1.msra.mxu0 0.0
          %2082 = vmatprep.mubr.f32.mxu0 0.0
          %2083 = vmatmul.mubr.f32.gmra.mrb[0].mxu0 %v1946
          %v2084 = vpop.f32.mrb[0].mxu0
          %v2085 = vadd.f32 %v2015, %v2084
          %v2086 = vpop.f32.mrb[0].mxu0
          %2087 = vdwg.mxu0
          %v2088 = vmul.f32 %v2085, %v1845
          %v2089 = vadd.f32 %v2088, %v1852
          %v2090 = vmax.f32 %v2089, 0.0
          %v2092 = vrot.slane %v2090, 7
          %vm2094 = vcmask 1040384
          %v2095 = vsel %vm2094, 0.0, %v2092
          %v2096 = vsel %vm2094, %v2092, 0.0
          %s2097 = scalar_lea.vmem [#allocation7], %s1866
          %2098 = vst.msk [vmem:[%s2097] sm:$0xff] %vm1648, %v2095
          %2099 = vst.msk [vmem:[%s2097 + $0x8] sm:$0x3] %vm1650, %v2096
        $region180: #{forward.1} parent=135 // loop_footer
          %s1859 = sadd.s32 1, %s1855
        $region181: #{forward.1} parent=135 // loop_footer_branch
          %1854 = sbr.rel target = $region177
        $region182: #{forward.1} parent=135 // loop_exit
          _
        %vm2100 = vcmask 259072
        %2101 = vst.msk [vmem:[#allocation8] sm:$0x3f] %vm2100, 0.0
        %s2102 = scalar_lea.vmem [#allocation8], 40
        %2103 = vst.msk [vmem:[%s2102] sm:$0x3f] %vm2100, 0.0
        loop: start=0, step=1, limit=4
        $region183: #{forward.1} parent=135 // loop_pre_header
          _
        $region184: #{forward.1} parent=135 // loop_header
          %s2105 = sphi 0, %s2109
          %p2106 = scmp.ge.s32.totalorder %s2105, 4
        $region185: #{forward.1} parent=135 // loop_header_branch
          %2108 = sbr.rel (%p2106) target = $region189
        $region186: #{forward.1} parent=135 // loop_body
          %s2110 = smul.u32 %s2105, 2
          %s2111 = sadd.s32 %s2110, 1
          %s2112 = smul.u32 %s2111, 16
          %s2113 = scalar_lea.vmem [#allocation7], %s2112
          %v2114 = vld [vmem:[%s2113 + $0x1] sm:$0xff]
          %s2115 = sadd.s32 %s2110, 2
          %s2116 = smul.u32 %s2115, 16
          %s2117 = scalar_lea.vmem [#allocation7], %s2116
          %v2118 = vld [vmem:[%s2117 + $0x1] sm:$0xff]
          %v2119 = vmax.f32 %v2114, %v2118
          %v2121 = vsel %vm916, %v1461, 0
          %2123 = vmatprep.subr.mxu0 0.0
          %2124 = vmatpush1.msra.mxu0 %v2119
          %2125 = vmatprep.subr.mxu0 0.0
          %2126 = vmatpush1.msra.mxu0 0.0
          %2127 = vmatprep.subr.mxu0 0.0
          %2128 = vmatpush1.msra.mxu0 0.0
          %2129 = vmatprep.subr.mxu0 0.0
          %2130 = vmatpush1.msra.mxu0 0.0
          %2131 = vmatprep.subr.mxu0 0.0
          %2132 = vmatpush1.msra.mxu0 0.0
          %2133 = vmatprep.subr.mxu0 0.0
          %2134 = vmatpush1.msra.mxu0 0.0
          %2135 = vmatprep.subr.mxu0 0.0
          %2136 = vmatpush1.msra.mxu0 0.0
          %2137 = vmatprep.subr.mxu0 0.0
          %2138 = vmatpush1.msra.mxu0 0.0
          %2139 = vmatprep.subr.mxu0 0.0
          %2140 = vmatpush1.msra.mxu0 0.0
          %2141 = vmatprep.subr.mxu0 0.0
          %2142 = vmatpush1.msra.mxu0 0.0
          %2143 = vmatprep.subr.mxu0 0.0
          %2144 = vmatpush1.msra.mxu0 0.0
          %2145 = vmatprep.subr.mxu0 0.0
          %2146 = vmatpush1.msra.mxu0 0.0
          %2147 = vmatprep.subr.mxu0 0.0
          %2148 = vmatpush1.msra.mxu0 0.0
          %2149 = vmatprep.subr.mxu0 0.0
          %2150 = vmatpush1.msra.mxu0 0.0
          %2151 = vmatprep.subr.mxu0 0.0
          %2152 = vmatpush1.msra.mxu0 0.0
          %2153 = vmatprep.subr.mxu0 0.0
          %2154 = vmatpush1.msra.mxu0 0.0
          %2155 = vmatprep.subr.mxu0 0.0
          %2156 = vmatpush1.msra.mxu0 0.0
          %2157 = vmatprep.subr.mxu0 0.0
          %2158 = vmatpush1.msra.mxu0 0.0
          %2159 = vmatprep.subr.mxu0 0.0
          %2160 = vmatpush1.msra.mxu0 0.0
          %2161 = vmatprep.subr.mxu0 0.0
          %2162 = vmatpush1.msra.mxu0 0.0
          %2163 = vmatprep.subr.mxu0 0.0
          %2164 = vmatpush1.msra.mxu0 0.0
          %2165 = vmatprep.subr.mxu0 0.0
          %2166 = vmatpush1.msra.mxu0 0.0
          %2167 = vmatprep.subr.mxu0 0.0
          %2168 = vmatpush1.msra.mxu0 0.0
          %2169 = vmatprep.subr.mxu0 0.0
          %2170 = vmatpush1.msra.mxu0 0.0
          %2171 = vmatprep.subr.mxu0 0.0
          %2172 = vmatpush1.msra.mxu0 0.0
          %2173 = vmatprep.subr.mxu0 0.0
          %2174 = vmatpush1.msra.mxu0 0.0
          %2175 = vmatprep.subr.mxu0 0.0
          %2176 = vmatpush1.msra.mxu0 0.0
          %2177 = vmatprep.subr.mxu0 0.0
          %2178 = vmatpush1.msra.mxu0 0.0
          %2179 = vmatprep.subr.mxu0 0.0
          %2180 = vmatpush1.msra.mxu0 0.0
          %2181 = vmatprep.subr.mxu0 0.0
          %2182 = vmatpush1.msra.mxu0 0.0
          %2183 = vmatprep.subr.mxu0 0.0
          %2184 = vmatpush1.msra.mxu0 0.0
          %2185 = vmatprep.subr.mxu0 0.0
          %2186 = vmatpush1.msra.mxu0 0.0
          %2187 = vmatprep.mubr.f32.mxu0 0.0
          %2188 = vmatmul.mubr.f32.gmra.mrb[0].mxu0 %v2121
          %v2189 = vpop.f32.mrb[0].mxu0
          %v2190 = vadd.f32 0.0, %v2189
          %v2191 = vpop.f32.mrb[0].mxu0
          %2192 = vdwg.mxu0
          %v2194 = vsel %vm916, %v1465, 0
          %2196 = vmatprep.subr.mxu0 0.0
          %2197 = vmatpush1.msra.mxu0 %v2119
          %2198 = vmatprep.subr.mxu0 0.0
          %2199 = vmatpush1.msra.mxu0 0.0
          %2200 = vmatprep.subr.mxu0 0.0
          %2201 = vmatpush1.msra.mxu0 0.0
          %2202 = vmatprep.subr.mxu0 0.0
          %2203 = vmatpush1.msra.mxu0 0.0
          %2204 = vmatprep.subr.mxu0 0.0
          %2205 = vmatpush1.msra.mxu0 0.0
          %2206 = vmatprep.subr.mxu0 0.0
          %2207 = vmatpush1.msra.mxu0 0.0
          %2208 = vmatprep.subr.mxu0 0.0
          %2209 = vmatpush1.msra.mxu0 0.0
          %2210 = vmatprep.subr.mxu0 0.0
          %2211 = vmatpush1.msra.mxu0 0.0
          %2212 = vmatprep.subr.mxu0 0.0
          %2213 = vmatpush1.msra.mxu0 0.0
          %2214 = vmatprep.subr.mxu0 0.0
          %2215 = vmatpush1.msra.mxu0 0.0
          %2216 = vmatprep.subr.mxu0 0.0
          %2217 = vmatpush1.msra.mxu0 0.0
          %2218 = vmatprep.subr.mxu0 0.0
          %2219 = vmatpush1.msra.mxu0 0.0
          %2220 = vmatprep.subr.mxu0 0.0
          %2221 = vmatpush1.msra.mxu0 0.0
          %2222 = vmatprep.subr.mxu0 0.0
          %2223 = vmatpush1.msra.mxu0 0.0
          %2224 = vmatprep.subr.mxu0 0.0
          %2225 = vmatpush1.msra.mxu0 0.0
          %2226 = vmatprep.subr.mxu0 0.0
          %2227 = vmatpush1.msra.mxu0 0.0
          %2228 = vmatprep.subr.mxu0 0.0
          %2229 = vmatpush1.msra.mxu0 0.0
          %2230 = vmatprep.subr.mxu0 0.0
          %2231 = vmatpush1.msra.mxu0 0.0
          %2232 = vmatprep.subr.mxu0 0.0
          %2233 = vmatpush1.msra.mxu0 0.0
          %2234 = vmatprep.subr.mxu0 0.0
          %2235 = vmatpush1.msra.mxu0 0.0
          %2236 = vmatprep.subr.mxu0 0.0
          %2237 = vmatpush1.msra.mxu0 0.0
          %2238 = vmatprep.subr.mxu0 0.0
          %2239 = vmatpush1.msra.mxu0 0.0
          %2240 = vmatprep.subr.mxu0 0.0
          %2241 = vmatpush1.msra.mxu0 0.0
          %2242 = vmatprep.subr.mxu0 0.0
          %2243 = vmatpush1.msra.mxu0 0.0
          %2244 = vmatprep.subr.mxu0 0.0
          %2245 = vmatpush1.msra.mxu0 0.0
          %2246 = vmatprep.subr.mxu0 0.0
          %2247 = vmatpush1.msra.mxu0 0.0
          %2248 = vmatprep.subr.mxu0 0.0
          %2249 = vmatpush1.msra.mxu0 0.0
          %2250 = vmatprep.subr.mxu0 0.0
          %2251 = vmatpush1.msra.mxu0 0.0
          %2252 = vmatprep.subr.mxu0 0.0
          %2253 = vmatpush1.msra.mxu0 0.0
          %2254 = vmatprep.subr.mxu0 0.0
          %2255 = vmatpush1.msra.mxu0 0.0
          %2256 = vmatprep.subr.mxu0 0.0
          %2257 = vmatpush1.msra.mxu0 0.0
          %2258 = vmatprep.subr.mxu0 0.0
          %2259 = vmatpush1.msra.mxu0 0.0
          %2260 = vmatprep.mubr.f32.mxu0 0.0
          %2261 = vmatmul.mubr.f32.gmra.mrb[0].mxu0 %v2194
          %v2262 = vpop.f32.mrb[0].mxu0
          %v2263 = vadd.f32 0.0, %v2262
          %v2264 = vpop.f32.mrb[0].mxu0
          %2265 = vdwg.mxu0
          %v2266 = vmax.f32 %v2190, %v2263
          %v2268 = vrot.slane %v2266, 7
          %vm2270 = vcmask 1040384
          %v2271 = vsel %vm2270, 0.0, %v2268
          %vm2272 = vcmask 1044480
          %v2273 = vsel %vm2272, %v2271, 0.0
          %s2274 = sadd.s32 %s2105, 1
          %s2275 = smul.u32 %s2274, 8
          %s2276 = scalar_lea.vmem [#allocation8], %s2275
          %2277 = vst.msk [vmem:[%s2276] sm:$0x3f] %vm2100, %v2273
        $region187: #{forward.1} parent=135 // loop_footer
          %s2109 = sadd.s32 1, %s2105
        $region188: #{forward.1} parent=135 // loop_footer_branch
          %2104 = sbr.rel target = $region184
        $region189: #{forward.1} parent=135 // loop_exit
          _
        %vm2278 = vcmask 521216
        %2279 = vst.msk [vmem:[#allocation9] sm:$0x3f] %vm2278, 0.0
        %s2280 = scalar_lea.vmem [#allocation9], 40
        %2281 = vst.msk [vmem:[%s2280] sm:$0x3f] %vm2278, 0.0
        %v2282 = vld [vmem:[%s29] sm:$0x1]
        %v2284 = vlaneseq
        %v2285 = vshrl.u32 %v2284, 7
        %v2286 = vsub.s32 0, %v2285
        %v2287 = vrot.slane %v2282, %v2286
        %v2289 = vld [vmem:[%s31] sm:$0x1]
        %v2291 = vlaneseq
        %v2292 = vshrl.u32 %v2291, 7
        %v2293 = vsub.s32 0, %v2292
        %v2294 = vrot.slane %v2289, %v2293
        loop: start=0, step=1, limit=4
        $region190: #{forward.1} parent=135 // loop_pre_header
          _
        $region191: #{forward.1} parent=135 // loop_header
          %s2297 = sphi 0, %s2301
          %p2298 = scmp.ge.s32.totalorder %s2297, 4
        $region192: #{forward.1} parent=135 // loop_header_branch
          %2300 = sbr.rel (%p2298) target = $region196
        $region193: #{forward.1} parent=135 // loop_body
          %s2302 = smul.u32 %s2297, 8
          %s2303 = scalar_lea.vmem [#allocation8], %s2302
          %v2304 = vld [vmem:[%s2303] sm:$0xf]
          %v2305 = vld [vmem:[%s2303 + $0x1] sm:$0xf]
          %v2306 = vld [vmem:[%s2303 + $0x2] sm:$0xf]
          %s2307 = sadd.s32 %s2297, 1
          %s2308 = smul.u32 %s2307, 8
          %s2309 = scalar_lea.vmem [#allocation8], %s2308
          %v2310 = vld [vmem:[%s2309] sm:$0xf]
          %v2311 = vld [vmem:[%s2309 + $0x1] sm:$0xf]
          %v2312 = vld [vmem:[%s2309 + $0x2] sm:$0xf]
          %s2313 = sadd.s32 %s2297, 2
          %s2314 = smul.u32 %s2313, 8
          %s2315 = scalar_lea.vmem [#allocation8], %s2314
          %v2316 = vld [vmem:[%s2315] sm:$0xf]
          %v2317 = vld [vmem:[%s2315 + $0x1] sm:$0xf]
          %v2318 = vld [vmem:[%s2315 + $0x2] sm:$0xf]
          %2320 = vrot.lane.b32.xlu0 %v2305, 32
          %v2321 = vpop.permute.xlu0 %2320
          %2324 = vrot.lane.b32.xlu0 %v2306, 64
          %v2325 = vpop.permute.xlu0 %2324
          %2328 = vrot.lane.b32.xlu0 %v2310, 96
          %v2329 = vpop.permute.xlu0 %2328
          %2332 = vrot.lane.b32.xlu0 %v2312, 32
          %v2333 = vpop.permute.xlu0 %2332
          %2336 = vrot.lane.b32.xlu0 %v2316, 64
          %v2337 = vpop.permute.xlu0 %2336
          %2340 = vrot.lane.b32.xlu0 %v2317, 96
          %v2341 = vpop.permute.xlu0 %2340
          %v2343 = vsel %vm1648, %v2304, %v2321
          %vm2344 = vcmask 523264
          %v2345 = vsel %vm2344, %v2343, %v2325
          %vm2346 = vcmask 785408
          %v2347 = vsel %vm2346, %v2345, %v2329
          %v2348 = vsel %vm1648, %v2311, %v2333
          %v2349 = vsel %vm2344, %v2348, %v2337
          %v2350 = vsel %vm2346, %v2349, %v2341
          %v2351 = vld [vmem:[%s27] sm:$0xff]
          %v2352 = vld [vmem:[%s27 + $0x8] sm:$0xff]
          %v2353 = vld [vmem:[%s27 + $0x10] sm:$0xff]
          %v2354 = vld [vmem:[%s27 + $0x18] sm:$0xff]
          %v2355 = vld [vmem:[%s27 + $0x20] sm:$0xff]
          %v2356 = vld [vmem:[%s27 + $0x28] sm:$0xff]
          %v2357 = vld [vmem:[%s27 + $0x30] sm:$0xff]
          %v2358 = vld [vmem:[%s27 + $0x38] sm:$0xff]
          %v2359 = vld [vmem:[%s27 + $0x40] sm:$0xff]
          %v2360 = vld [vmem:[%s27 + $0x48] sm:$0xff]
          %v2361 = vld [vmem:[%s27 + $0x50] sm:$0xff]
          %v2362 = vld [vmem:[%s27 + $0x58] sm:$0xff]
          %v2363 = vld [vmem:[%s27 + $0x60] sm:$0xff]
          %v2364 = vld [vmem:[%s27 + $0x68] sm:$0xff]
          %v2365 = vld [vmem:[%s27 + $0x70] sm:$0xff]
          %v2366 = vld [vmem:[%s27 + $0x78] sm:$0xff]
          %v2367 = vld [vmem:[%s27 + $0x80] sm:$0xff]
          %v2368 = vld [vmem:[%s27 + $0x88] sm:$0xff]
          %v2369 = vld [vmem:[%s27 + $0x90] sm:$0xff]
          %v2370 = vld [vmem:[%s27 + $0x98] sm:$0xff]
          %v2371 = vld [vmem:[%s27 + $0xa0] sm:$0xff]
          %v2372 = vld [vmem:[%s27 + $0xa8] sm:$0xff]
          %v2373 = vld [vmem:[%s27 + $0xb0] sm:$0xff]
          %v2374 = vld [vmem:[%s27 + $0xb8] sm:$0xff]
          %v2375 = vld [vmem:[%s27 + $0xc0] sm:$0xff]
          %v2376 = vld [vmem:[%s27 + $0xc8] sm:$0xff]
          %v2377 = vld [vmem:[%s27 + $0xd0] sm:$0xff]
          %v2378 = vld [vmem:[%s27 + $0xd8] sm:$0xff]
          %v2379 = vld [vmem:[%s27 + $0xe0] sm:$0xff]
          %v2380 = vld [vmem:[%s27 + $0xe8] sm:$0xff]
          %v2381 = vld [vmem:[%s27 + $0xf0] sm:$0xff]
          %v2382 = vld [vmem:[%s27 + $0xf8] sm:$0xff]
          %v2383 = vld [vmem:[%s27 + $0x100] sm:$0xff]
          %v2384 = vld [vmem:[%s27 + $0x108] sm:$0xff]
          %v2385 = vld [vmem:[%s27 + $0x110] sm:$0xff]
          %v2386 = vld [vmem:[%s27 + $0x118] sm:$0xff]
          %v2388 = vsel %vm1648, %v2318, 0
          %2390 = vmatprep.subr.mxu0 0.0
          %2391 = vmatpush1.msra.mxu0 %v2351
          %2392 = vmatprep.subr.mxu0 0.0
          %2393 = vmatpush1.msra.mxu0 %v2352
          %2394 = vmatprep.subr.mxu0 0.0
          %2395 = vmatpush1.msra.mxu0 %v2353
          %2396 = vmatprep.subr.mxu0 0.0
          %2397 = vmatpush1.msra.mxu0 %v2354
          %2398 = vmatprep.subr.mxu0 0.0
          %2399 = vmatpush1.msra.mxu0 %v2355
          %2400 = vmatprep.subr.mxu0 0.0
          %2401 = vmatpush1.msra.mxu0 %v2356
          %2402 = vmatprep.subr.mxu0 0.0
          %2403 = vmatpush1.msra.mxu0 %v2357
          %2404 = vmatprep.subr.mxu0 0.0
          %2405 = vmatpush1.msra.mxu0 %v2358
          %2406 = vmatprep.subr.mxu0 0.0
          %2407 = vmatpush1.msra.mxu0 %v2359
          %2408 = vmatprep.subr.mxu0 0.0
          %2409 = vmatpush1.msra.mxu0 %v2360
          %2410 = vmatprep.subr.mxu0 0.0
          %2411 = vmatpush1.msra.mxu0 %v2361
          %2412 = vmatprep.subr.mxu0 0.0
          %2413 = vmatpush1.msra.mxu0 %v2362
          %2414 = vmatprep.subr.mxu0 0.0
          %2415 = vmatpush1.msra.mxu0 %v2363
          %2416 = vmatprep.subr.mxu0 0.0
          %2417 = vmatpush1.msra.mxu0 %v2364
          %2418 = vmatprep.subr.mxu0 0.0
          %2419 = vmatpush1.msra.mxu0 %v2365
          %2420 = vmatprep.subr.mxu0 0.0
          %2421 = vmatpush1.msra.mxu0 %v2366
          %2422 = vmatprep.subr.mxu0 0.0
          %2423 = vmatpush1.msra.mxu0 %v2367
          %2424 = vmatprep.subr.mxu0 0.0
          %2425 = vmatpush1.msra.mxu0 %v2368
          %2426 = vmatprep.subr.mxu0 0.0
          %2427 = vmatpush1.msra.mxu0 %v2369
          %2428 = vmatprep.subr.mxu0 0.0
          %2429 = vmatpush1.msra.mxu0 %v2370
          %2430 = vmatprep.subr.mxu0 0.0
          %2431 = vmatpush1.msra.mxu0 %v2371
          %2432 = vmatprep.subr.mxu0 0.0
          %2433 = vmatpush1.msra.mxu0 %v2372
          %2434 = vmatprep.subr.mxu0 0.0
          %2435 = vmatpush1.msra.mxu0 %v2373
          %2436 = vmatprep.subr.mxu0 0.0
          %2437 = vmatpush1.msra.mxu0 %v2374
          %2438 = vmatprep.subr.mxu0 0.0
          %2439 = vmatpush1.msra.mxu0 %v2375
          %2440 = vmatprep.subr.mxu0 0.0
          %2441 = vmatpush1.msra.mxu0 %v2376
          %2442 = vmatprep.subr.mxu0 0.0
          %2443 = vmatpush1.msra.mxu0 %v2377
          %2444 = vmatprep.subr.mxu0 0.0
          %2445 = vmatpush1.msra.mxu0 %v2378
          %2446 = vmatprep.subr.mxu0 0.0
          %2447 = vmatpush1.msra.mxu0 %v2379
          %2448 = vmatprep.subr.mxu0 0.0
          %2449 = vmatpush1.msra.mxu0 %v2380
          %2450 = vmatprep.subr.mxu0 0.0
          %2451 = vmatpush1.msra.mxu0 %v2381
          %2452 = vmatprep.subr.mxu0 0.0
          %2453 = vmatpush1.msra.mxu0 %v2382
          %2454 = vmatprep.mubr.f32.mxu0 %v2350
          %2455 = vmatmul.mubr.f32.gmra.mrb[0].mxu0 %v2347
          %v2456 = vpop.f32.mrb[0].mxu0
          %v2457 = vadd.f32 0.0, %v2456
          %v2458 = vpop.f32.mrb[0].mxu0
          %2459 = vdwg.mxu0
          %2460 = vmatprep.subr.mxu0 0.0
          %2461 = vmatpush1.msra.mxu0 %v2383
          %2462 = vmatprep.subr.mxu0 0.0
          %2463 = vmatpush1.msra.mxu0 %v2384
          %2464 = vmatprep.subr.mxu0 0.0
          %2465 = vmatpush1.msra.mxu0 %v2385
          %2466 = vmatprep.subr.mxu0 0.0
          %2467 = vmatpush1.msra.mxu0 %v2386
          %2468 = vmatprep.subr.mxu0 0.0
          %2469 = vmatpush1.msra.mxu0 0.0
          %2470 = vmatprep.subr.mxu0 0.0
          %2471 = vmatpush1.msra.mxu0 0.0
          %2472 = vmatprep.subr.mxu0 0.0
          %2473 = vmatpush1.msra.mxu0 0.0
          %2474 = vmatprep.subr.mxu0 0.0
          %2475 = vmatpush1.msra.mxu0 0.0
          %2476 = vmatprep.subr.mxu0 0.0
          %2477 = vmatpush1.msra.mxu0 0.0
          %2478 = vmatprep.subr.mxu0 0.0
          %2479 = vmatpush1.msra.mxu0 0.0
          %2480 = vmatprep.subr.mxu0 0.0
          %2481 = vmatpush1.msra.mxu0 0.0
          %2482 = vmatprep.subr.mxu0 0.0
          %2483 = vmatpush1.msra.mxu0 0.0
          %2484 = vmatprep.subr.mxu0 0.0
          %2485 = vmatpush1.msra.mxu0 0.0
          %2486 = vmatprep.subr.mxu0 0.0
          %2487 = vmatpush1.msra.mxu0 0.0
          %2488 = vmatprep.subr.mxu0 0.0
          %2489 = vmatpush1.msra.mxu0 0.0
          %2490 = vmatprep.subr.mxu0 0.0
          %2491 = vmatpush1.msra.mxu0 0.0
          %2492 = vmatprep.subr.mxu0 0.0
          %2493 = vmatpush1.msra.mxu0 0.0
          %2494 = vmatprep.subr.mxu0 0.0
          %2495 = vmatpush1.msra.mxu0 0.0
          %2496 = vmatprep.subr.mxu0 0.0
          %2497 = vmatpush1.msra.mxu0 0.0
          %2498 = vmatprep.subr.mxu0 0.0
          %2499 = vmatpush1.msra.mxu0 0.0
          %2500 = vmatprep.subr.mxu0 0.0
          %2501 = vmatpush1.msra.mxu0 0.0
          %2502 = vmatprep.subr.mxu0 0.0
          %2503 = vmatpush1.msra.mxu0 0.0
          %2504 = vmatprep.subr.mxu0 0.0
          %2505 = vmatpush1.msra.mxu0 0.0
          %2506 = vmatprep.subr.mxu0 0.0
          %2507 = vmatpush1.msra.mxu0 0.0
          %2508 = vmatprep.subr.mxu0 0.0
          %2509 = vmatpush1.msra.mxu0 0.0
          %2510 = vmatprep.subr.mxu0 0.0
          %2511 = vmatpush1.msra.mxu0 0.0
          %2512 = vmatprep.subr.mxu0 0.0
          %2513 = vmatpush1.msra.mxu0 0.0
          %2514 = vmatprep.subr.mxu0 0.0
          %2515 = vmatpush1.msra.mxu0 0.0
          %2516 = vmatprep.subr.mxu0 0.0
          %2517 = vmatpush1.msra.mxu0 0.0
          %2518 = vmatprep.subr.mxu0 0.0
          %2519 = vmatpush1.msra.mxu0 0.0
          %2520 = vmatprep.subr.mxu0 0.0
          %2521 = vmatpush1.msra.mxu0 0.0
          %2522 = vmatprep.subr.mxu0 0.0
          %2523 = vmatpush1.msra.mxu0 0.0
          %2524 = vmatprep.mubr.f32.mxu0 0.0
          %2525 = vmatmul.mubr.f32.gmra.mrb[0].mxu0 %v2388
          %v2526 = vpop.f32.mrb[0].mxu0
          %v2527 = vadd.f32 %v2457, %v2526
          %v2528 = vpop.f32.mrb[0].mxu0
          %2529 = vdwg.mxu0
          %v2530 = vmul.f32 %v2527, %v2287
          %v2531 = vadd.f32 %v2530, %v2294
          %v2532 = vmax.f32 %v2531, 0.0
          %v2534 = vrot.slane %v2532, 7
          %vm2536 = vcmask 1040384
          %v2537 = vsel %vm2536, 0.0, %v2534
          %vm2538 = vcmask 1044480
          %v2539 = vsel %vm2538, %v2537, 0.0
          %s2540 = scalar_lea.vmem [#allocation9], %s2308
          %2541 = vst.msk [vmem:[%s2540] sm:$0x3f] %vm2278, %v2539
        $region194: #{forward.1} parent=135 // loop_footer
          %s2301 = sadd.s32 1, %s2297
        $region195: #{forward.1} parent=135 // loop_footer_branch
          %2296 = sbr.rel target = $region191
        $region196: #{forward.1} parent=135 // loop_exit
          _
        %2542 = vst.msk [vmem:[#allocation10] sm:$0x3f] %vm2278, 0.0
        %s2543 = scalar_lea.vmem [#allocation10], 40
        %2544 = vst.msk [vmem:[%s2543] sm:$0x3f] %vm2278, 0.0
        %v2545 = vld [vmem:[%s35] sm:$0x1]
        %v2547 = vlaneseq
        %v2548 = vshrl.u32 %v2547, 7
        %v2549 = vsub.s32 0, %v2548
        %v2550 = vrot.slane %v2545, %v2549
        %v2552 = vld [vmem:[%s37] sm:$0x1]
        %v2554 = vlaneseq
        %v2555 = vshrl.u32 %v2554, 7
        %v2556 = vsub.s32 0, %v2555
        %v2557 = vrot.slane %v2552, %v2556
        loop: start=0, step=1, limit=4
        $region197: #{forward.1} parent=135 // loop_pre_header
          _
        $region198: #{forward.1} parent=135 // loop_header
          %s2560 = sphi 0, %s2564
          %p2561 = scmp.ge.s32.totalorder %s2560, 4
        $region199: #{forward.1} parent=135 // loop_header_branch
          %2563 = sbr.rel (%p2561) target = $region203
        $region200: #{forward.1} parent=135 // loop_body
          %s2565 = smul.u32 %s2560, 8
          %s2566 = scalar_lea.vmem [#allocation9], %s2565
          %v2567 = vld [vmem:[%s2566] sm:$0xf]
          %v2568 = vld [vmem:[%s2566 + $0x1] sm:$0xf]
          %v2569 = vld [vmem:[%s2566 + $0x2] sm:$0xf]
          %s2570 = sadd.s32 %s2560, 1
          %s2571 = smul.u32 %s2570, 8
          %s2572 = scalar_lea.vmem [#allocation9], %s2571
          %v2573 = vld [vmem:[%s2572] sm:$0xf]
          %v2574 = vld [vmem:[%s2572 + $0x1] sm:$0xf]
          %v2575 = vld [vmem:[%s2572 + $0x2] sm:$0xf]
          %s2576 = sadd.s32 %s2560, 2
          %s2577 = smul.u32 %s2576, 8
          %s2578 = scalar_lea.vmem [#allocation9], %s2577
          %v2579 = vld [vmem:[%s2578] sm:$0xf]
          %v2580 = vld [vmem:[%s2578 + $0x1] sm:$0xf]
          %v2581 = vld [vmem:[%s2578 + $0x2] sm:$0xf]
          %2583 = vrot.lane.b32.xlu0 %v2568, 64
          %v2584 = vpop.permute.xlu0 %2583
          %2587 = vrot.lane.b32.xlu0 %v2573, 64
          %v2588 = vpop.permute.xlu0 %2587
          %2591 = vrot.lane.b32.xlu0 %v2575, 64
          %v2592 = vpop.permute.xlu0 %2591
          %2595 = vrot.lane.b32.xlu0 %v2580, 64
          %v2596 = vpop.permute.xlu0 %2595
          %vm2598 = vcmask 523264
          %v2599 = vsel %vm2598, %v2567, %v2584
          %v2600 = vsel %vm2598, %v2569, %v2588
          %v2601 = vsel %vm2598, %v2574, %v2592
          %v2602 = vsel %vm2598, %v2579, %v2596
          %v2603 = vld [vmem:[%s33] sm:$0xff]
          %v2604 = vld [vmem:[%s33 + $0x8] sm:$0xff]
          %v2605 = vld [vmem:[%s33 + $0x10] sm:$0xff]
          %v2606 = vld [vmem:[%s33 + $0x18] sm:$0xff]
          %v2607 = vld [vmem:[%s33 + $0x20] sm:$0xff]
          %v2608 = vld [vmem:[%s33 + $0x28] sm:$0xff]
          %v2609 = vld [vmem:[%s33 + $0x30] sm:$0xff]
          %v2610 = vld [vmem:[%s33 + $0x38] sm:$0xff]
          %v2611 = vld [vmem:[%s33 + $0x40] sm:$0xff]
          %v2612 = vld [vmem:[%s33 + $0x48] sm:$0xff]
          %v2613 = vld [vmem:[%s33 + $0x50] sm:$0xff]
          %v2614 = vld [vmem:[%s33 + $0x58] sm:$0xff]
          %v2615 = vld [vmem:[%s33 + $0x60] sm:$0xff]
          %v2616 = vld [vmem:[%s33 + $0x68] sm:$0xff]
          %v2617 = vld [vmem:[%s33 + $0x70] sm:$0xff]
          %v2618 = vld [vmem:[%s33 + $0x78] sm:$0xff]
          %v2619 = vld [vmem:[%s33 + $0x80] sm:$0xff]
          %v2620 = vld [vmem:[%s33 + $0x88] sm:$0xff]
          %v2621 = vld [vmem:[%s33 + $0x90] sm:$0xff]
          %v2622 = vld [vmem:[%s33 + $0x98] sm:$0xff]
          %v2623 = vld [vmem:[%s33 + $0xa0] sm:$0xff]
          %v2624 = vld [vmem:[%s33 + $0xa8] sm:$0xff]
          %v2625 = vld [vmem:[%s33 + $0xb0] sm:$0xff]
          %v2626 = vld [vmem:[%s33 + $0xb8] sm:$0xff]
          %v2627 = vld [vmem:[%s33 + $0xc0] sm:$0xff]
          %v2628 = vld [vmem:[%s33 + $0xc8] sm:$0xff]
          %v2629 = vld [vmem:[%s33 + $0xd0] sm:$0xff]
          %v2630 = vld [vmem:[%s33 + $0xd8] sm:$0xff]
          %v2631 = vld [vmem:[%s33 + $0xe0] sm:$0xff]
          %v2632 = vld [vmem:[%s33 + $0xe8] sm:$0xff]
          %v2633 = vld [vmem:[%s33 + $0xf0] sm:$0xff]
          %v2634 = vld [vmem:[%s33 + $0xf8] sm:$0xff]
          %v2635 = vld [vmem:[%s33 + $0x100] sm:$0xff]
          %v2636 = vld [vmem:[%s33 + $0x108] sm:$0xff]
          %v2637 = vld [vmem:[%s33 + $0x110] sm:$0xff]
          %v2638 = vld [vmem:[%s33 + $0x118] sm:$0xff]
          %v2639 = vld [vmem:[%s33 + $0x120] sm:$0xff]
          %v2640 = vld [vmem:[%s33 + $0x128] sm:$0xff]
          %v2641 = vld [vmem:[%s33 + $0x130] sm:$0xff]
          %v2642 = vld [vmem:[%s33 + $0x138] sm:$0xff]
          %v2643 = vld [vmem:[%s33 + $0x140] sm:$0xff]
          %v2644 = vld [vmem:[%s33 + $0x148] sm:$0xff]
          %v2645 = vld [vmem:[%s33 + $0x150] sm:$0xff]
          %v2646 = vld [vmem:[%s33 + $0x158] sm:$0xff]
          %v2647 = vld [vmem:[%s33 + $0x160] sm:$0xff]
          %v2648 = vld [vmem:[%s33 + $0x168] sm:$0xff]
          %v2649 = vld [vmem:[%s33 + $0x170] sm:$0xff]
          %v2650 = vld [vmem:[%s33 + $0x178] sm:$0xff]
          %v2651 = vld [vmem:[%s33 + $0x180] sm:$0xff]
          %v2652 = vld [vmem:[%s33 + $0x188] sm:$0xff]
          %v2653 = vld [vmem:[%s33 + $0x190] sm:$0xff]
          %v2654 = vld [vmem:[%s33 + $0x198] sm:$0xff]
          %v2655 = vld [vmem:[%s33 + $0x1a0] sm:$0xff]
          %v2656 = vld [vmem:[%s33 + $0x1a8] sm:$0xff]
          %v2657 = vld [vmem:[%s33 + $0x1b0] sm:$0xff]
          %v2658 = vld [vmem:[%s33 + $0x1b8] sm:$0xff]
          %v2659 = vld [vmem:[%s33 + $0x1c0] sm:$0xff]
          %v2660 = vld [vmem:[%s33 + $0x1c8] sm:$0xff]
          %v2661 = vld [vmem:[%s33 + $0x1d0] sm:$0xff]
          %v2662 = vld [vmem:[%s33 + $0x1d8] sm:$0xff]
          %v2663 = vld [vmem:[%s33 + $0x1e0] sm:$0xff]
          %v2664 = vld [vmem:[%s33 + $0x1e8] sm:$0xff]
          %v2665 = vld [vmem:[%s33 + $0x1f0] sm:$0xff]
          %v2666 = vld [vmem:[%s33 + $0x1f8] sm:$0xff]
          %v2667 = vld [vmem:[%s33 + $0x200] sm:$0xff]
          %v2668 = vld [vmem:[%s33 + $0x208] sm:$0xff]
          %v2669 = vld [vmem:[%s33 + $0x210] sm:$0xff]
          %v2670 = vld [vmem:[%s33 + $0x218] sm:$0xff]
          %v2671 = vld [vmem:[%s33 + $0x220] sm:$0xff]
          %v2672 = vld [vmem:[%s33 + $0x228] sm:$0xff]
          %v2673 = vld [vmem:[%s33 + $0x230] sm:$0xff]
          %v2674 = vld [vmem:[%s33 + $0x238] sm:$0xff]
          %v2676 = vsel %vm2598, %v2581, 0
          %2678 = vmatprep.subr.mxu0 0.0
          %2679 = vmatpush1.msra.mxu0 %v2603
          %2680 = vmatprep.subr.mxu0 0.0
          %2681 = vmatpush1.msra.mxu0 %v2604
          %2682 = vmatprep.subr.mxu0 0.0
          %2683 = vmatpush1.msra.mxu0 %v2605
          %2684 = vmatprep.subr.mxu0 0.0
          %2685 = vmatpush1.msra.mxu0 %v2606
          %2686 = vmatprep.subr.mxu0 0.0
          %2687 = vmatpush1.msra.mxu0 %v2607
          %2688 = vmatprep.subr.mxu0 0.0
          %2689 = vmatpush1.msra.mxu0 %v2608
          %2690 = vmatprep.subr.mxu0 0.0
          %2691 = vmatpush1.msra.mxu0 %v2609
          %2692 = vmatprep.subr.mxu0 0.0
          %2693 = vmatpush1.msra.mxu0 %v2610
          %2694 = vmatprep.subr.mxu0 0.0
          %2695 = vmatpush1.msra.mxu0 %v2611
          %2696 = vmatprep.subr.mxu0 0.0
          %2697 = vmatpush1.msra.mxu0 %v2612
          %2698 = vmatprep.subr.mxu0 0.0
          %2699 = vmatpush1.msra.mxu0 %v2613
          %2700 = vmatprep.subr.mxu0 0.0
          %2701 = vmatpush1.msra.mxu0 %v2614
          %2702 = vmatprep.subr.mxu0 0.0
          %2703 = vmatpush1.msra.mxu0 %v2615
          %2704 = vmatprep.subr.mxu0 0.0
          %2705 = vmatpush1.msra.mxu0 %v2616
          %2706 = vmatprep.subr.mxu0 0.0
          %2707 = vmatpush1.msra.mxu0 %v2617
          %2708 = vmatprep.subr.mxu0 0.0
          %2709 = vmatpush1.msra.mxu0 %v2618
          %2710 = vmatprep.subr.mxu0 0.0
          %2711 = vmatpush1.msra.mxu0 %v2619
          %2712 = vmatprep.subr.mxu0 0.0
          %2713 = vmatpush1.msra.mxu0 %v2620
          %2714 = vmatprep.subr.mxu0 0.0
          %2715 = vmatpush1.msra.mxu0 %v2621
          %2716 = vmatprep.subr.mxu0 0.0
          %2717 = vmatpush1.msra.mxu0 %v2622
          %2718 = vmatprep.subr.mxu0 0.0
          %2719 = vmatpush1.msra.mxu0 %v2623
          %2720 = vmatprep.subr.mxu0 0.0
          %2721 = vmatpush1.msra.mxu0 %v2624
          %2722 = vmatprep.subr.mxu0 0.0
          %2723 = vmatpush1.msra.mxu0 %v2625
          %2724 = vmatprep.subr.mxu0 0.0
          %2725 = vmatpush1.msra.mxu0 %v2626
          %2726 = vmatprep.subr.mxu0 0.0
          %2727 = vmatpush1.msra.mxu0 %v2627
          %2728 = vmatprep.subr.mxu0 0.0
          %2729 = vmatpush1.msra.mxu0 %v2628
          %2730 = vmatprep.subr.mxu0 0.0
          %2731 = vmatpush1.msra.mxu0 %v2629
          %2732 = vmatprep.subr.mxu0 0.0
          %2733 = vmatpush1.msra.mxu0 %v2630
          %2734 = vmatprep.subr.mxu0 0.0
          %2735 = vmatpush1.msra.mxu0 %v2631
          %2736 = vmatprep.subr.mxu0 0.0
          %2737 = vmatpush1.msra.mxu0 %v2632
          %2738 = vmatprep.subr.mxu0 0.0
          %2739 = vmatpush1.msra.mxu0 %v2633
          %2740 = vmatprep.subr.mxu0 0.0
          %2741 = vmatpush1.msra.mxu0 %v2634
          %2742 = vmatprep.mubr.f32.mxu0 %v2600
          %2743 = vmatmul.mubr.f32.gmra.mrb[0].mxu0 %v2599
          %v2744 = vpop.f32.mrb[0].mxu0
          %v2745 = vadd.f32 0.0, %v2744
          %v2746 = vpop.f32.mrb[0].mxu0
          %2747 = vdwg.mxu0
          %2748 = vmatprep.subr.mxu0 0.0
          %2749 = vmatpush1.msra.mxu0 %v2635
          %2750 = vmatprep.subr.mxu0 0.0
          %2751 = vmatpush1.msra.mxu0 %v2636
          %2752 = vmatprep.subr.mxu0 0.0
          %2753 = vmatpush1.msra.mxu0 %v2637
          %2754 = vmatprep.subr.mxu0 0.0
          %2755 = vmatpush1.msra.mxu0 %v2638
          %2756 = vmatprep.subr.mxu0 0.0
          %2757 = vmatpush1.msra.mxu0 %v2639
          %2758 = vmatprep.subr.mxu0 0.0
          %2759 = vmatpush1.msra.mxu0 %v2640
          %2760 = vmatprep.subr.mxu0 0.0
          %2761 = vmatpush1.msra.mxu0 %v2641
          %2762 = vmatprep.subr.mxu0 0.0
          %2763 = vmatpush1.msra.mxu0 %v2642
          %2764 = vmatprep.subr.mxu0 0.0
          %2765 = vmatpush1.msra.mxu0 %v2643
          %2766 = vmatprep.subr.mxu0 0.0
          %2767 = vmatpush1.msra.mxu0 %v2644
          %2768 = vmatprep.subr.mxu0 0.0
          %2769 = vmatpush1.msra.mxu0 %v2645
          %2770 = vmatprep.subr.mxu0 0.0
          %2771 = vmatpush1.msra.mxu0 %v2646
          %2772 = vmatprep.subr.mxu0 0.0
          %2773 = vmatpush1.msra.mxu0 %v2647
          %2774 = vmatprep.subr.mxu0 0.0
          %2775 = vmatpush1.msra.mxu0 %v2648
          %2776 = vmatprep.subr.mxu0 0.0
          %2777 = vmatpush1.msra.mxu0 %v2649
          %2778 = vmatprep.subr.mxu0 0.0
          %2779 = vmatpush1.msra.mxu0 %v2650
          %2780 = vmatprep.subr.mxu0 0.0
          %2781 = vmatpush1.msra.mxu0 %v2651
          %2782 = vmatprep.subr.mxu0 0.0
          %2783 = vmatpush1.msra.mxu0 %v2652
          %2784 = vmatprep.subr.mxu0 0.0
          %2785 = vmatpush1.msra.mxu0 %v2653
          %2786 = vmatprep.subr.mxu0 0.0
          %2787 = vmatpush1.msra.mxu0 %v2654
          %2788 = vmatprep.subr.mxu0 0.0
          %2789 = vmatpush1.msra.mxu0 %v2655
          %2790 = vmatprep.subr.mxu0 0.0
          %2791 = vmatpush1.msra.mxu0 %v2656
          %2792 = vmatprep.subr.mxu0 0.0
          %2793 = vmatpush1.msra.mxu0 %v2657
          %2794 = vmatprep.subr.mxu0 0.0
          %2795 = vmatpush1.msra.mxu0 %v2658
          %2796 = vmatprep.subr.mxu0 0.0
          %2797 = vmatpush1.msra.mxu0 %v2659
          %2798 = vmatprep.subr.mxu0 0.0
          %2799 = vmatpush1.msra.mxu0 %v2660
          %2800 = vmatprep.subr.mxu0 0.0
          %2801 = vmatpush1.msra.mxu0 %v2661
          %2802 = vmatprep.subr.mxu0 0.0
          %2803 = vmatpush1.msra.mxu0 %v2662
          %2804 = vmatprep.subr.mxu0 0.0
          %2805 = vmatpush1.msra.mxu0 %v2663
          %2806 = vmatprep.subr.mxu0 0.0
          %2807 = vmatpush1.msra.mxu0 %v2664
          %2808 = vmatprep.subr.mxu0 0.0
          %2809 = vmatpush1.msra.mxu0 %v2665
          %2810 = vmatprep.subr.mxu0 0.0
          %2811 = vmatpush1.msra.mxu0 %v2666
          %2812 = vmatprep.mubr.f32.mxu0 %v2602
          %2813 = vmatmul.mubr.f32.gmra.mrb[0].mxu0 %v2601
          %v2814 = vpop.f32.mrb[0].mxu0
          %v2815 = vadd.f32 %v2745, %v2814
          %v2816 = vpop.f32.mrb[0].mxu0
          %2817 = vdwg.mxu0
          %2818 = vmatprep.subr.mxu0 0.0
          %2819 = vmatpush1.msra.mxu0 %v2667
          %2820 = vmatprep.subr.mxu0 0.0
          %2821 = vmatpush1.msra.mxu0 %v2668
          %2822 = vmatprep.subr.mxu0 0.0
          %2823 = vmatpush1.msra.mxu0 %v2669
          %2824 = vmatprep.subr.mxu0 0.0
          %2825 = vmatpush1.msra.mxu0 %v2670
          %2826 = vmatprep.subr.mxu0 0.0
          %2827 = vmatpush1.msra.mxu0 %v2671
          %2828 = vmatprep.subr.mxu0 0.0
          %2829 = vmatpush1.msra.mxu0 %v2672
          %2830 = vmatprep.subr.mxu0 0.0
          %2831 = vmatpush1.msra.mxu0 %v2673
          %2832 = vmatprep.subr.mxu0 0.0
          %2833 = vmatpush1.msra.mxu0 %v2674
          %2834 = vmatprep.subr.mxu0 0.0
          %2835 = vmatpush1.msra.mxu0 0.0
          %2836 = vmatprep.subr.mxu0 0.0
          %2837 = vmatpush1.msra.mxu0 0.0
          %2838 = vmatprep.subr.mxu0 0.0
          %2839 = vmatpush1.msra.mxu0 0.0
          %2840 = vmatprep.subr.mxu0 0.0
          %2841 = vmatpush1.msra.mxu0 0.0
          %2842 = vmatprep.subr.mxu0 0.0
          %2843 = vmatpush1.msra.mxu0 0.0
          %2844 = vmatprep.subr.mxu0 0.0
          %2845 = vmatpush1.msra.mxu0 0.0
          %2846 = vmatprep.subr.mxu0 0.0
          %2847 = vmatpush1.msra.mxu0 0.0
          %2848 = vmatprep.subr.mxu0 0.0
          %2849 = vmatpush1.msra.mxu0 0.0
          %2850 = vmatprep.subr.mxu0 0.0
          %2851 = vmatpush1.msra.mxu0 0.0
          %2852 = vmatprep.subr.mxu0 0.0
          %2853 = vmatpush1.msra.mxu0 0.0
          %2854 = vmatprep.subr.mxu0 0.0
          %2855 = vmatpush1.msra.mxu0 0.0
          %2856 = vmatprep.subr.mxu0 0.0
          %2857 = vmatpush1.msra.mxu0 0.0
          %2858 = vmatprep.subr.mxu0 0.0
          %2859 = vmatpush1.msra.mxu0 0.0
          %2860 = vmatprep.subr.mxu0 0.0
          %2861 = vmatpush1.msra.mxu0 0.0
          %2862 = vmatprep.subr.mxu0 0.0
          %2863 = vmatpush1.msra.mxu0 0.0
          %2864 = vmatprep.subr.mxu0 0.0
          %2865 = vmatpush1.msra.mxu0 0.0
          %2866 = vmatprep.subr.mxu0 0.0
          %2867 = vmatpush1.msra.mxu0 0.0
          %2868 = vmatprep.subr.mxu0 0.0
          %2869 = vmatpush1.msra.mxu0 0.0
          %2870 = vmatprep.subr.mxu0 0.0
          %2871 = vmatpush1.msra.mxu0 0.0
          %2872 = vmatprep.subr.mxu0 0.0
          %2873 = vmatpush1.msra.mxu0 0.0
          %2874 = vmatprep.subr.mxu0 0.0
          %2875 = vmatpush1.msra.mxu0 0.0
          %2876 = vmatprep.subr.mxu0 0.0
          %2877 = vmatpush1.msra.mxu0 0.0
          %2878 = vmatprep.subr.mxu0 0.0
          %2879 = vmatpush1.msra.mxu0 0.0
          %2880 = vmatprep.subr.mxu0 0.0
          %2881 = vmatpush1.msra.mxu0 0.0
          %2882 = vmatprep.mubr.f32.mxu0 0.0
          %2883 = vmatmul.mubr.f32.gmra.mrb[0].mxu0 %v2676
          %v2884 = vpop.f32.mrb[0].mxu0
          %v2885 = vadd.f32 %v2815, %v2884
          %v2886 = vpop.f32.mrb[0].mxu0
          %2887 = vdwg.mxu0
          %v2888 = vmul.f32 %v2885, %v2550
          %v2889 = vadd.f32 %v2888, %v2557
          %v2890 = vmax.f32 %v2889, 0.0
          %v2892 = vrot.slane %v2890, 7
          %vm2894 = vcmask 1040384
          %v2895 = vsel %vm2894, 0.0, %v2892
          %vm2896 = vcmask 1044480
          %v2897 = vsel %vm2896, %v2895, 0.0
          %s2898 = scalar_lea.vmem [#allocation10], %s2571
          %2899 = vst.msk [vmem:[%s2898] sm:$0x3f] %vm2278, %v2897
        $region201: #{forward.1} parent=135 // loop_footer
          %s2564 = sadd.s32 1, %s2560
        $region202: #{forward.1} parent=135 // loop_footer_branch
          %2559 = sbr.rel target = $region198
        $region203: #{forward.1} parent=135 // loop_exit
          _
        %vm2900 = vcmask 519168
        %2901 = vst.msk [vmem:[#allocation11] sm:$0xf] %vm2900, 0.0
        %s2902 = scalar_lea.vmem [#allocation11], 12
        %2903 = vst.msk [vmem:[%s2902] sm:$0xf] %vm2900, 0.0
        loop: start=0, step=1, limit=2
        $region204: #{forward.1} parent=135 // loop_pre_header
          _
        $region205: #{forward.1} parent=135 // loop_header
          %s2905 = sphi 0, %s2909
          %p2906 = scmp.ge.s32.totalorder %s2905, 2
        $region206: #{forward.1} parent=135 // loop_header_branch
          %2908 = sbr.rel (%p2906) target = $region210
        $region207: #{forward.1} parent=135 // loop_body
          %s2910 = smul.u32 %s2905, 2
          %s2911 = sadd.s32 %s2910, 1
          %s2912 = smul.u32 %s2911, 8
          %s2913 = scalar_lea.vmem [#allocation10], %s2912
          %v2914 = vld [vmem:[%s2913 + $0x1] sm:$0xf]
          %s2915 = sadd.s32 %s2910, 2
          %s2916 = smul.u32 %s2915, 8
          %s2917 = scalar_lea.vmem [#allocation10], %s2916
          %v2918 = vld [vmem:[%s2917 + $0x1] sm:$0xf]
          %v2919 = vmax.f32 %v2914, %v2918
          %vm2920 = vcmask 31744
          %v2922 = vsel %vm2920, %v1461, 0
          %vm2924 = vcmask 1043456
          %v2926 = vsel %vm2924, %v2919, 0
          %2928 = vmatprep.subr.mxu0 0.0
          %2929 = vmatpush1.msra.mxu0 %v2926
          %2930 = vmatprep.subr.mxu0 0.0
          %2931 = vmatpush1.msra.mxu0 0.0
          %2932 = vmatprep.subr.mxu0 0.0
          %2933 = vmatpush1.msra.mxu0 0.0
          %2934 = vmatprep.subr.mxu0 0.0
          %2935 = vmatpush1.msra.mxu0 0.0
          %2936 = vmatprep.subr.mxu0 0.0
          %2937 = vmatpush1.msra.mxu0 0.0
          %2938 = vmatprep.subr.mxu0 0.0
          %2939 = vmatpush1.msra.mxu0 0.0
          %2940 = vmatprep.subr.mxu0 0.0
          %2941 = vmatpush1.msra.mxu0 0.0
          %2942 = vmatprep.subr.mxu0 0.0
          %2943 = vmatpush1.msra.mxu0 0.0
          %2944 = vmatprep.subr.mxu0 0.0
          %2945 = vmatpush1.msra.mxu0 0.0
          %2946 = vmatprep.subr.mxu0 0.0
          %2947 = vmatpush1.msra.mxu0 0.0
          %2948 = vmatprep.subr.mxu0 0.0
          %2949 = vmatpush1.msra.mxu0 0.0
          %2950 = vmatprep.subr.mxu0 0.0
          %2951 = vmatpush1.msra.mxu0 0.0
          %2952 = vmatprep.subr.mxu0 0.0
          %2953 = vmatpush1.msra.mxu0 0.0
          %2954 = vmatprep.subr.mxu0 0.0
          %2955 = vmatpush1.msra.mxu0 0.0
          %2956 = vmatprep.subr.mxu0 0.0
          %2957 = vmatpush1.msra.mxu0 0.0
          %2958 = vmatprep.subr.mxu0 0.0
          %2959 = vmatpush1.msra.mxu0 0.0
          %2960 = vmatprep.subr.mxu0 0.0
          %2961 = vmatpush1.msra.mxu0 0.0
          %2962 = vmatprep.subr.mxu0 0.0
          %2963 = vmatpush1.msra.mxu0 0.0
          %2964 = vmatprep.subr.mxu0 0.0
          %2965 = vmatpush1.msra.mxu0 0.0
          %2966 = vmatprep.subr.mxu0 0.0
          %2967 = vmatpush1.msra.mxu0 0.0
          %2968 = vmatprep.subr.mxu0 0.0
          %2969 = vmatpush1.msra.mxu0 0.0
          %2970 = vmatprep.subr.mxu0 0.0
          %2971 = vmatpush1.msra.mxu0 0.0
          %2972 = vmatprep.subr.mxu0 0.0
          %2973 = vmatpush1.msra.mxu0 0.0
          %2974 = vmatprep.subr.mxu0 0.0
          %2975 = vmatpush1.msra.mxu0 0.0
          %2976 = vmatprep.subr.mxu0 0.0
          %2977 = vmatpush1.msra.mxu0 0.0
          %2978 = vmatprep.subr.mxu0 0.0
          %2979 = vmatpush1.msra.mxu0 0.0
          %2980 = vmatprep.subr.mxu0 0.0
          %2981 = vmatpush1.msra.mxu0 0.0
          %2982 = vmatprep.subr.mxu0 0.0
          %2983 = vmatpush1.msra.mxu0 0.0
          %2984 = vmatprep.subr.mxu0 0.0
          %2985 = vmatpush1.msra.mxu0 0.0
          %2986 = vmatprep.subr.mxu0 0.0
          %2987 = vmatpush1.msra.mxu0 0.0
          %2988 = vmatprep.subr.mxu0 0.0
          %2989 = vmatpush1.msra.mxu0 0.0
          %2990 = vmatprep.subr.mxu0 0.0
          %2991 = vmatpush1.msra.mxu0 0.0
          %2992 = vmatprep.mubr.f32.mxu0 0.0
          %2993 = vmatmul.mubr.f32.gmra.mrb[0].mxu0 %v2922
          %v2994 = vpop.f32.mrb[0].mxu0
          %v2995 = vadd.f32 0.0, %v2994
          %v2996 = vpop.f32.mrb[0].mxu0
          %2997 = vdwg.mxu0
          %v2999 = vsel %vm2920, %v1465, 0
          %3001 = vmatprep.subr.mxu0 0.0
          %3002 = vmatpush1.msra.mxu0 %v2926
          %3003 = vmatprep.subr.mxu0 0.0
          %3004 = vmatpush1.msra.mxu0 0.0
          %3005 = vmatprep.subr.mxu0 0.0
          %3006 = vmatpush1.msra.mxu0 0.0
          %3007 = vmatprep.subr.mxu0 0.0
          %3008 = vmatpush1.msra.mxu0 0.0
          %3009 = vmatprep.subr.mxu0 0.0
          %3010 = vmatpush1.msra.mxu0 0.0
          %3011 = vmatprep.subr.mxu0 0.0
          %3012 = vmatpush1.msra.mxu0 0.0
          %3013 = vmatprep.subr.mxu0 0.0
          %3014 = vmatpush1.msra.mxu0 0.0
          %3015 = vmatprep.subr.mxu0 0.0
          %3016 = vmatpush1.msra.mxu0 0.0
          %3017 = vmatprep.subr.mxu0 0.0
          %3018 = vmatpush1.msra.mxu0 0.0
          %3019 = vmatprep.subr.mxu0 0.0
          %3020 = vmatpush1.msra.mxu0 0.0
          %3021 = vmatprep.subr.mxu0 0.0
          %3022 = vmatpush1.msra.mxu0 0.0
          %3023 = vmatprep.subr.mxu0 0.0
          %3024 = vmatpush1.msra.mxu0 0.0
          %3025 = vmatprep.subr.mxu0 0.0
          %3026 = vmatpush1.msra.mxu0 0.0
          %3027 = vmatprep.subr.mxu0 0.0
          %3028 = vmatpush1.msra.mxu0 0.0
          %3029 = vmatprep.subr.mxu0 0.0
          %3030 = vmatpush1.msra.mxu0 0.0
          %3031 = vmatprep.subr.mxu0 0.0
          %3032 = vmatpush1.msra.mxu0 0.0
          %3033 = vmatprep.subr.mxu0 0.0
          %3034 = vmatpush1.msra.mxu0 0.0
          %3035 = vmatprep.subr.mxu0 0.0
          %3036 = vmatpush1.msra.mxu0 0.0
          %3037 = vmatprep.subr.mxu0 0.0
          %3038 = vmatpush1.msra.mxu0 0.0
          %3039 = vmatprep.subr.mxu0 0.0
          %3040 = vmatpush1.msra.mxu0 0.0
          %3041 = vmatprep.subr.mxu0 0.0
          %3042 = vmatpush1.msra.mxu0 0.0
          %3043 = vmatprep.subr.mxu0 0.0
          %3044 = vmatpush1.msra.mxu0 0.0
          %3045 = vmatprep.subr.mxu0 0.0
          %3046 = vmatpush1.msra.mxu0 0.0
          %3047 = vmatprep.subr.mxu0 0.0
          %3048 = vmatpush1.msra.mxu0 0.0
          %3049 = vmatprep.subr.mxu0 0.0
          %3050 = vmatpush1.msra.mxu0 0.0
          %3051 = vmatprep.subr.mxu0 0.0
          %3052 = vmatpush1.msra.mxu0 0.0
          %3053 = vmatprep.subr.mxu0 0.0
          %3054 = vmatpush1.msra.mxu0 0.0
          %3055 = vmatprep.subr.mxu0 0.0
          %3056 = vmatpush1.msra.mxu0 0.0
          %3057 = vmatprep.subr.mxu0 0.0
          %3058 = vmatpush1.msra.mxu0 0.0
          %3059 = vmatprep.subr.mxu0 0.0
          %3060 = vmatpush1.msra.mxu0 0.0
          %3061 = vmatprep.subr.mxu0 0.0
          %3062 = vmatpush1.msra.mxu0 0.0
          %3063 = vmatprep.subr.mxu0 0.0
          %3064 = vmatpush1.msra.mxu0 0.0
          %3065 = vmatprep.mubr.f32.mxu0 0.0
          %3066 = vmatmul.mubr.f32.gmra.mrb[0].mxu0 %v2999
          %v3067 = vpop.f32.mrb[0].mxu0
          %v3068 = vadd.f32 0.0, %v3067
          %v3069 = vpop.f32.mrb[0].mxu0
          %3070 = vdwg.mxu0
          %v3071 = vmax.f32 %v2995, %v3068
          %v3073 = vrot.slane %v3071, 7
          %vm3075 = vcmask 1040384
          %v3076 = vsel %vm3075, 0.0, %v3073
          %vm3077 = vcmask 1042432
          %v3078 = vsel %vm3077, %v3076, 0.0
          %s3079 = sadd.s32 %s2905, 1
          %s3080 = smul.u32 %s3079, 4
          %s3081 = scalar_lea.vmem [#allocation11], %s3080
          %3082 = vst.msk [vmem:[%s3081] sm:$0xf] %vm2900, %v3078
        $region208: #{forward.1} parent=135 // loop_footer
          %s2909 = sadd.s32 1, %s2905
        $region209: #{forward.1} parent=135 // loop_footer_branch
          %2904 = sbr.rel target = $region205
        $region210: #{forward.1} parent=135 // loop_exit
          _
        %3083 = vst [vmem:[#allocation12] sm:$0xf] 0.0
        %s3084 = scalar_lea.vmem [#allocation12], 12
        %3085 = vst [vmem:[%s3084] sm:$0xf] 0.0
        %v3086 = vld [vmem:[%s41] sm:$0x1]
        %v3088 = vlaneseq
        %v3089 = vshrl.u32 %v3088, 7
        %v3090 = vsub.s32 0, %v3089
        %v3091 = vrot.slane %v3086, %v3090
        %v3093 = vld [vmem:[%s43] sm:$0x1]
        %v3095 = vlaneseq
        %v3096 = vshrl.u32 %v3095, 7
        %v3097 = vsub.s32 0, %v3096
        %v3098 = vrot.slane %v3093, %v3097
        loop: start=0, step=1, limit=2
        $region211: #{forward.1} parent=135 // loop_pre_header
          _
        $region212: #{forward.1} parent=135 // loop_header
          %s3101 = sphi 0, %s3105
          %p3102 = scmp.ge.s32.totalorder %s3101, 2
        $region213: #{forward.1} parent=135 // loop_header_branch
          %3104 = sbr.rel (%p3102) target = $region217
        $region214: #{forward.1} parent=135 // loop_body
          %s3106 = smul.u32 %s3101, 4
          %s3107 = scalar_lea.vmem [#allocation11], %s3106
          %v3108 = vld [vmem:[%s3107] sm:$0x3]
          %v3109 = vld [vmem:[%s3107 + $0x1] sm:$0x3]
          %v3110 = vld [vmem:[%s3107 + $0x2] sm:$0x3]
          %s3111 = sadd.s32 %s3101, 1
          %s3112 = smul.u32 %s3111, 4
          %s3113 = scalar_lea.vmem [#allocation11], %s3112
          %v3114 = vld [vmem:[%s3113] sm:$0x3]
          %v3115 = vld [vmem:[%s3113 + $0x1] sm:$0x3]
          %v3116 = vld [vmem:[%s3113 + $0x2] sm:$0x3]
          %s3117 = sadd.s32 %s3101, 2
          %s3118 = smul.u32 %s3117, 4
          %s3119 = scalar_lea.vmem [#allocation11], %s3118
          %v3120 = vld [vmem:[%s3119] sm:$0x3]
          %v3121 = vld [vmem:[%s3119 + $0x1] sm:$0x3]
          %v3122 = vld [vmem:[%s3119 + $0x2] sm:$0x3]
          %3124 = vrot.lane.b32.xlu0 %v3109, 64
          %v3125 = vpop.permute.xlu0 %3124
          %3128 = vrot.lane.b32.xlu0 %v3114, 64
          %v3129 = vpop.permute.xlu0 %3128
          %3132 = vrot.lane.b32.xlu0 %v3116, 64
          %v3133 = vpop.permute.xlu0 %3132
          %3136 = vrot.lane.b32.xlu0 %v3121, 64
          %v3137 = vpop.permute.xlu0 %3136
          %vm3139 = vcmask 523264
          %v3140 = vsel %vm3139, %v3108, %v3125
          %v3141 = vsel %vm3139, %v3110, %v3129
          %v3142 = vsel %vm3139, %v3115, %v3133
          %v3143 = vsel %vm3139, %v3120, %v3137
          %v3144 = vld [vmem:[%s39] sm:$0xff]
          %v3145 = vld [vmem:[%s39 + $0x8] sm:$0xff]
          %v3146 = vld [vmem:[%s39 + $0x10] sm:$0xff]
          %v3147 = vld [vmem:[%s39 + $0x18] sm:$0xff]
          %v3148 = vld [vmem:[%s39 + $0x20] sm:$0xff]
          %v3149 = vld [vmem:[%s39 + $0x28] sm:$0xff]
          %v3150 = vld [vmem:[%s39 + $0x30] sm:$0xff]
          %v3151 = vld [vmem:[%s39 + $0x38] sm:$0xff]
          %v3152 = vld [vmem:[%s39 + $0x40] sm:$0xff]
          %v3153 = vld [vmem:[%s39 + $0x48] sm:$0xff]
          %v3154 = vld [vmem:[%s39 + $0x50] sm:$0xff]
          %v3155 = vld [vmem:[%s39 + $0x58] sm:$0xff]
          %v3156 = vld [vmem:[%s39 + $0x60] sm:$0xff]
          %v3157 = vld [vmem:[%s39 + $0x68] sm:$0xff]
          %v3158 = vld [vmem:[%s39 + $0x70] sm:$0xff]
          %v3159 = vld [vmem:[%s39 + $0x78] sm:$0xff]
          %v3160 = vld [vmem:[%s39 + $0x80] sm:$0xff]
          %v3161 = vld [vmem:[%s39 + $0x88] sm:$0xff]
          %v3162 = vld [vmem:[%s39 + $0x90] sm:$0xff]
          %v3163 = vld [vmem:[%s39 + $0x98] sm:$0xff]
          %v3164 = vld [vmem:[%s39 + $0xa0] sm:$0xff]
          %v3165 = vld [vmem:[%s39 + $0xa8] sm:$0xff]
          %v3166 = vld [vmem:[%s39 + $0xb0] sm:$0xff]
          %v3167 = vld [vmem:[%s39 + $0xb8] sm:$0xff]
          %v3168 = vld [vmem:[%s39 + $0xc0] sm:$0xff]
          %v3169 = vld [vmem:[%s39 + $0xc8] sm:$0xff]
          %v3170 = vld [vmem:[%s39 + $0xd0] sm:$0xff]
          %v3171 = vld [vmem:[%s39 + $0xd8] sm:$0xff]
          %v3172 = vld [vmem:[%s39 + $0xe0] sm:$0xff]
          %v3173 = vld [vmem:[%s39 + $0xe8] sm:$0xff]
          %v3174 = vld [vmem:[%s39 + $0xf0] sm:$0xff]
          %v3175 = vld [vmem:[%s39 + $0xf8] sm:$0xff]
          %v3176 = vld [vmem:[%s39 + $0x100] sm:$0xff]
          %v3177 = vld [vmem:[%s39 + $0x108] sm:$0xff]
          %v3178 = vld [vmem:[%s39 + $0x110] sm:$0xff]
          %v3179 = vld [vmem:[%s39 + $0x118] sm:$0xff]
          %v3180 = vld [vmem:[%s39 + $0x120] sm:$0xff]
          %v3181 = vld [vmem:[%s39 + $0x128] sm:$0xff]
          %v3182 = vld [vmem:[%s39 + $0x130] sm:$0xff]
          %v3183 = vld [vmem:[%s39 + $0x138] sm:$0xff]
          %v3184 = vld [vmem:[%s39 + $0x140] sm:$0xff]
          %v3185 = vld [vmem:[%s39 + $0x148] sm:$0xff]
          %v3186 = vld [vmem:[%s39 + $0x150] sm:$0xff]
          %v3187 = vld [vmem:[%s39 + $0x158] sm:$0xff]
          %v3188 = vld [vmem:[%s39 + $0x160] sm:$0xff]
          %v3189 = vld [vmem:[%s39 + $0x168] sm:$0xff]
          %v3190 = vld [vmem:[%s39 + $0x170] sm:$0xff]
          %v3191 = vld [vmem:[%s39 + $0x178] sm:$0xff]
          %v3192 = vld [vmem:[%s39 + $0x180] sm:$0xff]
          %v3193 = vld [vmem:[%s39 + $0x188] sm:$0xff]
          %v3194 = vld [vmem:[%s39 + $0x190] sm:$0xff]
          %v3195 = vld [vmem:[%s39 + $0x198] sm:$0xff]
          %v3196 = vld [vmem:[%s39 + $0x1a0] sm:$0xff]
          %v3197 = vld [vmem:[%s39 + $0x1a8] sm:$0xff]
          %v3198 = vld [vmem:[%s39 + $0x1b0] sm:$0xff]
          %v3199 = vld [vmem:[%s39 + $0x1b8] sm:$0xff]
          %v3200 = vld [vmem:[%s39 + $0x1c0] sm:$0xff]
          %v3201 = vld [vmem:[%s39 + $0x1c8] sm:$0xff]
          %v3202 = vld [vmem:[%s39 + $0x1d0] sm:$0xff]
          %v3203 = vld [vmem:[%s39 + $0x1d8] sm:$0xff]
          %v3204 = vld [vmem:[%s39 + $0x1e0] sm:$0xff]
          %v3205 = vld [vmem:[%s39 + $0x1e8] sm:$0xff]
          %v3206 = vld [vmem:[%s39 + $0x1f0] sm:$0xff]
          %v3207 = vld [vmem:[%s39 + $0x1f8] sm:$0xff]
          %v3208 = vld [vmem:[%s39 + $0x200] sm:$0xff]
          %v3209 = vld [vmem:[%s39 + $0x208] sm:$0xff]
          %v3210 = vld [vmem:[%s39 + $0x210] sm:$0xff]
          %v3211 = vld [vmem:[%s39 + $0x218] sm:$0xff]
          %v3212 = vld [vmem:[%s39 + $0x220] sm:$0xff]
          %v3213 = vld [vmem:[%s39 + $0x228] sm:$0xff]
          %v3214 = vld [vmem:[%s39 + $0x230] sm:$0xff]
          %v3215 = vld [vmem:[%s39 + $0x238] sm:$0xff]
          %v3217 = vsel %vm3139, %v3122, 0
          %3219 = vmatprep.subr.mxu0 0.0
          %3220 = vmatpush1.msra.mxu0 %v3144
          %3221 = vmatprep.subr.mxu0 0.0
          %3222 = vmatpush1.msra.mxu0 %v3145
          %3223 = vmatprep.subr.mxu0 0.0
          %3224 = vmatpush1.msra.mxu0 %v3146
          %3225 = vmatprep.subr.mxu0 0.0
          %3226 = vmatpush1.msra.mxu0 %v3147
          %3227 = vmatprep.subr.mxu0 0.0
          %3228 = vmatpush1.msra.mxu0 %v3148
          %3229 = vmatprep.subr.mxu0 0.0
          %3230 = vmatpush1.msra.mxu0 %v3149
          %3231 = vmatprep.subr.mxu0 0.0
          %3232 = vmatpush1.msra.mxu0 %v3150
          %3233 = vmatprep.subr.mxu0 0.0
          %3234 = vmatpush1.msra.mxu0 %v3151
          %3235 = vmatprep.subr.mxu0 0.0
          %3236 = vmatpush1.msra.mxu0 %v3152
          %3237 = vmatprep.subr.mxu0 0.0
          %3238 = vmatpush1.msra.mxu0 %v3153
          %3239 = vmatprep.subr.mxu0 0.0
          %3240 = vmatpush1.msra.mxu0 %v3154
          %3241 = vmatprep.subr.mxu0 0.0
          %3242 = vmatpush1.msra.mxu0 %v3155
          %3243 = vmatprep.subr.mxu0 0.0
          %3244 = vmatpush1.msra.mxu0 %v3156
          %3245 = vmatprep.subr.mxu0 0.0
          %3246 = vmatpush1.msra.mxu0 %v3157
          %3247 = vmatprep.subr.mxu0 0.0
          %3248 = vmatpush1.msra.mxu0 %v3158
          %3249 = vmatprep.subr.mxu0 0.0
          %3250 = vmatpush1.msra.mxu0 %v3159
          %3251 = vmatprep.subr.mxu0 0.0
          %3252 = vmatpush1.msra.mxu0 %v3160
          %3253 = vmatprep.subr.mxu0 0.0
          %3254 = vmatpush1.msra.mxu0 %v3161
          %3255 = vmatprep.subr.mxu0 0.0
          %3256 = vmatpush1.msra.mxu0 %v3162
          %3257 = vmatprep.subr.mxu0 0.0
          %3258 = vmatpush1.msra.mxu0 %v3163
          %3259 = vmatprep.subr.mxu0 0.0
          %3260 = vmatpush1.msra.mxu0 %v3164
          %3261 = vmatprep.subr.mxu0 0.0
          %3262 = vmatpush1.msra.mxu0 %v3165
          %3263 = vmatprep.subr.mxu0 0.0
          %3264 = vmatpush1.msra.mxu0 %v3166
          %3265 = vmatprep.subr.mxu0 0.0
          %3266 = vmatpush1.msra.mxu0 %v3167
          %3267 = vmatprep.subr.mxu0 0.0
          %3268 = vmatpush1.msra.mxu0 %v3168
          %3269 = vmatprep.subr.mxu0 0.0
          %3270 = vmatpush1.msra.mxu0 %v3169
          %3271 = vmatprep.subr.mxu0 0.0
          %3272 = vmatpush1.msra.mxu0 %v3170
          %3273 = vmatprep.subr.mxu0 0.0
          %3274 = vmatpush1.msra.mxu0 %v3171
          %3275 = vmatprep.subr.mxu0 0.0
          %3276 = vmatpush1.msra.mxu0 %v3172
          %3277 = vmatprep.subr.mxu0 0.0
          %3278 = vmatpush1.msra.mxu0 %v3173
          %3279 = vmatprep.subr.mxu0 0.0
          %3280 = vmatpush1.msra.mxu0 %v3174
          %3281 = vmatprep.subr.mxu0 0.0
          %3282 = vmatpush1.msra.mxu0 %v3175
          %3283 = vmatprep.mubr.f32.mxu0 %v3141
          %3284 = vmatmul.mubr.f32.gmra.mrb[0].mxu0 %v3140
          %v3285 = vpop.f32.mrb[0].mxu0
          %v3286 = vadd.f32 0.0, %v3285
          %v3287 = vpop.f32.mrb[0].mxu0
          %3288 = vdwg.mxu0
          %3289 = vmatprep.subr.mxu0 0.0
          %3290 = vmatpush1.msra.mxu0 %v3176
          %3291 = vmatprep.subr.mxu0 0.0
          %3292 = vmatpush1.msra.mxu0 %v3177
          %3293 = vmatprep.subr.mxu0 0.0
          %3294 = vmatpush1.msra.mxu0 %v3178
          %3295 = vmatprep.subr.mxu0 0.0
          %3296 = vmatpush1.msra.mxu0 %v3179
          %3297 = vmatprep.subr.mxu0 0.0
          %3298 = vmatpush1.msra.mxu0 %v3180
          %3299 = vmatprep.subr.mxu0 0.0
          %3300 = vmatpush1.msra.mxu0 %v3181
          %3301 = vmatprep.subr.mxu0 0.0
          %3302 = vmatpush1.msra.mxu0 %v3182
          %3303 = vmatprep.subr.mxu0 0.0
          %3304 = vmatpush1.msra.mxu0 %v3183
          %3305 = vmatprep.subr.mxu0 0.0
          %3306 = vmatpush1.msra.mxu0 %v3184
          %3307 = vmatprep.subr.mxu0 0.0
          %3308 = vmatpush1.msra.mxu0 %v3185
          %3309 = vmatprep.subr.mxu0 0.0
          %3310 = vmatpush1.msra.mxu0 %v3186
          %3311 = vmatprep.subr.mxu0 0.0
          %3312 = vmatpush1.msra.mxu0 %v3187
          %3313 = vmatprep.subr.mxu0 0.0
          %3314 = vmatpush1.msra.mxu0 %v3188
          %3315 = vmatprep.subr.mxu0 0.0
          %3316 = vmatpush1.msra.mxu0 %v3189
          %3317 = vmatprep.subr.mxu0 0.0
          %3318 = vmatpush1.msra.mxu0 %v3190
          %3319 = vmatprep.subr.mxu0 0.0
          %3320 = vmatpush1.msra.mxu0 %v3191
          %3321 = vmatprep.subr.mxu0 0.0
          %3322 = vmatpush1.msra.mxu0 %v3192
          %3323 = vmatprep.subr.mxu0 0.0
          %3324 = vmatpush1.msra.mxu0 %v3193
          %3325 = vmatprep.subr.mxu0 0.0
          %3326 = vmatpush1.msra.mxu0 %v3194
          %3327 = vmatprep.subr.mxu0 0.0
          %3328 = vmatpush1.msra.mxu0 %v3195
          %3329 = vmatprep.subr.mxu0 0.0
          %3330 = vmatpush1.msra.mxu0 %v3196
          %3331 = vmatprep.subr.mxu0 0.0
          %3332 = vmatpush1.msra.mxu0 %v3197
          %3333 = vmatprep.subr.mxu0 0.0
          %3334 = vmatpush1.msra.mxu0 %v3198
          %3335 = vmatprep.subr.mxu0 0.0
          %3336 = vmatpush1.msra.mxu0 %v3199
          %3337 = vmatprep.subr.mxu0 0.0
          %3338 = vmatpush1.msra.mxu0 %v3200
          %3339 = vmatprep.subr.mxu0 0.0
          %3340 = vmatpush1.msra.mxu0 %v3201
          %3341 = vmatprep.subr.mxu0 0.0
          %3342 = vmatpush1.msra.mxu0 %v3202
          %3343 = vmatprep.subr.mxu0 0.0
          %3344 = vmatpush1.msra.mxu0 %v3203
          %3345 = vmatprep.subr.mxu0 0.0
          %3346 = vmatpush1.msra.mxu0 %v3204
          %3347 = vmatprep.subr.mxu0 0.0
          %3348 = vmatpush1.msra.mxu0 %v3205
          %3349 = vmatprep.subr.mxu0 0.0
          %3350 = vmatpush1.msra.mxu0 %v3206
          %3351 = vmatprep.subr.mxu0 0.0
          %3352 = vmatpush1.msra.mxu0 %v3207
          %3353 = vmatprep.mubr.f32.mxu0 %v3143
          %3354 = vmatmul.mubr.f32.gmra.mrb[0].mxu0 %v3142
          %v3355 = vpop.f32.mrb[0].mxu0
          %v3356 = vadd.f32 %v3286, %v3355
          %v3357 = vpop.f32.mrb[0].mxu0
          %3358 = vdwg.mxu0
          %3359 = vmatprep.subr.mxu0 0.0
          %3360 = vmatpush1.msra.mxu0 %v3208
          %3361 = vmatprep.subr.mxu0 0.0
          %3362 = vmatpush1.msra.mxu0 %v3209
          %3363 = vmatprep.subr.mxu0 0.0
          %3364 = vmatpush1.msra.mxu0 %v3210
          %3365 = vmatprep.subr.mxu0 0.0
          %3366 = vmatpush1.msra.mxu0 %v3211
          %3367 = vmatprep.subr.mxu0 0.0
          %3368 = vmatpush1.msra.mxu0 %v3212
          %3369 = vmatprep.subr.mxu0 0.0
          %3370 = vmatpush1.msra.mxu0 %v3213
          %3371 = vmatprep.subr.mxu0 0.0
          %3372 = vmatpush1.msra.mxu0 %v3214
          %3373 = vmatprep.subr.mxu0 0.0
          %3374 = vmatpush1.msra.mxu0 %v3215
          %3375 = vmatprep.subr.mxu0 0.0
          %3376 = vmatpush1.msra.mxu0 0.0
          %3377 = vmatprep.subr.mxu0 0.0
          %3378 = vmatpush1.msra.mxu0 0.0
          %3379 = vmatprep.subr.mxu0 0.0
          %3380 = vmatpush1.msra.mxu0 0.0
          %3381 = vmatprep.subr.mxu0 0.0
          %3382 = vmatpush1.msra.mxu0 0.0
          %3383 = vmatprep.subr.mxu0 0.0
          %3384 = vmatpush1.msra.mxu0 0.0
          %3385 = vmatprep.subr.mxu0 0.0
          %3386 = vmatpush1.msra.mxu0 0.0
          %3387 = vmatprep.subr.mxu0 0.0
          %3388 = vmatpush1.msra.mxu0 0.0
          %3389 = vmatprep.subr.mxu0 0.0
          %3390 = vmatpush1.msra.mxu0 0.0
          %3391 = vmatprep.subr.mxu0 0.0
          %3392 = vmatpush1.msra.mxu0 0.0
          %3393 = vmatprep.subr.mxu0 0.0
          %3394 = vmatpush1.msra.mxu0 0.0
          %3395 = vmatprep.subr.mxu0 0.0
          %3396 = vmatpush1.msra.mxu0 0.0
          %3397 = vmatprep.subr.mxu0 0.0
          %3398 = vmatpush1.msra.mxu0 0.0
          %3399 = vmatprep.subr.mxu0 0.0
          %3400 = vmatpush1.msra.mxu0 0.0
          %3401 = vmatprep.subr.mxu0 0.0
          %3402 = vmatpush1.msra.mxu0 0.0
          %3403 = vmatprep.subr.mxu0 0.0
          %3404 = vmatpush1.msra.mxu0 0.0
          %3405 = vmatprep.subr.mxu0 0.0
          %3406 = vmatpush1.msra.mxu0 0.0
          %3407 = vmatprep.subr.mxu0 0.0
          %3408 = vmatpush1.msra.mxu0 0.0
          %3409 = vmatprep.subr.mxu0 0.0
          %3410 = vmatpush1.msra.mxu0 0.0
          %3411 = vmatprep.subr.mxu0 0.0
          %3412 = vmatpush1.msra.mxu0 0.0
          %3413 = vmatprep.subr.mxu0 0.0
          %3414 = vmatpush1.msra.mxu0 0.0
          %3415 = vmatprep.subr.mxu0 0.0
          %3416 = vmatpush1.msra.mxu0 0.0
          %3417 = vmatprep.subr.mxu0 0.0
          %3418 = vmatpush1.msra.mxu0 0.0
          %3419 = vmatprep.subr.mxu0 0.0
          %3420 = vmatpush1.msra.mxu0 0.0
          %3421 = vmatprep.subr.mxu0 0.0
          %3422 = vmatpush1.msra.mxu0 0.0
          %3423 = vmatprep.mubr.f32.mxu0 0.0
          %3424 = vmatmul.mubr.f32.gmra.mrb[0].mxu0 %v3217
          %v3425 = vpop.f32.mrb[0].mxu0
          %v3426 = vadd.f32 %v3356, %v3425
          %v3427 = vpop.f32.mrb[0].mxu0
          %3428 = vdwg.mxu0
          %v3429 = vmul.f32 %v3426, %v3091
          %v3430 = vadd.f32 %v3429, %v3098
          %v3431 = vmax.f32 %v3430, 0.0
          %v3433 = vrot.slane %v3431, 7
          %vm3435 = vcmask 1040384
          %v3436 = vsel %vm3435, 0.0, %v3433
          %vm3437 = vcmask 1042432
          %v3438 = vsel %vm3437, %v3436, 0.0
          %s3439 = scalar_lea.vmem [#allocation12], %s3112
          %3440 = vst [vmem:[%s3439] sm:$0xf] %v3438
        $region215: #{forward.1} parent=135 // loop_footer
          %s3105 = sadd.s32 1, %s3101
        $region216: #{forward.1} parent=135 // loop_footer_branch
          %3100 = sbr.rel target = $region212
        $region217: #{forward.1} parent=135 // loop_exit
          _
        %3441 = vst [vmem:[#allocation13] sm:$0xf] 0.0
        %s3442 = scalar_lea.vmem [#allocation13], 12
        %3443 = vst [vmem:[%s3442] sm:$0xf] 0.0
        %v3444 = vld [vmem:[%s47] sm:$0x1]
        %v3446 = vlaneseq
        %v3447 = vshrl.u32 %v3446, 7
        %v3448 = vsub.s32 0, %v3447
        %v3449 = vrot.slane %v3444, %v3448
        %v3451 = vld [vmem:[%s49] sm:$0x1]
        %v3453 = vlaneseq
        %v3454 = vshrl.u32 %v3453, 7
        %v3455 = vsub.s32 0, %v3454
        %v3456 = vrot.slane %v3451, %v3455
        loop: start=0, step=1, limit=2
        $region218: #{forward.1} parent=135 // loop_pre_header
          _
        $region219: #{forward.1} parent=135 // loop_header
          %s3459 = sphi 0, %s3463
          %p3460 = scmp.ge.s32.totalorder %s3459, 2
        $region220: #{forward.1} parent=135 // loop_header_branch
          %3462 = sbr.rel (%p3460) target = $region224
        $region221: #{forward.1} parent=135 // loop_body
          %s3464 = smul.u32 %s3459, 4
          %s3465 = scalar_lea.vmem [#allocation12], %s3464
          %v3466 = vld [vmem:[%s3465] sm:$0x3]
          %v3467 = vld [vmem:[%s3465 + $0x1] sm:$0x3]
          %v3468 = vld [vmem:[%s3465 + $0x2] sm:$0x3]
          %s3469 = sadd.s32 %s3459, 1
          %s3470 = smul.u32 %s3469, 4
          %s3471 = scalar_lea.vmem [#allocation12], %s3470
          %v3472 = vld [vmem:[%s3471] sm:$0x3]
          %v3473 = vld [vmem:[%s3471 + $0x1] sm:$0x3]
          %v3474 = vld [vmem:[%s3471 + $0x2] sm:$0x3]
          %s3475 = sadd.s32 %s3459, 2
          %s3476 = smul.u32 %s3475, 4
          %s3477 = scalar_lea.vmem [#allocation12], %s3476
          %v3478 = vld [vmem:[%s3477] sm:$0x3]
          %v3479 = vld [vmem:[%s3477 + $0x1] sm:$0x3]
          %v3480 = vld [vmem:[%s3477 + $0x2] sm:$0x3]
          %v3481 = vld [vmem:[%s45] sm:$0xff]
          %v3482 = vld [vmem:[%s45 + $0x8] sm:$0xff]
          %v3483 = vld [vmem:[%s45 + $0x10] sm:$0xff]
          %v3484 = vld [vmem:[%s45 + $0x18] sm:$0xff]
          %v3485 = vld [vmem:[%s45 + $0x20] sm:$0xff]
          %v3486 = vld [vmem:[%s45 + $0x28] sm:$0xff]
          %v3487 = vld [vmem:[%s45 + $0x30] sm:$0xff]
          %v3488 = vld [vmem:[%s45 + $0x38] sm:$0xff]
          %v3489 = vld [vmem:[%s45 + $0x40] sm:$0xff]
          %v3490 = vld [vmem:[%s45 + $0x48] sm:$0xff]
          %v3491 = vld [vmem:[%s45 + $0x50] sm:$0xff]
          %v3492 = vld [vmem:[%s45 + $0x58] sm:$0xff]
          %v3493 = vld [vmem:[%s45 + $0x60] sm:$0xff]
          %v3494 = vld [vmem:[%s45 + $0x68] sm:$0xff]
          %v3495 = vld [vmem:[%s45 + $0x70] sm:$0xff]
          %v3496 = vld [vmem:[%s45 + $0x78] sm:$0xff]
          %v3497 = vld [vmem:[%s45 + $0x80] sm:$0xff]
          %v3498 = vld [vmem:[%s45 + $0x88] sm:$0xff]
          %v3499 = vld [vmem:[%s45 + $0x90] sm:$0xff]
          %v3500 = vld [vmem:[%s45 + $0x98] sm:$0xff]
          %v3501 = vld [vmem:[%s45 + $0xa0] sm:$0xff]
          %v3502 = vld [vmem:[%s45 + $0xa8] sm:$0xff]
          %v3503 = vld [vmem:[%s45 + $0xb0] sm:$0xff]
          %v3504 = vld [vmem:[%s45 + $0xb8] sm:$0xff]
          %v3505 = vld [vmem:[%s45 + $0xc0] sm:$0xff]
          %v3506 = vld [vmem:[%s45 + $0xc8] sm:$0xff]
          %v3507 = vld [vmem:[%s45 + $0xd0] sm:$0xff]
          %v3508 = vld [vmem:[%s45 + $0xd8] sm:$0xff]
          %v3509 = vld [vmem:[%s45 + $0xe0] sm:$0xff]
          %v3510 = vld [vmem:[%s45 + $0xe8] sm:$0xff]
          %v3511 = vld [vmem:[%s45 + $0xf0] sm:$0xff]
          %v3512 = vld [vmem:[%s45 + $0xf8] sm:$0xff]
          %v3513 = vld [vmem:[%s45 + $0x100] sm:$0xff]
          %v3514 = vld [vmem:[%s45 + $0x108] sm:$0xff]
          %v3515 = vld [vmem:[%s45 + $0x110] sm:$0xff]
          %v3516 = vld [vmem:[%s45 + $0x118] sm:$0xff]
          %v3517 = vld [vmem:[%s45 + $0x120] sm:$0xff]
          %v3518 = vld [vmem:[%s45 + $0x128] sm:$0xff]
          %v3519 = vld [vmem:[%s45 + $0x130] sm:$0xff]
          %v3520 = vld [vmem:[%s45 + $0x138] sm:$0xff]
          %v3521 = vld [vmem:[%s45 + $0x140] sm:$0xff]
          %v3522 = vld [vmem:[%s45 + $0x148] sm:$0xff]
          %v3523 = vld [vmem:[%s45 + $0x150] sm:$0xff]
          %v3524 = vld [vmem:[%s45 + $0x158] sm:$0xff]
          %v3525 = vld [vmem:[%s45 + $0x160] sm:$0xff]
          %v3526 = vld [vmem:[%s45 + $0x168] sm:$0xff]
          %v3527 = vld [vmem:[%s45 + $0x170] sm:$0xff]
          %v3528 = vld [vmem:[%s45 + $0x178] sm:$0xff]
          %v3529 = vld [vmem:[%s45 + $0x180] sm:$0xff]
          %v3530 = vld [vmem:[%s45 + $0x188] sm:$0xff]
          %v3531 = vld [vmem:[%s45 + $0x190] sm:$0xff]
          %v3532 = vld [vmem:[%s45 + $0x198] sm:$0xff]
          %v3533 = vld [vmem:[%s45 + $0x1a0] sm:$0xff]
          %v3534 = vld [vmem:[%s45 + $0x1a8] sm:$0xff]
          %v3535 = vld [vmem:[%s45 + $0x1b0] sm:$0xff]
          %v3536 = vld [vmem:[%s45 + $0x1b8] sm:$0xff]
          %v3537 = vld [vmem:[%s45 + $0x1c0] sm:$0xff]
          %v3538 = vld [vmem:[%s45 + $0x1c8] sm:$0xff]
          %v3539 = vld [vmem:[%s45 + $0x1d0] sm:$0xff]
          %v3540 = vld [vmem:[%s45 + $0x1d8] sm:$0xff]
          %v3541 = vld [vmem:[%s45 + $0x1e0] sm:$0xff]
          %v3542 = vld [vmem:[%s45 + $0x1e8] sm:$0xff]
          %v3543 = vld [vmem:[%s45 + $0x1f0] sm:$0xff]
          %v3544 = vld [vmem:[%s45 + $0x1f8] sm:$0xff]
          %v3545 = vld [vmem:[%s45 + $0x200] sm:$0xff]
          %v3546 = vld [vmem:[%s45 + $0x208] sm:$0xff]
          %v3547 = vld [vmem:[%s45 + $0x210] sm:$0xff]
          %v3548 = vld [vmem:[%s45 + $0x218] sm:$0xff]
          %v3549 = vld [vmem:[%s45 + $0x220] sm:$0xff]
          %v3550 = vld [vmem:[%s45 + $0x228] sm:$0xff]
          %v3551 = vld [vmem:[%s45 + $0x230] sm:$0xff]
          %v3552 = vld [vmem:[%s45 + $0x238] sm:$0xff]
          %v3553 = vld [vmem:[%s45 + $0x240] sm:$0xff]
          %v3554 = vld [vmem:[%s45 + $0x248] sm:$0xff]
          %v3555 = vld [vmem:[%s45 + $0x250] sm:$0xff]
          %v3556 = vld [vmem:[%s45 + $0x258] sm:$0xff]
          %v3557 = vld [vmem:[%s45 + $0x260] sm:$0xff]
          %v3558 = vld [vmem:[%s45 + $0x268] sm:$0xff]
          %v3559 = vld [vmem:[%s45 + $0x270] sm:$0xff]
          %v3560 = vld [vmem:[%s45 + $0x278] sm:$0xff]
          %v3561 = vld [vmem:[%s45 + $0x280] sm:$0xff]
          %v3562 = vld [vmem:[%s45 + $0x288] sm:$0xff]
          %v3563 = vld [vmem:[%s45 + $0x290] sm:$0xff]
          %v3564 = vld [vmem:[%s45 + $0x298] sm:$0xff]
          %v3565 = vld [vmem:[%s45 + $0x2a0] sm:$0xff]
          %v3566 = vld [vmem:[%s45 + $0x2a8] sm:$0xff]
          %v3567 = vld [vmem:[%s45 + $0x2b0] sm:$0xff]
          %v3568 = vld [vmem:[%s45 + $0x2b8] sm:$0xff]
          %v3569 = vld [vmem:[%s45 + $0x2c0] sm:$0xff]
          %v3570 = vld [vmem:[%s45 + $0x2c8] sm:$0xff]
          %v3571 = vld [vmem:[%s45 + $0x2d0] sm:$0xff]
          %v3572 = vld [vmem:[%s45 + $0x2d8] sm:$0xff]
          %v3573 = vld [vmem:[%s45 + $0x2e0] sm:$0xff]
          %v3574 = vld [vmem:[%s45 + $0x2e8] sm:$0xff]
          %v3575 = vld [vmem:[%s45 + $0x2f0] sm:$0xff]
          %v3576 = vld [vmem:[%s45 + $0x2f8] sm:$0xff]
          %v3577 = vld [vmem:[%s45 + $0x300] sm:$0xff]
          %v3578 = vld [vmem:[%s45 + $0x308] sm:$0xff]
          %v3579 = vld [vmem:[%s45 + $0x310] sm:$0xff]
          %v3580 = vld [vmem:[%s45 + $0x318] sm:$0xff]
          %v3581 = vld [vmem:[%s45 + $0x320] sm:$0xff]
          %v3582 = vld [vmem:[%s45 + $0x328] sm:$0xff]
          %v3583 = vld [vmem:[%s45 + $0x330] sm:$0xff]
          %v3584 = vld [vmem:[%s45 + $0x338] sm:$0xff]
          %v3585 = vld [vmem:[%s45 + $0x340] sm:$0xff]
          %v3586 = vld [vmem:[%s45 + $0x348] sm:$0xff]
          %v3587 = vld [vmem:[%s45 + $0x350] sm:$0xff]
          %v3588 = vld [vmem:[%s45 + $0x358] sm:$0xff]
          %v3589 = vld [vmem:[%s45 + $0x360] sm:$0xff]
          %v3590 = vld [vmem:[%s45 + $0x368] sm:$0xff]
          %v3591 = vld [vmem:[%s45 + $0x370] sm:$0xff]
          %v3592 = vld [vmem:[%s45 + $0x378] sm:$0xff]
          %v3593 = vld [vmem:[%s45 + $0x380] sm:$0xff]
          %v3594 = vld [vmem:[%s45 + $0x388] sm:$0xff]
          %v3595 = vld [vmem:[%s45 + $0x390] sm:$0xff]
          %v3596 = vld [vmem:[%s45 + $0x398] sm:$0xff]
          %v3597 = vld [vmem:[%s45 + $0x3a0] sm:$0xff]
          %v3598 = vld [vmem:[%s45 + $0x3a8] sm:$0xff]
          %v3599 = vld [vmem:[%s45 + $0x3b0] sm:$0xff]
          %v3600 = vld [vmem:[%s45 + $0x3b8] sm:$0xff]
          %v3601 = vld [vmem:[%s45 + $0x3c0] sm:$0xff]
          %v3602 = vld [vmem:[%s45 + $0x3c8] sm:$0xff]
          %v3603 = vld [vmem:[%s45 + $0x3d0] sm:$0xff]
          %v3604 = vld [vmem:[%s45 + $0x3d8] sm:$0xff]
          %v3605 = vld [vmem:[%s45 + $0x3e0] sm:$0xff]
          %v3606 = vld [vmem:[%s45 + $0x3e8] sm:$0xff]
          %v3607 = vld [vmem:[%s45 + $0x3f0] sm:$0xff]
          %v3608 = vld [vmem:[%s45 + $0x3f8] sm:$0xff]
          %v3609 = vld [vmem:[%s45 + $0x400] sm:$0xff]
          %v3610 = vld [vmem:[%s45 + $0x408] sm:$0xff]
          %v3611 = vld [vmem:[%s45 + $0x410] sm:$0xff]
          %v3612 = vld [vmem:[%s45 + $0x418] sm:$0xff]
          %v3613 = vld [vmem:[%s45 + $0x420] sm:$0xff]
          %v3614 = vld [vmem:[%s45 + $0x428] sm:$0xff]
          %v3615 = vld [vmem:[%s45 + $0x430] sm:$0xff]
          %v3616 = vld [vmem:[%s45 + $0x438] sm:$0xff]
          %v3617 = vld [vmem:[%s45 + $0x440] sm:$0xff]
          %v3618 = vld [vmem:[%s45 + $0x448] sm:$0xff]
          %v3619 = vld [vmem:[%s45 + $0x450] sm:$0xff]
          %v3620 = vld [vmem:[%s45 + $0x458] sm:$0xff]
          %v3621 = vld [vmem:[%s45 + $0x460] sm:$0xff]
          %v3622 = vld [vmem:[%s45 + $0x468] sm:$0xff]
          %v3623 = vld [vmem:[%s45 + $0x470] sm:$0xff]
          %v3624 = vld [vmem:[%s45 + $0x478] sm:$0xff]
          %3625 = vmatprep.subr.mxu0 0.0
          %3626 = vmatpush1.msra.mxu0 %v3481
          %3627 = vmatprep.subr.mxu0 0.0
          %3628 = vmatpush1.msra.mxu0 %v3482
          %3629 = vmatprep.subr.mxu0 0.0
          %3630 = vmatpush1.msra.mxu0 %v3483
          %3631 = vmatprep.subr.mxu0 0.0
          %3632 = vmatpush1.msra.mxu0 %v3484
          %3633 = vmatprep.subr.mxu0 0.0
          %3634 = vmatpush1.msra.mxu0 %v3485
          %3635 = vmatprep.subr.mxu0 0.0
          %3636 = vmatpush1.msra.mxu0 %v3486
          %3637 = vmatprep.subr.mxu0 0.0
          %3638 = vmatpush1.msra.mxu0 %v3487
          %3639 = vmatprep.subr.mxu0 0.0
          %3640 = vmatpush1.msra.mxu0 %v3488
          %3641 = vmatprep.subr.mxu0 0.0
          %3642 = vmatpush1.msra.mxu0 %v3489
          %3643 = vmatprep.subr.mxu0 0.0
          %3644 = vmatpush1.msra.mxu0 %v3490
          %3645 = vmatprep.subr.mxu0 0.0
          %3646 = vmatpush1.msra.mxu0 %v3491
          %3647 = vmatprep.subr.mxu0 0.0
          %3648 = vmatpush1.msra.mxu0 %v3492
          %3649 = vmatprep.subr.mxu0 0.0
          %3650 = vmatpush1.msra.mxu0 %v3493
          %3651 = vmatprep.subr.mxu0 0.0
          %3652 = vmatpush1.msra.mxu0 %v3494
          %3653 = vmatprep.subr.mxu0 0.0
          %3654 = vmatpush1.msra.mxu0 %v3495
          %3655 = vmatprep.subr.mxu0 0.0
          %3656 = vmatpush1.msra.mxu0 %v3496
          %3657 = vmatprep.subr.mxu0 0.0
          %3658 = vmatpush1.msra.mxu0 %v3497
          %3659 = vmatprep.subr.mxu0 0.0
          %3660 = vmatpush1.msra.mxu0 %v3498
          %3661 = vmatprep.subr.mxu0 0.0
          %3662 = vmatpush1.msra.mxu0 %v3499
          %3663 = vmatprep.subr.mxu0 0.0
          %3664 = vmatpush1.msra.mxu0 %v3500
          %3665 = vmatprep.subr.mxu0 0.0
          %3666 = vmatpush1.msra.mxu0 %v3501
          %3667 = vmatprep.subr.mxu0 0.0
          %3668 = vmatpush1.msra.mxu0 %v3502
          %3669 = vmatprep.subr.mxu0 0.0
          %3670 = vmatpush1.msra.mxu0 %v3503
          %3671 = vmatprep.subr.mxu0 0.0
          %3672 = vmatpush1.msra.mxu0 %v3504
          %3673 = vmatprep.subr.mxu0 0.0
          %3674 = vmatpush1.msra.mxu0 %v3505
          %3675 = vmatprep.subr.mxu0 0.0
          %3676 = vmatpush1.msra.mxu0 %v3506
          %3677 = vmatprep.subr.mxu0 0.0
          %3678 = vmatpush1.msra.mxu0 %v3507
          %3679 = vmatprep.subr.mxu0 0.0
          %3680 = vmatpush1.msra.mxu0 %v3508
          %3681 = vmatprep.subr.mxu0 0.0
          %3682 = vmatpush1.msra.mxu0 %v3509
          %3683 = vmatprep.subr.mxu0 0.0
          %3684 = vmatpush1.msra.mxu0 %v3510
          %3685 = vmatprep.subr.mxu0 0.0
          %3686 = vmatpush1.msra.mxu0 %v3511
          %3687 = vmatprep.subr.mxu0 0.0
          %3688 = vmatpush1.msra.mxu0 %v3512
          %3689 = vmatprep.mubr.f32.mxu0 %v3467
          %3690 = vmatmul.mubr.f32.gmra.mrb[0].mxu0 %v3466
          %v3691 = vpop.f32.mrb[0].mxu0
          %v3692 = vadd.f32 0.0, %v3691
          %v3693 = vpop.f32.mrb[0].mxu0
          %3694 = vdwg.mxu0
          %3695 = vmatprep.subr.mxu0 0.0
          %3696 = vmatpush1.msra.mxu0 %v3513
          %3697 = vmatprep.subr.mxu0 0.0
          %3698 = vmatpush1.msra.mxu0 %v3514
          %3699 = vmatprep.subr.mxu0 0.0
          %3700 = vmatpush1.msra.mxu0 %v3515
          %3701 = vmatprep.subr.mxu0 0.0
          %3702 = vmatpush1.msra.mxu0 %v3516
          %3703 = vmatprep.subr.mxu0 0.0
          %3704 = vmatpush1.msra.mxu0 %v3517
          %3705 = vmatprep.subr.mxu0 0.0
          %3706 = vmatpush1.msra.mxu0 %v3518
          %3707 = vmatprep.subr.mxu0 0.0
          %3708 = vmatpush1.msra.mxu0 %v3519
          %3709 = vmatprep.subr.mxu0 0.0
          %3710 = vmatpush1.msra.mxu0 %v3520
          %3711 = vmatprep.subr.mxu0 0.0
          %3712 = vmatpush1.msra.mxu0 %v3521
          %3713 = vmatprep.subr.mxu0 0.0
          %3714 = vmatpush1.msra.mxu0 %v3522
          %3715 = vmatprep.subr.mxu0 0.0
          %3716 = vmatpush1.msra.mxu0 %v3523
          %3717 = vmatprep.subr.mxu0 0.0
          %3718 = vmatpush1.msra.mxu0 %v3524
          %3719 = vmatprep.subr.mxu0 0.0
          %3720 = vmatpush1.msra.mxu0 %v3525
          %3721 = vmatprep.subr.mxu0 0.0
          %3722 = vmatpush1.msra.mxu0 %v3526
          %3723 = vmatprep.subr.mxu0 0.0
          %3724 = vmatpush1.msra.mxu0 %v3527
          %3725 = vmatprep.subr.mxu0 0.0
          %3726 = vmatpush1.msra.mxu0 %v3528
          %3727 = vmatprep.subr.mxu0 0.0
          %3728 = vmatpush1.msra.mxu0 %v3529
          %3729 = vmatprep.subr.mxu0 0.0
          %3730 = vmatpush1.msra.mxu0 %v3530
          %3731 = vmatprep.subr.mxu0 0.0
          %3732 = vmatpush1.msra.mxu0 %v3531
          %3733 = vmatprep.subr.mxu0 0.0
          %3734 = vmatpush1.msra.mxu0 %v3532
          %3735 = vmatprep.subr.mxu0 0.0
          %3736 = vmatpush1.msra.mxu0 %v3533
          %3737 = vmatprep.subr.mxu0 0.0
          %3738 = vmatpush1.msra.mxu0 %v3534
          %3739 = vmatprep.subr.mxu0 0.0
          %3740 = vmatpush1.msra.mxu0 %v3535
          %3741 = vmatprep.subr.mxu0 0.0
          %3742 = vmatpush1.msra.mxu0 %v3536
          %3743 = vmatprep.subr.mxu0 0.0
          %3744 = vmatpush1.msra.mxu0 %v3537
          %3745 = vmatprep.subr.mxu0 0.0
          %3746 = vmatpush1.msra.mxu0 %v3538
          %3747 = vmatprep.subr.mxu0 0.0
          %3748 = vmatpush1.msra.mxu0 %v3539
          %3749 = vmatprep.subr.mxu0 0.0
          %3750 = vmatpush1.msra.mxu0 %v3540
          %3751 = vmatprep.subr.mxu0 0.0
          %3752 = vmatpush1.msra.mxu0 %v3541
          %3753 = vmatprep.subr.mxu0 0.0
          %3754 = vmatpush1.msra.mxu0 %v3542
          %3755 = vmatprep.subr.mxu0 0.0
          %3756 = vmatpush1.msra.mxu0 %v3543
          %3757 = vmatprep.subr.mxu0 0.0
          %3758 = vmatpush1.msra.mxu0 %v3544
          %3759 = vmatprep.mubr.f32.mxu0 %v3472
          %3760 = vmatmul.mubr.f32.gmra.mrb[0].mxu0 %v3468
          %v3761 = vpop.f32.mrb[0].mxu0
          %v3762 = vadd.f32 %v3692, %v3761
          %v3763 = vpop.f32.mrb[0].mxu0
          %3764 = vdwg.mxu0
          %3765 = vmatprep.subr.mxu0 0.0
          %3766 = vmatpush1.msra.mxu0 %v3545
          %3767 = vmatprep.subr.mxu0 0.0
          %3768 = vmatpush1.msra.mxu0 %v3546
          %3769 = vmatprep.subr.mxu0 0.0
          %3770 = vmatpush1.msra.mxu0 %v3547
          %3771 = vmatprep.subr.mxu0 0.0
          %3772 = vmatpush1.msra.mxu0 %v3548
          %3773 = vmatprep.subr.mxu0 0.0
          %3774 = vmatpush1.msra.mxu0 %v3549
          %3775 = vmatprep.subr.mxu0 0.0
          %3776 = vmatpush1.msra.mxu0 %v3550
          %3777 = vmatprep.subr.mxu0 0.0
          %3778 = vmatpush1.msra.mxu0 %v3551
          %3779 = vmatprep.subr.mxu0 0.0
          %3780 = vmatpush1.msra.mxu0 %v3552
          %3781 = vmatprep.subr.mxu0 0.0
          %3782 = vmatpush1.msra.mxu0 %v3553
          %3783 = vmatprep.subr.mxu0 0.0
          %3784 = vmatpush1.msra.mxu0 %v3554
          %3785 = vmatprep.subr.mxu0 0.0
          %3786 = vmatpush1.msra.mxu0 %v3555
          %3787 = vmatprep.subr.mxu0 0.0
          %3788 = vmatpush1.msra.mxu0 %v3556
          %3789 = vmatprep.subr.mxu0 0.0
          %3790 = vmatpush1.msra.mxu0 %v3557
          %3791 = vmatprep.subr.mxu0 0.0
          %3792 = vmatpush1.msra.mxu0 %v3558
          %3793 = vmatprep.subr.mxu0 0.0
          %3794 = vmatpush1.msra.mxu0 %v3559
          %3795 = vmatprep.subr.mxu0 0.0
          %3796 = vmatpush1.msra.mxu0 %v3560
          %3797 = vmatprep.subr.mxu0 0.0
          %3798 = vmatpush1.msra.mxu0 %v3561
          %3799 = vmatprep.subr.mxu0 0.0
          %3800 = vmatpush1.msra.mxu0 %v3562
          %3801 = vmatprep.subr.mxu0 0.0
          %3802 = vmatpush1.msra.mxu0 %v3563
          %3803 = vmatprep.subr.mxu0 0.0
          %3804 = vmatpush1.msra.mxu0 %v3564
          %3805 = vmatprep.subr.mxu0 0.0
          %3806 = vmatpush1.msra.mxu0 %v3565
          %3807 = vmatprep.subr.mxu0 0.0
          %3808 = vmatpush1.msra.mxu0 %v3566
          %3809 = vmatprep.subr.mxu0 0.0
          %3810 = vmatpush1.msra.mxu0 %v3567
          %3811 = vmatprep.subr.mxu0 0.0
          %3812 = vmatpush1.msra.mxu0 %v3568
          %3813 = vmatprep.subr.mxu0 0.0
          %3814 = vmatpush1.msra.mxu0 %v3569
          %3815 = vmatprep.subr.mxu0 0.0
          %3816 = vmatpush1.msra.mxu0 %v3570
          %3817 = vmatprep.subr.mxu0 0.0
          %3818 = vmatpush1.msra.mxu0 %v3571
          %3819 = vmatprep.subr.mxu0 0.0
          %3820 = vmatpush1.msra.mxu0 %v3572
          %3821 = vmatprep.subr.mxu0 0.0
          %3822 = vmatpush1.msra.mxu0 %v3573
          %3823 = vmatprep.subr.mxu0 0.0
          %3824 = vmatpush1.msra.mxu0 %v3574
          %3825 = vmatprep.subr.mxu0 0.0
          %3826 = vmatpush1.msra.mxu0 %v3575
          %3827 = vmatprep.subr.mxu0 0.0
          %3828 = vmatpush1.msra.mxu0 %v3576
          %3829 = vmatprep.mubr.f32.mxu0 %v3474
          %3830 = vmatmul.mubr.f32.gmra.mrb[0].mxu0 %v3473
          %v3831 = vpop.f32.mrb[0].mxu0
          %v3832 = vadd.f32 %v3762, %v3831
          %v3833 = vpop.f32.mrb[0].mxu0
          %3834 = vdwg.mxu0
          %3835 = vmatprep.subr.mxu0 0.0
          %3836 = vmatpush1.msra.mxu0 %v3577
          %3837 = vmatprep.subr.mxu0 0.0
          %3838 = vmatpush1.msra.mxu0 %v3578
          %3839 = vmatprep.subr.mxu0 0.0
          %3840 = vmatpush1.msra.mxu0 %v3579
          %3841 = vmatprep.subr.mxu0 0.0
          %3842 = vmatpush1.msra.mxu0 %v3580
          %3843 = vmatprep.subr.mxu0 0.0
          %3844 = vmatpush1.msra.mxu0 %v3581
          %3845 = vmatprep.subr.mxu0 0.0
          %3846 = vmatpush1.msra.mxu0 %v3582
          %3847 = vmatprep.subr.mxu0 0.0
          %3848 = vmatpush1.msra.mxu0 %v3583
          %3849 = vmatprep.subr.mxu0 0.0
          %3850 = vmatpush1.msra.mxu0 %v3584
          %3851 = vmatprep.subr.mxu0 0.0
          %3852 = vmatpush1.msra.mxu0 %v3585
          %3853 = vmatprep.subr.mxu0 0.0
          %3854 = vmatpush1.msra.mxu0 %v3586
          %3855 = vmatprep.subr.mxu0 0.0
          %3856 = vmatpush1.msra.mxu0 %v3587
          %3857 = vmatprep.subr.mxu0 0.0
          %3858 = vmatpush1.msra.mxu0 %v3588
          %3859 = vmatprep.subr.mxu0 0.0
          %3860 = vmatpush1.msra.mxu0 %v3589
          %3861 = vmatprep.subr.mxu0 0.0
          %3862 = vmatpush1.msra.mxu0 %v3590
          %3863 = vmatprep.subr.mxu0 0.0
          %3864 = vmatpush1.msra.mxu0 %v3591
          %3865 = vmatprep.subr.mxu0 0.0
          %3866 = vmatpush1.msra.mxu0 %v3592
          %3867 = vmatprep.subr.mxu0 0.0
          %3868 = vmatpush1.msra.mxu0 %v3593
          %3869 = vmatprep.subr.mxu0 0.0
          %3870 = vmatpush1.msra.mxu0 %v3594
          %3871 = vmatprep.subr.mxu0 0.0
          %3872 = vmatpush1.msra.mxu0 %v3595
          %3873 = vmatprep.subr.mxu0 0.0
          %3874 = vmatpush1.msra.mxu0 %v3596
          %3875 = vmatprep.subr.mxu0 0.0
          %3876 = vmatpush1.msra.mxu0 %v3597
          %3877 = vmatprep.subr.mxu0 0.0
          %3878 = vmatpush1.msra.mxu0 %v3598
          %3879 = vmatprep.subr.mxu0 0.0
          %3880 = vmatpush1.msra.mxu0 %v3599
          %3881 = vmatprep.subr.mxu0 0.0
          %3882 = vmatpush1.msra.mxu0 %v3600
          %3883 = vmatprep.subr.mxu0 0.0
          %3884 = vmatpush1.msra.mxu0 %v3601
          %3885 = vmatprep.subr.mxu0 0.0
          %3886 = vmatpush1.msra.mxu0 %v3602
          %3887 = vmatprep.subr.mxu0 0.0
          %3888 = vmatpush1.msra.mxu0 %v3603
          %3889 = vmatprep.subr.mxu0 0.0
          %3890 = vmatpush1.msra.mxu0 %v3604
          %3891 = vmatprep.subr.mxu0 0.0
          %3892 = vmatpush1.msra.mxu0 %v3605
          %3893 = vmatprep.subr.mxu0 0.0
          %3894 = vmatpush1.msra.mxu0 %v3606
          %3895 = vmatprep.subr.mxu0 0.0
          %3896 = vmatpush1.msra.mxu0 %v3607
          %3897 = vmatprep.subr.mxu0 0.0
          %3898 = vmatpush1.msra.mxu0 %v3608
          %3899 = vmatprep.mubr.f32.mxu0 %v3479
          %3900 = vmatmul.mubr.f32.gmra.mrb[0].mxu0 %v3478
          %v3901 = vpop.f32.mrb[0].mxu0
          %v3902 = vadd.f32 %v3832, %v3901
          %v3903 = vpop.f32.mrb[0].mxu0
          %3904 = vdwg.mxu0
          %3905 = vmatprep.subr.mxu0 0.0
          %3906 = vmatpush1.msra.mxu0 %v3609
          %3907 = vmatprep.subr.mxu0 0.0
          %3908 = vmatpush1.msra.mxu0 %v3610
          %3909 = vmatprep.subr.mxu0 0.0
          %3910 = vmatpush1.msra.mxu0 %v3611
          %3911 = vmatprep.subr.mxu0 0.0
          %3912 = vmatpush1.msra.mxu0 %v3612
          %3913 = vmatprep.subr.mxu0 0.0
          %3914 = vmatpush1.msra.mxu0 %v3613
          %3915 = vmatprep.subr.mxu0 0.0
          %3916 = vmatpush1.msra.mxu0 %v3614
          %3917 = vmatprep.subr.mxu0 0.0
          %3918 = vmatpush1.msra.mxu0 %v3615
          %3919 = vmatprep.subr.mxu0 0.0
          %3920 = vmatpush1.msra.mxu0 %v3616
          %3921 = vmatprep.subr.mxu0 0.0
          %3922 = vmatpush1.msra.mxu0 %v3617
          %3923 = vmatprep.subr.mxu0 0.0
          %3924 = vmatpush1.msra.mxu0 %v3618
          %3925 = vmatprep.subr.mxu0 0.0
          %3926 = vmatpush1.msra.mxu0 %v3619
          %3927 = vmatprep.subr.mxu0 0.0
          %3928 = vmatpush1.msra.mxu0 %v3620
          %3929 = vmatprep.subr.mxu0 0.0
          %3930 = vmatpush1.msra.mxu0 %v3621
          %3931 = vmatprep.subr.mxu0 0.0
          %3932 = vmatpush1.msra.mxu0 %v3622
          %3933 = vmatprep.subr.mxu0 0.0
          %3934 = vmatpush1.msra.mxu0 %v3623
          %3935 = vmatprep.subr.mxu0 0.0
          %3936 = vmatpush1.msra.mxu0 %v3624
          %3937 = vmatprep.subr.mxu0 0.0
          %3938 = vmatpush1.msra.mxu0 0.0
          %3939 = vmatprep.subr.mxu0 0.0
          %3940 = vmatpush1.msra.mxu0 0.0
          %3941 = vmatprep.subr.mxu0 0.0
          %3942 = vmatpush1.msra.mxu0 0.0
          %3943 = vmatprep.subr.mxu0 0.0
          %3944 = vmatpush1.msra.mxu0 0.0
          %3945 = vmatprep.subr.mxu0 0.0
          %3946 = vmatpush1.msra.mxu0 0.0
          %3947 = vmatprep.subr.mxu0 0.0
          %3948 = vmatpush1.msra.mxu0 0.0
          %3949 = vmatprep.subr.mxu0 0.0
          %3950 = vmatpush1.msra.mxu0 0.0
          %3951 = vmatprep.subr.mxu0 0.0
          %3952 = vmatpush1.msra.mxu0 0.0
          %3953 = vmatprep.subr.mxu0 0.0
          %3954 = vmatpush1.msra.mxu0 0.0
          %3955 = vmatprep.subr.mxu0 0.0
          %3956 = vmatpush1.msra.mxu0 0.0
          %3957 = vmatprep.subr.mxu0 0.0
          %3958 = vmatpush1.msra.mxu0 0.0
          %3959 = vmatprep.subr.mxu0 0.0
          %3960 = vmatpush1.msra.mxu0 0.0
          %3961 = vmatprep.subr.mxu0 0.0
          %3962 = vmatpush1.msra.mxu0 0.0
          %3963 = vmatprep.subr.mxu0 0.0
          %3964 = vmatpush1.msra.mxu0 0.0
          %3965 = vmatprep.subr.mxu0 0.0
          %3966 = vmatpush1.msra.mxu0 0.0
          %3967 = vmatprep.subr.mxu0 0.0
          %3968 = vmatpush1.msra.mxu0 0.0
          %3969 = vmatprep.mubr.f32.mxu0 0.0
          %3970 = vmatmul.mubr.f32.gmra.mrb[0].mxu0 %v3480
          %v3971 = vpop.f32.mrb[0].mxu0
          %v3972 = vadd.f32 %v3902, %v3971
          %v3973 = vpop.f32.mrb[0].mxu0
          %3974 = vdwg.mxu0
          %v3975 = vmul.f32 %v3972, %v3449
          %v3976 = vadd.f32 %v3975, %v3456
          %v3977 = vmax.f32 %v3976, 0.0
          %v3979 = vrot.slane %v3977, 7
          %vm3981 = vcmask 1040384
          %v3982 = vsel %vm3981, 0.0, %v3979
          %vm3983 = vcmask 1042432
          %v3984 = vsel %vm3983, %v3982, 0.0
          %s3985 = scalar_lea.vmem [#allocation13], %s3470
          %3986 = vst [vmem:[%s3985] sm:$0xf] %v3984
        $region222: #{forward.1} parent=135 // loop_footer
          %s3463 = sadd.s32 1, %s3459
        $region223: #{forward.1} parent=135 // loop_footer_branch
          %3458 = sbr.rel target = $region219
        $region224: #{forward.1} parent=135 // loop_exit
          _
        %s3987 = scalar_lea.vmem [#allocation13], 4
        %v3988 = vld [vmem:[%s3987 + $0x1] sm:$0x3]
        %s3989 = scalar_lea.vmem [#allocation13], 8
        %v3990 = vld [vmem:[%s3989 + $0x1] sm:$0x3]
        %v3992 = vrot.slane %v3990, 6
        %vm3994 = vcmask 1041408
        %v3995 = vsel %vm3994, %v3988, %v3992
        %v3996 = vld [vmem:[%s57] sm:$0xff]
        %v3997 = vld [vmem:[%s57 + $0x8] sm:$0xff]
        %v3998 = vld [vmem:[%s57 + $0x10] sm:$0xff]
        %v3999 = vld [vmem:[%s57 + $0x18] sm:$0xff]
        %v4000 = vld [vmem:[%s57 + $0x20] sm:$0xff]
        %v4001 = vld [vmem:[%s57 + $0x28] sm:$0xff]
        %v4002 = vld [vmem:[%s57 + $0x30] sm:$0xff]
        %v4003 = vld [vmem:[%s57 + $0x38] sm:$0xff]
        %v4004 = vld [vmem:[%s57 + $0x40] sm:$0xff]
        %v4005 = vld [vmem:[%s57 + $0x48] sm:$0xff]
        %v4006 = vld [vmem:[%s57 + $0x50] sm:$0xff]
        %v4007 = vld [vmem:[%s57 + $0x58] sm:$0xff]
        %v4008 = vld [vmem:[%s57 + $0x60] sm:$0xff]
        %v4009 = vld [vmem:[%s57 + $0x68] sm:$0xff]
        %v4010 = vld [vmem:[%s57 + $0x70] sm:$0xff]
        %v4011 = vld [vmem:[%s57 + $0x78] sm:$0xff]
        %v4012 = vld [vmem:[%s57 + $0x80] sm:$0xff]
        %v4013 = vld [vmem:[%s57 + $0x88] sm:$0xff]
        %v4014 = vld [vmem:[%s57 + $0x90] sm:$0xff]
        %v4015 = vld [vmem:[%s57 + $0x98] sm:$0xff]
        %v4016 = vld [vmem:[%s57 + $0xa0] sm:$0xff]
        %v4017 = vld [vmem:[%s57 + $0xa8] sm:$0xff]
        %v4018 = vld [vmem:[%s57 + $0xb0] sm:$0xff]
        %v4019 = vld [vmem:[%s57 + $0xb8] sm:$0xff]
        %v4020 = vld [vmem:[%s57 + $0xc0] sm:$0xff]
        %v4021 = vld [vmem:[%s57 + $0xc8] sm:$0xff]
        %v4022 = vld [vmem:[%s57 + $0xd0] sm:$0xff]
        %v4023 = vld [vmem:[%s57 + $0xd8] sm:$0xff]
        %v4024 = vld [vmem:[%s57 + $0xe0] sm:$0xff]
        %v4025 = vld [vmem:[%s57 + $0xe8] sm:$0xff]
        %v4026 = vld [vmem:[%s57 + $0xf0] sm:$0xff]
        %v4027 = vld [vmem:[%s57 + $0xf8] sm:$0xff]
        %vm4028 = vcmask 31744
        %v4030 = vsel %vm4028, %v3996, 0
        %v4033 = vsel %vm4028, %v3997, 0
        %v4036 = vsel %vm4028, %v3998, 0
        %v4039 = vsel %vm4028, %v3999, 0
        %v4042 = vsel %vm4028, %v4000, 0
        %v4045 = vsel %vm4028, %v4001, 0
        %v4048 = vsel %vm4028, %v4002, 0
        %v4051 = vsel %vm4028, %v4003, 0
        %v4054 = vsel %vm4028, %v4004, 0
        %v4057 = vsel %vm4028, %v4005, 0
        %v4060 = vsel %vm4028, %v4006, 0
        %v4063 = vsel %vm4028, %v4007, 0
        %v4066 = vsel %vm4028, %v4008, 0
        %v4069 = vsel %vm4028, %v4009, 0
        %v4072 = vsel %vm4028, %v4010, 0
        %v4075 = vsel %vm4028, %v4011, 0
        %v4078 = vsel %vm4028, %v4012, 0
        %v4081 = vsel %vm4028, %v4013, 0
        %v4084 = vsel %vm4028, %v4014, 0
        %v4087 = vsel %vm4028, %v4015, 0
        %v4090 = vsel %vm4028, %v4016, 0
        %v4093 = vsel %vm4028, %v4017, 0
        %v4096 = vsel %vm4028, %v4018, 0
        %v4099 = vsel %vm4028, %v4019, 0
        %v4102 = vsel %vm4028, %v4020, 0
        %v4105 = vsel %vm4028, %v4021, 0
        %v4108 = vsel %vm4028, %v4022, 0
        %v4111 = vsel %vm4028, %v4023, 0
        %v4114 = vsel %vm4028, %v4024, 0
        %v4117 = vsel %vm4028, %v4025, 0
        %v4120 = vsel %vm4028, %v4026, 0
        %v4123 = vsel %vm4028, %v4027, 0
        %vm4125 = vcmask 1043456
        %v4127 = vsel %vm4125, %v3995, 0
        %4129 = vmatprep.subr.mxu0 0.0
        %4130 = vmatpush1.msra.mxu0 %v4127
        %4131 = vmatprep.subr.mxu0 0.0
        %4132 = vmatpush1.msra.mxu0 0.0
        %4133 = vmatprep.subr.mxu0 0.0
        %4134 = vmatpush1.msra.mxu0 0.0
        %4135 = vmatprep.subr.mxu0 0.0
        %4136 = vmatpush1.msra.mxu0 0.0
        %4137 = vmatprep.subr.mxu0 0.0
        %4138 = vmatpush1.msra.mxu0 0.0
        %4139 = vmatprep.subr.mxu0 0.0
        %4140 = vmatpush1.msra.mxu0 0.0
        %4141 = vmatprep.subr.mxu0 0.0
        %4142 = vmatpush1.msra.mxu0 0.0
        %4143 = vmatprep.subr.mxu0 0.0
        %4144 = vmatpush1.msra.mxu0 0.0
        %4145 = vmatprep.subr.mxu0 0.0
        %4146 = vmatpush1.msra.mxu0 0.0
        %4147 = vmatprep.subr.mxu0 0.0
        %4148 = vmatpush1.msra.mxu0 0.0
        %4149 = vmatprep.subr.mxu0 0.0
        %4150 = vmatpush1.msra.mxu0 0.0
        %4151 = vmatprep.subr.mxu0 0.0
        %4152 = vmatpush1.msra.mxu0 0.0
        %4153 = vmatprep.subr.mxu0 0.0
        %4154 = vmatpush1.msra.mxu0 0.0
        %4155 = vmatprep.subr.mxu0 0.0
        %4156 = vmatpush1.msra.mxu0 0.0
        %4157 = vmatprep.subr.mxu0 0.0
        %4158 = vmatpush1.msra.mxu0 0.0
        %4159 = vmatprep.subr.mxu0 0.0
        %4160 = vmatpush1.msra.mxu0 0.0
        %4161 = vmatprep.subr.mxu0 0.0
        %4162 = vmatpush1.msra.mxu0 0.0
        %4163 = vmatprep.subr.mxu0 0.0
        %4164 = vmatpush1.msra.mxu0 0.0
        %4165 = vmatprep.subr.mxu0 0.0
        %4166 = vmatpush1.msra.mxu0 0.0
        %4167 = vmatprep.subr.mxu0 0.0
        %4168 = vmatpush1.msra.mxu0 0.0
        %4169 = vmatprep.subr.mxu0 0.0
        %4170 = vmatpush1.msra.mxu0 0.0
        %4171 = vmatprep.subr.mxu0 0.0
        %4172 = vmatpush1.msra.mxu0 0.0
        %4173 = vmatprep.subr.mxu0 0.0
        %4174 = vmatpush1.msra.mxu0 0.0
        %4175 = vmatprep.subr.mxu0 0.0
        %4176 = vmatpush1.msra.mxu0 0.0
        %4177 = vmatprep.subr.mxu0 0.0
        %4178 = vmatpush1.msra.mxu0 0.0
        %4179 = vmatprep.subr.mxu0 0.0
        %4180 = vmatpush1.msra.mxu0 0.0
        %4181 = vmatprep.subr.mxu0 0.0
        %4182 = vmatpush1.msra.mxu0 0.0
        %4183 = vmatprep.subr.mxu0 0.0
        %4184 = vmatpush1.msra.mxu0 0.0
        %4185 = vmatprep.subr.mxu0 0.0
        %4186 = vmatpush1.msra.mxu0 0.0
        %4187 = vmatprep.subr.mxu0 0.0
        %4188 = vmatpush1.msra.mxu0 0.0
        %4189 = vmatprep.subr.mxu0 0.0
        %4190 = vmatpush1.msra.mxu0 0.0
        %4191 = vmatprep.subr.mxu0 0.0
        %4192 = vmatpush1.msra.mxu0 0.0
        %4193 = vmatprep.mubr.f32.mxu0 0.0
        %4194 = vmatmul.mubr.f32.gmra.mrb[0].mxu0 %v4030
        %v4195 = vpop.f32.mrb[0].mxu0
        %v4196 = vadd.f32 0.0, %v4195
        %v4197 = vpop.f32.mrb[0].mxu0
        %4198 = vmatprep.mubr.f32.mxu0 0.0
        %4199 = vmatmul.mubr.f32.gmra.mrb[0].mxu0 %v4033
        %v4200 = vpop.f32.mrb[0].mxu0
        %v4201 = vadd.f32 0.0, %v4200
        %v4202 = vpop.f32.mrb[0].mxu0
        %4203 = vmatprep.mubr.f32.mxu0 0.0
        %4204 = vmatmul.mubr.f32.gmra.mrb[0].mxu0 %v4036
        %v4205 = vpop.f32.mrb[0].mxu0
        %v4206 = vadd.f32 0.0, %v4205
        %v4207 = vpop.f32.mrb[0].mxu0
        %4208 = vmatprep.mubr.f32.mxu0 0.0
        %4209 = vmatmul.mubr.f32.gmra.mrb[0].mxu0 %v4039
        %v4210 = vpop.f32.mrb[0].mxu0
        %v4211 = vadd.f32 0.0, %v4210
        %v4212 = vpop.f32.mrb[0].mxu0
        %4213 = vmatprep.mubr.f32.mxu0 0.0
        %4214 = vmatmul.mubr.f32.gmra.mrb[0].mxu0 %v4042
        %v4215 = vpop.f32.mrb[0].mxu0
        %v4216 = vadd.f32 0.0, %v4215
        %v4217 = vpop.f32.mrb[0].mxu0
        %4218 = vmatprep.mubr.f32.mxu0 0.0
        %4219 = vmatmul.mubr.f32.gmra.mrb[0].mxu0 %v4045
        %v4220 = vpop.f32.mrb[0].mxu0
        %v4221 = vadd.f32 0.0, %v4220
        %v4222 = vpop.f32.mrb[0].mxu0
        %4223 = vmatprep.mubr.f32.mxu0 0.0
        %4224 = vmatmul.mubr.f32.gmra.mrb[0].mxu0 %v4048
        %v4225 = vpop.f32.mrb[0].mxu0
        %v4226 = vadd.f32 0.0, %v4225
        %v4227 = vpop.f32.mrb[0].mxu0
        %4228 = vmatprep.mubr.f32.mxu0 0.0
        %4229 = vmatmul.mubr.f32.gmra.mrb[0].mxu0 %v4051
        %v4230 = vpop.f32.mrb[0].mxu0
        %v4231 = vadd.f32 0.0, %v4230
        %v4232 = vpop.f32.mrb[0].mxu0
        %4233 = vmatprep.mubr.f32.mxu0 0.0
        %4234 = vmatmul.mubr.f32.gmra.mrb[0].mxu0 %v4054
        %v4235 = vpop.f32.mrb[0].mxu0
        %v4236 = vadd.f32 0.0, %v4235
        %v4237 = vpop.f32.mrb[0].mxu0
        %4238 = vmatprep.mubr.f32.mxu0 0.0
        %4239 = vmatmul.mubr.f32.gmra.mrb[0].mxu0 %v4057
        %v4240 = vpop.f32.mrb[0].mxu0
        %v4241 = vadd.f32 0.0, %v4240
        %v4242 = vpop.f32.mrb[0].mxu0
        %4243 = vmatprep.mubr.f32.mxu0 0.0
        %4244 = vmatmul.mubr.f32.gmra.mrb[0].mxu0 %v4060
        %v4245 = vpop.f32.mrb[0].mxu0
        %v4246 = vadd.f32 0.0, %v4245
        %v4247 = vpop.f32.mrb[0].mxu0
        %4248 = vmatprep.mubr.f32.mxu0 0.0
        %4249 = vmatmul.mubr.f32.gmra.mrb[0].mxu0 %v4063
        %v4250 = vpop.f32.mrb[0].mxu0
        %v4251 = vadd.f32 0.0, %v4250
        %v4252 = vpop.f32.mrb[0].mxu0
        %4253 = vmatprep.mubr.f32.mxu0 0.0
        %4254 = vmatmul.mubr.f32.gmra.mrb[0].mxu0 %v4066
        %v4255 = vpop.f32.mrb[0].mxu0
        %v4256 = vadd.f32 0.0, %v4255
        %v4257 = vpop.f32.mrb[0].mxu0
        %4258 = vmatprep.mubr.f32.mxu0 0.0
        %4259 = vmatmul.mubr.f32.gmra.mrb[0].mxu0 %v4069
        %v4260 = vpop.f32.mrb[0].mxu0
        %v4261 = vadd.f32 0.0, %v4260
        %v4262 = vpop.f32.mrb[0].mxu0
        %4263 = vmatprep.mubr.f32.mxu0 0.0
        %4264 = vmatmul.mubr.f32.gmra.mrb[0].mxu0 %v4072
        %v4265 = vpop.f32.mrb[0].mxu0
        %v4266 = vadd.f32 0.0, %v4265
        %v4267 = vpop.f32.mrb[0].mxu0
        %4268 = vmatprep.mubr.f32.mxu0 0.0
        %4269 = vmatmul.mubr.f32.gmra.mrb[0].mxu0 %v4075
        %v4270 = vpop.f32.mrb[0].mxu0
        %v4271 = vadd.f32 0.0, %v4270
        %v4272 = vpop.f32.mrb[0].mxu0
        %4273 = vmatprep.mubr.f32.mxu0 0.0
        %4274 = vmatmul.mubr.f32.gmra.mrb[0].mxu0 %v4078
        %v4275 = vpop.f32.mrb[0].mxu0
        %v4276 = vadd.f32 0.0, %v4275
        %v4277 = vpop.f32.mrb[0].mxu0
        %4278 = vmatprep.mubr.f32.mxu0 0.0
        %4279 = vmatmul.mubr.f32.gmra.mrb[0].mxu0 %v4081
        %v4280 = vpop.f32.mrb[0].mxu0
        %v4281 = vadd.f32 0.0, %v4280
        %v4282 = vpop.f32.mrb[0].mxu0
        %4283 = vmatprep.mubr.f32.mxu0 0.0
        %4284 = vmatmul.mubr.f32.gmra.mrb[0].mxu0 %v4084
        %v4285 = vpop.f32.mrb[0].mxu0
        %v4286 = vadd.f32 0.0, %v4285
        %v4287 = vpop.f32.mrb[0].mxu0
        %4288 = vmatprep.mubr.f32.mxu0 0.0
        %4289 = vmatmul.mubr.f32.gmra.mrb[0].mxu0 %v4087
        %v4290 = vpop.f32.mrb[0].mxu0
        %v4291 = vadd.f32 0.0, %v4290
        %v4292 = vpop.f32.mrb[0].mxu0
        %4293 = vmatprep.mubr.f32.mxu0 0.0
        %4294 = vmatmul.mubr.f32.gmra.mrb[0].mxu0 %v4090
        %v4295 = vpop.f32.mrb[0].mxu0
        %v4296 = vadd.f32 0.0, %v4295
        %v4297 = vpop.f32.mrb[0].mxu0
        %4298 = vmatprep.mubr.f32.mxu0 0.0
        %4299 = vmatmul.mubr.f32.gmra.mrb[0].mxu0 %v4093
        %v4300 = vpop.f32.mrb[0].mxu0
        %v4301 = vadd.f32 0.0, %v4300
        %v4302 = vpop.f32.mrb[0].mxu0
        %4303 = vmatprep.mubr.f32.mxu0 0.0
        %4304 = vmatmul.mubr.f32.gmra.mrb[0].mxu0 %v4096
        %v4305 = vpop.f32.mrb[0].mxu0
        %v4306 = vadd.f32 0.0, %v4305
        %v4307 = vpop.f32.mrb[0].mxu0
        %4308 = vmatprep.mubr.f32.mxu0 0.0
        %4309 = vmatmul.mubr.f32.gmra.mrb[0].mxu0 %v4099
        %v4310 = vpop.f32.mrb[0].mxu0
        %v4311 = vadd.f32 0.0, %v4310
        %v4312 = vpop.f32.mrb[0].mxu0
        %4313 = vmatprep.mubr.f32.mxu0 0.0
        %4314 = vmatmul.mubr.f32.gmra.mrb[0].mxu0 %v4102
        %v4315 = vpop.f32.mrb[0].mxu0
        %v4316 = vadd.f32 0.0, %v4315
        %v4317 = vpop.f32.mrb[0].mxu0
        %4318 = vmatprep.mubr.f32.mxu0 0.0
        %4319 = vmatmul.mubr.f32.gmra.mrb[0].mxu0 %v4105
        %v4320 = vpop.f32.mrb[0].mxu0
        %v4321 = vadd.f32 0.0, %v4320
        %v4322 = vpop.f32.mrb[0].mxu0
        %4323 = vmatprep.mubr.f32.mxu0 0.0
        %4324 = vmatmul.mubr.f32.gmra.mrb[0].mxu0 %v4108
        %v4325 = vpop.f32.mrb[0].mxu0
        %v4326 = vadd.f32 0.0, %v4325
        %v4327 = vpop.f32.mrb[0].mxu0
        %4328 = vmatprep.mubr.f32.mxu0 0.0
        %4329 = vmatmul.mubr.f32.gmra.mrb[0].mxu0 %v4111
        %v4330 = vpop.f32.mrb[0].mxu0
        %v4331 = vadd.f32 0.0, %v4330
        %v4332 = vpop.f32.mrb[0].mxu0
        %4333 = vmatprep.mubr.f32.mxu0 0.0
        %4334 = vmatmul.mubr.f32.gmra.mrb[0].mxu0 %v4114
        %v4335 = vpop.f32.mrb[0].mxu0
        %v4336 = vadd.f32 0.0, %v4335
        %v4337 = vpop.f32.mrb[0].mxu0
        %4338 = vmatprep.mubr.f32.mxu0 0.0
        %4339 = vmatmul.mubr.f32.gmra.mrb[0].mxu0 %v4117
        %v4340 = vpop.f32.mrb[0].mxu0
        %v4341 = vadd.f32 0.0, %v4340
        %v4342 = vpop.f32.mrb[0].mxu0
        %4343 = vmatprep.mubr.f32.mxu0 0.0
        %4344 = vmatmul.mubr.f32.gmra.mrb[0].mxu0 %v4120
        %v4345 = vpop.f32.mrb[0].mxu0
        %v4346 = vadd.f32 0.0, %v4345
        %v4347 = vpop.f32.mrb[0].mxu0
        %4348 = vmatprep.mubr.f32.mxu0 0.0
        %4349 = vmatmul.mubr.f32.gmra.mrb[0].mxu0 %v4123
        %v4350 = vpop.f32.mrb[0].mxu0
        %v4351 = vadd.f32 0.0, %v4350
        %v4352 = vpop.f32.mrb[0].mxu0
        %4353 = vdwg.mxu0
        %4354 = vst [vmem:[#allocation14] sm:$0xff] 0.0
        %4355 = vst [vmem:[#allocation14 + $0x8] sm:$0xff] 0.0
        %4356 = vst [vmem:[#allocation14 + $0x10] sm:$0x3] 0.0
        %s4357 = scalar_lea.vmem [#allocation14], 408
        %4358 = vst [vmem:[%s4357] sm:$0xff] 0.0
        %4359 = vst [vmem:[%s4357 + $0x8] sm:$0xff] 0.0
        %4360 = vst [vmem:[%s4357 + $0x10] sm:$0x3] 0.0
        %vm4363 = vcmask 1040384
        %v4364 = vrot.slane %v4196, 7
        %v4365 = vrot.slane %v4201, 7
        %v4366 = vsel %vm4363, %v4364, %v4365
        %v4370 = vsel %vm4363, 0.0, %v4364
        %v4371 = vsel %vm4363, %v4365, 0.0
        %s4372 = scalar_lea.vmem [#allocation14], 24
        %4373 = vst [vmem:[%s4372] sm:$0xff] %v4370
        %4374 = vst [vmem:[%s4372 + $0x8] sm:$0xff] %v4366
        %4375 = vst [vmem:[%s4372 + $0x10] sm:$0x3] %v4371
        %v4378 = vrot.slane %v4206, 7
        %v4379 = vrot.slane %v4211, 7
        %v4380 = vsel %vm4363, %v4378, %v4379
        %v4384 = vsel %vm4363, 0.0, %v4378
        %v4385 = vsel %vm4363, %v4379, 0.0
        %s4386 = scalar_lea.vmem [#allocation14], 48
        %4387 = vst [vmem:[%s4386] sm:$0xff] %v4384
        %4388 = vst [vmem:[%s4386 + $0x8] sm:$0xff] %v4380
        %4389 = vst [vmem:[%s4386 + $0x10] sm:$0x3] %v4385
        %v4392 = vrot.slane %v4216, 7
        %v4393 = vrot.slane %v4221, 7
        %v4394 = vsel %vm4363, %v4392, %v4393
        %v4398 = vsel %vm4363, 0.0, %v4392
        %v4399 = vsel %vm4363, %v4393, 0.0
        %s4400 = scalar_lea.vmem [#allocation14], 72
        %4401 = vst [vmem:[%s4400] sm:$0xff] %v4398
        %4402 = vst [vmem:[%s4400 + $0x8] sm:$0xff] %v4394
        %4403 = vst [vmem:[%s4400 + $0x10] sm:$0x3] %v4399
        %v4406 = vrot.slane %v4226, 7
        %v4407 = vrot.slane %v4231, 7
        %v4408 = vsel %vm4363, %v4406, %v4407
        %v4412 = vsel %vm4363, 0.0, %v4406
        %v4413 = vsel %vm4363, %v4407, 0.0
        %s4414 = scalar_lea.vmem [#allocation14], 96
        %4415 = vst [vmem:[%s4414] sm:$0xff] %v4412
        %4416 = vst [vmem:[%s4414 + $0x8] sm:$0xff] %v4408
        %4417 = vst [vmem:[%s4414 + $0x10] sm:$0x3] %v4413
        %v4420 = vrot.slane %v4236, 7
        %v4421 = vrot.slane %v4241, 7
        %v4422 = vsel %vm4363, %v4420, %v4421
        %v4426 = vsel %vm4363, 0.0, %v4420
        %v4427 = vsel %vm4363, %v4421, 0.0
        %s4428 = scalar_lea.vmem [#allocation14], 120
        %4429 = vst [vmem:[%s4428] sm:$0xff] %v4426
        %4430 = vst [vmem:[%s4428 + $0x8] sm:$0xff] %v4422
        %4431 = vst [vmem:[%s4428 + $0x10] sm:$0x3] %v4427
        %v4434 = vrot.slane %v4246, 7
        %v4435 = vrot.slane %v4251, 7
        %v4436 = vsel %vm4363, %v4434, %v4435
        %v4440 = vsel %vm4363, 0.0, %v4434
        %v4441 = vsel %vm4363, %v4435, 0.0
        %s4442 = scalar_lea.vmem [#allocation14], 144
        %4443 = vst [vmem:[%s4442] sm:$0xff] %v4440
        %4444 = vst [vmem:[%s4442 + $0x8] sm:$0xff] %v4436
        %4445 = vst [vmem:[%s4442 + $0x10] sm:$0x3] %v4441
        %v4448 = vrot.slane %v4256, 7
        %v4449 = vrot.slane %v4261, 7
        %v4450 = vsel %vm4363, %v4448, %v4449
        %v4454 = vsel %vm4363, 0.0, %v4448
        %v4455 = vsel %vm4363, %v4449, 0.0
        %s4456 = scalar_lea.vmem [#allocation14], 168
        %4457 = vst [vmem:[%s4456] sm:$0xff] %v4454
        %4458 = vst [vmem:[%s4456 + $0x8] sm:$0xff] %v4450
        %4459 = vst [vmem:[%s4456 + $0x10] sm:$0x3] %v4455
        %v4462 = vrot.slane %v4266, 7
        %v4463 = vrot.slane %v4271, 7
        %v4464 = vsel %vm4363, %v4462, %v4463
        %v4468 = vsel %vm4363, 0.0, %v4462
        %v4469 = vsel %vm4363, %v4463, 0.0
        %s4470 = scalar_lea.vmem [#allocation14], 192
        %4471 = vst [vmem:[%s4470] sm:$0xff] %v4468
        %4472 = vst [vmem:[%s4470 + $0x8] sm:$0xff] %v4464
        %4473 = vst [vmem:[%s4470 + $0x10] sm:$0x3] %v4469
        %v4476 = vrot.slane %v4276, 7
        %v4477 = vrot.slane %v4281, 7
        %v4478 = vsel %vm4363, %v4476, %v4477
        %v4482 = vsel %vm4363, 0.0, %v4476
        %v4483 = vsel %vm4363, %v4477, 0.0
        %s4484 = scalar_lea.vmem [#allocation14], 216
        %4485 = vst [vmem:[%s4484] sm:$0xff] %v4482
        %4486 = vst [vmem:[%s4484 + $0x8] sm:$0xff] %v4478
        %4487 = vst [vmem:[%s4484 + $0x10] sm:$0x3] %v4483
        %v4490 = vrot.slane %v4286, 7
        %v4491 = vrot.slane %v4291, 7
        %v4492 = vsel %vm4363, %v4490, %v4491
        %v4496 = vsel %vm4363, 0.0, %v4490
        %v4497 = vsel %vm4363, %v4491, 0.0
        %s4498 = scalar_lea.vmem [#allocation14], 240
        %4499 = vst [vmem:[%s4498] sm:$0xff] %v4496
        %4500 = vst [vmem:[%s4498 + $0x8] sm:$0xff] %v4492
        %4501 = vst [vmem:[%s4498 + $0x10] sm:$0x3] %v4497
        %v4504 = vrot.slane %v4296, 7
        %v4505 = vrot.slane %v4301, 7
        %v4506 = vsel %vm4363, %v4504, %v4505
        %v4510 = vsel %vm4363, 0.0, %v4504
        %v4511 = vsel %vm4363, %v4505, 0.0
        %s4512 = scalar_lea.vmem [#allocation14], 264
        %4513 = vst [vmem:[%s4512] sm:$0xff] %v4510
        %4514 = vst [vmem:[%s4512 + $0x8] sm:$0xff] %v4506
        %4515 = vst [vmem:[%s4512 + $0x10] sm:$0x3] %v4511
        %v4518 = vrot.slane %v4306, 7
        %v4519 = vrot.slane %v4311, 7
        %v4520 = vsel %vm4363, %v4518, %v4519
        %v4524 = vsel %vm4363, 0.0, %v4518
        %v4525 = vsel %vm4363, %v4519, 0.0
        %s4526 = scalar_lea.vmem [#allocation14], 288
        %4527 = vst [vmem:[%s4526] sm:$0xff] %v4524
        %4528 = vst [vmem:[%s4526 + $0x8] sm:$0xff] %v4520
        %4529 = vst [vmem:[%s4526 + $0x10] sm:$0x3] %v4525
        %v4532 = vrot.slane %v4316, 7
        %v4533 = vrot.slane %v4321, 7
        %v4534 = vsel %vm4363, %v4532, %v4533
        %v4538 = vsel %vm4363, 0.0, %v4532
        %v4539 = vsel %vm4363, %v4533, 0.0
        %s4540 = scalar_lea.vmem [#allocation14], 312
        %4541 = vst [vmem:[%s4540] sm:$0xff] %v4538
        %4542 = vst [vmem:[%s4540 + $0x8] sm:$0xff] %v4534
        %4543 = vst [vmem:[%s4540 + $0x10] sm:$0x3] %v4539
        %v4546 = vrot.slane %v4326, 7
        %v4547 = vrot.slane %v4331, 7
        %v4548 = vsel %vm4363, %v4546, %v4547
        %v4552 = vsel %vm4363, 0.0, %v4546
        %v4553 = vsel %vm4363, %v4547, 0.0
        %s4554 = scalar_lea.vmem [#allocation14], 336
        %4555 = vst [vmem:[%s4554] sm:$0xff] %v4552
        %4556 = vst [vmem:[%s4554 + $0x8] sm:$0xff] %v4548
        %4557 = vst [vmem:[%s4554 + $0x10] sm:$0x3] %v4553
        %v4560 = vrot.slane %v4336, 7
        %v4561 = vrot.slane %v4341, 7
        %v4562 = vsel %vm4363, %v4560, %v4561
        %v4566 = vsel %vm4363, 0.0, %v4560
        %v4567 = vsel %vm4363, %v4561, 0.0
        %s4568 = scalar_lea.vmem [#allocation14], 360
        %4569 = vst [vmem:[%s4568] sm:$0xff] %v4566
        %4570 = vst [vmem:[%s4568 + $0x8] sm:$0xff] %v4562
        %4571 = vst [vmem:[%s4568 + $0x10] sm:$0x3] %v4567
        %v4574 = vrot.slane %v4346, 7
        %v4575 = vrot.slane %v4351, 7
        %v4576 = vsel %vm4363, %v4574, %v4575
        %v4580 = vsel %vm4363, 0.0, %v4574
        %v4581 = vsel %vm4363, %v4575, 0.0
        %s4582 = scalar_lea.vmem [#allocation14], 384
        %4583 = vst [vmem:[%s4582] sm:$0xff] %v4580
        %4584 = vst [vmem:[%s4582 + $0x8] sm:$0xff] %v4576
        %4585 = vst [vmem:[%s4582 + $0x10] sm:$0x3] %v4581
        %v4586 = vld [vmem:[%s53] sm:$0x1]
        %v4588 = vlaneseq
        %v4589 = vshrl.u32 %v4588, 7
        %v4590 = vsub.s32 0, %v4589
        %v4591 = vrot.slane %v4586, %v4590
        %v4593 = vld [vmem:[#allocation15] sm:$0x1]
        %v4595 = vlaneseq
        %v4596 = vshrl.u32 %v4595, 7
        %v4597 = vsub.s32 0, %v4596
        %v4598 = vrot.slane %v4593, %v4597
        loop: start=0, step=1, limit=16
        $region225: #{forward.1} parent=135 // loop_pre_header
          _
        $region226: #{forward.1} parent=135 // loop_header
          %s4601 = sphi 0, %s4605
          %p4602 = scmp.ge.s32.totalorder %s4601, 16
        $region227: #{forward.1} parent=135 // loop_header_branch
          %4604 = sbr.rel (%p4602) target = $region231
        $region228: #{forward.1} parent=135 // loop_body
          %s4606 = smul.u32 %s4601, 24
          %s4607 = scalar_lea.vmem [#allocation14], %s4606
          %v4608 = vld [vmem:[%s4607] sm:$0xff]
          %v4609 = vld [vmem:[%s4607 + $0x8] sm:$0xff]
          %v4610 = vld [vmem:[%s4607 + $0x1] sm:$0xff]
          %v4611 = vld [vmem:[%s4607 + $0x9] sm:$0xff]
          %v4612 = vld [vmem:[%s4607 + $0x2] sm:$0xff]
          %v4613 = vld [vmem:[%s4607 + $0xa] sm:$0xff]
          %s4614 = sadd.s32 %s4601, 1
          %s4615 = smul.u32 %s4614, 24
          %s4616 = scalar_lea.vmem [#allocation14], %s4615
          %v4617 = vld [vmem:[%s4616] sm:$0xff]
          %v4618 = vld [vmem:[%s4616 + $0x8] sm:$0xff]
          %v4619 = vld [vmem:[%s4616 + $0x1] sm:$0xff]
          %v4620 = vld [vmem:[%s4616 + $0x9] sm:$0xff]
          %v4621 = vld [vmem:[%s4616 + $0x2] sm:$0xff]
          %v4622 = vld [vmem:[%s4616 + $0xa] sm:$0xff]
          %s4623 = sadd.s32 %s4601, 2
          %s4624 = smul.u32 %s4623, 24
          %s4625 = scalar_lea.vmem [#allocation14], %s4624
          %v4626 = vld [vmem:[%s4625] sm:$0xff]
          %v4627 = vld [vmem:[%s4625 + $0x8] sm:$0xff]
          %v4628 = vld [vmem:[%s4625 + $0x1] sm:$0xff]
          %v4629 = vld [vmem:[%s4625 + $0x9] sm:$0xff]
          %v4630 = vld [vmem:[%s4625 + $0x2] sm:$0xff]
          %v4631 = vld [vmem:[%s4625 + $0xa] sm:$0xff]
          %v4632 = vld [vmem:[%s51] sm:$0xff]
          %v4633 = vld [vmem:[%s51 + $0x8] sm:$0xff]
          %v4634 = vld [vmem:[%s51 + $0x10] sm:$0xff]
          %v4635 = vld [vmem:[%s51 + $0x18] sm:$0xff]
          %v4636 = vld [vmem:[%s51 + $0x20] sm:$0xff]
          %v4637 = vld [vmem:[%s51 + $0x28] sm:$0xff]
          %v4638 = vld [vmem:[%s51 + $0x30] sm:$0xff]
          %v4639 = vld [vmem:[%s51 + $0x38] sm:$0xff]
          %v4640 = vld [vmem:[%s51 + $0x40] sm:$0xff]
          %v4641 = vld [vmem:[%s51 + $0x48] sm:$0xff]
          %v4642 = vld [vmem:[%s51 + $0x50] sm:$0xff]
          %v4643 = vld [vmem:[%s51 + $0x58] sm:$0xff]
          %v4644 = vld [vmem:[%s51 + $0x60] sm:$0xff]
          %v4645 = vld [vmem:[%s51 + $0x68] sm:$0xff]
          %v4646 = vld [vmem:[%s51 + $0x70] sm:$0xff]
          %v4647 = vld [vmem:[%s51 + $0x78] sm:$0xff]
          %v4648 = vld [vmem:[%s51 + $0x80] sm:$0xff]
          %v4649 = vld [vmem:[%s51 + $0x88] sm:$0xff]
          %v4650 = vld [vmem:[%s51 + $0x90] sm:$0xff]
          %v4651 = vld [vmem:[%s51 + $0x98] sm:$0xff]
          %v4652 = vld [vmem:[%s51 + $0xa0] sm:$0xff]
          %v4653 = vld [vmem:[%s51 + $0xa8] sm:$0xff]
          %v4654 = vld [vmem:[%s51 + $0xb0] sm:$0xff]
          %v4655 = vld [vmem:[%s51 + $0xb8] sm:$0xff]
          %v4656 = vld [vmem:[%s51 + $0xc0] sm:$0xff]
          %v4657 = vld [vmem:[%s51 + $0xc8] sm:$0xff]
          %v4658 = vld [vmem:[%s51 + $0xd0] sm:$0xff]
          %v4659 = vld [vmem:[%s51 + $0xd8] sm:$0xff]
          %v4660 = vld [vmem:[%s51 + $0xe0] sm:$0xff]
          %v4661 = vld [vmem:[%s51 + $0xe8] sm:$0xff]
          %v4662 = vld [vmem:[%s51 + $0xf0] sm:$0xff]
          %v4663 = vld [vmem:[%s51 + $0xf8] sm:$0xff]
          %v4664 = vld [vmem:[%s51 + $0x100] sm:$0xff]
          %v4665 = vld [vmem:[%s51 + $0x108] sm:$0xff]
          %v4666 = vld [vmem:[%s51 + $0x110] sm:$0xff]
          %v4667 = vld [vmem:[%s51 + $0x118] sm:$0xff]
          %v4668 = vld [vmem:[%s51 + $0x120] sm:$0xff]
          %v4669 = vld [vmem:[%s51 + $0x128] sm:$0xff]
          %v4670 = vld [vmem:[%s51 + $0x130] sm:$0xff]
          %v4671 = vld [vmem:[%s51 + $0x138] sm:$0xff]
          %v4672 = vld [vmem:[%s51 + $0x140] sm:$0xff]
          %v4673 = vld [vmem:[%s51 + $0x148] sm:$0xff]
          %v4674 = vld [vmem:[%s51 + $0x150] sm:$0xff]
          %v4675 = vld [vmem:[%s51 + $0x158] sm:$0xff]
          %v4676 = vld [vmem:[%s51 + $0x160] sm:$0xff]
          %v4677 = vld [vmem:[%s51 + $0x168] sm:$0xff]
          %v4678 = vld [vmem:[%s51 + $0x170] sm:$0xff]
          %v4679 = vld [vmem:[%s51 + $0x178] sm:$0xff]
          %v4680 = vld [vmem:[%s51 + $0x180] sm:$0xff]
          %v4681 = vld [vmem:[%s51 + $0x188] sm:$0xff]
          %v4682 = vld [vmem:[%s51 + $0x190] sm:$0xff]
          %v4683 = vld [vmem:[%s51 + $0x198] sm:$0xff]
          %v4684 = vld [vmem:[%s51 + $0x1a0] sm:$0xff]
          %v4685 = vld [vmem:[%s51 + $0x1a8] sm:$0xff]
          %v4686 = vld [vmem:[%s51 + $0x1b0] sm:$0xff]
          %v4687 = vld [vmem:[%s51 + $0x1b8] sm:$0xff]
          %v4688 = vld [vmem:[%s51 + $0x1c0] sm:$0xff]
          %v4689 = vld [vmem:[%s51 + $0x1c8] sm:$0xff]
          %v4690 = vld [vmem:[%s51 + $0x1d0] sm:$0xff]
          %v4691 = vld [vmem:[%s51 + $0x1d8] sm:$0xff]
          %v4692 = vld [vmem:[%s51 + $0x1e0] sm:$0xff]
          %v4693 = vld [vmem:[%s51 + $0x1e8] sm:$0xff]
          %v4694 = vld [vmem:[%s51 + $0x1f0] sm:$0xff]
          %v4695 = vld [vmem:[%s51 + $0x1f8] sm:$0xff]
          %v4696 = vld [vmem:[%s51 + $0x200] sm:$0xff]
          %v4697 = vld [vmem:[%s51 + $0x208] sm:$0xff]
          %v4698 = vld [vmem:[%s51 + $0x210] sm:$0xff]
          %v4699 = vld [vmem:[%s51 + $0x218] sm:$0xff]
          %v4700 = vld [vmem:[%s51 + $0x220] sm:$0xff]
          %v4701 = vld [vmem:[%s51 + $0x228] sm:$0xff]
          %v4702 = vld [vmem:[%s51 + $0x230] sm:$0xff]
          %v4703 = vld [vmem:[%s51 + $0x238] sm:$0xff]
          %v4704 = vld [vmem:[%s51 + $0x240] sm:$0xff]
          %v4705 = vld [vmem:[%s51 + $0x248] sm:$0xff]
          %v4706 = vld [vmem:[%s51 + $0x250] sm:$0xff]
          %v4707 = vld [vmem:[%s51 + $0x258] sm:$0xff]
          %v4708 = vld [vmem:[%s51 + $0x260] sm:$0xff]
          %v4709 = vld [vmem:[%s51 + $0x268] sm:$0xff]
          %v4710 = vld [vmem:[%s51 + $0x270] sm:$0xff]
          %v4711 = vld [vmem:[%s51 + $0x278] sm:$0xff]
          %v4712 = vld [vmem:[%s51 + $0x280] sm:$0xff]
          %v4713 = vld [vmem:[%s51 + $0x288] sm:$0xff]
          %v4714 = vld [vmem:[%s51 + $0x290] sm:$0xff]
          %v4715 = vld [vmem:[%s51 + $0x298] sm:$0xff]
          %v4716 = vld [vmem:[%s51 + $0x2a0] sm:$0xff]
          %v4717 = vld [vmem:[%s51 + $0x2a8] sm:$0xff]
          %v4718 = vld [vmem:[%s51 + $0x2b0] sm:$0xff]
          %v4719 = vld [vmem:[%s51 + $0x2b8] sm:$0xff]
          %v4720 = vld [vmem:[%s51 + $0x2c0] sm:$0xff]
          %v4721 = vld [vmem:[%s51 + $0x2c8] sm:$0xff]
          %v4722 = vld [vmem:[%s51 + $0x2d0] sm:$0xff]
          %v4723 = vld [vmem:[%s51 + $0x2d8] sm:$0xff]
          %v4724 = vld [vmem:[%s51 + $0x2e0] sm:$0xff]
          %v4725 = vld [vmem:[%s51 + $0x2e8] sm:$0xff]
          %v4726 = vld [vmem:[%s51 + $0x2f0] sm:$0xff]
          %v4727 = vld [vmem:[%s51 + $0x2f8] sm:$0xff]
          %v4728 = vld [vmem:[%s51 + $0x300] sm:$0xff]
          %v4729 = vld [vmem:[%s51 + $0x308] sm:$0xff]
          %v4730 = vld [vmem:[%s51 + $0x310] sm:$0xff]
          %v4731 = vld [vmem:[%s51 + $0x318] sm:$0xff]
          %v4732 = vld [vmem:[%s51 + $0x320] sm:$0xff]
          %v4733 = vld [vmem:[%s51 + $0x328] sm:$0xff]
          %v4734 = vld [vmem:[%s51 + $0x330] sm:$0xff]
          %v4735 = vld [vmem:[%s51 + $0x338] sm:$0xff]
          %v4736 = vld [vmem:[%s51 + $0x340] sm:$0xff]
          %v4737 = vld [vmem:[%s51 + $0x348] sm:$0xff]
          %v4738 = vld [vmem:[%s51 + $0x350] sm:$0xff]
          %v4739 = vld [vmem:[%s51 + $0x358] sm:$0xff]
          %v4740 = vld [vmem:[%s51 + $0x360] sm:$0xff]
          %v4741 = vld [vmem:[%s51 + $0x368] sm:$0xff]
          %v4742 = vld [vmem:[%s51 + $0x370] sm:$0xff]
          %v4743 = vld [vmem:[%s51 + $0x378] sm:$0xff]
          %v4744 = vld [vmem:[%s51 + $0x380] sm:$0xff]
          %v4745 = vld [vmem:[%s51 + $0x388] sm:$0xff]
          %v4746 = vld [vmem:[%s51 + $0x390] sm:$0xff]
          %v4747 = vld [vmem:[%s51 + $0x398] sm:$0xff]
          %v4748 = vld [vmem:[%s51 + $0x3a0] sm:$0xff]
          %v4749 = vld [vmem:[%s51 + $0x3a8] sm:$0xff]
          %v4750 = vld [vmem:[%s51 + $0x3b0] sm:$0xff]
          %v4751 = vld [vmem:[%s51 + $0x3b8] sm:$0xff]
          %v4752 = vld [vmem:[%s51 + $0x3c0] sm:$0xff]
          %v4753 = vld [vmem:[%s51 + $0x3c8] sm:$0xff]
          %v4754 = vld [vmem:[%s51 + $0x3d0] sm:$0xff]
          %v4755 = vld [vmem:[%s51 + $0x3d8] sm:$0xff]
          %v4756 = vld [vmem:[%s51 + $0x3e0] sm:$0xff]
          %v4757 = vld [vmem:[%s51 + $0x3e8] sm:$0xff]
          %v4758 = vld [vmem:[%s51 + $0x3f0] sm:$0xff]
          %v4759 = vld [vmem:[%s51 + $0x3f8] sm:$0xff]
          %v4760 = vld [vmem:[%s51 + $0x400] sm:$0xff]
          %v4761 = vld [vmem:[%s51 + $0x408] sm:$0xff]
          %v4762 = vld [vmem:[%s51 + $0x410] sm:$0xff]
          %v4763 = vld [vmem:[%s51 + $0x418] sm:$0xff]
          %v4764 = vld [vmem:[%s51 + $0x420] sm:$0xff]
          %v4765 = vld [vmem:[%s51 + $0x428] sm:$0xff]
          %v4766 = vld [vmem:[%s51 + $0x430] sm:$0xff]
          %v4767 = vld [vmem:[%s51 + $0x438] sm:$0xff]
          %v4768 = vld [vmem:[%s51 + $0x440] sm:$0xff]
          %v4769 = vld [vmem:[%s51 + $0x448] sm:$0xff]
          %v4770 = vld [vmem:[%s51 + $0x450] sm:$0xff]
          %v4771 = vld [vmem:[%s51 + $0x458] sm:$0xff]
          %v4772 = vld [vmem:[%s51 + $0x460] sm:$0xff]
          %v4773 = vld [vmem:[%s51 + $0x468] sm:$0xff]
          %v4774 = vld [vmem:[%s51 + $0x470] sm:$0xff]
          %v4775 = vld [vmem:[%s51 + $0x478] sm:$0xff]
          %4776 = vmatprep.subr.mxu0 0.0
          %4777 = vmatpush1.msra.mxu0 %v4632
          %4778 = vmatprep.subr.mxu0 0.0
          %4779 = vmatpush1.msra.mxu0 %v4633
          %4780 = vmatprep.subr.mxu0 0.0
          %4781 = vmatpush1.msra.mxu0 %v4634
          %4782 = vmatprep.subr.mxu0 0.0
          %4783 = vmatpush1.msra.mxu0 %v4635
          %4784 = vmatprep.subr.mxu0 0.0
          %4785 = vmatpush1.msra.mxu0 %v4636
          %4786 = vmatprep.subr.mxu0 0.0
          %4787 = vmatpush1.msra.mxu0 %v4637
          %4788 = vmatprep.subr.mxu0 0.0
          %4789 = vmatpush1.msra.mxu0 %v4638
          %4790 = vmatprep.subr.mxu0 0.0
          %4791 = vmatpush1.msra.mxu0 %v4639
          %4792 = vmatprep.subr.mxu0 0.0
          %4793 = vmatpush1.msra.mxu0 %v4640
          %4794 = vmatprep.subr.mxu0 0.0
          %4795 = vmatpush1.msra.mxu0 %v4641
          %4796 = vmatprep.subr.mxu0 0.0
          %4797 = vmatpush1.msra.mxu0 %v4642
          %4798 = vmatprep.subr.mxu0 0.0
          %4799 = vmatpush1.msra.mxu0 %v4643
          %4800 = vmatprep.subr.mxu0 0.0
          %4801 = vmatpush1.msra.mxu0 %v4644
          %4802 = vmatprep.subr.mxu0 0.0
          %4803 = vmatpush1.msra.mxu0 %v4645
          %4804 = vmatprep.subr.mxu0 0.0
          %4805 = vmatpush1.msra.mxu0 %v4646
          %4806 = vmatprep.subr.mxu0 0.0
          %4807 = vmatpush1.msra.mxu0 %v4647
          %4808 = vmatprep.subr.mxu0 0.0
          %4809 = vmatpush1.msra.mxu0 %v4648
          %4810 = vmatprep.subr.mxu0 0.0
          %4811 = vmatpush1.msra.mxu0 %v4649
          %4812 = vmatprep.subr.mxu0 0.0
          %4813 = vmatpush1.msra.mxu0 %v4650
          %4814 = vmatprep.subr.mxu0 0.0
          %4815 = vmatpush1.msra.mxu0 %v4651
          %4816 = vmatprep.subr.mxu0 0.0
          %4817 = vmatpush1.msra.mxu0 %v4652
          %4818 = vmatprep.subr.mxu0 0.0
          %4819 = vmatpush1.msra.mxu0 %v4653
          %4820 = vmatprep.subr.mxu0 0.0
          %4821 = vmatpush1.msra.mxu0 %v4654
          %4822 = vmatprep.subr.mxu0 0.0
          %4823 = vmatpush1.msra.mxu0 %v4655
          %4824 = vmatprep.subr.mxu0 0.0
          %4825 = vmatpush1.msra.mxu0 %v4656
          %4826 = vmatprep.subr.mxu0 0.0
          %4827 = vmatpush1.msra.mxu0 %v4657
          %4828 = vmatprep.subr.mxu0 0.0
          %4829 = vmatpush1.msra.mxu0 %v4658
          %4830 = vmatprep.subr.mxu0 0.0
          %4831 = vmatpush1.msra.mxu0 %v4659
          %4832 = vmatprep.subr.mxu0 0.0
          %4833 = vmatpush1.msra.mxu0 %v4660
          %4834 = vmatprep.subr.mxu0 0.0
          %4835 = vmatpush1.msra.mxu0 %v4661
          %4836 = vmatprep.subr.mxu0 0.0
          %4837 = vmatpush1.msra.mxu0 %v4662
          %4838 = vmatprep.subr.mxu0 0.0
          %4839 = vmatpush1.msra.mxu0 %v4663
          %4840 = vmatprep.mubr.f32.mxu0 %v4610
          %4841 = vmatmul.mubr.f32.gmra.mrb[0].mxu0 %v4608
          %v4842 = vpop.f32.mrb[0].mxu0
          %v4843 = vadd.f32 0.0, %v4842
          %v4844 = vpop.f32.mrb[0].mxu0
          %4845 = vmatprep.mubr.f32.mxu0 %v4611
          %4846 = vmatmul.mubr.f32.gmra.mrb[0].mxu0 %v4609
          %v4847 = vpop.f32.mrb[0].mxu0
          %v4848 = vadd.f32 0.0, %v4847
          %v4849 = vpop.f32.mrb[0].mxu0
          %4850 = vdwg.mxu0
          %4851 = vmatprep.subr.mxu0 0.0
          %4852 = vmatpush1.msra.mxu0 %v4664
          %4853 = vmatprep.subr.mxu0 0.0
          %4854 = vmatpush1.msra.mxu0 %v4665
          %4855 = vmatprep.subr.mxu0 0.0
          %4856 = vmatpush1.msra.mxu0 %v4666
          %4857 = vmatprep.subr.mxu0 0.0
          %4858 = vmatpush1.msra.mxu0 %v4667
          %4859 = vmatprep.subr.mxu0 0.0
          %4860 = vmatpush1.msra.mxu0 %v4668
          %4861 = vmatprep.subr.mxu0 0.0
          %4862 = vmatpush1.msra.mxu0 %v4669
          %4863 = vmatprep.subr.mxu0 0.0
          %4864 = vmatpush1.msra.mxu0 %v4670
          %4865 = vmatprep.subr.mxu0 0.0
          %4866 = vmatpush1.msra.mxu0 %v4671
          %4867 = vmatprep.subr.mxu0 0.0
          %4868 = vmatpush1.msra.mxu0 %v4672
          %4869 = vmatprep.subr.mxu0 0.0
          %4870 = vmatpush1.msra.mxu0 %v4673
          %4871 = vmatprep.subr.mxu0 0.0
          %4872 = vmatpush1.msra.mxu0 %v4674
          %4873 = vmatprep.subr.mxu0 0.0
          %4874 = vmatpush1.msra.mxu0 %v4675
          %4875 = vmatprep.subr.mxu0 0.0
          %4876 = vmatpush1.msra.mxu0 %v4676
          %4877 = vmatprep.subr.mxu0 0.0
          %4878 = vmatpush1.msra.mxu0 %v4677
          %4879 = vmatprep.subr.mxu0 0.0
          %4880 = vmatpush1.msra.mxu0 %v4678
          %4881 = vmatprep.subr.mxu0 0.0
          %4882 = vmatpush1.msra.mxu0 %v4679
          %4883 = vmatprep.subr.mxu0 0.0
          %4884 = vmatpush1.msra.mxu0 %v4680
          %4885 = vmatprep.subr.mxu0 0.0
          %4886 = vmatpush1.msra.mxu0 %v4681
          %4887 = vmatprep.subr.mxu0 0.0
          %4888 = vmatpush1.msra.mxu0 %v4682
          %4889 = vmatprep.subr.mxu0 0.0
          %4890 = vmatpush1.msra.mxu0 %v4683
          %4891 = vmatprep.subr.mxu0 0.0
          %4892 = vmatpush1.msra.mxu0 %v4684
          %4893 = vmatprep.subr.mxu0 0.0
          %4894 = vmatpush1.msra.mxu0 %v4685
          %4895 = vmatprep.subr.mxu0 0.0
          %4896 = vmatpush1.msra.mxu0 %v4686
          %4897 = vmatprep.subr.mxu0 0.0
          %4898 = vmatpush1.msra.mxu0 %v4687
          %4899 = vmatprep.subr.mxu0 0.0
          %4900 = vmatpush1.msra.mxu0 %v4688
          %4901 = vmatprep.subr.mxu0 0.0
          %4902 = vmatpush1.msra.mxu0 %v4689
          %4903 = vmatprep.subr.mxu0 0.0
          %4904 = vmatpush1.msra.mxu0 %v4690
          %4905 = vmatprep.subr.mxu0 0.0
          %4906 = vmatpush1.msra.mxu0 %v4691
          %4907 = vmatprep.subr.mxu0 0.0
          %4908 = vmatpush1.msra.mxu0 %v4692
          %4909 = vmatprep.subr.mxu0 0.0
          %4910 = vmatpush1.msra.mxu0 %v4693
          %4911 = vmatprep.subr.mxu0 0.0
          %4912 = vmatpush1.msra.mxu0 %v4694
          %4913 = vmatprep.subr.mxu0 0.0
          %4914 = vmatpush1.msra.mxu0 %v4695
          %4915 = vmatprep.mubr.f32.mxu0 %v4617
          %4916 = vmatmul.mubr.f32.gmra.mrb[0].mxu0 %v4612
          %v4917 = vpop.f32.mrb[0].mxu0
          %v4918 = vadd.f32 %v4843, %v4917
          %v4919 = vpop.f32.mrb[0].mxu0
          %4920 = vmatprep.mubr.f32.mxu0 %v4618
          %4921 = vmatmul.mubr.f32.gmra.mrb[0].mxu0 %v4613
          %v4922 = vpop.f32.mrb[0].mxu0
          %v4923 = vadd.f32 %v4848, %v4922
          %v4924 = vpop.f32.mrb[0].mxu0
          %4925 = vdwg.mxu0
          %4926 = vmatprep.subr.mxu0 0.0
          %4927 = vmatpush1.msra.mxu0 %v4696
          %4928 = vmatprep.subr.mxu0 0.0
          %4929 = vmatpush1.msra.mxu0 %v4697
          %4930 = vmatprep.subr.mxu0 0.0
          %4931 = vmatpush1.msra.mxu0 %v4698
          %4932 = vmatprep.subr.mxu0 0.0
          %4933 = vmatpush1.msra.mxu0 %v4699
          %4934 = vmatprep.subr.mxu0 0.0
          %4935 = vmatpush1.msra.mxu0 %v4700
          %4936 = vmatprep.subr.mxu0 0.0
          %4937 = vmatpush1.msra.mxu0 %v4701
          %4938 = vmatprep.subr.mxu0 0.0
          %4939 = vmatpush1.msra.mxu0 %v4702
          %4940 = vmatprep.subr.mxu0 0.0
          %4941 = vmatpush1.msra.mxu0 %v4703
          %4942 = vmatprep.subr.mxu0 0.0
          %4943 = vmatpush1.msra.mxu0 %v4704
          %4944 = vmatprep.subr.mxu0 0.0
          %4945 = vmatpush1.msra.mxu0 %v4705
          %4946 = vmatprep.subr.mxu0 0.0
          %4947 = vmatpush1.msra.mxu0 %v4706
          %4948 = vmatprep.subr.mxu0 0.0
          %4949 = vmatpush1.msra.mxu0 %v4707
          %4950 = vmatprep.subr.mxu0 0.0
          %4951 = vmatpush1.msra.mxu0 %v4708
          %4952 = vmatprep.subr.mxu0 0.0
          %4953 = vmatpush1.msra.mxu0 %v4709
          %4954 = vmatprep.subr.mxu0 0.0
          %4955 = vmatpush1.msra.mxu0 %v4710
          %4956 = vmatprep.subr.mxu0 0.0
          %4957 = vmatpush1.msra.mxu0 %v4711
          %4958 = vmatprep.subr.mxu0 0.0
          %4959 = vmatpush1.msra.mxu0 %v4712
          %4960 = vmatprep.subr.mxu0 0.0
          %4961 = vmatpush1.msra.mxu0 %v4713
          %4962 = vmatprep.subr.mxu0 0.0
          %4963 = vmatpush1.msra.mxu0 %v4714
          %4964 = vmatprep.subr.mxu0 0.0
          %4965 = vmatpush1.msra.mxu0 %v4715
          %4966 = vmatprep.subr.mxu0 0.0
          %4967 = vmatpush1.msra.mxu0 %v4716
          %4968 = vmatprep.subr.mxu0 0.0
          %4969 = vmatpush1.msra.mxu0 %v4717
          %4970 = vmatprep.subr.mxu0 0.0
          %4971 = vmatpush1.msra.mxu0 %v4718
          %4972 = vmatprep.subr.mxu0 0.0
          %4973 = vmatpush1.msra.mxu0 %v4719
          %4974 = vmatprep.subr.mxu0 0.0
          %4975 = vmatpush1.msra.mxu0 %v4720
          %4976 = vmatprep.subr.mxu0 0.0
          %4977 = vmatpush1.msra.mxu0 %v4721
          %4978 = vmatprep.subr.mxu0 0.0
          %4979 = vmatpush1.msra.mxu0 %v4722
          %4980 = vmatprep.subr.mxu0 0.0
          %4981 = vmatpush1.msra.mxu0 %v4723
          %4982 = vmatprep.subr.mxu0 0.0
          %4983 = vmatpush1.msra.mxu0 %v4724
          %4984 = vmatprep.subr.mxu0 0.0
          %4985 = vmatpush1.msra.mxu0 %v4725
          %4986 = vmatprep.subr.mxu0 0.0
          %4987 = vmatpush1.msra.mxu0 %v4726
          %4988 = vmatprep.subr.mxu0 0.0
          %4989 = vmatpush1.msra.mxu0 %v4727
          %4990 = vmatprep.mubr.f32.mxu0 %v4621
          %4991 = vmatmul.mubr.f32.gmra.mrb[0].mxu0 %v4619
          %v4992 = vpop.f32.mrb[0].mxu0
          %v4993 = vadd.f32 %v4918, %v4992
          %v4994 = vpop.f32.mrb[0].mxu0
          %4995 = vmatprep.mubr.f32.mxu0 %v4622
          %4996 = vmatmul.mubr.f32.gmra.mrb[0].mxu0 %v4620
          %v4997 = vpop.f32.mrb[0].mxu0
          %v4998 = vadd.f32 %v4923, %v4997
          %v4999 = vpop.f32.mrb[0].mxu0
          %5000 = vdwg.mxu0
          %5001 = vmatprep.subr.mxu0 0.0
          %5002 = vmatpush1.msra.mxu0 %v4728
          %5003 = vmatprep.subr.mxu0 0.0
          %5004 = vmatpush1.msra.mxu0 %v4729
          %5005 = vmatprep.subr.mxu0 0.0
          %5006 = vmatpush1.msra.mxu0 %v4730
          %5007 = vmatprep.subr.mxu0 0.0
          %5008 = vmatpush1.msra.mxu0 %v4731
          %5009 = vmatprep.subr.mxu0 0.0
          %5010 = vmatpush1.msra.mxu0 %v4732
          %5011 = vmatprep.subr.mxu0 0.0
          %5012 = vmatpush1.msra.mxu0 %v4733
          %5013 = vmatprep.subr.mxu0 0.0
          %5014 = vmatpush1.msra.mxu0 %v4734
          %5015 = vmatprep.subr.mxu0 0.0
          %5016 = vmatpush1.msra.mxu0 %v4735
          %5017 = vmatprep.subr.mxu0 0.0
          %5018 = vmatpush1.msra.mxu0 %v4736
          %5019 = vmatprep.subr.mxu0 0.0
          %5020 = vmatpush1.msra.mxu0 %v4737
          %5021 = vmatprep.subr.mxu0 0.0
          %5022 = vmatpush1.msra.mxu0 %v4738
          %5023 = vmatprep.subr.mxu0 0.0
          %5024 = vmatpush1.msra.mxu0 %v4739
          %5025 = vmatprep.subr.mxu0 0.0
          %5026 = vmatpush1.msra.mxu0 %v4740
          %5027 = vmatprep.subr.mxu0 0.0
          %5028 = vmatpush1.msra.mxu0 %v4741
          %5029 = vmatprep.subr.mxu0 0.0
          %5030 = vmatpush1.msra.mxu0 %v4742
          %5031 = vmatprep.subr.mxu0 0.0
          %5032 = vmatpush1.msra.mxu0 %v4743
          %5033 = vmatprep.subr.mxu0 0.0
          %5034 = vmatpush1.msra.mxu0 %v4744
          %5035 = vmatprep.subr.mxu0 0.0
          %5036 = vmatpush1.msra.mxu0 %v4745
          %5037 = vmatprep.subr.mxu0 0.0
          %5038 = vmatpush1.msra.mxu0 %v4746
          %5039 = vmatprep.subr.mxu0 0.0
          %5040 = vmatpush1.msra.mxu0 %v4747
          %5041 = vmatprep.subr.mxu0 0.0
          %5042 = vmatpush1.msra.mxu0 %v4748
          %5043 = vmatprep.subr.mxu0 0.0
          %5044 = vmatpush1.msra.mxu0 %v4749
          %5045 = vmatprep.subr.mxu0 0.0
          %5046 = vmatpush1.msra.mxu0 %v4750
          %5047 = vmatprep.subr.mxu0 0.0
          %5048 = vmatpush1.msra.mxu0 %v4751
          %5049 = vmatprep.subr.mxu0 0.0
          %5050 = vmatpush1.msra.mxu0 %v4752
          %5051 = vmatprep.subr.mxu0 0.0
          %5052 = vmatpush1.msra.mxu0 %v4753
          %5053 = vmatprep.subr.mxu0 0.0
          %5054 = vmatpush1.msra.mxu0 %v4754
          %5055 = vmatprep.subr.mxu0 0.0
          %5056 = vmatpush1.msra.mxu0 %v4755
          %5057 = vmatprep.subr.mxu0 0.0
          %5058 = vmatpush1.msra.mxu0 %v4756
          %5059 = vmatprep.subr.mxu0 0.0
          %5060 = vmatpush1.msra.mxu0 %v4757
          %5061 = vmatprep.subr.mxu0 0.0
          %5062 = vmatpush1.msra.mxu0 %v4758
          %5063 = vmatprep.subr.mxu0 0.0
          %5064 = vmatpush1.msra.mxu0 %v4759
          %5065 = vmatprep.mubr.f32.mxu0 %v4628
          %5066 = vmatmul.mubr.f32.gmra.mrb[0].mxu0 %v4626
          %v5067 = vpop.f32.mrb[0].mxu0
          %v5068 = vadd.f32 %v4993, %v5067
          %v5069 = vpop.f32.mrb[0].mxu0
          %5070 = vmatprep.mubr.f32.mxu0 %v4629
          %5071 = vmatmul.mubr.f32.gmra.mrb[0].mxu0 %v4627
          %v5072 = vpop.f32.mrb[0].mxu0
          %v5073 = vadd.f32 %v4998, %v5072
          %v5074 = vpop.f32.mrb[0].mxu0
          %5075 = vdwg.mxu0
          %5076 = vmatprep.subr.mxu0 0.0
          %5077 = vmatpush1.msra.mxu0 %v4760
          %5078 = vmatprep.subr.mxu0 0.0
          %5079 = vmatpush1.msra.mxu0 %v4761
          %5080 = vmatprep.subr.mxu0 0.0
          %5081 = vmatpush1.msra.mxu0 %v4762
          %5082 = vmatprep.subr.mxu0 0.0
          %5083 = vmatpush1.msra.mxu0 %v4763
          %5084 = vmatprep.subr.mxu0 0.0
          %5085 = vmatpush1.msra.mxu0 %v4764
          %5086 = vmatprep.subr.mxu0 0.0
          %5087 = vmatpush1.msra.mxu0 %v4765
          %5088 = vmatprep.subr.mxu0 0.0
          %5089 = vmatpush1.msra.mxu0 %v4766
          %5090 = vmatprep.subr.mxu0 0.0
          %5091 = vmatpush1.msra.mxu0 %v4767
          %5092 = vmatprep.subr.mxu0 0.0
          %5093 = vmatpush1.msra.mxu0 %v4768
          %5094 = vmatprep.subr.mxu0 0.0
          %5095 = vmatpush1.msra.mxu0 %v4769
          %5096 = vmatprep.subr.mxu0 0.0
          %5097 = vmatpush1.msra.mxu0 %v4770
          %5098 = vmatprep.subr.mxu0 0.0
          %5099 = vmatpush1.msra.mxu0 %v4771
          %5100 = vmatprep.subr.mxu0 0.0
          %5101 = vmatpush1.msra.mxu0 %v4772
          %5102 = vmatprep.subr.mxu0 0.0
          %5103 = vmatpush1.msra.mxu0 %v4773
          %5104 = vmatprep.subr.mxu0 0.0
          %5105 = vmatpush1.msra.mxu0 %v4774
          %5106 = vmatprep.subr.mxu0 0.0
          %5107 = vmatpush1.msra.mxu0 %v4775
          %5108 = vmatprep.subr.mxu0 0.0
          %5109 = vmatpush1.msra.mxu0 0.0
          %5110 = vmatprep.subr.mxu0 0.0
          %5111 = vmatpush1.msra.mxu0 0.0
          %5112 = vmatprep.subr.mxu0 0.0
          %5113 = vmatpush1.msra.mxu0 0.0
          %5114 = vmatprep.subr.mxu0 0.0
          %5115 = vmatpush1.msra.mxu0 0.0
          %5116 = vmatprep.subr.mxu0 0.0
          %5117 = vmatpush1.msra.mxu0 0.0
          %5118 = vmatprep.subr.mxu0 0.0
          %5119 = vmatpush1.msra.mxu0 0.0
          %5120 = vmatprep.subr.mxu0 0.0
          %5121 = vmatpush1.msra.mxu0 0.0
          %5122 = vmatprep.subr.mxu0 0.0
          %5123 = vmatpush1.msra.mxu0 0.0
          %5124 = vmatprep.subr.mxu0 0.0
          %5125 = vmatpush1.msra.mxu0 0.0
          %5126 = vmatprep.subr.mxu0 0.0
          %5127 = vmatpush1.msra.mxu0 0.0
          %5128 = vmatprep.subr.mxu0 0.0
          %5129 = vmatpush1.msra.mxu0 0.0
          %5130 = vmatprep.subr.mxu0 0.0
          %5131 = vmatpush1.msra.mxu0 0.0
          %5132 = vmatprep.subr.mxu0 0.0
          %5133 = vmatpush1.msra.mxu0 0.0
          %5134 = vmatprep.subr.mxu0 0.0
          %5135 = vmatpush1.msra.mxu0 0.0
          %5136 = vmatprep.subr.mxu0 0.0
          %5137 = vmatpush1.msra.mxu0 0.0
          %5138 = vmatprep.subr.mxu0 0.0
          %5139 = vmatpush1.msra.mxu0 0.0
          %5140 = vmatprep.mubr.f32.mxu0 0.0
          %5141 = vmatmul.mubr.f32.gmra.mrb[0].mxu0 %v4630
          %v5142 = vpop.f32.mrb[0].mxu0
          %v5143 = vadd.f32 %v5068, %v5142
          %v5144 = vpop.f32.mrb[0].mxu0
          %5145 = vmatprep.mubr.f32.mxu0 0.0
          %5146 = vmatmul.mubr.f32.gmra.mrb[0].mxu0 %v4631
          %v5147 = vpop.f32.mrb[0].mxu0
          %v5148 = vadd.f32 %v5073, %v5147
          %v5149 = vpop.f32.mrb[0].mxu0
          %5150 = vdwg.mxu0
          %v5151 = vmul.f32 %v5143, %v4591
          %v5152 = vmul.f32 %v5148, %v4591
          %v5153 = vadd.f32 %v5151, %v4598
          %v5154 = vadd.f32 %v5152, %v4598
          %s5155 = smul.u32 %s4601, 16
          %s5156 = scalar_lea.vmem %s915, %s5155
          %vm5157 = vcmask 15360
          %5158 = vst.msk [vmem:[%s5156] sm:$0xff] %vm5157, %v5153
          %5159 = vst.msk [vmem:[%s5156 + $0x8] sm:$0xff] %vm5157, %v5154
        $region229: #{forward.1} parent=135 // loop_footer
          %s4605 = sadd.s32 1, %s4601
        $region230: #{forward.1} parent=135 // loop_footer_branch
          %4600 = sbr.rel target = $region226
        $region231: #{forward.1} parent=135 // loop_exit
          _
        %p5160 = scmp.lt.s32.totalorder %s71, 1
        %s5161 = scalar_select %p5160, %s71, 1
        %s5162 = smul.addr %s5161, 32
        %s5163 = smul.addr %s5162, 8
        %s5164 = scalar_lea.vmem %s59, %s5163
        // Predicated region
        $region232: #{forward.1} parent=135 // pred_check
          %p5165 = pneg %p703
        $region233: #{forward.1} parent=135 // pred_check_branch
          %5167 = sbr.rel (%p5165) target = $region235
        $region234: #{forward.1} parent=135 // pred_region
          _
        $region235: #{forward.1} parent=135 // pred_fallthru
          _
      $region136: #{forward.1} parent=5 // pred_fallthru
        _
      %p5168 = scmp.le.s32.totalorder 2, %s66
      // Predicated region
      $region236: #{forward.1} parent=5 // pred_check
        %p5169 = pneg %p5168
      $region237: #{forward.1} parent=5 // pred_check_branch
        %5171 = sbr.rel (%p5169) target = $region239
      $region238: #{forward.1} parent=5 // pred_region
        %s5172 = ssub.s32 %s66, 2
        // Predicated region
        $region240: #{forward.1} parent=238 // pred_check
          %p5173 = pneg %p709
        $region241: #{forward.1} parent=238 // pred_check_branch
          %5175 = sbr.rel (%p5173) target = $region243
        $region242: #{forward.1} parent=238 // pred_region
          %p5176 = scmp.lt.s32.totalorder %s72, 1
          %s5177 = scalar_select %p5176, %s72, 1
          %s5178 = smul.addr %s5177, 32
          %s5179 = smul.addr %s5178, 8
          %s5180 = scalar_lea.vmem %s59, %s5179
        $region243: #{forward.1} parent=238 // pred_fallthru
          _
      $region239: #{forward.1} parent=5 // pred_fallthru
        _
    $region6: #{forward.1} parent=1 // loop_footer
      %s70 = sadd.s32 1, %s66
    $region7: #{forward.1} parent=1 // loop_footer_branch
      %65 = sbr.rel target = $region3
    $region8: #{forward.1} parent=1 // loop_exit
      _
    %5181 = vsyncpa [#allocation16], 1
    %s5182 = scalar_lea.sflag [#allocation16], 1
    %5183 = vsyncpa %s5182, 1

</llo_original>
